<compile_context>
chip_gen: v6e
topology: v6e:2x2x1
jax: 0.10.0
libtpu: 0.0.40
codegen_flags: <defaults>
</compile_context>

<pallas_src>
import functools

import numpy as np

import jax
import jax.numpy as jnp
from jax.experimental import pallas as pl
from jax.experimental.pallas import tpu as pltpu


# ----------------------------------------------------------------------------
# Fused Pallas kernel: neg-sigmoid + 3x (conv3x3+ReLU+residual, score conv)
# ----------------------------------------------------------------------------
def _reverse_stage_kernel(x_ref, y_ref, mask_ref, wz_ref, bz_ref, ws_ref,
                          bs_ref, o_ref, z_ref, s_ref, *, C, SLOT, Lp, R, Wp):
    """One batch element, everything resident in VMEM.

    x_ref   : (1, C, Lp)      padded input image, spatial flattened on lanes
    y_ref   : (1, 1, Lp)      padded prior map
    mask_ref: (1, Lp)         1.0 on real pixels, 0.0 on padding ring + tail
    wz_ref  : (3, C, 9*SLOT)  folded conv weights (x_cat concat eliminated)
    bz_ref  : (3, C, 1)       conv biases
    ws_ref  : (3, 8, 9*SLOT)  score weights (row 0 real, rows 1..7 zero pad)
    bs_ref  : (3, 1, 1)       score biases
    o_ref   : (1, 1, Lp)      output y (padded layout)
    z_ref   : (SLOT, Lp+2R)   state buffer: rows 0..C-1 = x, row C = y,
                              rows C+1..SLOT-1 and all margins/tails = 0
    s_ref   : (9*SLOT, Lp)    im2col operand (fully overwritten before use)
    """
    offs = tuple(dy * Wp + dx for dy in (-1, 0, 1) for dx in (-1, 0, 1))

    # Cheap full zero of the small state buffer (~15 vregs). This is what
    # guarantees the lane margins, pad rows and lane tail are exactly 0, even
    # with stale VMEM from a previous kernel or a megacore grid split.
    # s_ref needs NO zeroing: every stage_taps pass overwrites all of it.
    z_ref[...] = jnp.zeros_like(z_ref)

    mask = mask_ref[...]                               # (1, Lp)
    mask_c = jnp.broadcast_to(mask, (C, Lp))           # hoisted: built once

    # Initial state. x already has a zero ring / zero tail from the host pad;
    # y = 1 - sigmoid(y) fused here, ring/tail forced back to exactly 0.
    z_ref[0:C, R:R + Lp] = x_ref[0]
    z_ref[C:C + 1, R:R + Lp] = jax.nn.sigmoid(-y_ref[0]) * mask

    def stage_taps():
        # 9 shifted copies of the state image. Each copy is a full SLOT-row
        # (sublane-aligned) block and a whole number of lane vregs (Lp=3*128),
        # so every store is an unmasked full-vreg vst. Shifts are plain
        # static-offset loads from the margin-extended buffer (no roll/mask).
        for t, off in enumerate(offs):
            s_ref[t * SLOT:(t + 1) * SLOT, :] = z_ref[:, R + off:R + off + Lp]

    for blk in range(3):                               # weak / medium / strong
        # ---- x = x + relu(conv3x3(x_cat) + b), in place in z_ref -----------
        # x_cat (group-interleaved concat) is folded into the weights over
        # [x | y]: conv(x_cat) == conv_x(x) + conv_ysum(y).
        stage_taps()
        conv = jnp.dot(wz_ref[blk], s_ref[...],
                       preferred_element_type=jnp.float32)           # (C, Lp)
        z_ref[0:C, R:R + Lp] = (
            z_ref[0:C, R:R + Lp]
            + jnp.maximum(conv + bz_ref[blk], 0.0) * mask_c)

        # ---- y = y + (score3x3(x) + b), in place in z_ref row C ------------
        # The y row and the zero pad rows ride along in s_ref; their weight
        # columns in ws are exactly zero, so they contribute nothing.
        stage_taps()
        sc = jnp.dot(ws_ref[blk], s_ref[...],
                     preferred_element_type=jnp.float32)              # (8, Lp)
        z_ref[C:C + 1, R:R + Lp] = (
            z_ref[C:C + 1, R:R + Lp] + (sc[0:1, :] + bs_ref[blk]) * mask)

    o_ref[0] = z_ref[C:C + 1, R:R + Lp]


# ----------------------------------------------------------------------------
# Parameter construction / packing (done once, outside the hot path)
# ----------------------------------------------------------------------------
def make_gra_params(key, channel, group):
    """Random params matching nn.Conv2d(channel+group, channel, 3) and
    nn.Conv2d(channel, 1, 3); conv_w is HWIO with the group-interleaved Cin."""
    cin = channel + group
    k1, k2, k3, k4 = jax.random.split(key, 4)
    return {
        "group": group,
        "conv_w": 0.1 * jax.random.normal(k1, (3, 3, cin, channel), jnp.float32),
        "conv_b": 0.1 * jax.random.normal(k2, (channel,), jnp.float32),
        "score_w": 0.1 * jax.random.normal(k3, (3, 3, channel, 1), jnp.float32),
        "score_b": 0.1 * jax.random.normal(k4, (1,), jnp.float32),
    }


def pack_reverse_stage_params(params, channel):
    """Fold the GRA interleave + 3x3 taps into dense (Cout, 9*SLOT) matrices.

    conv(x_cat) = conv_x(x) + conv_ysum(y): the y-tap weights at the 'group'
    replicated positions are summed, so the concat tensors never exist.
    Layout matches the kernel's im2col scratch: tap-major, SLOT rows per tap
    (SLOT = round_up(C+1, 8)); unused columns are exactly zero so pad rows /
    the y row in the score pass contribute nothing.
    """
    C = channel
    SLOT = ((C + 1 + 7) // 8) * 8
    K = 9 * SLOT
    wz_l, bz_l, ws_l, bs_l = [], [], [], []
    for name in ("weak", "medium", "strong"):
        p = params[name]
        group = p["group"]
        sub = C // group
        w = p["conv_w"]                                          # (3,3,C+g,C)
        x_idx = np.array([g * (sub + 1) + c
                          for g in range(group) for c in range(sub)])
        y_idx = np.array([g * (sub + 1) + sub for g in range(group)])
        wx = w[:, :, x_idx, :]                                   # (3,3,C,C)
        wy = jnp.sum(w[:, :, y_idx, :], axis=2, keepdims=True)   # (3,3,1,C)
        wzy = jnp.concatenate([wx, wy], axis=2)                  # (3,3,C+1,C)
        sw = p["score_w"]                                        # (3,3,C,1)

        wz = jnp.zeros((C, K), jnp.float32)
        ws = jnp.zeros((8, K), jnp.float32)
        for t in range(9):
            ky, kx = t // 3, t % 3
            wz = wz.at[:, t * SLOT:t * SLOT + C + 1].set(wzy[ky, kx].T)
            ws = ws.at[0:1, t * SLOT:t * SLOT + C].set(sw[ky, kx].T)
        wz_l.append(wz)
        bz_l.append(p["conv_b"].reshape(C, 1))
        ws_l.append(ws)
        bs_l.append(p["score_b"].reshape(1, 1))
    return {
        "wz": jnp.stack(wz_l),   # (3, C, K)
        "bz": jnp.stack(bz_l),   # (3, C, 1)
        "ws": jnp.stack(ws_l),   # (3, 8, K)
        "bs": jnp.stack(bs_l),   # (3, 1, 1)
    }


# ----------------------------------------------------------------------------
# Public entry point (jitted): NCHW in, NCHW out
# ----------------------------------------------------------------------------
def _reverse_stage_impl(x_nchw, y_nchw, packed):
    B, C, H, W = x_nchw.shape
    Hp, Wp = H + 2, W + 2
    L = Hp * Wp
    Lp = ((L + 127) // 128) * 128            # lane-dense spatial length
    SLOT = ((C + 1 + 7) // 8) * 8
    K = 9 * SLOT
    # Lane margin for tap shifts: a multiple of 128 (aligned image-window
    # stores) that is >= the largest tap offset (Wp + 1).
    R = ((Wp + 1 + 127) // 128) * 128

    # One-time input prep: SAME-pad spatially, flatten to lanes, pad the lane
    # tail to Lp with zeros (NCHW needs no transpose -- channels land on
    # sublanes, spatial on lanes).
    x = jnp.pad(x_nchw.astype(jnp.float32),
                ((0, 0), (0, 0), (1, 1), (1, 1))).reshape(B, C, L)
    x = jnp.pad(x, ((0, 0), (0, 0), (0, Lp - L)))
    y = jnp.pad(y_nchw.astype(jnp.float32),
                ((0, 0), (0, 0), (1, 1), (1, 1))).reshape(B, 1, L)
    y = jnp.pad(y, ((0, 0), (0, 0), (0, Lp - L)))
    mask = jnp.pad(jnp.ones((H, W), jnp.float32),
                   ((1, 1), (1, 1))).reshape(1, L)
    mask = jnp.pad(mask, ((0, 0), (0, Lp - L)))

    kernel = functools.partial(_reverse_stage_kernel,
                               C=C, SLOT=SLOT, Lp=Lp, R=R, Wp=Wp)
    out = pl.pallas_call(
        kernel,
        out_shape=jax.ShapeDtypeStruct((B, 1, Lp), jnp.float32),
        grid=(B,),
        in_specs=[
            pl.BlockSpec((1, C, Lp), lambda b: (b, 0, 0)),
            pl.BlockSpec((1, 1, Lp), lambda b: (b, 0, 0)),
            pl.BlockSpec((1, Lp), lambda b: (0, 0)),
            pl.BlockSpec((3, C, K), lambda b: (0, 0, 0)),
            pl.BlockSpec((3, C, 1), lambda b: (0, 0, 0)),
            pl.BlockSpec((3, 8, K), lambda b: (0, 0, 0)),
            pl.BlockSpec((3, 1, 1), lambda b: (0, 0, 0)),
        ],
        out_specs=pl.BlockSpec((1, 1, Lp), lambda b: (b, 0, 0)),
        scratch_shapes=[
            pltpu.VMEM((SLOT, Lp + 2 * R), jnp.float32),   # state buffer
            pltpu.VMEM((K, Lp), jnp.float32),              # im2col operand
        ],
        compiler_params=pltpu.CompilerParams(
            dimension_semantics=("parallel",)),
    )(x, y, mask, packed["wz"], packed["bz"], packed["ws"], packed["bs"])

    return out[:, :, :L].reshape(B, 1, Hp, Wp)[:, :, 1:H + 1, 1:W + 1]


reverse_stage = jax.jit(_reverse_stage_impl)


# ----------------------------------------------------------------------------
# Pure-JAX reference (correctness check only; uses the raw interleaved params)
# ----------------------------------------------------------------------------
def _conv3x3_ref(x_nhwc, w_hwio, b):
    out = jax.lax.conv_general_dilated(
        x_nhwc, w_hwio, (1, 1), "SAME",
        dimension_numbers=("NHWC", "HWIO", "NHWC"))
    return out + b


def _gra_ref(x, y, p):
    C = x.shape[-1]
    group = p["group"]
    if group == 1:
        x_cat = jnp.concatenate([x, y], axis=-1)
    else:
        sub = C // group
        parts = []
        for g in range(group):
            parts.append(x[..., g * sub:(g + 1) * sub])
            parts.append(y)
        x_cat = jnp.concatenate(parts, axis=-1)
    x_new = x + jax.nn.relu(_conv3x3_ref(x_cat, p["conv_w"], p["conv_b"]))
    y_new = y + _conv3x3_ref(x_new, p["score_w"], p["score_b"])
    return x_new, y_new


def reverse_stage_ref(x_nchw, y_nchw, params):
    x = jnp.transpose(x_nchw, (0, 2, 3, 1)).astype(jnp.float32)
    y = jnp.transpose(y_nchw, (0, 2, 3, 1)).astype(jnp.float32)
    y = 1.0 - jax.nn.sigmoid(y)
    x, y = _gra_ref(x, y, params["weak"])
    x, y = _gra_ref(x, y, params["medium"])
    _, y = _gra_ref(x, y, params["strong"])
    return jnp.transpose(y, (0, 3, 1, 2))


# ----------------------------------------------------------------------------
if __name__ == "__main__":
    B, C, H, W = 2, 16, 16, 16   # channel=16 -> GRA groups 1 / 2 / 16

    key = jax.random.PRNGKey(0)
    kx, ky, kw, km, ks = jax.random.split(key, 5)

    x = jax.random.normal(kx, (B, C, H, W), jnp.float32)   # NCHW (PyTorch)
    y = jax.random.normal(ky, (B, 1, H, W), jnp.float32)

    params = {
        "weak":   make_gra_params(kw, C, 1),        # GRA(channel, channel)
        "medium": make_gra_params(km, C, C // 8),   # GRA(channel, 8)
        "strong": make_gra_params(ks, C, C),        # GRA(channel, 1)
    }
    packed = pack_reverse_stage_params(params, C)

    out = jax.block_until_ready(reverse_stage(x, y, packed))

    ref = jax.block_until_ready(reverse_stage_ref(x, y, params))
    assert out.shape == (B, 1, H, W)
    max_err = float(jnp.max(jnp.abs(out - ref)))
    assert jnp.allclose(out, ref, rtol=2e-4, atol=2e-4), max_err

    print("KERNEL_OK")
</pallas_src>

<mosaic_0001>
module attributes {stable_mosaic.version = 11 : i64} {
  func.func @_reverse_stage_kernel(%arg0: i32, %arg1: memref<1x16x384xf32, #tpu.memory_space<vmem>>, %arg2: memref<1x1x384xf32, #tpu.memory_space<vmem>>, %arg3: memref<1x384xf32, #tpu.memory_space<vmem>>, %arg4: memref<3x16x216xf32, #tpu.memory_space<vmem>>, %arg5: memref<3x16x1xf32, #tpu.memory_space<vmem>>, %arg6: memref<3x8x216xf32, #tpu.memory_space<vmem>>, %arg7: memref<3x1x1xf32, #tpu.memory_space<vmem>>, %arg8: memref<1x1x384xf32, #tpu.memory_space<vmem>>, %arg9: memref<24x640xf32, #tpu.memory_space<vmem>>, %arg10: memref<216x384xf32, #tpu.memory_space<vmem>>) attributes {dimension_semantics = [#tpu.dimension_semantics<parallel>], iteration_bounds = array<i64: 2>, scalar_prefetch = 0 : i64, scratch_operands = 2 : i64, tpu.core_type = #tpu.core_type<tc>, window_params = [{transform_indices = @transform_0, window_bounds = array<i64: 1, 16, 384>}, {transform_indices = @transform_1, window_bounds = array<i64: 1, 1, 384>}, {pipeline_mode = #tpu.pipeline_mode<synchronous>, transform_indices = @transform_2, window_bounds = array<i64: 1, 384>}, {pipeline_mode = #tpu.pipeline_mode<synchronous>, transform_indices = @transform_3, window_bounds = array<i64: 3, 16, 216>}, {pipeline_mode = #tpu.pipeline_mode<synchronous>, transform_indices = @transform_4, window_bounds = array<i64: 3, 16, 1>}, {pipeline_mode = #tpu.pipeline_mode<synchronous>, transform_indices = @transform_5, window_bounds = array<i64: 3, 8, 216>}, {pipeline_mode = #tpu.pipeline_mode<synchronous>, transform_indices = @transform_6, window_bounds = array<i64: 3, 1, 1>}, {transform_indices = @transform_7, window_bounds = array<i64: 1, 1, 384>}]} {
    %cst = arith.constant 0.000000e+00 : f32
    %0 = vector.broadcast %cst : f32 to vector<24x640xf32>
    %c0 = arith.constant 0 : index
    %c0_0 = arith.constant 0 : index
    %1 = vector.load %arg9[%c0, %c0_0] : memref<24x640xf32, #tpu.memory_space<vmem>>, vector<24x640xf32>
    tpu.vector_store %arg9[%c0, %c0_0], %0 {strides = array<i32>} : memref<24x640xf32, #tpu.memory_space<vmem>>, vector<24x640xf32>,
    %c0_1 = arith.constant 0 : index
    %c0_2 = arith.constant 0 : index
    %2 = vector.load %arg3[%c0_1, %c0_2] : memref<1x384xf32, #tpu.memory_space<vmem>>, vector<1x384xf32>
    %3 = vector.shape_cast %2 : vector<1x384xf32> to vector<1x384xf32>
    %4 = vector.broadcast %3 : vector<1x384xf32> to vector<16x384xf32>
    %c0_3 = arith.constant 0 : index
    %c0_4 = arith.constant 0 : index
    %c0_5 = arith.constant 0 : index
    %5 = vector.load %arg1[%c0_3, %c0_4, %c0_5] : memref<1x16x384xf32, #tpu.memory_space<vmem>>, vector<1x16x384xf32>
    %6 = vector.shape_cast %5 : vector<1x16x384xf32> to vector<16x384xf32>
    %c0_6 = arith.constant 0 : index
    %c128 = arith.constant 128 : index
    %7 = vector.load %arg9[%c0_6, %c128] : memref<24x640xf32, #tpu.memory_space<vmem>>, vector<16x384xf32>
    tpu.vector_store %arg9[%c0_6, %c128], %6 {strides = array<i32>} : memref<24x640xf32, #tpu.memory_space<vmem>>, vector<16x384xf32>,
    %c0_7 = arith.constant 0 : index
    %c0_8 = arith.constant 0 : index
    %c0_9 = arith.constant 0 : index
    %8 = vector.load %arg2[%c0_7, %c0_8, %c0_9] : memref<1x1x384xf32, #tpu.memory_space<vmem>>, vector<1x1x384xf32>
    %9 = vector.shape_cast %8 : vector<1x1x384xf32> to vector<1x384xf32>
    %cst_10 = arith.constant 0.000000e+00 : f32
    %10 = vector.broadcast %cst_10 : f32 to vector<1x384xf32>
    %11 = arith.subf %10, %9 : vector<1x384xf32>
    %12 = arith.negf %11 : vector<1x384xf32>
    %13 = math.exp %12 : vector<1x384xf32>
    %cst_11 = arith.constant 1.000000e+00 : f32
    %14 = vector.broadcast %cst_11 : f32 to vector<1x384xf32>
    %15 = arith.addf %14, %13 : vector<1x384xf32>
    %16 = arith.divf %14, %15 : vector<1x384xf32>
    %17 = arith.mulf %16, %2 : vector<1x384xf32>
    %c16 = arith.constant 16 : index
    %c128_12 = arith.constant 128 : index
    %18 = vector.load %arg9[%c16, %c128_12] : memref<24x640xf32, #tpu.memory_space<vmem>>, vector<1x384xf32>
    tpu.vector_store %arg9[%c16, %c128_12], %17 {strides = array<i32>} : memref<24x640xf32, #tpu.memory_space<vmem>>, vector<1x384xf32>,
    %c0_13 = arith.constant 0 : index
    %c109 = arith.constant 109 : index
    %19 = vector.load %arg9[%c0_13, %c109] : memref<24x640xf32, #tpu.memory_space<vmem>>, vector<24x384xf32>
    %c0_14 = arith.constant 0 : index
    %c0_15 = arith.constant 0 : index
    %20 = vector.load %arg10[%c0_14, %c0_15] : memref<216x384xf32, #tpu.memory_space<vmem>>, vector<24x384xf32>
    tpu.vector_store %arg10[%c0_14, %c0_15], %19 {strides = array<i32>} : memref<216x384xf32, #tpu.memory_space<vmem>>, vector<24x384xf32>,
    %c0_16 = arith.constant 0 : index
    %c110 = arith.constant 110 : index
    %21 = vector.load %arg9[%c0_16, %c110] : memref<24x640xf32, #tpu.memory_space<vmem>>, vector<24x384xf32>
    %c24 = arith.constant 24 : index
    %c0_17 = arith.constant 0 : index
    %22 = vector.load %arg10[%c24, %c0_17] : memref<216x384xf32, #tpu.memory_space<vmem>>, vector<24x384xf32>
    tpu.vector_store %arg10[%c24, %c0_17], %21 {strides = array<i32>} : memref<216x384xf32, #tpu.memory_space<vmem>>, vector<24x384xf32>,
    %c0_18 = arith.constant 0 : index
    %c111 = arith.constant 111 : index
    %23 = vector.load %arg9[%c0_18, %c111] : memref<24x640xf32, #tpu.memory_space<vmem>>, vector<24x384xf32>
    %c48 = arith.constant 48 : index
    %c0_19 = arith.constant 0 : index
    %24 = vector.load %arg10[%c48, %c0_19] : memref<216x384xf32, #tpu.memory_space<vmem>>, vector<24x384xf32>
    tpu.vector_store %arg10[%c48, %c0_19], %23 {strides = array<i32>} : memref<216x384xf32, #tpu.memory_space<vmem>>, vector<24x384xf32>,
    %c0_20 = arith.constant 0 : index
    %c127 = arith.constant 127 : index
    %25 = vector.load %arg9[%c0_20, %c127] : memref<24x640xf32, #tpu.memory_space<vmem>>, vector<24x384xf32>
    %c72 = arith.constant 72 : index
    %c0_21 = arith.constant 0 : index
    %26 = vector.load %arg10[%c72, %c0_21] : memref<216x384xf32, #tpu.memory_space<vmem>>, vector<24x384xf32>
    tpu.vector_store %arg10[%c72, %c0_21], %25 {strides = array<i32>} : memref<216x384xf32, #tpu.memory_space<vmem>>, vector<24x384xf32>,
    %c0_22 = arith.constant 0 : index
    %c128_23 = arith.constant 128 : index
    %27 = vector.load %arg9[%c0_22, %c128_23] : memref<24x640xf32, #tpu.memory_space<vmem>>, vector<24x384xf32>
    %c96 = arith.constant 96 : index
    %c0_24 = arith.constant 0 : index
    %28 = vector.load %arg10[%c96, %c0_24] : memref<216x384xf32, #tpu.memory_space<vmem>>, vector<24x384xf32>
    tpu.vector_store %arg10[%c96, %c0_24], %27 {strides = array<i32>} : memref<216x384xf32, #tpu.memory_space<vmem>>, vector<24x384xf32>,
    %c0_25 = arith.constant 0 : index
    %c129 = arith.constant 129 : index
    %29 = vector.load %arg9[%c0_25, %c129] : memref<24x640xf32, #tpu.memory_space<vmem>>, vector<24x384xf32>
    %c120 = arith.constant 120 : index
    %c0_26 = arith.constant 0 : index
    %30 = vector.load %arg10[%c120, %c0_26] : memref<216x384xf32, #tpu.memory_space<vmem>>, vector<24x384xf32>
    tpu.vector_store %arg10[%c120, %c0_26], %29 {strides = array<i32>} : memref<216x384xf32, #tpu.memory_space<vmem>>, vector<24x384xf32>,
    %c0_27 = arith.constant 0 : index
    %c145 = arith.constant 145 : index
    %31 = vector.load %arg9[%c0_27, %c145] : memref<24x640xf32, #tpu.memory_space<vmem>>, vector<24x384xf32>
    %c144 = arith.constant 144 : index
    %c0_28 = arith.constant 0 : index
    %32 = vector.load %arg10[%c144, %c0_28] : memref<216x384xf32, #tpu.memory_space<vmem>>, vector<24x384xf32>
    tpu.vector_store %arg10[%c144, %c0_28], %31 {strides = array<i32>} : memref<216x384xf32, #tpu.memory_space<vmem>>, vector<24x384xf32>,
    %c0_29 = arith.constant 0 : index
    %c146 = arith.constant 146 : index
    %33 = vector.load %arg9[%c0_29, %c146] : memref<24x640xf32, #tpu.memory_space<vmem>>, vector<24x384xf32>
    %c168 = arith.constant 168 : index
    %c0_30 = arith.constant 0 : index
    %34 = vector.load %arg10[%c168, %c0_30] : memref<216x384xf32, #tpu.memory_space<vmem>>, vector<24x384xf32>
    tpu.vector_store %arg10[%c168, %c0_30], %33 {strides = array<i32>} : memref<216x384xf32, #tpu.memory_space<vmem>>, vector<24x384xf32>,
    %c0_31 = arith.constant 0 : index
    %c147 = arith.constant 147 : index
    %35 = vector.load %arg9[%c0_31, %c147] : memref<24x640xf32, #tpu.memory_space<vmem>>, vector<24x384xf32>
    %c192 = arith.constant 192 : index
    %c0_32 = arith.constant 0 : index
    %36 = vector.load %arg10[%c192, %c0_32] : memref<216x384xf32, #tpu.memory_space<vmem>>, vector<24x384xf32>
    tpu.vector_store %arg10[%c192, %c0_32], %35 {strides = array<i32>} : memref<216x384xf32, #tpu.memory_space<vmem>>, vector<24x384xf32>,
    %c0_33 = arith.constant 0 : index
    %c0_34 = arith.constant 0 : index
    %c0_35 = arith.constant 0 : index
    %37 = vector.load %arg4[%c0_33, %c0_34, %c0_35] : memref<3x16x216xf32, #tpu.memory_space<vmem>>, vector<1x16x216xf32>
    %38 = vector.shape_cast %37 : vector<1x16x216xf32> to vector<16x216xf32>
    %c0_36 = arith.constant 0 : index
    %c0_37 = arith.constant 0 : index
    %39 = vector.load %arg10[%c0_36, %c0_37] : memref<216x384xf32, #tpu.memory_space<vmem>>, vector<216x384xf32>
    %cst_38 = arith.constant dense<0.000000e+00> : vector<16x384xf32>
    %40 = tpu.matmul %38, %39, %cst_38 {dimension_numbers = #tpu.dot_dimension_numbers<[1], [0], [0], [1], [0, 0, 1, 1], [], []>} : vector<16x216xf32>, vector<216x384xf32>, vector<16x384xf32> -> vector<16x384xf32>
    %c0_39 = arith.constant 0 : index
    %c128_40 = arith.constant 128 : index
    %41 = vector.load %arg9[%c0_39, %c128_40] : memref<24x640xf32, #tpu.memory_space<vmem>>, vector<16x384xf32>
    %c0_41 = arith.constant 0 : index
    %c0_42 = arith.constant 0 : index
    %c0_43 = arith.constant 0 : index
    %42 = vector.load %arg5[%c0_41, %c0_42, %c0_43] : memref<3x16x1xf32, #tpu.memory_space<vmem>>, vector<1x16x1xf32>
    %43 = vector.shape_cast %42 : vector<1x16x1xf32> to vector<16x1xf32>
    %44 = vector.broadcast %43 : vector<16x1xf32> to vector<16x384xf32>
    %45 = arith.addf %40, %44 : vector<16x384xf32>
    %cst_44 = arith.constant 0.000000e+00 : f32
    %46 = vector.broadcast %cst_44 : f32 to vector<16x384xf32>
    %47 = arith.maximumf %45, %46 : vector<16x384xf32>
    %48 = arith.mulf %47, %4 : vector<16x384xf32>
    %49 = arith.addf %41, %48 : vector<16x384xf32>
    %c0_45 = arith.constant 0 : index
    %c128_46 = arith.constant 128 : index
    %50 = vector.load %arg9[%c0_45, %c128_46] : memref<24x640xf32, #tpu.memory_space<vmem>>, vector<16x384xf32>
    tpu.vector_store %arg9[%c0_45, %c128_46], %49 {strides = array<i32>} : memref<24x640xf32, #tpu.memory_space<vmem>>, vector<16x384xf32>,
    %c0_47 = arith.constant 0 : index
    %c109_48 = arith.constant 109 : index
    %51 = vector.load %arg9[%c0_47, %c109_48] : memref<24x640xf32, #tpu.memory_space<vmem>>, vector<24x384xf32>
    %c0_49 = arith.constant 0 : index
    %c0_50 = arith.constant 0 : index
    %52 = vector.load %arg10[%c0_49, %c0_50] : memref<216x384xf32, #tpu.memory_space<vmem>>, vector<24x384xf32>
    tpu.vector_store %arg10[%c0_49, %c0_50], %51 {strides = array<i32>} : memref<216x384xf32, #tpu.memory_space<vmem>>, vector<24x384xf32>,
    %c0_51 = arith.constant 0 : index
    %c110_52 = arith.constant 110 : index
    %53 = vector.load %arg9[%c0_51, %c110_52] : memref<24x640xf32, #tpu.memory_space<vmem>>, vector<24x384xf32>
    %c24_53 = arith.constant 24 : index
    %c0_54 = arith.constant 0 : index
    %54 = vector.load %arg10[%c24_53, %c0_54] : memref<216x384xf32, #tpu.memory_space<vmem>>, vector<24x384xf32>
    tpu.vector_store %arg10[%c24_53, %c0_54], %53 {strides = array<i32>} : memref<216x384xf32, #tpu.memory_space<vmem>>, vector<24x384xf32>,
    %c0_55 = arith.constant 0 : index
    %c111_56 = arith.constant 111 : index
    %55 = vector.load %arg9[%c0_55, %c111_56] : memref<24x640xf32, #tpu.memory_space<vmem>>, vector<24x384xf32>
    %c48_57 = arith.constant 48 : index
    %c0_58 = arith.constant 0 : index
    %56 = vector.load %arg10[%c48_57, %c0_58] : memref<216x384xf32, #tpu.memory_space<vmem>>, vector<24x384xf32>
    tpu.vector_store %arg10[%c48_57, %c0_58], %55 {strides = array<i32>} : memref<216x384xf32, #tpu.memory_space<vmem>>, vector<24x384xf32>,
    %c0_59 = arith.constant 0 : index
    %c127_60 = arith.constant 127 : index
    %57 = vector.load %arg9[%c0_59, %c127_60] : memref<24x640xf32, #tpu.memory_space<vmem>>, vector<24x384xf32>
    %c72_61 = arith.constant 72 : index
    %c0_62 = arith.constant 0 : index
    %58 = vector.load %arg10[%c72_61, %c0_62] : memref<216x384xf32, #tpu.memory_space<vmem>>, vector<24x384xf32>
    tpu.vector_store %arg10[%c72_61, %c0_62], %57 {strides = array<i32>} : memref<216x384xf32, #tpu.memory_space<vmem>>, vector<24x384xf32>,
    %c0_63 = arith.constant 0 : index
    %c128_64 = arith.constant 128 : index
    %59 = vector.load %arg9[%c0_63, %c128_64] : memref<24x640xf32, #tpu.memory_space<vmem>>, vector<24x384xf32>
    %c96_65 = arith.constant 96 : index
    %c0_66 = arith.constant 0 : index
    %60 = vector.load %arg10[%c96_65, %c0_66] : memref<216x384xf32, #tpu.memory_space<vmem>>, vector<24x384xf32>
    tpu.vector_store %arg10[%c96_65, %c0_66], %59 {strides = array<i32>} : memref<216x384xf32, #tpu.memory_space<vmem>>, vector<24x384xf32>,
    %c0_67 = arith.constant 0 : index
    %c129_68 = arith.constant 129 : index
    %61 = vector.load %arg9[%c0_67, %c129_68] : memref<24x640xf32, #tpu.memory_space<vmem>>, vector<24x384xf32>
    %c120_69 = arith.constant 120 : index
    %c0_70 = arith.constant 0 : index
    %62 = vector.load %arg10[%c120_69, %c0_70] : memref<216x384xf32, #tpu.memory_space<vmem>>, vector<24x384xf32>
    tpu.vector_store %arg10[%c120_69, %c0_70], %61 {strides = array<i32>} : memref<216x384xf32, #tpu.memory_space<vmem>>, vector<24x384xf32>,
    %c0_71 = arith.constant 0 : index
    %c145_72 = arith.constant 145 : index
    %63 = vector.load %arg9[%c0_71, %c145_72] : memref<24x640xf32, #tpu.memory_space<vmem>>, vector<24x384xf32>
    %c144_73 = arith.constant 144 : index
    %c0_74 = arith.constant 0 : index
    %64 = vector.load %arg10[%c144_73, %c0_74] : memref<216x384xf32, #tpu.memory_space<vmem>>, vector<24x384xf32>
    tpu.vector_store %arg10[%c144_73, %c0_74], %63 {strides = array<i32>} : memref<216x384xf32, #tpu.memory_space<vmem>>, vector<24x384xf32>,
    %c0_75 = arith.constant 0 : index
    %c146_76 = arith.constant 146 : index
    %65 = vector.load %arg9[%c0_75, %c146_76] : memref<24x640xf32, #tpu.memory_space<vmem>>, vector<24x384xf32>
    %c168_77 = arith.constant 168 : index
    %c0_78 = arith.constant 0 : index
    %66 = vector.load %arg10[%c168_77, %c0_78] : memref<216x384xf32, #tpu.memory_space<vmem>>, vector<24x384xf32>
    tpu.vector_store %arg10[%c168_77, %c0_78], %65 {strides = array<i32>} : memref<216x384xf32, #tpu.memory_space<vmem>>, vector<24x384xf32>,
    %c0_79 = arith.constant 0 : index
    %c147_80 = arith.constant 147 : index
    %67 = vector.load %arg9[%c0_79, %c147_80] : memref<24x640xf32, #tpu.memory_space<vmem>>, vector<24x384xf32>
    %c192_81 = arith.constant 192 : index
    %c0_82 = arith.constant 0 : index
    %68 = vector.load %arg10[%c192_81, %c0_82] : memref<216x384xf32, #tpu.memory_space<vmem>>, vector<24x384xf32>
    tpu.vector_store %arg10[%c192_81, %c0_82], %67 {strides = array<i32>} : memref<216x384xf32, #tpu.memory_space<vmem>>, vector<24x384xf32>,
    %c0_83 = arith.constant 0 : index
    %c0_84 = arith.constant 0 : index
    %c0_85 = arith.constant 0 : index
    %69 = vector.load %arg6[%c0_83, %c0_84, %c0_85] : memref<3x8x216xf32, #tpu.memory_space<vmem>>, vector<1x8x216xf32>
    %70 = vector.shape_cast %69 : vector<1x8x216xf32> to vector<8x216xf32>
    %c0_86 = arith.constant 0 : index
    %c0_87 = arith.constant 0 : index
    %71 = vector.load %arg10[%c0_86, %c0_87] : memref<216x384xf32, #tpu.memory_space<vmem>>, vector<216x384xf32>
    %cst_88 = arith.constant dense<0.000000e+00> : vector<8x384xf32>
    %72 = tpu.matmul %70, %71, %cst_88 {dimension_numbers = #tpu.dot_dimension_numbers<[1], [0], [0], [1], [0, 0, 1, 1], [], []>} : vector<8x216xf32>, vector<216x384xf32>, vector<8x384xf32> -> vector<8x384xf32>
    %c16_89 = arith.constant 16 : index
    %c128_90 = arith.constant 128 : index
    %73 = vector.load %arg9[%c16_89, %c128_90] : memref<24x640xf32, #tpu.memory_space<vmem>>, vector<1x384xf32>
    %74 = vector.extract_strided_slice %72 {offsets = [0, 0], sizes = [1, 384], strides = [1, 1]} : vector<8x384xf32> to vector<1x384xf32>
    %c0_91 = arith.constant 0 : index
    %c0_92 = arith.constant 0 : index
    %c0_93 = arith.constant 0 : index
    %75 = vector.load %arg7[%c0_91, %c0_92, %c0_93] : memref<3x1x1xf32, #tpu.memory_space<vmem>>, vector<1x1x1xf32>
    %76 = vector.shape_cast %75 : vector<1x1x1xf32> to vector<1x1xf32>
    %77 = vector.broadcast %76 : vector<1x1xf32> to vector<1x384xf32>
    %78 = arith.addf %74, %77 : vector<1x384xf32>
    %79 = arith.mulf %78, %2 : vector<1x384xf32>
    %80 = arith.addf %73, %79 : vector<1x384xf32>
    %c16_94 = arith.constant 16 : index
    %c128_95 = arith.constant 128 : index
    %81 = vector.load %arg9[%c16_94, %c128_95] : memref<24x640xf32, #tpu.memory_space<vmem>>, vector<1x384xf32>
    tpu.vector_store %arg9[%c16_94, %c128_95], %80 {strides = array<i32>} : memref<24x640xf32, #tpu.memory_space<vmem>>, vector<1x384xf32>,
    %c0_96 = arith.constant 0 : index
    %c109_97 = arith.constant 109 : index
    %82 = vector.load %arg9[%c0_96, %c109_97] : memref<24x640xf32, #tpu.memory_space<vmem>>, vector<24x384xf32>
    %c0_98 = arith.constant 0 : index
    %c0_99 = arith.constant 0 : index
    %83 = vector.load %arg10[%c0_98, %c0_99] : memref<216x384xf32, #tpu.memory_space<vmem>>, vector<24x384xf32>
    tpu.vector_store %arg10[%c0_98, %c0_99], %82 {strides = array<i32>} : memref<216x384xf32, #tpu.memory_space<vmem>>, vector<24x384xf32>,
    %c0_100 = arith.constant 0 : index
    %c110_101 = arith.constant 110 : index
    %84 = vector.load %arg9[%c0_100, %c110_101] : memref<24x640xf32, #tpu.memory_space<vmem>>, vector<24x384xf32>
    %c24_102 = arith.constant 24 : index
    %c0_103 = arith.constant 0 : index
    %85 = vector.load %arg10[%c24_102, %c0_103] : memref<216x384xf32, #tpu.memory_space<vmem>>, vector<24x384xf32>
    tpu.vector_store %arg10[%c24_102, %c0_103], %84 {strides = array<i32>} : memref<216x384xf32, #tpu.memory_space<vmem>>, vector<24x384xf32>,
    %c0_104 = arith.constant 0 : index
    %c111_105 = arith.constant 111 : index
    %86 = vector.load %arg9[%c0_104, %c111_105] : memref<24x640xf32, #tpu.memory_space<vmem>>, vector<24x384xf32>
    %c48_106 = arith.constant 48 : index
    %c0_107 = arith.constant 0 : index
    %87 = vector.load %arg10[%c48_106, %c0_107] : memref<216x384xf32, #tpu.memory_space<vmem>>, vector<24x384xf32>
    tpu.vector_store %arg10[%c48_106, %c0_107], %86 {strides = array<i32>} : memref<216x384xf32, #tpu.memory_space<vmem>>, vector<24x384xf32>,
    %c0_108 = arith.constant 0 : index
    %c127_109 = arith.constant 127 : index
    %88 = vector.load %arg9[%c0_108, %c127_109] : memref<24x640xf32, #tpu.memory_space<vmem>>, vector<24x384xf32>
    %c72_110 = arith.constant 72 : index
    %c0_111 = arith.constant 0 : index
    %89 = vector.load %arg10[%c72_110, %c0_111] : memref<216x384xf32, #tpu.memory_space<vmem>>, vector<24x384xf32>
    tpu.vector_store %arg10[%c72_110, %c0_111], %88 {strides = array<i32>} : memref<216x384xf32, #tpu.memory_space<vmem>>, vector<24x384xf32>,
    %c0_112 = arith.constant 0 : index
    %c128_113 = arith.constant 128 : index
    %90 = vector.load %arg9[%c0_112, %c128_113] : memref<24x640xf32, #tpu.memory_space<vmem>>, vector<24x384xf32>
    %c96_114 = arith.constant 96 : index
    %c0_115 = arith.constant 0 : index
    %91 = vector.load %arg10[%c96_114, %c0_115] : memref<216x384xf32, #tpu.memory_space<vmem>>, vector<24x384xf32>
    tpu.vector_store %arg10[%c96_114, %c0_115], %90 {strides = array<i32>} : memref<216x384xf32, #tpu.memory_space<vmem>>, vector<24x384xf32>,
    %c0_116 = arith.constant 0 : index
    %c129_117 = arith.constant 129 : index
    %92 = vector.load %arg9[%c0_116, %c129_117] : memref<24x640xf32, #tpu.memory_space<vmem>>, vector<24x384xf32>
    %c120_118 = arith.constant 120 : index
    %c0_119 = arith.constant 0 : index
    %93 = vector.load %arg10[%c120_118, %c0_119] : memref<216x384xf32, #tpu.memory_space<vmem>>, vector<24x384xf32>
    tpu.vector_store %arg10[%c120_118, %c0_119], %92 {strides = array<i32>} : memref<216x384xf32, #tpu.memory_space<vmem>>, vector<24x384xf32>,
    %c0_120 = arith.constant 0 : index
    %c145_121 = arith.constant 145 : index
    %94 = vector.load %arg9[%c0_120, %c145_121] : memref<24x640xf32, #tpu.memory_space<vmem>>, vector<24x384xf32>
    %c144_122 = arith.constant 144 : index
    %c0_123 = arith.constant 0 : index
    %95 = vector.load %arg10[%c144_122, %c0_123] : memref<216x384xf32, #tpu.memory_space<vmem>>, vector<24x384xf32>
    tpu.vector_store %arg10[%c144_122, %c0_123], %94 {strides = array<i32>} : memref<216x384xf32, #tpu.memory_space<vmem>>, vector<24x384xf32>,
    %c0_124 = arith.constant 0 : index
    %c146_125 = arith.constant 146 : index
    %96 = vector.load %arg9[%c0_124, %c146_125] : memref<24x640xf32, #tpu.memory_space<vmem>>, vector<24x384xf32>
    %c168_126 = arith.constant 168 : index
    %c0_127 = arith.constant 0 : index
    %97 = vector.load %arg10[%c168_126, %c0_127] : memref<216x384xf32, #tpu.memory_space<vmem>>, vector<24x384xf32>
    tpu.vector_store %arg10[%c168_126, %c0_127], %96 {strides = array<i32>} : memref<216x384xf32, #tpu.memory_space<vmem>>, vector<24x384xf32>,
    %c0_128 = arith.constant 0 : index
    %c147_129 = arith.constant 147 : index
    %98 = vector.load %arg9[%c0_128, %c147_129] : memref<24x640xf32, #tpu.memory_space<vmem>>, vector<24x384xf32>
    %c192_130 = arith.constant 192 : index
    %c0_131 = arith.constant 0 : index
    %99 = vector.load %arg10[%c192_130, %c0_131] : memref<216x384xf32, #tpu.memory_space<vmem>>, vector<24x384xf32>
    tpu.vector_store %arg10[%c192_130, %c0_131], %98 {strides = array<i32>} : memref<216x384xf32, #tpu.memory_space<vmem>>, vector<24x384xf32>,
    %c1 = arith.constant 1 : index
    %c0_132 = arith.constant 0 : index
    %c0_133 = arith.constant 0 : index
    %100 = vector.load %arg4[%c1, %c0_132, %c0_133] : memref<3x16x216xf32, #tpu.memory_space<vmem>>, vector<1x16x216xf32>
    %101 = vector.shape_cast %100 : vector<1x16x216xf32> to vector<16x216xf32>
    %c0_134 = arith.constant 0 : index
    %c0_135 = arith.constant 0 : index
    %102 = vector.load %arg10[%c0_134, %c0_135] : memref<216x384xf32, #tpu.memory_space<vmem>>, vector<216x384xf32>
    %cst_136 = arith.constant dense<0.000000e+00> : vector<16x384xf32>
    %103 = tpu.matmul %101, %102, %cst_136 {dimension_numbers = #tpu.dot_dimension_numbers<[1], [0], [0], [1], [0, 0, 1, 1], [], []>} : vector<16x216xf32>, vector<216x384xf32>, vector<16x384xf32> -> vector<16x384xf32>
    %c0_137 = arith.constant 0 : index
    %c128_138 = arith.constant 128 : index
    %104 = vector.load %arg9[%c0_137, %c128_138] : memref<24x640xf32, #tpu.memory_space<vmem>>, vector<16x384xf32>
    %c1_139 = arith.constant 1 : index
    %c0_140 = arith.constant 0 : index
    %c0_141 = arith.constant 0 : index
    %105 = vector.load %arg5[%c1_139, %c0_140, %c0_141] : memref<3x16x1xf32, #tpu.memory_space<vmem>>, vector<1x16x1xf32>
    %106 = vector.shape_cast %105 : vector<1x16x1xf32> to vector<16x1xf32>
    %107 = vector.broadcast %106 : vector<16x1xf32> to vector<16x384xf32>
    %108 = arith.addf %103, %107 : vector<16x384xf32>
    %cst_142 = arith.constant 0.000000e+00 : f32
    %109 = vector.broadcast %cst_142 : f32 to vector<16x384xf32>
    %110 = arith.maximumf %108, %109 : vector<16x384xf32>
    %111 = arith.mulf %110, %4 : vector<16x384xf32>
    %112 = arith.addf %104, %111 : vector<16x384xf32>
    %c0_143 = arith.constant 0 : index
    %c128_144 = arith.constant 128 : index
    %113 = vector.load %arg9[%c0_143, %c128_144] : memref<24x640xf32, #tpu.memory_space<vmem>>, vector<16x384xf32>
    tpu.vector_store %arg9[%c0_143, %c128_144], %112 {strides = array<i32>} : memref<24x640xf32, #tpu.memory_space<vmem>>, vector<16x384xf32>,
    %c0_145 = arith.constant 0 : index
    %c109_146 = arith.constant 109 : index
    %114 = vector.load %arg9[%c0_145, %c109_146] : memref<24x640xf32, #tpu.memory_space<vmem>>, vector<24x384xf32>
    %c0_147 = arith.constant 0 : index
    %c0_148 = arith.constant 0 : index
    %115 = vector.load %arg10[%c0_147, %c0_148] : memref<216x384xf32, #tpu.memory_space<vmem>>, vector<24x384xf32>
    tpu.vector_store %arg10[%c0_147, %c0_148], %114 {strides = array<i32>} : memref<216x384xf32, #tpu.memory_space<vmem>>, vector<24x384xf32>,
    %c0_149 = arith.constant 0 : index
    %c110_150 = arith.constant 110 : index
    %116 = vector.load %arg9[%c0_149, %c110_150] : memref<24x640xf32, #tpu.memory_space<vmem>>, vector<24x384xf32>
    %c24_151 = arith.constant 24 : index
    %c0_152 = arith.constant 0 : index
    %117 = vector.load %arg10[%c24_151, %c0_152] : memref<216x384xf32, #tpu.memory_space<vmem>>, vector<24x384xf32>
    tpu.vector_store %arg10[%c24_151, %c0_152], %116 {strides = array<i32>} : memref<216x384xf32, #tpu.memory_space<vmem>>, vector<24x384xf32>,
    %c0_153 = arith.constant 0 : index
    %c111_154 = arith.constant 111 : index
    %118 = vector.load %arg9[%c0_153, %c111_154] : memref<24x640xf32, #tpu.memory_space<vmem>>, vector<24x384xf32>
    %c48_155 = arith.constant 48 : index
    %c0_156 = arith.constant 0 : index
    %119 = vector.load %arg10[%c48_155, %c0_156] : memref<216x384xf32, #tpu.memory_space<vmem>>, vector<24x384xf32>
    tpu.vector_store %arg10[%c48_155, %c0_156], %118 {strides = array<i32>} : memref<216x384xf32, #tpu.memory_space<vmem>>, vector<24x384xf32>,
    %c0_157 = arith.constant 0 : index
    %c127_158 = arith.constant 127 : index
    %120 = vector.load %arg9[%c0_157, %c127_158] : memref<24x640xf32, #tpu.memory_space<vmem>>, vector<24x384xf32>
    %c72_159 = arith.constant 72 : index
    %c0_160 = arith.constant 0 : index
    %121 = vector.load %arg10[%c72_159, %c0_160] : memref<216x384xf32, #tpu.memory_space<vmem>>, vector<24x384xf32>
    tpu.vector_store %arg10[%c72_159, %c0_160], %120 {strides = array<i32>} : memref<216x384xf32, #tpu.memory_space<vmem>>, vector<24x384xf32>,
    %c0_161 = arith.constant 0 : index
    %c128_162 = arith.constant 128 : index
    %122 = vector.load %arg9[%c0_161, %c128_162] : memref<24x640xf32, #tpu.memory_space<vmem>>, vector<24x384xf32>
    %c96_163 = arith.constant 96 : index
    %c0_164 = arith.constant 0 : index
    %123 = vector.load %arg10[%c96_163, %c0_164] : memref<216x384xf32, #tpu.memory_space<vmem>>, vector<24x384xf32>
    tpu.vector_store %arg10[%c96_163, %c0_164], %122 {strides = array<i32>} : memref<216x384xf32, #tpu.memory_space<vmem>>, vector<24x384xf32>,
    %c0_165 = arith.constant 0 : index
    %c129_166 = arith.constant 129 : index
    %124 = vector.load %arg9[%c0_165, %c129_166] : memref<24x640xf32, #tpu.memory_space<vmem>>, vector<24x384xf32>
    %c120_167 = arith.constant 120 : index
    %c0_168 = arith.constant 0 : index
    %125 = vector.load %arg10[%c120_167, %c0_168] : memref<216x384xf32, #tpu.memory_space<vmem>>, vector<24x384xf32>
    tpu.vector_store %arg10[%c120_167, %c0_168], %124 {strides = array<i32>} : memref<216x384xf32, #tpu.memory_space<vmem>>, vector<24x384xf32>,
    %c0_169 = arith.constant 0 : index
    %c145_170 = arith.constant 145 : index
    %126 = vector.load %arg9[%c0_169, %c145_170] : memref<24x640xf32, #tpu.memory_space<vmem>>, vector<24x384xf32>
    %c144_171 = arith.constant 144 : index
    %c0_172 = arith.constant 0 : index
    %127 = vector.load %arg10[%c144_171, %c0_172] : memref<216x384xf32, #tpu.memory_space<vmem>>, vector<24x384xf32>
    tpu.vector_store %arg10[%c144_171, %c0_172], %126 {strides = array<i32>} : memref<216x384xf32, #tpu.memory_space<vmem>>, vector<24x384xf32>,
    %c0_173 = arith.constant 0 : index
    %c146_174 = arith.constant 146 : index
    %128 = vector.load %arg9[%c0_173, %c146_174] : memref<24x640xf32, #tpu.memory_space<vmem>>, vector<24x384xf32>
    %c168_175 = arith.constant 168 : index
    %c0_176 = arith.constant 0 : index
    %129 = vector.load %arg10[%c168_175, %c0_176] : memref<216x384xf32, #tpu.memory_space<vmem>>, vector<24x384xf32>
    tpu.vector_store %arg10[%c168_175, %c0_176], %128 {strides = array<i32>} : memref<216x384xf32, #tpu.memory_space<vmem>>, vector<24x384xf32>,
    %c0_177 = arith.constant 0 : index
    %c147_178 = arith.constant 147 : index
    %130 = vector.load %arg9[%c0_177, %c147_178] : memref<24x640xf32, #tpu.memory_space<vmem>>, vector<24x384xf32>
    %c192_179 = arith.constant 192 : index
    %c0_180 = arith.constant 0 : index
    %131 = vector.load %arg10[%c192_179, %c0_180] : memref<216x384xf32, #tpu.memory_space<vmem>>, vector<24x384xf32>
    tpu.vector_store %arg10[%c192_179, %c0_180], %130 {strides = array<i32>} : memref<216x384xf32, #tpu.memory_space<vmem>>, vector<24x384xf32>,
    %c1_181 = arith.constant 1 : index
    %c0_182 = arith.constant 0 : index
    %c0_183 = arith.constant 0 : index
    %132 = vector.load %arg6[%c1_181, %c0_182, %c0_183] : memref<3x8x216xf32, #tpu.memory_space<vmem>>, vector<1x8x216xf32>
    %133 = vector.shape_cast %132 : vector<1x8x216xf32> to vector<8x216xf32>
    %c0_184 = arith.constant 0 : index
    %c0_185 = arith.constant 0 : index
    %134 = vector.load %arg10[%c0_184, %c0_185] : memref<216x384xf32, #tpu.memory_space<vmem>>, vector<216x384xf32>
    %cst_186 = arith.constant dense<0.000000e+00> : vector<8x384xf32>
    %135 = tpu.matmul %133, %134, %cst_186 {dimension_numbers = #tpu.dot_dimension_numbers<[1], [0], [0], [1], [0, 0, 1, 1], [], []>} : vector<8x216xf32>, vector<216x384xf32>, vector<8x384xf32> -> vector<8x384xf32>
    %c16_187 = arith.constant 16 : index
    %c128_188 = arith.constant 128 : index
    %136 = vector.load %arg9[%c16_187, %c128_188] : memref<24x640xf32, #tpu.memory_space<vmem>>, vector<1x384xf32>
    %137 = vector.extract_strided_slice %135 {offsets = [0, 0], sizes = [1, 384], strides = [1, 1]} : vector<8x384xf32> to vector<1x384xf32>
    %c1_189 = arith.constant 1 : index
    %c0_190 = arith.constant 0 : index
    %c0_191 = arith.constant 0 : index
    %138 = vector.load %arg7[%c1_189, %c0_190, %c0_191] : memref<3x1x1xf32, #tpu.memory_space<vmem>>, vector<1x1x1xf32>
    %139 = vector.shape_cast %138 : vector<1x1x1xf32> to vector<1x1xf32>
    %140 = vector.broadcast %139 : vector<1x1xf32> to vector<1x384xf32>
    %141 = arith.addf %137, %140 : vector<1x384xf32>
    %142 = arith.mulf %141, %2 : vector<1x384xf32>
    %143 = arith.addf %136, %142 : vector<1x384xf32>
    %c16_192 = arith.constant 16 : index
    %c128_193 = arith.constant 128 : index
    %144 = vector.load %arg9[%c16_192, %c128_193] : memref<24x640xf32, #tpu.memory_space<vmem>>, vector<1x384xf32>
    tpu.vector_store %arg9[%c16_192, %c128_193], %143 {strides = array<i32>} : memref<24x640xf32, #tpu.memory_space<vmem>>, vector<1x384xf32>,
    %c0_194 = arith.constant 0 : index
    %c109_195 = arith.constant 109 : index
    %145 = vector.load %arg9[%c0_194, %c109_195] : memref<24x640xf32, #tpu.memory_space<vmem>>, vector<24x384xf32>
    %c0_196 = arith.constant 0 : index
    %c0_197 = arith.constant 0 : index
    %146 = vector.load %arg10[%c0_196, %c0_197] : memref<216x384xf32, #tpu.memory_space<vmem>>, vector<24x384xf32>
    tpu.vector_store %arg10[%c0_196, %c0_197], %145 {strides = array<i32>} : memref<216x384xf32, #tpu.memory_space<vmem>>, vector<24x384xf32>,
    %c0_198 = arith.constant 0 : index
    %c110_199 = arith.constant 110 : index
    %147 = vector.load %arg9[%c0_198, %c110_199] : memref<24x640xf32, #tpu.memory_space<vmem>>, vector<24x384xf32>
    %c24_200 = arith.constant 24 : index
    %c0_201 = arith.constant 0 : index
    %148 = vector.load %arg10[%c24_200, %c0_201] : memref<216x384xf32, #tpu.memory_space<vmem>>, vector<24x384xf32>
    tpu.vector_store %arg10[%c24_200, %c0_201], %147 {strides = array<i32>} : memref<216x384xf32, #tpu.memory_space<vmem>>, vector<24x384xf32>,
    %c0_202 = arith.constant 0 : index
    %c111_203 = arith.constant 111 : index
    %149 = vector.load %arg9[%c0_202, %c111_203] : memref<24x640xf32, #tpu.memory_space<vmem>>, vector<24x384xf32>
    %c48_204 = arith.constant 48 : index
    %c0_205 = arith.constant 0 : index
    %150 = vector.load %arg10[%c48_204, %c0_205] : memref<216x384xf32, #tpu.memory_space<vmem>>, vector<24x384xf32>
    tpu.vector_store %arg10[%c48_204, %c0_205], %149 {strides = array<i32>} : memref<216x384xf32, #tpu.memory_space<vmem>>, vector<24x384xf32>,
    %c0_206 = arith.constant 0 : index
    %c127_207 = arith.constant 127 : index
    %151 = vector.load %arg9[%c0_206, %c127_207] : memref<24x640xf32, #tpu.memory_space<vmem>>, vector<24x384xf32>
    %c72_208 = arith.constant 72 : index
    %c0_209 = arith.constant 0 : index
    %152 = vector.load %arg10[%c72_208, %c0_209] : memref<216x384xf32, #tpu.memory_space<vmem>>, vector<24x384xf32>
    tpu.vector_store %arg10[%c72_208, %c0_209], %151 {strides = array<i32>} : memref<216x384xf32, #tpu.memory_space<vmem>>, vector<24x384xf32>,
    %c0_210 = arith.constant 0 : index
    %c128_211 = arith.constant 128 : index
    %153 = vector.load %arg9[%c0_210, %c128_211] : memref<24x640xf32, #tpu.memory_space<vmem>>, vector<24x384xf32>
    %c96_212 = arith.constant 96 : index
    %c0_213 = arith.constant 0 : index
    %154 = vector.load %arg10[%c96_212, %c0_213] : memref<216x384xf32, #tpu.memory_space<vmem>>, vector<24x384xf32>
    tpu.vector_store %arg10[%c96_212, %c0_213], %153 {strides = array<i32>} : memref<216x384xf32, #tpu.memory_space<vmem>>, vector<24x384xf32>,
    %c0_214 = arith.constant 0 : index
    %c129_215 = arith.constant 129 : index
    %155 = vector.load %arg9[%c0_214, %c129_215] : memref<24x640xf32, #tpu.memory_space<vmem>>, vector<24x384xf32>
    %c120_216 = arith.constant 120 : index
    %c0_217 = arith.constant 0 : index
    %156 = vector.load %arg10[%c120_216, %c0_217] : memref<216x384xf32, #tpu.memory_space<vmem>>, vector<24x384xf32>
    tpu.vector_store %arg10[%c120_216, %c0_217], %155 {strides = array<i32>} : memref<216x384xf32, #tpu.memory_space<vmem>>, vector<24x384xf32>,
    %c0_218 = arith.constant 0 : index
    %c145_219 = arith.constant 145 : index
    %157 = vector.load %arg9[%c0_218, %c145_219] : memref<24x640xf32, #tpu.memory_space<vmem>>, vector<24x384xf32>
    %c144_220 = arith.constant 144 : index
    %c0_221 = arith.constant 0 : index
    %158 = vector.load %arg10[%c144_220, %c0_221] : memref<216x384xf32, #tpu.memory_space<vmem>>, vector<24x384xf32>
    tpu.vector_store %arg10[%c144_220, %c0_221], %157 {strides = array<i32>} : memref<216x384xf32, #tpu.memory_space<vmem>>, vector<24x384xf32>,
    %c0_222 = arith.constant 0 : index
    %c146_223 = arith.constant 146 : index
    %159 = vector.load %arg9[%c0_222, %c146_223] : memref<24x640xf32, #tpu.memory_space<vmem>>, vector<24x384xf32>
    %c168_224 = arith.constant 168 : index
    %c0_225 = arith.constant 0 : index
    %160 = vector.load %arg10[%c168_224, %c0_225] : memref<216x384xf32, #tpu.memory_space<vmem>>, vector<24x384xf32>
    tpu.vector_store %arg10[%c168_224, %c0_225], %159 {strides = array<i32>} : memref<216x384xf32, #tpu.memory_space<vmem>>, vector<24x384xf32>,
    %c0_226 = arith.constant 0 : index
    %c147_227 = arith.constant 147 : index
    %161 = vector.load %arg9[%c0_226, %c147_227] : memref<24x640xf32, #tpu.memory_space<vmem>>, vector<24x384xf32>
    %c192_228 = arith.constant 192 : index
    %c0_229 = arith.constant 0 : index
    %162 = vector.load %arg10[%c192_228, %c0_229] : memref<216x384xf32, #tpu.memory_space<vmem>>, vector<24x384xf32>
    tpu.vector_store %arg10[%c192_228, %c0_229], %161 {strides = array<i32>} : memref<216x384xf32, #tpu.memory_space<vmem>>, vector<24x384xf32>,
    %c2 = arith.constant 2 : index
    %c0_230 = arith.constant 0 : index
    %c0_231 = arith.constant 0 : index
    %163 = vector.load %arg4[%c2, %c0_230, %c0_231] : memref<3x16x216xf32, #tpu.memory_space<vmem>>, vector<1x16x216xf32>
    %164 = vector.shape_cast %163 : vector<1x16x216xf32> to vector<16x216xf32>
    %c0_232 = arith.constant 0 : index
    %c0_233 = arith.constant 0 : index
    %165 = vector.load %arg10[%c0_232, %c0_233] : memref<216x384xf32, #tpu.memory_space<vmem>>, vector<216x384xf32>
    %cst_234 = arith.constant dense<0.000000e+00> : vector<16x384xf32>
    %166 = tpu.matmul %164, %165, %cst_234 {dimension_numbers = #tpu.dot_dimension_numbers<[1], [0], [0], [1], [0, 0, 1, 1], [], []>} : vector<16x216xf32>, vector<216x384xf32>, vector<16x384xf32> -> vector<16x384xf32>
    %c0_235 = arith.constant 0 : index
    %c128_236 = arith.constant 128 : index
    %167 = vector.load %arg9[%c0_235, %c128_236] : memref<24x640xf32, #tpu.memory_space<vmem>>, vector<16x384xf32>
    %c2_237 = arith.constant 2 : index
    %c0_238 = arith.constant 0 : index
    %c0_239 = arith.constant 0 : index
    %168 = vector.load %arg5[%c2_237, %c0_238, %c0_239] : memref<3x16x1xf32, #tpu.memory_space<vmem>>, vector<1x16x1xf32>
    %169 = vector.shape_cast %168 : vector<1x16x1xf32> to vector<16x1xf32>
    %170 = vector.broadcast %169 : vector<16x1xf32> to vector<16x384xf32>
    %171 = arith.addf %166, %170 : vector<16x384xf32>
    %cst_240 = arith.constant 0.000000e+00 : f32
    %172 = vector.broadcast %cst_240 : f32 to vector<16x384xf32>
    %173 = arith.maximumf %171, %172 : vector<16x384xf32>
    %174 = arith.mulf %173, %4 : vector<16x384xf32>
    %175 = arith.addf %167, %174 : vector<16x384xf32>
    %c0_241 = arith.constant 0 : index
    %c128_242 = arith.constant 128 : index
    %176 = vector.load %arg9[%c0_241, %c128_242] : memref<24x640xf32, #tpu.memory_space<vmem>>, vector<16x384xf32>
    tpu.vector_store %arg9[%c0_241, %c128_242], %175 {strides = array<i32>} : memref<24x640xf32, #tpu.memory_space<vmem>>, vector<16x384xf32>,
    %c0_243 = arith.constant 0 : index
    %c109_244 = arith.constant 109 : index
    %177 = vector.load %arg9[%c0_243, %c109_244] : memref<24x640xf32, #tpu.memory_space<vmem>>, vector<24x384xf32>
    %c0_245 = arith.constant 0 : index
    %c0_246 = arith.constant 0 : index
    %178 = vector.load %arg10[%c0_245, %c0_246] : memref<216x384xf32, #tpu.memory_space<vmem>>, vector<24x384xf32>
    tpu.vector_store %arg10[%c0_245, %c0_246], %177 {strides = array<i32>} : memref<216x384xf32, #tpu.memory_space<vmem>>, vector<24x384xf32>,
    %c0_247 = arith.constant 0 : index
    %c110_248 = arith.constant 110 : index
    %179 = vector.load %arg9[%c0_247, %c110_248] : memref<24x640xf32, #tpu.memory_space<vmem>>, vector<24x384xf32>
    %c24_249 = arith.constant 24 : index
    %c0_250 = arith.constant 0 : index
    %180 = vector.load %arg10[%c24_249, %c0_250] : memref<216x384xf32, #tpu.memory_space<vmem>>, vector<24x384xf32>
    tpu.vector_store %arg10[%c24_249, %c0_250], %179 {strides = array<i32>} : memref<216x384xf32, #tpu.memory_space<vmem>>, vector<24x384xf32>,
    %c0_251 = arith.constant 0 : index
    %c111_252 = arith.constant 111 : index
    %181 = vector.load %arg9[%c0_251, %c111_252] : memref<24x640xf32, #tpu.memory_space<vmem>>, vector<24x384xf32>
    %c48_253 = arith.constant 48 : index
    %c0_254 = arith.constant 0 : index
    %182 = vector.load %arg10[%c48_253, %c0_254] : memref<216x384xf32, #tpu.memory_space<vmem>>, vector<24x384xf32>
    tpu.vector_store %arg10[%c48_253, %c0_254], %181 {strides = array<i32>} : memref<216x384xf32, #tpu.memory_space<vmem>>, vector<24x384xf32>,
    %c0_255 = arith.constant 0 : index
    %c127_256 = arith.constant 127 : index
    %183 = vector.load %arg9[%c0_255, %c127_256] : memref<24x640xf32, #tpu.memory_space<vmem>>, vector<24x384xf32>
    %c72_257 = arith.constant 72 : index
    %c0_258 = arith.constant 0 : index
    %184 = vector.load %arg10[%c72_257, %c0_258] : memref<216x384xf32, #tpu.memory_space<vmem>>, vector<24x384xf32>
    tpu.vector_store %arg10[%c72_257, %c0_258], %183 {strides = array<i32>} : memref<216x384xf32, #tpu.memory_space<vmem>>, vector<24x384xf32>,
    %c0_259 = arith.constant 0 : index
    %c128_260 = arith.constant 128 : index
    %185 = vector.load %arg9[%c0_259, %c128_260] : memref<24x640xf32, #tpu.memory_space<vmem>>, vector<24x384xf32>
    %c96_261 = arith.constant 96 : index
    %c0_262 = arith.constant 0 : index
    %186 = vector.load %arg10[%c96_261, %c0_262] : memref<216x384xf32, #tpu.memory_space<vmem>>, vector<24x384xf32>
    tpu.vector_store %arg10[%c96_261, %c0_262], %185 {strides = array<i32>} : memref<216x384xf32, #tpu.memory_space<vmem>>, vector<24x384xf32>,
    %c0_263 = arith.constant 0 : index
    %c129_264 = arith.constant 129 : index
    %187 = vector.load %arg9[%c0_263, %c129_264] : memref<24x640xf32, #tpu.memory_space<vmem>>, vector<24x384xf32>
    %c120_265 = arith.constant 120 : index
    %c0_266 = arith.constant 0 : index
    %188 = vector.load %arg10[%c120_265, %c0_266] : memref<216x384xf32, #tpu.memory_space<vmem>>, vector<24x384xf32>
    tpu.vector_store %arg10[%c120_265, %c0_266], %187 {strides = array<i32>} : memref<216x384xf32, #tpu.memory_space<vmem>>, vector<24x384xf32>,
    %c0_267 = arith.constant 0 : index
    %c145_268 = arith.constant 145 : index
    %189 = vector.load %arg9[%c0_267, %c145_268] : memref<24x640xf32, #tpu.memory_space<vmem>>, vector<24x384xf32>
    %c144_269 = arith.constant 144 : index
    %c0_270 = arith.constant 0 : index
    %190 = vector.load %arg10[%c144_269, %c0_270] : memref<216x384xf32, #tpu.memory_space<vmem>>, vector<24x384xf32>
    tpu.vector_store %arg10[%c144_269, %c0_270], %189 {strides = array<i32>} : memref<216x384xf32, #tpu.memory_space<vmem>>, vector<24x384xf32>,
    %c0_271 = arith.constant 0 : index
    %c146_272 = arith.constant 146 : index
    %191 = vector.load %arg9[%c0_271, %c146_272] : memref<24x640xf32, #tpu.memory_space<vmem>>, vector<24x384xf32>
    %c168_273 = arith.constant 168 : index
    %c0_274 = arith.constant 0 : index
    %192 = vector.load %arg10[%c168_273, %c0_274] : memref<216x384xf32, #tpu.memory_space<vmem>>, vector<24x384xf32>
    tpu.vector_store %arg10[%c168_273, %c0_274], %191 {strides = array<i32>} : memref<216x384xf32, #tpu.memory_space<vmem>>, vector<24x384xf32>,
    %c0_275 = arith.constant 0 : index
    %c147_276 = arith.constant 147 : index
    %193 = vector.load %arg9[%c0_275, %c147_276] : memref<24x640xf32, #tpu.memory_space<vmem>>, vector<24x384xf32>
    %c192_277 = arith.constant 192 : index
    %c0_278 = arith.constant 0 : index
    %194 = vector.load %arg10[%c192_277, %c0_278] : memref<216x384xf32, #tpu.memory_space<vmem>>, vector<24x384xf32>
    tpu.vector_store %arg10[%c192_277, %c0_278], %193 {strides = array<i32>} : memref<216x384xf32, #tpu.memory_space<vmem>>, vector<24x384xf32>,
    %c2_279 = arith.constant 2 : index
    %c0_280 = arith.constant 0 : index
    %c0_281 = arith.constant 0 : index
    %195 = vector.load %arg6[%c2_279, %c0_280, %c0_281] : memref<3x8x216xf32, #tpu.memory_space<vmem>>, vector<1x8x216xf32>
    %196 = vector.shape_cast %195 : vector<1x8x216xf32> to vector<8x216xf32>
    %c0_282 = arith.constant 0 : index
    %c0_283 = arith.constant 0 : index
    %197 = vector.load %arg10[%c0_282, %c0_283] : memref<216x384xf32, #tpu.memory_space<vmem>>, vector<216x384xf32>
    %cst_284 = arith.constant dense<0.000000e+00> : vector<8x384xf32>
    %198 = tpu.matmul %196, %197, %cst_284 {dimension_numbers = #tpu.dot_dimension_numbers<[1], [0], [0], [1], [0, 0, 1, 1], [], []>} : vector<8x216xf32>, vector<216x384xf32>, vector<8x384xf32> -> vector<8x384xf32>
    %c16_285 = arith.constant 16 : index
    %c128_286 = arith.constant 128 : index
    %199 = vector.load %arg9[%c16_285, %c128_286] : memref<24x640xf32, #tpu.memory_space<vmem>>, vector<1x384xf32>
    %200 = vector.extract_strided_slice %198 {offsets = [0, 0], sizes = [1, 384], strides = [1, 1]} : vector<8x384xf32> to vector<1x384xf32>
    %c2_287 = arith.constant 2 : index
    %c0_288 = arith.constant 0 : index
    %c0_289 = arith.constant 0 : index
    %201 = vector.load %arg7[%c2_287, %c0_288, %c0_289] : memref<3x1x1xf32, #tpu.memory_space<vmem>>, vector<1x1x1xf32>
    %202 = vector.shape_cast %201 : vector<1x1x1xf32> to vector<1x1xf32>
    %203 = vector.broadcast %202 : vector<1x1xf32> to vector<1x384xf32>
    %204 = arith.addf %200, %203 : vector<1x384xf32>
    %205 = arith.mulf %204, %2 : vector<1x384xf32>
    %206 = arith.addf %199, %205 : vector<1x384xf32>
    %c16_290 = arith.constant 16 : index
    %c128_291 = arith.constant 128 : index
    %207 = vector.load %arg9[%c16_290, %c128_291] : memref<24x640xf32, #tpu.memory_space<vmem>>, vector<1x384xf32>
    tpu.vector_store %arg9[%c16_290, %c128_291], %206 {strides = array<i32>} : memref<24x640xf32, #tpu.memory_space<vmem>>, vector<1x384xf32>,
    %c16_292 = arith.constant 16 : index
    %c128_293 = arith.constant 128 : index
    %208 = vector.load %arg9[%c16_292, %c128_293] : memref<24x640xf32, #tpu.memory_space<vmem>>, vector<1x384xf32>
    %c0_294 = arith.constant 0 : index
    %c0_295 = arith.constant 0 : index
    %c0_296 = arith.constant 0 : index
    %209 = vector.load %arg8[%c0_294, %c0_295, %c0_296] : memref<1x1x384xf32, #tpu.memory_space<vmem>>, vector<1x1x384xf32>
    %210 = vector.shape_cast %209 : vector<1x1x384xf32> to vector<1x384xf32>
    %211 = vector.shape_cast %208 : vector<1x384xf32> to vector<1x1x384xf32>
    tpu.vector_store %arg8[%c0_294, %c0_295, %c0_296], %211 {strides = array<i32>} : memref<1x1x384xf32, #tpu.memory_space<vmem>>, vector<1x1x384xf32>,
    return
  }
  func.func @transform_0(%arg0: i32) -> (i32, i32, i32) {
    %c0_i32 = arith.constant 0 : i32
    %c0_i32_0 = arith.constant 0 : i32
    %c0_i32_1 = arith.constant 0 : i32
    return %arg0, %c0_i32, %c0_i32_0 : i32, i32, i32
  }
  func.func @transform_1(%arg0: i32) -> (i32, i32, i32) {
    %c0_i32 = arith.constant 0 : i32
    %c0_i32_0 = arith.constant 0 : i32
    %c0_i32_1 = arith.constant 0 : i32
    return %arg0, %c0_i32, %c0_i32_0 : i32, i32, i32
  }
  func.func @transform_2(%arg0: i32) -> (i32, i32) {
    %c0_i32 = arith.constant 0 : i32
    %c0_i32_0 = arith.constant 0 : i32
    %c0_i32_1 = arith.constant 0 : i32
    return %c0_i32, %c0_i32_0 : i32, i32
  }
  func.func @transform_3(%arg0: i32) -> (i32, i32, i32) {
    %c0_i32 = arith.constant 0 : i32
    %c0_i32_0 = arith.constant 0 : i32
    %c0_i32_1 = arith.constant 0 : i32
    %c0_i32_2 = arith.constant 0 : i32
    return %c0_i32, %c0_i32_0, %c0_i32_1 : i32, i32, i32
  }
  func.func @transform_4(%arg0: i32) -> (i32, i32, i32) {
    %c0_i32 = arith.constant 0 : i32
    %c0_i32_0 = arith.constant 0 : i32
    %c0_i32_1 = arith.constant 0 : i32
    %c0_i32_2 = arith.constant 0 : i32
    return %c0_i32, %c0_i32_0, %c0_i32_1 : i32, i32, i32
  }
  func.func @transform_5(%arg0: i32) -> (i32, i32, i32) {
    %c0_i32 = arith.constant 0 : i32
    %c0_i32_0 = arith.constant 0 : i32
    %c0_i32_1 = arith.constant 0 : i32
    %c0_i32_2 = arith.constant 0 : i32
    return %c0_i32, %c0_i32_0, %c0_i32_1 : i32, i32, i32
  }
  func.func @transform_6(%arg0: i32) -> (i32, i32, i32) {
    %c0_i32 = arith.constant 0 : i32
    %c0_i32_0 = arith.constant 0 : i32
    %c0_i32_1 = arith.constant 0 : i32
    %c0_i32_2 = arith.constant 0 : i32
    return %c0_i32, %c0_i32_0, %c0_i32_1 : i32, i32, i32
  }
  func.func @transform_7(%arg0: i32) -> (i32, i32, i32) {
    %c0_i32 = arith.constant 0 : i32
    %c0_i32_0 = arith.constant 0 : i32
    %c0_i32_1 = arith.constant 0 : i32
    return %arg0, %c0_i32, %c0_i32_0 : i32, i32, i32
  }
}

</mosaic_0001>

<llo_original>
// kernel: _reverse_stage_impl.1
$region0: #{_reverse_stage_impl.1}
  #allocation0 [shape = 'u32[]', space=smem, size = 0x4, offset = 0x4, fixed_abs, tag = 'smem constant byte address 0x4 - core index']
  #allocation1 [shape = 'u32[144,128]{1,0:T(1,128)}', space=vmem, size = 0x12000, scoped, tag = 'internal scratch']
  #allocation2 [shape = 'f32[24,640]{1,0:T(8,128)}', space=vmem, size = 0xf000, scoped, tag = 'scratch operand']
  #allocation3 [shape = 'f32[216,384]{1,0:T(8,128)}', space=vmem, size = 0x51000, scoped, tag = 'scratch operand']
  %s0 = inlined_call_operand.vmem [shape: f32[2,16,384], index: 0, kind: input, shape index: {}]
  %s1 = inlined_call_operand.vmem [shape: f32[2,1,384], index: 1, kind: input, shape index: {}]
  %s2 = inlined_call_operand.vmem [shape: f32[1,384], index: 2, kind: input, shape index: {}]
  %s3 = inlined_call_operand.vmem [shape: f32[3,16,216], index: 3, kind: input, shape index: {}]
  %s4 = inlined_call_operand.vmem [shape: f32[3,16,1], index: 4, kind: input, shape index: {}]
  %s5 = inlined_call_operand.vmem [shape: f32[3,8,216], index: 5, kind: input, shape index: {}]
  %s6 = inlined_call_operand.vmem [shape: f32[3,1,1], index: 6, kind: input, shape index: {}]
  %s7 = inlined_call_operand.vmem [shape: f32[2,1,384], index: 7, kind: output, shape index: {}]
  %s8 = sld [smem:[#allocation0]]
  $region61: #{_reverse_stage_impl.1} parent=0
    _
  %s10 = ssub.s32 1, %s8
  %s11 = scalar_select 0, %s10, %s8
  loop: start=0, step=1, limit=4
  $region2: #{_reverse_stage_impl.1} parent=0 // loop_pre_header
    _
  $region3: #{_reverse_stage_impl.1} parent=0 // loop_header
    %s13 = sphi 0, %s17
    %p14 = scmp.ge.s32.totalorder %s13, 4
    %s23 = sphi 0, %s25
    %s26 = sphi 0, %s23
    %s27 = sphi 0, %s26
    %s43 = sphi 0, %s27
    %s49 = sphi 0, %s51
    %s52 = sphi 0, %s49
    %s53 = sphi 0, %s52
    %s69 = sphi 0, %s53
    %s73 = sphi 0, %s73
    %s75 = sphi 0, %s73
    %s76 = sphi 0, %s75
    %s90 = sphi 0, %s76
    %s94 = sphi 0, %s94
    %s96 = sphi 0, %s94
    %s97 = sphi 0, %s96
    %s111 = sphi 0, %s97
    %s115 = sphi 0, %s115
    %s117 = sphi 0, %s115
    %s118 = sphi 0, %s117
    %s132 = sphi 0, %s118
    %s136 = sphi 0, %s136
    %s138 = sphi 0, %s136
    %s139 = sphi 0, %s138
    %s153 = sphi 0, %s139
    %s157 = sphi 0, %s157
    %s159 = sphi 0, %s157
    %s160 = sphi 0, %s159
    %s174 = sphi 0, %s160
    %s180 = sphi 0, %s182
    %s183 = sphi 0, %s180
    %s184 = sphi 0, %s183
    %s200 = sphi 0, %s184
  $region4: #{_reverse_stage_impl.1} parent=0 // loop_header_branch
    %16 = sbr.rel (%p14) target = $region8
  $region5: #{_reverse_stage_impl.1} parent=0 // loop_body
    %s18 = ssub.s32 %s13, 1
    %s19 = ssub.s32 %s13, 2
    %s20 = sadd.s32 %s13, 1
    %s21 = ssub.s32 %s13, %s20
    %p22 = scmp.eq.s32.totalorder %s21, 0
    %s24 = sadd.s32 %s23, 1
    %s25 = scalar_select %p22, %s23, %s24
    %p28 = pneg %p22
    %p29 = scmp.eq.s32.totalorder %s13, 1
    %p30 = por %p28, %p29
    %p31 = scmp.ne.s32.totalorder %s23, %s26
    %p32 = scmp.eq.s32.totalorder %s13, 0
    %p33 = por %p31, %p32
    %p34 = scmp.ne.s32.totalorder %s23, %s26
    %p35 = scmp.eq.s32.totalorder %s18, 1
    %p36 = por %p34, %p35
    %p37 = scmp.ne.s32.totalorder %s26, %s27
    %p38 = scmp.eq.s32.totalorder %s18, 0
    %p39 = por %p37, %p38
    %p40 = scmp.ne.s32.totalorder %s26, %s27
    %p41 = scmp.eq.s32.totalorder %s19, 1
    %p42 = por %p40, %p41
    %p44 = scmp.ne.s32.totalorder %s27, %s43
    %p45 = scmp.eq.s32.totalorder %s19, 0
    %p46 = por %p44, %p45
    %s47 = ssub.s32 %s13, %s20
    %p48 = scmp.eq.s32.totalorder %s47, 0
    %s50 = sadd.s32 %s49, 1
    %s51 = scalar_select %p48, %s49, %s50
    %p54 = pneg %p48
    %p55 = scmp.eq.s32.totalorder %s13, 1
    %p56 = por %p54, %p55
    %p57 = scmp.ne.s32.totalorder %s49, %s52
    %p58 = scmp.eq.s32.totalorder %s13, 0
    %p59 = por %p57, %p58
    %p60 = scmp.ne.s32.totalorder %s49, %s52
    %p61 = scmp.eq.s32.totalorder %s18, 1
    %p62 = por %p60, %p61
    %p63 = scmp.ne.s32.totalorder %s52, %s53
    %p64 = scmp.eq.s32.totalorder %s18, 0
    %p65 = por %p63, %p64
    %p66 = scmp.ne.s32.totalorder %s52, %s53
    %p67 = scmp.eq.s32.totalorder %s19, 1
    %p68 = por %p66, %p67
    %p70 = scmp.ne.s32.totalorder %s53, %s69
    %p71 = scmp.eq.s32.totalorder %s19, 0
    %p72 = por %p70, %p71
    %s74 = sadd.s32 %s73, 1
    %p77 = scmp.eq.s32.totalorder %s13, 1
    %p78 = scmp.ne.s32.totalorder %s73, %s75
    %p79 = scmp.eq.s32.totalorder %s13, 0
    %p80 = por %p78, %p79
    %p81 = scmp.ne.s32.totalorder %s73, %s75
    %p82 = scmp.eq.s32.totalorder %s18, 1
    %p83 = por %p81, %p82
    %p84 = scmp.ne.s32.totalorder %s75, %s76
    %p85 = scmp.eq.s32.totalorder %s18, 0
    %p86 = por %p84, %p85
    %p87 = scmp.ne.s32.totalorder %s75, %s76
    %p88 = scmp.eq.s32.totalorder %s19, 1
    %p89 = por %p87, %p88
    %p91 = scmp.ne.s32.totalorder %s76, %s90
    %p92 = scmp.eq.s32.totalorder %s19, 0
    %p93 = por %p91, %p92
    %s95 = sadd.s32 %s94, 1
    %p98 = scmp.eq.s32.totalorder %s13, 1
    %p99 = scmp.ne.s32.totalorder %s94, %s96
    %p100 = scmp.eq.s32.totalorder %s13, 0
    %p101 = por %p99, %p100
    %p102 = scmp.ne.s32.totalorder %s94, %s96
    %p103 = scmp.eq.s32.totalorder %s18, 1
    %p104 = por %p102, %p103
    %p105 = scmp.ne.s32.totalorder %s96, %s97
    %p106 = scmp.eq.s32.totalorder %s18, 0
    %p107 = por %p105, %p106
    %p108 = scmp.ne.s32.totalorder %s96, %s97
    %p109 = scmp.eq.s32.totalorder %s19, 1
    %p110 = por %p108, %p109
    %p112 = scmp.ne.s32.totalorder %s97, %s111
    %p113 = scmp.eq.s32.totalorder %s19, 0
    %p114 = por %p112, %p113
    %s116 = sadd.s32 %s115, 1
    %p119 = scmp.eq.s32.totalorder %s13, 1
    %p120 = scmp.ne.s32.totalorder %s115, %s117
    %p121 = scmp.eq.s32.totalorder %s13, 0
    %p122 = por %p120, %p121
    %p123 = scmp.ne.s32.totalorder %s115, %s117
    %p124 = scmp.eq.s32.totalorder %s18, 1
    %p125 = por %p123, %p124
    %p126 = scmp.ne.s32.totalorder %s117, %s118
    %p127 = scmp.eq.s32.totalorder %s18, 0
    %p128 = por %p126, %p127
    %p129 = scmp.ne.s32.totalorder %s117, %s118
    %p130 = scmp.eq.s32.totalorder %s19, 1
    %p131 = por %p129, %p130
    %p133 = scmp.ne.s32.totalorder %s118, %s132
    %p134 = scmp.eq.s32.totalorder %s19, 0
    %p135 = por %p133, %p134
    %s137 = sadd.s32 %s136, 1
    %p140 = scmp.eq.s32.totalorder %s13, 1
    %p141 = scmp.ne.s32.totalorder %s136, %s138
    %p142 = scmp.eq.s32.totalorder %s13, 0
    %p143 = por %p141, %p142
    %p144 = scmp.ne.s32.totalorder %s136, %s138
    %p145 = scmp.eq.s32.totalorder %s18, 1
    %p146 = por %p144, %p145
    %p147 = scmp.ne.s32.totalorder %s138, %s139
    %p148 = scmp.eq.s32.totalorder %s18, 0
    %p149 = por %p147, %p148
    %p150 = scmp.ne.s32.totalorder %s138, %s139
    %p151 = scmp.eq.s32.totalorder %s19, 1
    %p152 = por %p150, %p151
    %p154 = scmp.ne.s32.totalorder %s139, %s153
    %p155 = scmp.eq.s32.totalorder %s19, 0
    %p156 = por %p154, %p155
    %s158 = sadd.s32 %s157, 1
    %p161 = scmp.eq.s32.totalorder %s13, 1
    %p162 = scmp.ne.s32.totalorder %s157, %s159
    %p163 = scmp.eq.s32.totalorder %s13, 0
    %p164 = por %p162, %p163
    %p165 = scmp.ne.s32.totalorder %s157, %s159
    %p166 = scmp.eq.s32.totalorder %s18, 1
    %p167 = por %p165, %p166
    %p168 = scmp.ne.s32.totalorder %s159, %s160
    %p169 = scmp.eq.s32.totalorder %s18, 0
    %p170 = por %p168, %p169
    %p171 = scmp.ne.s32.totalorder %s159, %s160
    %p172 = scmp.eq.s32.totalorder %s19, 1
    %p173 = por %p171, %p172
    %p175 = scmp.ne.s32.totalorder %s160, %s174
    %p176 = scmp.eq.s32.totalorder %s19, 0
    %p177 = por %p175, %p176
    %s178 = ssub.s32 %s13, %s20
    %p179 = scmp.eq.s32.totalorder %s178, 0
    %s181 = sadd.s32 %s180, 1
    %s182 = scalar_select %p179, %s180, %s181
    %p185 = pneg %p179
    %p186 = scmp.eq.s32.totalorder %s13, 1
    %p187 = por %p185, %p186
    %p188 = scmp.ne.s32.totalorder %s180, %s183
    %p189 = scmp.eq.s32.totalorder %s13, 0
    %p190 = por %p188, %p189
    %p191 = scmp.ne.s32.totalorder %s180, %s183
    %p192 = scmp.eq.s32.totalorder %s18, 1
    %p193 = por %p191, %p192
    %p194 = scmp.ne.s32.totalorder %s183, %s184
    %p195 = scmp.eq.s32.totalorder %s18, 0
    %p196 = por %p194, %p195
    %p197 = scmp.ne.s32.totalorder %s183, %s184
    %p198 = scmp.eq.s32.totalorder %s19, 1
    %p199 = por %p197, %p198
    %p201 = scmp.ne.s32.totalorder %s184, %s200
    %p202 = scmp.eq.s32.totalorder %s19, 0
    %p203 = por %p201, %p202
    %p204 = scmp.le.s32.totalorder 1, %s13
    %p205 = scmp.lt.s32.totalorder %s13, 3
    %p206 = pnand %p204, %p205
    %p207 = pneg %p206
    // Predicated region
    $region9: #{_reverse_stage_impl.1} parent=5 // pred_check
      _
    $region10: #{_reverse_stage_impl.1} parent=5 // pred_check_branch
      %209 = sbr.rel (%p206) target = $region12
    $region11: #{_reverse_stage_impl.1} parent=5 // pred_region
      %s210 = ssub.s32 %s13, 1
      // Predicated region
      $region13: #{_reverse_stage_impl.1} parent=11 // pred_check
        %p211 = pneg %p86
      $region14: #{_reverse_stage_impl.1} parent=11 // pred_check_branch
        %213 = sbr.rel (%p211) target = $region16
      $region15: #{_reverse_stage_impl.1} parent=11 // pred_region
        _
      $region16: #{_reverse_stage_impl.1} parent=11 // pred_fallthru
        _
      // Predicated region
      $region17: #{_reverse_stage_impl.1} parent=11 // pred_check
        %p214 = pneg %p107
      $region18: #{_reverse_stage_impl.1} parent=11 // pred_check_branch
        %216 = sbr.rel (%p214) target = $region20
      $region19: #{_reverse_stage_impl.1} parent=11 // pred_region
        _
      $region20: #{_reverse_stage_impl.1} parent=11 // pred_fallthru
        _
      // Predicated region
      $region21: #{_reverse_stage_impl.1} parent=11 // pred_check
        %p217 = pneg %p128
      $region22: #{_reverse_stage_impl.1} parent=11 // pred_check_branch
        %219 = sbr.rel (%p217) target = $region24
      $region23: #{_reverse_stage_impl.1} parent=11 // pred_region
        _
      $region24: #{_reverse_stage_impl.1} parent=11 // pred_fallthru
        _
      // Predicated region
      $region25: #{_reverse_stage_impl.1} parent=11 // pred_check
        %p220 = pneg %p149
      $region26: #{_reverse_stage_impl.1} parent=11 // pred_check_branch
        %222 = sbr.rel (%p220) target = $region28
      $region27: #{_reverse_stage_impl.1} parent=11 // pred_region
        _
      $region28: #{_reverse_stage_impl.1} parent=11 // pred_fallthru
        _
      // Predicated region
      $region29: #{_reverse_stage_impl.1} parent=11 // pred_check
        %p223 = pneg %p170
      $region30: #{_reverse_stage_impl.1} parent=11 // pred_check_branch
        %225 = sbr.rel (%p223) target = $region32
      $region31: #{_reverse_stage_impl.1} parent=11 // pred_region
        _
      $region32: #{_reverse_stage_impl.1} parent=11 // pred_fallthru
        _
    $region12: #{_reverse_stage_impl.1} parent=5 // pred_fallthru
      _
    %p226 = scmp.lt.s32.totalorder %s13, 2
    // Predicated region
    $region33: #{_reverse_stage_impl.1} parent=5 // pred_check
      %p227 = pneg %p226
    $region34: #{_reverse_stage_impl.1} parent=5 // pred_check_branch
      %229 = sbr.rel (%p227) target = $region36
    $region35: #{_reverse_stage_impl.1} parent=5 // pred_region
      // Predicated region
      $region37: #{_reverse_stage_impl.1} parent=35 // pred_check
        %p230 = pneg %p33
      $region38: #{_reverse_stage_impl.1} parent=35 // pred_check_branch
        %232 = sbr.rel (%p230) target = $region40
      $region39: #{_reverse_stage_impl.1} parent=35 // pred_region
        %p233 = scmp.lt.s32.totalorder %s13, 1
        %s234 = scalar_select %p233, %s13, 1
        %s235 = smul.addr %s234, 6
        %s236 = smul.addr %s235, 8
        %s237 = scalar_lea.vmem %s0, %s236
      $region40: #{_reverse_stage_impl.1} parent=35 // pred_fallthru
        _
      // Predicated region
      $region41: #{_reverse_stage_impl.1} parent=35 // pred_check
        %p238 = pneg %p59
      $region42: #{_reverse_stage_impl.1} parent=35 // pred_check_branch
        %240 = sbr.rel (%p238) target = $region44
      $region43: #{_reverse_stage_impl.1} parent=35 // pred_region
        %p241 = scmp.lt.s32.totalorder %s13, 1
        %s242 = scalar_select %p241, %s13, 1
        %s243 = smul.addr %s242, 3
        %s244 = scalar_lea.vmem %s1, %s243
      $region44: #{_reverse_stage_impl.1} parent=35 // pred_fallthru
        _
    $region36: #{_reverse_stage_impl.1} parent=5 // pred_fallthru
      _
    %p245 = scmp.le.s32.totalorder 1, %s13
    %p246 = scmp.lt.s32.totalorder %s13, 3
    %p247 = pnand %p245, %p246
    %p248 = pneg %p247
    // Predicated region
    $region45: #{_reverse_stage_impl.1} parent=5 // pred_check
      _
    $region46: #{_reverse_stage_impl.1} parent=5 // pred_check_branch
      %250 = sbr.rel (%p247) target = $region48
    $region47: #{_reverse_stage_impl.1} parent=5 // pred_region
      %s251 = ssub.s32 %s13, 1
      %p252 = scmp.lt.s32.totalorder %s18, 1
      %s253 = scalar_select %p252, %s18, 1
      %s254 = smul.addr %s253, 6
      %s255 = smul.addr %s254, 8
      %s256 = scalar_lea.vmem %s0, %s255
      %p257 = pneg %p39
      %p258 = pneg %p36
      %p259 = scmp.lt.s32.totalorder %s18, 1
      %s260 = scalar_select %p259, %s18, 1
      %s261 = smul.addr %s260, 3
      %s262 = scalar_lea.vmem %s1, %s261
      %p263 = pneg %p65
      %p264 = pneg %p62
      %p265 = pneg %p86
      %p266 = pneg %p83
      %p267 = pneg %p107
      %p268 = pneg %p104
      %p269 = pneg %p128
      %p270 = pneg %p125
      %p271 = pneg %p149
      %p272 = pneg %p146
      %p273 = pneg %p170
      %p274 = pneg %p167
      %p275 = pneg %p196
      %p276 = pneg %p193
      %p277 = scmp.lt.s32.totalorder %s18, 1
      %s278 = scalar_select %p277, %s18, 1
      %s279 = smul.addr %s278, 3
      %s280 = scalar_lea.vmem %s7, %s279
      %p281 = scmp.lt.s32.totalorder %s18, 1
      %s282 = scalar_select %p281, %s18, 1
      %s283 = smul.addr %s282, 6
      %s284 = smul.addr %s283, 8
      %s285 = scalar_lea.vmem %s0, %s284
      %p286 = scmp.lt.s32.totalorder %s18, 1
      %s287 = scalar_select %p286, %s18, 1
      %s288 = smul.addr %s287, 3
      %s289 = scalar_lea.vmem %s1, %s288
      %p290 = scmp.lt.s32.totalorder %s18, 1
      %s291 = scalar_select %p290, %s18, 1
      %s292 = smul.addr %s291, 3
      %s293 = scalar_lea.vmem %s7, %s292
      %294 = vst [vmem:[#allocation2] sm:$0xff] 0.0
      %295 = vst [vmem:[#allocation2 + $0x8] sm:$0xff] 0.0
      %296 = vst [vmem:[#allocation2 + $0x10] sm:$0xff] 0.0
      %297 = vst [vmem:[#allocation2 + $0x18] sm:$0xff] 0.0
      %298 = vst [vmem:[#allocation2 + $0x20] sm:$0xff] 0.0
      %299 = vst [vmem:[#allocation2 + $0x28] sm:$0xff] 0.0
      %300 = vst [vmem:[#allocation2 + $0x30] sm:$0xff] 0.0
      %301 = vst [vmem:[#allocation2 + $0x38] sm:$0xff] 0.0
      %302 = vst [vmem:[#allocation2 + $0x40] sm:$0xff] 0.0
      %303 = vst [vmem:[#allocation2 + $0x48] sm:$0xff] 0.0
      %304 = vst [vmem:[#allocation2 + $0x50] sm:$0xff] 0.0
      %305 = vst [vmem:[#allocation2 + $0x58] sm:$0xff] 0.0
      %306 = vst [vmem:[#allocation2 + $0x60] sm:$0xff] 0.0
      %307 = vst [vmem:[#allocation2 + $0x68] sm:$0xff] 0.0
      %308 = vst [vmem:[#allocation2 + $0x70] sm:$0xff] 0.0
      %v309 = vld [vmem:[%s2] sm:$0x7]
      %v311 = vlaneseq
      %v312 = vshrl.u32 %v311, 7
      %v313 = vsub.s32 0, %v312
      %v314 = vrot.slane %v309, %v313
      %v315 = vlaneseq
      %v316 = vshrl.u32 %v315, 7
      %v317 = vsub.s32 1, %v316
      %v318 = vrot.slane %v309, %v317
      %v319 = vlaneseq
      %v320 = vshrl.u32 %v319, 7
      %v321 = vsub.s32 2, %v320
      %v322 = vrot.slane %v309, %v321
      %v326 = vld [vmem:[%s285] sm:$0xff]
      %v327 = vld [vmem:[%s285 + $0x8] sm:$0xff]
      %v328 = vld [vmem:[%s285 + $0x10] sm:$0xff]
      %v329 = vld [vmem:[%s285 + $0x18] sm:$0xff]
      %v330 = vld [vmem:[%s285 + $0x20] sm:$0xff]
      %v331 = vld [vmem:[%s285 + $0x28] sm:$0xff]
      %332 = vst [vmem:[#allocation2 + $0x8] sm:$0xff] %v326
      %333 = vst [vmem:[#allocation2 + $0x10] sm:$0xff] %v327
      %334 = vst [vmem:[#allocation2 + $0x18] sm:$0xff] %v328
      %335 = vst [vmem:[#allocation2 + $0x30] sm:$0xff] %v329
      %336 = vst [vmem:[#allocation2 + $0x38] sm:$0xff] %v330
      %337 = vst [vmem:[#allocation2 + $0x40] sm:$0xff] %v331
      %v338 = vld [vmem:[%s289] sm:$0x7]
      %v339 = vsub.f32 0.0, %v338
      %v340 = vxor.u32 %v339, 2147483648
      %v341 = vmul.f32 %v340, 1.442695
      %v342 = vpow.pop %v341
      %v343 = vadd.f32 %v342, 1.0
      %v344 = vrcp.pop %v343
      %v345 = vmul.f32 1.0, %v344
      %v346 = vmul.f32 %v345, %v309
      %v347 = vlaneseq
      %vm348 = vcmp.ge.s32.totalorder %v347, 0
      %vm349 = vcmp.lt.s32.totalorder %v347, 384
      %vm350 = vmand %vm348, %vm349
      %s351 = scalar_lea.vmem [#allocation2], 88
      %352 = vst.msk [vmem:[%s351] ss:$8 sm:$0x7] %vm350, %v346
      %353 = vst.msk [vmem:[%s351] ss:$8 sm:$0x0] %vm350, %v346
      %v354 = vld [vmem:[#allocation2] sm:$0xff]
      %v355 = vld [vmem:[#allocation2 + $0x8] sm:$0xff]
      %v356 = vld [vmem:[#allocation2 + $0x10] sm:$0xff]
      %v357 = vld [vmem:[#allocation2 + $0x18] sm:$0xff]
      %v358 = vld [vmem:[#allocation2 + $0x28] sm:$0xff]
      %v359 = vld [vmem:[#allocation2 + $0x30] sm:$0xff]
      %v360 = vld [vmem:[#allocation2 + $0x38] sm:$0xff]
      %v361 = vld [vmem:[#allocation2 + $0x40] sm:$0xff]
      %v362 = vld [vmem:[#allocation2 + $0x50] sm:$0xff]
      %v363 = vld [vmem:[#allocation2 + $0x58] sm:$0xff]
      %v364 = vld [vmem:[#allocation2 + $0x60] sm:$0xff]
      %v365 = vld [vmem:[#allocation2 + $0x68] sm:$0xff]
      %378 = vrot.lane.b32.xlu0 %v354, 19
      %v379 = vpop.permute.xlu0 %378
      %380 = vrot.lane.b32.xlu0 %v355, 19
      %v381 = vpop.permute.xlu0 %380
      %382 = vrot.lane.b32.xlu0 %v356, 19
      %v383 = vpop.permute.xlu0 %382
      %384 = vrot.lane.b32.xlu0 %v357, 19
      %v385 = vpop.permute.xlu0 %384
      %386 = vrot.lane.b32.xlu0 %v358, 19
      %v387 = vpop.permute.xlu0 %386
      %388 = vrot.lane.b32.xlu0 %v359, 19
      %v389 = vpop.permute.xlu0 %388
      %390 = vrot.lane.b32.xlu0 %v360, 19
      %v391 = vpop.permute.xlu0 %390
      %392 = vrot.lane.b32.xlu0 %v361, 19
      %v393 = vpop.permute.xlu0 %392
      %394 = vrot.lane.b32.xlu0 %v362, 19
      %v395 = vpop.permute.xlu0 %394
      %396 = vrot.lane.b32.xlu0 %v363, 19
      %v397 = vpop.permute.xlu0 %396
      %398 = vrot.lane.b32.xlu0 %v364, 19
      %v399 = vpop.permute.xlu0 %398
      %400 = vrot.lane.b32.xlu0 %v365, 19
      %v401 = vpop.permute.xlu0 %400
      %vm402 = vcmask 154624
      %v403 = vsel %vm402, %v379, %v381
      %v404 = vsel %vm402, %v381, %v383
      %v405 = vsel %vm402, %v383, %v385
      %v406 = vsel %vm402, %v387, %v389
      %v407 = vsel %vm402, %v389, %v391
      %v408 = vsel %vm402, %v391, %v393
      %v409 = vsel %vm402, %v395, %v397
      %v410 = vsel %vm402, %v397, %v399
      %v411 = vsel %vm402, %v399, %v401
      %421 = vst [vmem:[#allocation3] sm:$0xff] %v403
      %422 = vst [vmem:[#allocation3 + $0x8] sm:$0xff] %v404
      %423 = vst [vmem:[#allocation3 + $0x10] sm:$0xff] %v405
      %424 = vst [vmem:[#allocation3 + $0x18] sm:$0xff] %v406
      %425 = vst [vmem:[#allocation3 + $0x20] sm:$0xff] %v407
      %426 = vst [vmem:[#allocation3 + $0x28] sm:$0xff] %v408
      %427 = vst [vmem:[#allocation3 + $0x30] sm:$0xff] %v409
      %428 = vst [vmem:[#allocation3 + $0x38] sm:$0xff] %v410
      %429 = vst [vmem:[#allocation3 + $0x40] sm:$0xff] %v411
      %v430 = vld [vmem:[#allocation2] sm:$0xff]
      %v431 = vld [vmem:[#allocation2 + $0x8] sm:$0xff]
      %v432 = vld [vmem:[#allocation2 + $0x10] sm:$0xff]
      %v433 = vld [vmem:[#allocation2 + $0x18] sm:$0xff]
      %v434 = vld [vmem:[#allocation2 + $0x28] sm:$0xff]
      %v435 = vld [vmem:[#allocation2 + $0x30] sm:$0xff]
      %v436 = vld [vmem:[#allocation2 + $0x38] sm:$0xff]
      %v437 = vld [vmem:[#allocation2 + $0x40] sm:$0xff]
      %v438 = vld [vmem:[#allocation2 + $0x50] sm:$0xff]
      %v439 = vld [vmem:[#allocation2 + $0x58] sm:$0xff]
      %v440 = vld [vmem:[#allocation2 + $0x60] sm:$0xff]
      %v441 = vld [vmem:[#allocation2 + $0x68] sm:$0xff]
      %454 = vrot.lane.b32.xlu0 %v430, 18
      %v455 = vpop.permute.xlu0 %454
      %456 = vrot.lane.b32.xlu0 %v431, 18
      %v457 = vpop.permute.xlu0 %456
      %458 = vrot.lane.b32.xlu0 %v432, 18
      %v459 = vpop.permute.xlu0 %458
      %460 = vrot.lane.b32.xlu0 %v433, 18
      %v461 = vpop.permute.xlu0 %460
      %462 = vrot.lane.b32.xlu0 %v434, 18
      %v463 = vpop.permute.xlu0 %462
      %464 = vrot.lane.b32.xlu0 %v435, 18
      %v465 = vpop.permute.xlu0 %464
      %466 = vrot.lane.b32.xlu0 %v436, 18
      %v467 = vpop.permute.xlu0 %466
      %468 = vrot.lane.b32.xlu0 %v437, 18
      %v469 = vpop.permute.xlu0 %468
      %470 = vrot.lane.b32.xlu0 %v438, 18
      %v471 = vpop.permute.xlu0 %470
      %472 = vrot.lane.b32.xlu0 %v439, 18
      %v473 = vpop.permute.xlu0 %472
      %474 = vrot.lane.b32.xlu0 %v440, 18
      %v475 = vpop.permute.xlu0 %474
      %476 = vrot.lane.b32.xlu0 %v441, 18
      %v477 = vpop.permute.xlu0 %476
      %vm478 = vcmask 146432
      %v479 = vsel %vm478, %v455, %v457
      %v480 = vsel %vm478, %v457, %v459
      %v481 = vsel %vm478, %v459, %v461
      %v482 = vsel %vm478, %v463, %v465
      %v483 = vsel %vm478, %v465, %v467
      %v484 = vsel %vm478, %v467, %v469
      %v485 = vsel %vm478, %v471, %v473
      %v486 = vsel %vm478, %v473, %v475
      %v487 = vsel %vm478, %v475, %v477
      %497 = vst [vmem:[#allocation3 + $0x48] sm:$0xff] %v479
      %498 = vst [vmem:[#allocation3 + $0x50] sm:$0xff] %v480
      %499 = vst [vmem:[#allocation3 + $0x58] sm:$0xff] %v481
      %500 = vst [vmem:[#allocation3 + $0x60] sm:$0xff] %v482
      %501 = vst [vmem:[#allocation3 + $0x68] sm:$0xff] %v483
      %502 = vst [vmem:[#allocation3 + $0x70] sm:$0xff] %v484
      %503 = vst [vmem:[#allocation3 + $0x78] sm:$0xff] %v485
      %504 = vst [vmem:[#allocation3 + $0x80] sm:$0xff] %v486
      %505 = vst [vmem:[#allocation3 + $0x88] sm:$0xff] %v487
      %v506 = vld [vmem:[#allocation2] sm:$0xff]
      %v507 = vld [vmem:[#allocation2 + $0x8] sm:$0xff]
      %v508 = vld [vmem:[#allocation2 + $0x10] sm:$0xff]
      %v509 = vld [vmem:[#allocation2 + $0x18] sm:$0xff]
      %v510 = vld [vmem:[#allocation2 + $0x28] sm:$0xff]
      %v511 = vld [vmem:[#allocation2 + $0x30] sm:$0xff]
      %v512 = vld [vmem:[#allocation2 + $0x38] sm:$0xff]
      %v513 = vld [vmem:[#allocation2 + $0x40] sm:$0xff]
      %v514 = vld [vmem:[#allocation2 + $0x50] sm:$0xff]
      %v515 = vld [vmem:[#allocation2 + $0x58] sm:$0xff]
      %v516 = vld [vmem:[#allocation2 + $0x60] sm:$0xff]
      %v517 = vld [vmem:[#allocation2 + $0x68] sm:$0xff]
      %530 = vrot.lane.b32.xlu0 %v506, 17
      %v531 = vpop.permute.xlu0 %530
      %532 = vrot.lane.b32.xlu0 %v507, 17
      %v533 = vpop.permute.xlu0 %532
      %534 = vrot.lane.b32.xlu0 %v508, 17
      %v535 = vpop.permute.xlu0 %534
      %536 = vrot.lane.b32.xlu0 %v509, 17
      %v537 = vpop.permute.xlu0 %536
      %538 = vrot.lane.b32.xlu0 %v510, 17
      %v539 = vpop.permute.xlu0 %538
      %540 = vrot.lane.b32.xlu0 %v511, 17
      %v541 = vpop.permute.xlu0 %540
      %542 = vrot.lane.b32.xlu0 %v512, 17
      %v543 = vpop.permute.xlu0 %542
      %544 = vrot.lane.b32.xlu0 %v513, 17
      %v545 = vpop.permute.xlu0 %544
      %546 = vrot.lane.b32.xlu0 %v514, 17
      %v547 = vpop.permute.xlu0 %546
      %548 = vrot.lane.b32.xlu0 %v515, 17
      %v549 = vpop.permute.xlu0 %548
      %550 = vrot.lane.b32.xlu0 %v516, 17
      %v551 = vpop.permute.xlu0 %550
      %552 = vrot.lane.b32.xlu0 %v517, 17
      %v553 = vpop.permute.xlu0 %552
      %vm554 = vcmask 138240
      %v555 = vsel %vm554, %v531, %v533
      %v556 = vsel %vm554, %v533, %v535
      %v557 = vsel %vm554, %v535, %v537
      %v558 = vsel %vm554, %v539, %v541
      %v559 = vsel %vm554, %v541, %v543
      %v560 = vsel %vm554, %v543, %v545
      %v561 = vsel %vm554, %v547, %v549
      %v562 = vsel %vm554, %v549, %v551
      %v563 = vsel %vm554, %v551, %v553
      %573 = vst [vmem:[#allocation3 + $0x90] sm:$0xff] %v555
      %574 = vst [vmem:[#allocation3 + $0x98] sm:$0xff] %v556
      %575 = vst [vmem:[#allocation3 + $0xa0] sm:$0xff] %v557
      %576 = vst [vmem:[#allocation3 + $0xa8] sm:$0xff] %v558
      %577 = vst [vmem:[#allocation3 + $0xb0] sm:$0xff] %v559
      %578 = vst [vmem:[#allocation3 + $0xb8] sm:$0xff] %v560
      %579 = vst [vmem:[#allocation3 + $0xc0] sm:$0xff] %v561
      %580 = vst [vmem:[#allocation3 + $0xc8] sm:$0xff] %v562
      %581 = vst [vmem:[#allocation3 + $0xd0] sm:$0xff] %v563
      %v582 = vld [vmem:[#allocation2] sm:$0xff]
      %v583 = vld [vmem:[#allocation2 + $0x8] sm:$0xff]
      %v584 = vld [vmem:[#allocation2 + $0x10] sm:$0xff]
      %v585 = vld [vmem:[#allocation2 + $0x18] sm:$0xff]
      %v586 = vld [vmem:[#allocation2 + $0x28] sm:$0xff]
      %v587 = vld [vmem:[#allocation2 + $0x30] sm:$0xff]
      %v588 = vld [vmem:[#allocation2 + $0x38] sm:$0xff]
      %v589 = vld [vmem:[#allocation2 + $0x40] sm:$0xff]
      %v590 = vld [vmem:[#allocation2 + $0x50] sm:$0xff]
      %v591 = vld [vmem:[#allocation2 + $0x58] sm:$0xff]
      %v592 = vld [vmem:[#allocation2 + $0x60] sm:$0xff]
      %v593 = vld [vmem:[#allocation2 + $0x68] sm:$0xff]
      %606 = vrot.lane.b32.xlu0 %v582, 1
      %v607 = vpop.permute.xlu0 %606
      %608 = vrot.lane.b32.xlu0 %v583, 1
      %v609 = vpop.permute.xlu0 %608
      %610 = vrot.lane.b32.xlu0 %v584, 1
      %v611 = vpop.permute.xlu0 %610
      %612 = vrot.lane.b32.xlu0 %v585, 1
      %v613 = vpop.permute.xlu0 %612
      %614 = vrot.lane.b32.xlu0 %v586, 1
      %v615 = vpop.permute.xlu0 %614
      %616 = vrot.lane.b32.xlu0 %v587, 1
      %v617 = vpop.permute.xlu0 %616
      %618 = vrot.lane.b32.xlu0 %v588, 1
      %v619 = vpop.permute.xlu0 %618
      %620 = vrot.lane.b32.xlu0 %v589, 1
      %v621 = vpop.permute.xlu0 %620
      %622 = vrot.lane.b32.xlu0 %v590, 1
      %v623 = vpop.permute.xlu0 %622
      %624 = vrot.lane.b32.xlu0 %v591, 1
      %v625 = vpop.permute.xlu0 %624
      %626 = vrot.lane.b32.xlu0 %v592, 1
      %v627 = vpop.permute.xlu0 %626
      %628 = vrot.lane.b32.xlu0 %v593, 1
      %v629 = vpop.permute.xlu0 %628
      %vm630 = vcmask 7168
      %v631 = vsel %vm630, %v607, %v609
      %v632 = vsel %vm630, %v609, %v611
      %v633 = vsel %vm630, %v611, %v613
      %v634 = vsel %vm630, %v615, %v617
      %v635 = vsel %vm630, %v617, %v619
      %v636 = vsel %vm630, %v619, %v621
      %v637 = vsel %vm630, %v623, %v625
      %v638 = vsel %vm630, %v625, %v627
      %v639 = vsel %vm630, %v627, %v629
      %649 = vst [vmem:[#allocation3 + $0xd8] sm:$0xff] %v631
      %650 = vst [vmem:[#allocation3 + $0xe0] sm:$0xff] %v632
      %651 = vst [vmem:[#allocation3 + $0xe8] sm:$0xff] %v633
      %652 = vst [vmem:[#allocation3 + $0xf0] sm:$0xff] %v634
      %653 = vst [vmem:[#allocation3 + $0xf8] sm:$0xff] %v635
      %654 = vst [vmem:[#allocation3 + $0x100] sm:$0xff] %v636
      %655 = vst [vmem:[#allocation3 + $0x108] sm:$0xff] %v637
      %656 = vst [vmem:[#allocation3 + $0x110] sm:$0xff] %v638
      %657 = vst [vmem:[#allocation3 + $0x118] sm:$0xff] %v639
      %v658 = vld [vmem:[#allocation2 + $0x8] sm:$0xff]
      %v659 = vld [vmem:[#allocation2 + $0x10] sm:$0xff]
      %v660 = vld [vmem:[#allocation2 + $0x18] sm:$0xff]
      %v661 = vld [vmem:[#allocation2 + $0x30] sm:$0xff]
      %v662 = vld [vmem:[#allocation2 + $0x38] sm:$0xff]
      %v663 = vld [vmem:[#allocation2 + $0x40] sm:$0xff]
      %v664 = vld [vmem:[#allocation2 + $0x58] sm:$0xff]
      %v665 = vld [vmem:[#allocation2 + $0x60] sm:$0xff]
      %v666 = vld [vmem:[#allocation2 + $0x68] sm:$0xff]
      %667 = vst [vmem:[#allocation3 + $0x120] sm:$0xff] %v658
      %668 = vst [vmem:[#allocation3 + $0x128] sm:$0xff] %v659
      %669 = vst [vmem:[#allocation3 + $0x130] sm:$0xff] %v660
      %670 = vst [vmem:[#allocation3 + $0x138] sm:$0xff] %v661
      %671 = vst [vmem:[#allocation3 + $0x140] sm:$0xff] %v662
      %672 = vst [vmem:[#allocation3 + $0x148] sm:$0xff] %v663
      %673 = vst [vmem:[#allocation3 + $0x150] sm:$0xff] %v664
      %674 = vst [vmem:[#allocation3 + $0x158] sm:$0xff] %v665
      %675 = vst [vmem:[#allocation3 + $0x160] sm:$0xff] %v666
      %v676 = vld [vmem:[#allocation2 + $0x8] sm:$0xff]
      %v677 = vld [vmem:[#allocation2 + $0x10] sm:$0xff]
      %v678 = vld [vmem:[#allocation2 + $0x18] sm:$0xff]
      %v679 = vld [vmem:[#allocation2 + $0x20] sm:$0xff]
      %v680 = vld [vmem:[#allocation2 + $0x30] sm:$0xff]
      %v681 = vld [vmem:[#allocation2 + $0x38] sm:$0xff]
      %v682 = vld [vmem:[#allocation2 + $0x40] sm:$0xff]
      %v683 = vld [vmem:[#allocation2 + $0x48] sm:$0xff]
      %v684 = vld [vmem:[#allocation2 + $0x58] sm:$0xff]
      %v685 = vld [vmem:[#allocation2 + $0x60] sm:$0xff]
      %v686 = vld [vmem:[#allocation2 + $0x68] sm:$0xff]
      %v687 = vld [vmem:[#allocation2 + $0x70] sm:$0xff]
      %700 = vrot.lane.b32.xlu0 %v676, 127
      %v701 = vpop.permute.xlu0 %700
      %702 = vrot.lane.b32.xlu0 %v677, 127
      %v703 = vpop.permute.xlu0 %702
      %704 = vrot.lane.b32.xlu0 %v678, 127
      %v705 = vpop.permute.xlu0 %704
      %706 = vrot.lane.b32.xlu0 %v679, 127
      %v707 = vpop.permute.xlu0 %706
      %708 = vrot.lane.b32.xlu0 %v680, 127
      %v709 = vpop.permute.xlu0 %708
      %710 = vrot.lane.b32.xlu0 %v681, 127
      %v711 = vpop.permute.xlu0 %710
      %712 = vrot.lane.b32.xlu0 %v682, 127
      %v713 = vpop.permute.xlu0 %712
      %714 = vrot.lane.b32.xlu0 %v683, 127
      %v715 = vpop.permute.xlu0 %714
      %716 = vrot.lane.b32.xlu0 %v684, 127
      %v717 = vpop.permute.xlu0 %716
      %718 = vrot.lane.b32.xlu0 %v685, 127
      %v719 = vpop.permute.xlu0 %718
      %720 = vrot.lane.b32.xlu0 %v686, 127
      %v721 = vpop.permute.xlu0 %720
      %722 = vrot.lane.b32.xlu0 %v687, 127
      %v723 = vpop.permute.xlu0 %722
      %vm724 = vcmask 1039360
      %v725 = vsel %vm724, %v701, %v703
      %v726 = vsel %vm724, %v703, %v705
      %v727 = vsel %vm724, %v705, %v707
      %v728 = vsel %vm724, %v709, %v711
      %v729 = vsel %vm724, %v711, %v713
      %v730 = vsel %vm724, %v713, %v715
      %v731 = vsel %vm724, %v717, %v719
      %v732 = vsel %vm724, %v719, %v721
      %v733 = vsel %vm724, %v721, %v723
      %743 = vst [vmem:[#allocation3 + $0x168] sm:$0xff] %v725
      %744 = vst [vmem:[#allocation3 + $0x170] sm:$0xff] %v726
      %745 = vst [vmem:[#allocation3 + $0x178] sm:$0xff] %v727
      %746 = vst [vmem:[#allocation3 + $0x180] sm:$0xff] %v728
      %747 = vst [vmem:[#allocation3 + $0x188] sm:$0xff] %v729
      %748 = vst [vmem:[#allocation3 + $0x190] sm:$0xff] %v730
      %749 = vst [vmem:[#allocation3 + $0x198] sm:$0xff] %v731
      %750 = vst [vmem:[#allocation3 + $0x1a0] sm:$0xff] %v732
      %751 = vst [vmem:[#allocation3 + $0x1a8] sm:$0xff] %v733
      %v752 = vld [vmem:[#allocation2 + $0x8] sm:$0xff]
      %v753 = vld [vmem:[#allocation2 + $0x10] sm:$0xff]
      %v754 = vld [vmem:[#allocation2 + $0x18] sm:$0xff]
      %v755 = vld [vmem:[#allocation2 + $0x20] sm:$0xff]
      %v756 = vld [vmem:[#allocation2 + $0x30] sm:$0xff]
      %v757 = vld [vmem:[#allocation2 + $0x38] sm:$0xff]
      %v758 = vld [vmem:[#allocation2 + $0x40] sm:$0xff]
      %v759 = vld [vmem:[#allocation2 + $0x48] sm:$0xff]
      %v760 = vld [vmem:[#allocation2 + $0x58] sm:$0xff]
      %v761 = vld [vmem:[#allocation2 + $0x60] sm:$0xff]
      %v762 = vld [vmem:[#allocation2 + $0x68] sm:$0xff]
      %v763 = vld [vmem:[#allocation2 + $0x70] sm:$0xff]
      %776 = vrot.lane.b32.xlu0 %v752, 111
      %v777 = vpop.permute.xlu0 %776
      %778 = vrot.lane.b32.xlu0 %v753, 111
      %v779 = vpop.permute.xlu0 %778
      %780 = vrot.lane.b32.xlu0 %v754, 111
      %v781 = vpop.permute.xlu0 %780
      %782 = vrot.lane.b32.xlu0 %v755, 111
      %v783 = vpop.permute.xlu0 %782
      %784 = vrot.lane.b32.xlu0 %v756, 111
      %v785 = vpop.permute.xlu0 %784
      %786 = vrot.lane.b32.xlu0 %v757, 111
      %v787 = vpop.permute.xlu0 %786
      %788 = vrot.lane.b32.xlu0 %v758, 111
      %v789 = vpop.permute.xlu0 %788
      %790 = vrot.lane.b32.xlu0 %v759, 111
      %v791 = vpop.permute.xlu0 %790
      %792 = vrot.lane.b32.xlu0 %v760, 111
      %v793 = vpop.permute.xlu0 %792
      %794 = vrot.lane.b32.xlu0 %v761, 111
      %v795 = vpop.permute.xlu0 %794
      %796 = vrot.lane.b32.xlu0 %v762, 111
      %v797 = vpop.permute.xlu0 %796
      %798 = vrot.lane.b32.xlu0 %v763, 111
      %v799 = vpop.permute.xlu0 %798
      %vm800 = vcmask 908288
      %v801 = vsel %vm800, %v777, %v779
      %v802 = vsel %vm800, %v779, %v781
      %v803 = vsel %vm800, %v781, %v783
      %v804 = vsel %vm800, %v785, %v787
      %v805 = vsel %vm800, %v787, %v789
      %v806 = vsel %vm800, %v789, %v791
      %v807 = vsel %vm800, %v793, %v795
      %v808 = vsel %vm800, %v795, %v797
      %v809 = vsel %vm800, %v797, %v799
      %819 = vst [vmem:[#allocation3 + $0x1b0] sm:$0xff] %v801
      %820 = vst [vmem:[#allocation3 + $0x1b8] sm:$0xff] %v802
      %821 = vst [vmem:[#allocation3 + $0x1c0] sm:$0xff] %v803
      %822 = vst [vmem:[#allocation3 + $0x1c8] sm:$0xff] %v804
      %823 = vst [vmem:[#allocation3 + $0x1d0] sm:$0xff] %v805
      %824 = vst [vmem:[#allocation3 + $0x1d8] sm:$0xff] %v806
      %825 = vst [vmem:[#allocation3 + $0x1e0] sm:$0xff] %v807
      %826 = vst [vmem:[#allocation3 + $0x1e8] sm:$0xff] %v808
      %827 = vst [vmem:[#allocation3 + $0x1f0] sm:$0xff] %v809
      %v828 = vld [vmem:[#allocation2 + $0x8] sm:$0xff]
      %v829 = vld [vmem:[#allocation2 + $0x10] sm:$0xff]
      %v830 = vld [vmem:[#allocation2 + $0x18] sm:$0xff]
      %v831 = vld [vmem:[#allocation2 + $0x20] sm:$0xff]
      %v832 = vld [vmem:[#allocation2 + $0x30] sm:$0xff]
      %v833 = vld [vmem:[#allocation2 + $0x38] sm:$0xff]
      %v834 = vld [vmem:[#allocation2 + $0x40] sm:$0xff]
      %v835 = vld [vmem:[#allocation2 + $0x48] sm:$0xff]
      %v836 = vld [vmem:[#allocation2 + $0x58] sm:$0xff]
      %v837 = vld [vmem:[#allocation2 + $0x60] sm:$0xff]
      %v838 = vld [vmem:[#allocation2 + $0x68] sm:$0xff]
      %v839 = vld [vmem:[#allocation2 + $0x70] sm:$0xff]
      %852 = vrot.lane.b32.xlu0 %v828, 110
      %v853 = vpop.permute.xlu0 %852
      %854 = vrot.lane.b32.xlu0 %v829, 110
      %v855 = vpop.permute.xlu0 %854
      %856 = vrot.lane.b32.xlu0 %v830, 110
      %v857 = vpop.permute.xlu0 %856
      %858 = vrot.lane.b32.xlu0 %v831, 110
      %v859 = vpop.permute.xlu0 %858
      %860 = vrot.lane.b32.xlu0 %v832, 110
      %v861 = vpop.permute.xlu0 %860
      %862 = vrot.lane.b32.xlu0 %v833, 110
      %v863 = vpop.permute.xlu0 %862
      %864 = vrot.lane.b32.xlu0 %v834, 110
      %v865 = vpop.permute.xlu0 %864
      %866 = vrot.lane.b32.xlu0 %v835, 110
      %v867 = vpop.permute.xlu0 %866
      %868 = vrot.lane.b32.xlu0 %v836, 110
      %v869 = vpop.permute.xlu0 %868
      %870 = vrot.lane.b32.xlu0 %v837, 110
      %v871 = vpop.permute.xlu0 %870
      %872 = vrot.lane.b32.xlu0 %v838, 110
      %v873 = vpop.permute.xlu0 %872
      %874 = vrot.lane.b32.xlu0 %v839, 110
      %v875 = vpop.permute.xlu0 %874
      %vm876 = vcmask 900096
      %v877 = vsel %vm876, %v853, %v855
      %v878 = vsel %vm876, %v855, %v857
      %v879 = vsel %vm876, %v857, %v859
      %v880 = vsel %vm876, %v861, %v863
      %v881 = vsel %vm876, %v863, %v865
      %v882 = vsel %vm876, %v865, %v867
      %v883 = vsel %vm876, %v869, %v871
      %v884 = vsel %vm876, %v871, %v873
      %v885 = vsel %vm876, %v873, %v875
      %895 = vst [vmem:[#allocation3 + $0x1f8] sm:$0xff] %v877
      %896 = vst [vmem:[#allocation3 + $0x200] sm:$0xff] %v878
      %897 = vst [vmem:[#allocation3 + $0x208] sm:$0xff] %v879
      %898 = vst [vmem:[#allocation3 + $0x210] sm:$0xff] %v880
      %899 = vst [vmem:[#allocation3 + $0x218] sm:$0xff] %v881
      %900 = vst [vmem:[#allocation3 + $0x220] sm:$0xff] %v882
      %901 = vst [vmem:[#allocation3 + $0x228] sm:$0xff] %v883
      %902 = vst [vmem:[#allocation3 + $0x230] sm:$0xff] %v884
      %903 = vst [vmem:[#allocation3 + $0x238] sm:$0xff] %v885
      %v904 = vld [vmem:[#allocation2 + $0x8] sm:$0xff]
      %v905 = vld [vmem:[#allocation2 + $0x10] sm:$0xff]
      %v906 = vld [vmem:[#allocation2 + $0x18] sm:$0xff]
      %v907 = vld [vmem:[#allocation2 + $0x20] sm:$0xff]
      %v908 = vld [vmem:[#allocation2 + $0x30] sm:$0xff]
      %v909 = vld [vmem:[#allocation2 + $0x38] sm:$0xff]
      %v910 = vld [vmem:[#allocation2 + $0x40] sm:$0xff]
      %v911 = vld [vmem:[#allocation2 + $0x48] sm:$0xff]
      %v912 = vld [vmem:[#allocation2 + $0x58] sm:$0xff]
      %v913 = vld [vmem:[#allocation2 + $0x60] sm:$0xff]
      %v914 = vld [vmem:[#allocation2 + $0x68] sm:$0xff]
      %v915 = vld [vmem:[#allocation2 + $0x70] sm:$0xff]
      %928 = vrot.lane.b32.xlu0 %v904, 109
      %v929 = vpop.permute.xlu0 %928
      %930 = vrot.lane.b32.xlu0 %v905, 109
      %v931 = vpop.permute.xlu0 %930
      %932 = vrot.lane.b32.xlu0 %v906, 109
      %v933 = vpop.permute.xlu0 %932
      %934 = vrot.lane.b32.xlu0 %v907, 109
      %v935 = vpop.permute.xlu0 %934
      %936 = vrot.lane.b32.xlu0 %v908, 109
      %v937 = vpop.permute.xlu0 %936
      %938 = vrot.lane.b32.xlu0 %v909, 109
      %v939 = vpop.permute.xlu0 %938
      %940 = vrot.lane.b32.xlu0 %v910, 109
      %v941 = vpop.permute.xlu0 %940
      %942 = vrot.lane.b32.xlu0 %v911, 109
      %v943 = vpop.permute.xlu0 %942
      %944 = vrot.lane.b32.xlu0 %v912, 109
      %v945 = vpop.permute.xlu0 %944
      %946 = vrot.lane.b32.xlu0 %v913, 109
      %v947 = vpop.permute.xlu0 %946
      %948 = vrot.lane.b32.xlu0 %v914, 109
      %v949 = vpop.permute.xlu0 %948
      %950 = vrot.lane.b32.xlu0 %v915, 109
      %v951 = vpop.permute.xlu0 %950
      %vm952 = vcmask 891904
      %v953 = vsel %vm952, %v929, %v931
      %v954 = vsel %vm952, %v931, %v933
      %v955 = vsel %vm952, %v933, %v935
      %v956 = vsel %vm952, %v937, %v939
      %v957 = vsel %vm952, %v939, %v941
      %v958 = vsel %vm952, %v941, %v943
      %v959 = vsel %vm952, %v945, %v947
      %v960 = vsel %vm952, %v947, %v949
      %v961 = vsel %vm952, %v949, %v951
      %971 = vst [vmem:[#allocation3 + $0x240] sm:$0xff] %v953
      %972 = vst [vmem:[#allocation3 + $0x248] sm:$0xff] %v954
      %973 = vst [vmem:[#allocation3 + $0x250] sm:$0xff] %v955
      %974 = vst [vmem:[#allocation3 + $0x258] sm:$0xff] %v956
      %975 = vst [vmem:[#allocation3 + $0x260] sm:$0xff] %v957
      %976 = vst [vmem:[#allocation3 + $0x268] sm:$0xff] %v958
      %977 = vst [vmem:[#allocation3 + $0x270] sm:$0xff] %v959
      %978 = vst [vmem:[#allocation3 + $0x278] sm:$0xff] %v960
      %979 = vst [vmem:[#allocation3 + $0x280] sm:$0xff] %v961
      %v980 = vld [vmem:[%s3] sm:$0xff]
      %v981 = vld [vmem:[%s3 + $0x8] sm:$0xff]
      %v982 = vld [vmem:[%s3 + $0x10] sm:$0xff]
      %v983 = vld [vmem:[%s3 + $0x18] sm:$0xff]
      %v984 = vld [vmem:[#allocation3] sm:$0xff]
      %v985 = vld [vmem:[#allocation3 + $0x8] sm:$0xff]
      %v986 = vld [vmem:[#allocation3 + $0x10] sm:$0xff]
      %v987 = vld [vmem:[#allocation3 + $0x18] sm:$0xff]
      %v988 = vld [vmem:[#allocation3 + $0x20] sm:$0xff]
      %v989 = vld [vmem:[#allocation3 + $0x28] sm:$0xff]
      %v990 = vld [vmem:[#allocation3 + $0x30] sm:$0xff]
      %v991 = vld [vmem:[#allocation3 + $0x38] sm:$0xff]
      %v992 = vld [vmem:[#allocation3 + $0x40] sm:$0xff]
      %v993 = vld [vmem:[#allocation3 + $0x48] sm:$0xff]
      %v994 = vld [vmem:[#allocation3 + $0x50] sm:$0xff]
      %v995 = vld [vmem:[#allocation3 + $0x58] sm:$0xff]
      %v996 = vld [vmem:[#allocation3 + $0x60] sm:$0xff]
      %v997 = vld [vmem:[#allocation3 + $0x68] sm:$0xff]
      %v998 = vld [vmem:[#allocation3 + $0x70] sm:$0xff]
      %v999 = vld [vmem:[#allocation3 + $0x78] sm:$0xff]
      %v1000 = vld [vmem:[#allocation3 + $0x80] sm:$0xff]
      %v1001 = vld [vmem:[#allocation3 + $0x88] sm:$0xff]
      %v1002 = vld [vmem:[#allocation3 + $0x90] sm:$0xff]
      %v1003 = vld [vmem:[#allocation3 + $0x98] sm:$0xff]
      %v1004 = vld [vmem:[#allocation3 + $0xa0] sm:$0xff]
      %v1005 = vld [vmem:[#allocation3 + $0xa8] sm:$0xff]
      %v1006 = vld [vmem:[#allocation3 + $0xb0] sm:$0xff]
      %v1007 = vld [vmem:[#allocation3 + $0xb8] sm:$0xff]
      %v1008 = vld [vmem:[#allocation3 + $0xc0] sm:$0xff]
      %v1009 = vld [vmem:[#allocation3 + $0xc8] sm:$0xff]
      %v1010 = vld [vmem:[#allocation3 + $0xd0] sm:$0xff]
      %v1011 = vld [vmem:[#allocation3 + $0xd8] sm:$0xff]
      %v1012 = vld [vmem:[#allocation3 + $0xe0] sm:$0xff]
      %v1013 = vld [vmem:[#allocation3 + $0xe8] sm:$0xff]
      %v1014 = vld [vmem:[#allocation3 + $0xf0] sm:$0xff]
      %v1015 = vld [vmem:[#allocation3 + $0xf8] sm:$0xff]
      %v1016 = vld [vmem:[#allocation3 + $0x100] sm:$0xff]
      %v1017 = vld [vmem:[#allocation3 + $0x108] sm:$0xff]
      %v1018 = vld [vmem:[#allocation3 + $0x110] sm:$0xff]
      %v1019 = vld [vmem:[#allocation3 + $0x118] sm:$0xff]
      %v1020 = vld [vmem:[#allocation3 + $0x120] sm:$0xff]
      %v1021 = vld [vmem:[#allocation3 + $0x128] sm:$0xff]
      %v1022 = vld [vmem:[#allocation3 + $0x130] sm:$0xff]
      %v1023 = vld [vmem:[#allocation3 + $0x138] sm:$0xff]
      %v1024 = vld [vmem:[#allocation3 + $0x140] sm:$0xff]
      %v1025 = vld [vmem:[#allocation3 + $0x148] sm:$0xff]
      %v1026 = vld [vmem:[#allocation3 + $0x150] sm:$0xff]
      %v1027 = vld [vmem:[#allocation3 + $0x158] sm:$0xff]
      %v1028 = vld [vmem:[#allocation3 + $0x160] sm:$0xff]
      %v1029 = vld [vmem:[#allocation3 + $0x168] sm:$0xff]
      %v1030 = vld [vmem:[#allocation3 + $0x170] sm:$0xff]
      %v1031 = vld [vmem:[#allocation3 + $0x178] sm:$0xff]
      %v1032 = vld [vmem:[#allocation3 + $0x180] sm:$0xff]
      %v1033 = vld [vmem:[#allocation3 + $0x188] sm:$0xff]
      %v1034 = vld [vmem:[#allocation3 + $0x190] sm:$0xff]
      %v1035 = vld [vmem:[#allocation3 + $0x198] sm:$0xff]
      %v1036 = vld [vmem:[#allocation3 + $0x1a0] sm:$0xff]
      %v1037 = vld [vmem:[#allocation3 + $0x1a8] sm:$0xff]
      %v1038 = vld [vmem:[#allocation3 + $0x1b0] sm:$0xff]
      %v1039 = vld [vmem:[#allocation3 + $0x1b8] sm:$0xff]
      %v1040 = vld [vmem:[#allocation3 + $0x1c0] sm:$0xff]
      %v1041 = vld [vmem:[#allocation3 + $0x1c8] sm:$0xff]
      %v1042 = vld [vmem:[#allocation3 + $0x1d0] sm:$0xff]
      %v1043 = vld [vmem:[#allocation3 + $0x1d8] sm:$0xff]
      %v1044 = vld [vmem:[#allocation3 + $0x1e0] sm:$0xff]
      %v1045 = vld [vmem:[#allocation3 + $0x1e8] sm:$0xff]
      %v1046 = vld [vmem:[#allocation3 + $0x1f0] sm:$0xff]
      %v1047 = vld [vmem:[#allocation3 + $0x1f8] sm:$0xff]
      %v1048 = vld [vmem:[#allocation3 + $0x200] sm:$0xff]
      %v1049 = vld [vmem:[#allocation3 + $0x208] sm:$0xff]
      %v1050 = vld [vmem:[#allocation3 + $0x210] sm:$0xff]
      %v1051 = vld [vmem:[#allocation3 + $0x218] sm:$0xff]
      %v1052 = vld [vmem:[#allocation3 + $0x220] sm:$0xff]
      %v1053 = vld [vmem:[#allocation3 + $0x228] sm:$0xff]
      %v1054 = vld [vmem:[#allocation3 + $0x230] sm:$0xff]
      %v1055 = vld [vmem:[#allocation3 + $0x238] sm:$0xff]
      %v1056 = vld [vmem:[#allocation3 + $0x240] sm:$0xff]
      %v1057 = vld [vmem:[#allocation3 + $0x248] sm:$0xff]
      %v1058 = vld [vmem:[#allocation3 + $0x250] sm:$0xff]
      %v1059 = vld [vmem:[#allocation3 + $0x258] sm:$0xff]
      %v1060 = vld [vmem:[#allocation3 + $0x260] sm:$0xff]
      %v1061 = vld [vmem:[#allocation3 + $0x268] sm:$0xff]
      %v1062 = vld [vmem:[#allocation3 + $0x270] sm:$0xff]
      %v1063 = vld [vmem:[#allocation3 + $0x278] sm:$0xff]
      %v1064 = vld [vmem:[#allocation3 + $0x280] sm:$0xff]
      %v1065 = vld [vmem:[#allocation2 + $0x8] sm:$0xff]
      %v1066 = vld [vmem:[#allocation2 + $0x10] sm:$0xff]
      %v1067 = vld [vmem:[#allocation2 + $0x18] sm:$0xff]
      %v1068 = vld [vmem:[#allocation2 + $0x30] sm:$0xff]
      %v1069 = vld [vmem:[#allocation2 + $0x38] sm:$0xff]
      %v1070 = vld [vmem:[#allocation2 + $0x40] sm:$0xff]
      %v1071 = vld [vmem:[%s4] sm:$0xff]
      %v1072 = vld [vmem:[%s4 + $0x8] sm:$0xff]
      %1074 = vset.pattern.permute.xlu0 0
      %1075 = vperm.xlu0 %1074, %v1071
      %v1076 = vpop.permute.xlu0 %1075
      %1079 = vset.pattern.permute.xlu0 0
      %1080 = vperm.xlu0 %1079, %v1072
      %v1081 = vpop.permute.xlu0 %1080
      %vm1083 = vcmask 719872
      %v1085 = vsel %vm1083, %v981, 0
      %v1088 = vsel %vm1083, %v983, 0
      %1090 = vmatprep.subr.mxu0 %v1030
      %1091 = vmatpush1.msra.mxu0 %v1029
      %1092 = vmatprep.subr.mxu0 %v1027
      %1093 = vmatpush1.msra.mxu0 %v1026
      %1094 = vmatprep.subr.mxu0 %v1024
      %1095 = vmatpush1.msra.mxu0 %v1023
      %1096 = vmatprep.subr.mxu0 %v1021
      %1097 = vmatpush1.msra.mxu0 %v1020
      %1098 = vmatprep.subr.mxu0 %v1018
      %1099 = vmatpush1.msra.mxu0 %v1017
      %1100 = vmatprep.subr.mxu0 %v1015
      %1101 = vmatpush1.msra.mxu0 %v1014
      %1102 = vmatprep.subr.mxu0 %v1012
      %1103 = vmatpush1.msra.mxu0 %v1011
      %1104 = vmatprep.subr.mxu0 %v1009
      %1105 = vmatpush1.msra.mxu0 %v1008
      %1106 = vmatprep.subr.mxu0 %v1006
      %1107 = vmatpush1.msra.mxu0 %v1005
      %1108 = vmatprep.subr.mxu0 %v1003
      %1109 = vmatpush1.msra.mxu0 %v1002
      %1110 = vmatprep.subr.mxu0 %v1000
      %1111 = vmatpush1.msra.mxu0 %v999
      %1112 = vmatprep.subr.mxu0 %v997
      %1113 = vmatpush1.msra.mxu0 %v996
      %1114 = vmatprep.subr.mxu0 %v994
      %1115 = vmatpush1.msra.mxu0 %v993
      %1116 = vmatprep.subr.mxu0 %v991
      %1117 = vmatpush1.msra.mxu0 %v990
      %1118 = vmatprep.subr.mxu0 %v988
      %1119 = vmatpush1.msra.mxu0 %v987
      %1120 = vmatprep.subr.mxu0 %v985
      %1121 = vmatpush1.msra.mxu0 %v984
      %1122 = vmatprep.subr.mxu0 0.0
      %1123 = vmatpush2.msra.mxu0 0.0
      %1124 = vmatprep.subr.mxu0 0.0
      %1125 = vmatpush2.msra.mxu0 0.0
      %1126 = vmatprep.subr.mxu0 0.0
      %1127 = vmatpush2.msra.mxu0 0.0
      %1128 = vmatprep.subr.mxu0 0.0
      %1129 = vmatpush2.msra.mxu0 0.0
      %1130 = vmatprep.subr.mxu0 0.0
      %1131 = vmatpush2.msra.mxu0 0.0
      %1132 = vmatprep.subr.mxu0 %v1063
      %1133 = vmatpush2.msra.mxu0 %v1062
      %1134 = vmatprep.subr.mxu0 %v1060
      %1135 = vmatpush2.msra.mxu0 %v1059
      %1136 = vmatprep.subr.mxu0 %v1057
      %1137 = vmatpush2.msra.mxu0 %v1056
      %1138 = vmatprep.subr.mxu0 %v1054
      %1139 = vmatpush2.msra.mxu0 %v1053
      %1140 = vmatprep.subr.mxu0 %v1051
      %1141 = vmatpush2.msra.mxu0 %v1050
      %1142 = vmatprep.subr.mxu0 %v1048
      %1143 = vmatpush2.msra.mxu0 %v1047
      %1144 = vmatprep.subr.mxu0 %v1045
      %1145 = vmatpush2.msra.mxu0 %v1044
      %1146 = vmatprep.subr.mxu0 %v1042
      %1147 = vmatpush2.msra.mxu0 %v1041
      %1148 = vmatprep.subr.mxu0 %v1039
      %1149 = vmatpush2.msra.mxu0 %v1038
      %1150 = vmatprep.subr.mxu0 %v1036
      %1151 = vmatpush2.msra.mxu0 %v1035
      %1152 = vmatprep.subr.mxu0 %v1033
      %1153 = vmatpush2.msra.mxu0 %v1032
      %1154 = vmatprep.mubr.f32.mxu0 %v1085
      %1155 = vmatmul.mubr.f32.gmra.mxu0 %v980
      %v1156 = vpop.f32.mrf.mxu0
      %v1157 = vadd.f32 %v1076, %v1156
      %v1158 = vpop.f32.mrf.mxu0
      %v1159 = vadd.f32 %v1076, %v1158
      %1160 = vmatprep.mubr.f32.mxu0 %v1088
      %1161 = vmatmul.mubr.f32.gmra.mxu0 %v982
      %v1162 = vpop.f32.mrf.mxu0
      %v1163 = vadd.f32 %v1081, %v1162
      %v1164 = vpop.f32.mrf.mxu0
      %v1165 = vadd.f32 %v1081, %v1164
      %1166 = vdwg.mxu0
      %1167 = vmatprep.subr.mxu0 0.0
      %1168 = vmatpush1.msra.mxu0 %v1031
      %1169 = vmatprep.subr.mxu0 0.0
      %1170 = vmatpush1.msra.mxu0 %v1028
      %1171 = vmatprep.subr.mxu0 0.0
      %1172 = vmatpush1.msra.mxu0 %v1025
      %1173 = vmatprep.subr.mxu0 0.0
      %1174 = vmatpush1.msra.mxu0 %v1022
      %1175 = vmatprep.subr.mxu0 0.0
      %1176 = vmatpush1.msra.mxu0 %v1019
      %1177 = vmatprep.subr.mxu0 0.0
      %1178 = vmatpush1.msra.mxu0 %v1016
      %1179 = vmatprep.subr.mxu0 0.0
      %1180 = vmatpush1.msra.mxu0 %v1013
      %1181 = vmatprep.subr.mxu0 0.0
      %1182 = vmatpush1.msra.mxu0 %v1010
      %1183 = vmatprep.subr.mxu0 0.0
      %1184 = vmatpush1.msra.mxu0 %v1007
      %1185 = vmatprep.subr.mxu0 0.0
      %1186 = vmatpush1.msra.mxu0 %v1004
      %1187 = vmatprep.subr.mxu0 0.0
      %1188 = vmatpush1.msra.mxu0 %v1001
      %1189 = vmatprep.subr.mxu0 0.0
      %1190 = vmatpush1.msra.mxu0 %v998
      %1191 = vmatprep.subr.mxu0 0.0
      %1192 = vmatpush1.msra.mxu0 %v995
      %1193 = vmatprep.subr.mxu0 0.0
      %1194 = vmatpush1.msra.mxu0 %v992
      %1195 = vmatprep.subr.mxu0 0.0
      %1196 = vmatpush1.msra.mxu0 %v989
      %1197 = vmatprep.subr.mxu0 0.0
      %1198 = vmatpush1.msra.mxu0 %v986
      %1199 = vmatprep.subr.mxu0 0.0
      %1200 = vmatpush2.msra.mxu0 0.0
      %1201 = vmatprep.subr.mxu0 0.0
      %1202 = vmatpush2.msra.mxu0 0.0
      %1203 = vmatprep.subr.mxu0 0.0
      %1204 = vmatpush2.msra.mxu0 0.0
      %1205 = vmatprep.subr.mxu0 0.0
      %1206 = vmatpush2.msra.mxu0 0.0
      %1207 = vmatprep.subr.mxu0 0.0
      %1208 = vmatpush2.msra.mxu0 0.0
      %1209 = vmatprep.subr.mxu0 0.0
      %1210 = vmatpush2.msra.mxu0 %v1064
      %1211 = vmatprep.subr.mxu0 0.0
      %1212 = vmatpush2.msra.mxu0 %v1061
      %1213 = vmatprep.subr.mxu0 0.0
      %1214 = vmatpush2.msra.mxu0 %v1058
      %1215 = vmatprep.subr.mxu0 0.0
      %1216 = vmatpush2.msra.mxu0 %v1055
      %1217 = vmatprep.subr.mxu0 0.0
      %1218 = vmatpush2.msra.mxu0 %v1052
      %1219 = vmatprep.subr.mxu0 0.0
      %1220 = vmatpush2.msra.mxu0 %v1049
      %1221 = vmatprep.subr.mxu0 0.0
      %1222 = vmatpush2.msra.mxu0 %v1046
      %1223 = vmatprep.subr.mxu0 0.0
      %1224 = vmatpush2.msra.mxu0 %v1043
      %1225 = vmatprep.subr.mxu0 0.0
      %1226 = vmatpush2.msra.mxu0 %v1040
      %1227 = vmatprep.subr.mxu0 0.0
      %1228 = vmatpush2.msra.mxu0 %v1037
      %1229 = vmatprep.subr.mxu0 0.0
      %1230 = vmatpush2.msra.mxu0 %v1034
      %1231 = vmatprep.mubr.f32.mxu0 %v1085
      %1232 = vmatmul.mubr.f32.gmra.mxu0 %v980
      %v1233 = vpop.f32.mrf.mxu0
      %v1234 = vadd.f32 %v1076, %v1233
      %v1235 = vpop.f32.mrf.mxu0
      %1236 = vmatprep.mubr.f32.mxu0 %v1088
      %1237 = vmatmul.mubr.f32.gmra.mxu0 %v982
      %v1238 = vpop.f32.mrf.mxu0
      %v1239 = vadd.f32 %v1081, %v1238
      %v1240 = vpop.f32.mrf.mxu0
      %1241 = vdwg.mxu0
      %v1242 = vmax.f32 %v1157, 0.0
      %v1243 = vmax.f32 %v1159, 0.0
      %v1244 = vmax.f32 %v1234, 0.0
      %v1245 = vmax.f32 %v1163, 0.0
      %v1246 = vmax.f32 %v1165, 0.0
      %v1247 = vmax.f32 %v1239, 0.0
      %v1248 = vmul.f32 %v1242, %v314
      %v1249 = vmul.f32 %v1243, %v318
      %v1250 = vmul.f32 %v1244, %v322
      %v1251 = vmul.f32 %v1245, %v314
      %v1252 = vmul.f32 %v1246, %v318
      %v1253 = vmul.f32 %v1247, %v322
      %v1254 = vadd.f32 %v1065, %v1248
      %v1255 = vadd.f32 %v1066, %v1249
      %v1256 = vadd.f32 %v1067, %v1250
      %v1257 = vadd.f32 %v1068, %v1251
      %v1258 = vadd.f32 %v1069, %v1252
      %v1259 = vadd.f32 %v1070, %v1253
      %1260 = vst [vmem:[#allocation2 + $0x8] sm:$0xff] %v1254
      %1261 = vst [vmem:[#allocation2 + $0x10] sm:$0xff] %v1255
      %1262 = vst [vmem:[#allocation2 + $0x18] sm:$0xff] %v1256
      %1263 = vst [vmem:[#allocation2 + $0x30] sm:$0xff] %v1257
      %1264 = vst [vmem:[#allocation2 + $0x38] sm:$0xff] %v1258
      %1265 = vst [vmem:[#allocation2 + $0x40] sm:$0xff] %v1259
      %v1266 = vld [vmem:[#allocation2] sm:$0xff]
      %v1267 = vld [vmem:[#allocation2 + $0x8] sm:$0xff]
      %v1268 = vld [vmem:[#allocation2 + $0x10] sm:$0xff]
      %v1269 = vld [vmem:[#allocation2 + $0x18] sm:$0xff]
      %v1270 = vld [vmem:[#allocation2 + $0x28] sm:$0xff]
      %v1271 = vld [vmem:[#allocation2 + $0x30] sm:$0xff]
      %v1272 = vld [vmem:[#allocation2 + $0x38] sm:$0xff]
      %v1273 = vld [vmem:[#allocation2 + $0x40] sm:$0xff]
      %v1274 = vld [vmem:[#allocation2 + $0x50] sm:$0xff]
      %v1275 = vld [vmem:[#allocation2 + $0x58] sm:$0xff]
      %v1276 = vld [vmem:[#allocation2 + $0x60] sm:$0xff]
      %v1277 = vld [vmem:[#allocation2 + $0x68] sm:$0xff]
      %1290 = vrot.lane.b32.xlu0 %v1266, 19
      %v1291 = vpop.permute.xlu0 %1290
      %1292 = vrot.lane.b32.xlu0 %v1267, 19
      %v1293 = vpop.permute.xlu0 %1292
      %1294 = vrot.lane.b32.xlu0 %v1268, 19
      %v1295 = vpop.permute.xlu0 %1294
      %1296 = vrot.lane.b32.xlu0 %v1269, 19
      %v1297 = vpop.permute.xlu0 %1296
      %1298 = vrot.lane.b32.xlu0 %v1270, 19
      %v1299 = vpop.permute.xlu0 %1298
      %1300 = vrot.lane.b32.xlu0 %v1271, 19
      %v1301 = vpop.permute.xlu0 %1300
      %1302 = vrot.lane.b32.xlu0 %v1272, 19
      %v1303 = vpop.permute.xlu0 %1302
      %1304 = vrot.lane.b32.xlu0 %v1273, 19
      %v1305 = vpop.permute.xlu0 %1304
      %1306 = vrot.lane.b32.xlu0 %v1274, 19
      %v1307 = vpop.permute.xlu0 %1306
      %1308 = vrot.lane.b32.xlu0 %v1275, 19
      %v1309 = vpop.permute.xlu0 %1308
      %1310 = vrot.lane.b32.xlu0 %v1276, 19
      %v1311 = vpop.permute.xlu0 %1310
      %1312 = vrot.lane.b32.xlu0 %v1277, 19
      %v1313 = vpop.permute.xlu0 %1312
      %v1314 = vsel %vm402, %v1291, %v1293
      %v1315 = vsel %vm402, %v1293, %v1295
      %v1316 = vsel %vm402, %v1295, %v1297
      %v1317 = vsel %vm402, %v1299, %v1301
      %v1318 = vsel %vm402, %v1301, %v1303
      %v1319 = vsel %vm402, %v1303, %v1305
      %v1320 = vsel %vm402, %v1307, %v1309
      %v1321 = vsel %vm402, %v1309, %v1311
      %v1322 = vsel %vm402, %v1311, %v1313
      %1332 = vst [vmem:[#allocation3] sm:$0xff] %v1314
      %1333 = vst [vmem:[#allocation3 + $0x8] sm:$0xff] %v1315
      %1334 = vst [vmem:[#allocation3 + $0x10] sm:$0xff] %v1316
      %1335 = vst [vmem:[#allocation3 + $0x18] sm:$0xff] %v1317
      %1336 = vst [vmem:[#allocation3 + $0x20] sm:$0xff] %v1318
      %1337 = vst [vmem:[#allocation3 + $0x28] sm:$0xff] %v1319
      %1338 = vst [vmem:[#allocation3 + $0x30] sm:$0xff] %v1320
      %1339 = vst [vmem:[#allocation3 + $0x38] sm:$0xff] %v1321
      %1340 = vst [vmem:[#allocation3 + $0x40] sm:$0xff] %v1322
      %v1341 = vld [vmem:[#allocation2] sm:$0xff]
      %v1342 = vld [vmem:[#allocation2 + $0x8] sm:$0xff]
      %v1343 = vld [vmem:[#allocation2 + $0x10] sm:$0xff]
      %v1344 = vld [vmem:[#allocation2 + $0x18] sm:$0xff]
      %v1345 = vld [vmem:[#allocation2 + $0x28] sm:$0xff]
      %v1346 = vld [vmem:[#allocation2 + $0x30] sm:$0xff]
      %v1347 = vld [vmem:[#allocation2 + $0x38] sm:$0xff]
      %v1348 = vld [vmem:[#allocation2 + $0x40] sm:$0xff]
      %v1349 = vld [vmem:[#allocation2 + $0x50] sm:$0xff]
      %v1350 = vld [vmem:[#allocation2 + $0x58] sm:$0xff]
      %v1351 = vld [vmem:[#allocation2 + $0x60] sm:$0xff]
      %v1352 = vld [vmem:[#allocation2 + $0x68] sm:$0xff]
      %1365 = vrot.lane.b32.xlu0 %v1341, 18
      %v1366 = vpop.permute.xlu0 %1365
      %1367 = vrot.lane.b32.xlu0 %v1342, 18
      %v1368 = vpop.permute.xlu0 %1367
      %1369 = vrot.lane.b32.xlu0 %v1343, 18
      %v1370 = vpop.permute.xlu0 %1369
      %1371 = vrot.lane.b32.xlu0 %v1344, 18
      %v1372 = vpop.permute.xlu0 %1371
      %1373 = vrot.lane.b32.xlu0 %v1345, 18
      %v1374 = vpop.permute.xlu0 %1373
      %1375 = vrot.lane.b32.xlu0 %v1346, 18
      %v1376 = vpop.permute.xlu0 %1375
      %1377 = vrot.lane.b32.xlu0 %v1347, 18
      %v1378 = vpop.permute.xlu0 %1377
      %1379 = vrot.lane.b32.xlu0 %v1348, 18
      %v1380 = vpop.permute.xlu0 %1379
      %1381 = vrot.lane.b32.xlu0 %v1349, 18
      %v1382 = vpop.permute.xlu0 %1381
      %1383 = vrot.lane.b32.xlu0 %v1350, 18
      %v1384 = vpop.permute.xlu0 %1383
      %1385 = vrot.lane.b32.xlu0 %v1351, 18
      %v1386 = vpop.permute.xlu0 %1385
      %1387 = vrot.lane.b32.xlu0 %v1352, 18
      %v1388 = vpop.permute.xlu0 %1387
      %v1389 = vsel %vm478, %v1366, %v1368
      %v1390 = vsel %vm478, %v1368, %v1370
      %v1391 = vsel %vm478, %v1370, %v1372
      %v1392 = vsel %vm478, %v1374, %v1376
      %v1393 = vsel %vm478, %v1376, %v1378
      %v1394 = vsel %vm478, %v1378, %v1380
      %v1395 = vsel %vm478, %v1382, %v1384
      %v1396 = vsel %vm478, %v1384, %v1386
      %v1397 = vsel %vm478, %v1386, %v1388
      %1407 = vst [vmem:[#allocation3 + $0x48] sm:$0xff] %v1389
      %1408 = vst [vmem:[#allocation3 + $0x50] sm:$0xff] %v1390
      %1409 = vst [vmem:[#allocation3 + $0x58] sm:$0xff] %v1391
      %1410 = vst [vmem:[#allocation3 + $0x60] sm:$0xff] %v1392
      %1411 = vst [vmem:[#allocation3 + $0x68] sm:$0xff] %v1393
      %1412 = vst [vmem:[#allocation3 + $0x70] sm:$0xff] %v1394
      %1413 = vst [vmem:[#allocation3 + $0x78] sm:$0xff] %v1395
      %1414 = vst [vmem:[#allocation3 + $0x80] sm:$0xff] %v1396
      %1415 = vst [vmem:[#allocation3 + $0x88] sm:$0xff] %v1397
      %v1416 = vld [vmem:[#allocation2] sm:$0xff]
      %v1417 = vld [vmem:[#allocation2 + $0x8] sm:$0xff]
      %v1418 = vld [vmem:[#allocation2 + $0x10] sm:$0xff]
      %v1419 = vld [vmem:[#allocation2 + $0x18] sm:$0xff]
      %v1420 = vld [vmem:[#allocation2 + $0x28] sm:$0xff]
      %v1421 = vld [vmem:[#allocation2 + $0x30] sm:$0xff]
      %v1422 = vld [vmem:[#allocation2 + $0x38] sm:$0xff]
      %v1423 = vld [vmem:[#allocation2 + $0x40] sm:$0xff]
      %v1424 = vld [vmem:[#allocation2 + $0x50] sm:$0xff]
      %v1425 = vld [vmem:[#allocation2 + $0x58] sm:$0xff]
      %v1426 = vld [vmem:[#allocation2 + $0x60] sm:$0xff]
      %v1427 = vld [vmem:[#allocation2 + $0x68] sm:$0xff]
      %1440 = vrot.lane.b32.xlu0 %v1416, 17
      %v1441 = vpop.permute.xlu0 %1440
      %1442 = vrot.lane.b32.xlu0 %v1417, 17
      %v1443 = vpop.permute.xlu0 %1442
      %1444 = vrot.lane.b32.xlu0 %v1418, 17
      %v1445 = vpop.permute.xlu0 %1444
      %1446 = vrot.lane.b32.xlu0 %v1419, 17
      %v1447 = vpop.permute.xlu0 %1446
      %1448 = vrot.lane.b32.xlu0 %v1420, 17
      %v1449 = vpop.permute.xlu0 %1448
      %1450 = vrot.lane.b32.xlu0 %v1421, 17
      %v1451 = vpop.permute.xlu0 %1450
      %1452 = vrot.lane.b32.xlu0 %v1422, 17
      %v1453 = vpop.permute.xlu0 %1452
      %1454 = vrot.lane.b32.xlu0 %v1423, 17
      %v1455 = vpop.permute.xlu0 %1454
      %1456 = vrot.lane.b32.xlu0 %v1424, 17
      %v1457 = vpop.permute.xlu0 %1456
      %1458 = vrot.lane.b32.xlu0 %v1425, 17
      %v1459 = vpop.permute.xlu0 %1458
      %1460 = vrot.lane.b32.xlu0 %v1426, 17
      %v1461 = vpop.permute.xlu0 %1460
      %1462 = vrot.lane.b32.xlu0 %v1427, 17
      %v1463 = vpop.permute.xlu0 %1462
      %v1464 = vsel %vm554, %v1441, %v1443
      %v1465 = vsel %vm554, %v1443, %v1445
      %v1466 = vsel %vm554, %v1445, %v1447
      %v1467 = vsel %vm554, %v1449, %v1451
      %v1468 = vsel %vm554, %v1451, %v1453
      %v1469 = vsel %vm554, %v1453, %v1455
      %v1470 = vsel %vm554, %v1457, %v1459
      %v1471 = vsel %vm554, %v1459, %v1461
      %v1472 = vsel %vm554, %v1461, %v1463
      %1482 = vst [vmem:[#allocation3 + $0x90] sm:$0xff] %v1464
      %1483 = vst [vmem:[#allocation3 + $0x98] sm:$0xff] %v1465
      %1484 = vst [vmem:[#allocation3 + $0xa0] sm:$0xff] %v1466
      %1485 = vst [vmem:[#allocation3 + $0xa8] sm:$0xff] %v1467
      %1486 = vst [vmem:[#allocation3 + $0xb0] sm:$0xff] %v1468
      %1487 = vst [vmem:[#allocation3 + $0xb8] sm:$0xff] %v1469
      %1488 = vst [vmem:[#allocation3 + $0xc0] sm:$0xff] %v1470
      %1489 = vst [vmem:[#allocation3 + $0xc8] sm:$0xff] %v1471
      %1490 = vst [vmem:[#allocation3 + $0xd0] sm:$0xff] %v1472
      %v1491 = vld [vmem:[#allocation2] sm:$0xff]
      %v1492 = vld [vmem:[#allocation2 + $0x8] sm:$0xff]
      %v1493 = vld [vmem:[#allocation2 + $0x10] sm:$0xff]
      %v1494 = vld [vmem:[#allocation2 + $0x18] sm:$0xff]
      %v1495 = vld [vmem:[#allocation2 + $0x28] sm:$0xff]
      %v1496 = vld [vmem:[#allocation2 + $0x30] sm:$0xff]
      %v1497 = vld [vmem:[#allocation2 + $0x38] sm:$0xff]
      %v1498 = vld [vmem:[#allocation2 + $0x40] sm:$0xff]
      %v1499 = vld [vmem:[#allocation2 + $0x50] sm:$0xff]
      %v1500 = vld [vmem:[#allocation2 + $0x58] sm:$0xff]
      %v1501 = vld [vmem:[#allocation2 + $0x60] sm:$0xff]
      %v1502 = vld [vmem:[#allocation2 + $0x68] sm:$0xff]
      %1515 = vrot.lane.b32.xlu0 %v1491, 1
      %v1516 = vpop.permute.xlu0 %1515
      %1517 = vrot.lane.b32.xlu0 %v1492, 1
      %v1518 = vpop.permute.xlu0 %1517
      %1519 = vrot.lane.b32.xlu0 %v1493, 1
      %v1520 = vpop.permute.xlu0 %1519
      %1521 = vrot.lane.b32.xlu0 %v1494, 1
      %v1522 = vpop.permute.xlu0 %1521
      %1523 = vrot.lane.b32.xlu0 %v1495, 1
      %v1524 = vpop.permute.xlu0 %1523
      %1525 = vrot.lane.b32.xlu0 %v1496, 1
      %v1526 = vpop.permute.xlu0 %1525
      %1527 = vrot.lane.b32.xlu0 %v1497, 1
      %v1528 = vpop.permute.xlu0 %1527
      %1529 = vrot.lane.b32.xlu0 %v1498, 1
      %v1530 = vpop.permute.xlu0 %1529
      %1531 = vrot.lane.b32.xlu0 %v1499, 1
      %v1532 = vpop.permute.xlu0 %1531
      %1533 = vrot.lane.b32.xlu0 %v1500, 1
      %v1534 = vpop.permute.xlu0 %1533
      %1535 = vrot.lane.b32.xlu0 %v1501, 1
      %v1536 = vpop.permute.xlu0 %1535
      %1537 = vrot.lane.b32.xlu0 %v1502, 1
      %v1538 = vpop.permute.xlu0 %1537
      %v1539 = vsel %vm630, %v1516, %v1518
      %v1540 = vsel %vm630, %v1518, %v1520
      %v1541 = vsel %vm630, %v1520, %v1522
      %v1542 = vsel %vm630, %v1524, %v1526
      %v1543 = vsel %vm630, %v1526, %v1528
      %v1544 = vsel %vm630, %v1528, %v1530
      %v1545 = vsel %vm630, %v1532, %v1534
      %v1546 = vsel %vm630, %v1534, %v1536
      %v1547 = vsel %vm630, %v1536, %v1538
      %1557 = vst [vmem:[#allocation3 + $0xd8] sm:$0xff] %v1539
      %1558 = vst [vmem:[#allocation3 + $0xe0] sm:$0xff] %v1540
      %1559 = vst [vmem:[#allocation3 + $0xe8] sm:$0xff] %v1541
      %1560 = vst [vmem:[#allocation3 + $0xf0] sm:$0xff] %v1542
      %1561 = vst [vmem:[#allocation3 + $0xf8] sm:$0xff] %v1543
      %1562 = vst [vmem:[#allocation3 + $0x100] sm:$0xff] %v1544
      %1563 = vst [vmem:[#allocation3 + $0x108] sm:$0xff] %v1545
      %1564 = vst [vmem:[#allocation3 + $0x110] sm:$0xff] %v1546
      %1565 = vst [vmem:[#allocation3 + $0x118] sm:$0xff] %v1547
      %v1566 = vld [vmem:[#allocation2 + $0x8] sm:$0xff]
      %v1567 = vld [vmem:[#allocation2 + $0x10] sm:$0xff]
      %v1568 = vld [vmem:[#allocation2 + $0x18] sm:$0xff]
      %v1569 = vld [vmem:[#allocation2 + $0x30] sm:$0xff]
      %v1570 = vld [vmem:[#allocation2 + $0x38] sm:$0xff]
      %v1571 = vld [vmem:[#allocation2 + $0x40] sm:$0xff]
      %v1572 = vld [vmem:[#allocation2 + $0x58] sm:$0xff]
      %v1573 = vld [vmem:[#allocation2 + $0x60] sm:$0xff]
      %v1574 = vld [vmem:[#allocation2 + $0x68] sm:$0xff]
      %1575 = vst [vmem:[#allocation3 + $0x120] sm:$0xff] %v1566
      %1576 = vst [vmem:[#allocation3 + $0x128] sm:$0xff] %v1567
      %1577 = vst [vmem:[#allocation3 + $0x130] sm:$0xff] %v1568
      %1578 = vst [vmem:[#allocation3 + $0x138] sm:$0xff] %v1569
      %1579 = vst [vmem:[#allocation3 + $0x140] sm:$0xff] %v1570
      %1580 = vst [vmem:[#allocation3 + $0x148] sm:$0xff] %v1571
      %1581 = vst [vmem:[#allocation3 + $0x150] sm:$0xff] %v1572
      %1582 = vst [vmem:[#allocation3 + $0x158] sm:$0xff] %v1573
      %1583 = vst [vmem:[#allocation3 + $0x160] sm:$0xff] %v1574
      %v1584 = vld [vmem:[#allocation2 + $0x8] sm:$0xff]
      %v1585 = vld [vmem:[#allocation2 + $0x10] sm:$0xff]
      %v1586 = vld [vmem:[#allocation2 + $0x18] sm:$0xff]
      %v1587 = vld [vmem:[#allocation2 + $0x20] sm:$0xff]
      %v1588 = vld [vmem:[#allocation2 + $0x30] sm:$0xff]
      %v1589 = vld [vmem:[#allocation2 + $0x38] sm:$0xff]
      %v1590 = vld [vmem:[#allocation2 + $0x40] sm:$0xff]
      %v1591 = vld [vmem:[#allocation2 + $0x48] sm:$0xff]
      %v1592 = vld [vmem:[#allocation2 + $0x58] sm:$0xff]
      %v1593 = vld [vmem:[#allocation2 + $0x60] sm:$0xff]
      %v1594 = vld [vmem:[#allocation2 + $0x68] sm:$0xff]
      %v1595 = vld [vmem:[#allocation2 + $0x70] sm:$0xff]
      %1608 = vrot.lane.b32.xlu0 %v1584, 127
      %v1609 = vpop.permute.xlu0 %1608
      %1610 = vrot.lane.b32.xlu0 %v1585, 127
      %v1611 = vpop.permute.xlu0 %1610
      %1612 = vrot.lane.b32.xlu0 %v1586, 127
      %v1613 = vpop.permute.xlu0 %1612
      %1614 = vrot.lane.b32.xlu0 %v1587, 127
      %v1615 = vpop.permute.xlu0 %1614
      %1616 = vrot.lane.b32.xlu0 %v1588, 127
      %v1617 = vpop.permute.xlu0 %1616
      %1618 = vrot.lane.b32.xlu0 %v1589, 127
      %v1619 = vpop.permute.xlu0 %1618
      %1620 = vrot.lane.b32.xlu0 %v1590, 127
      %v1621 = vpop.permute.xlu0 %1620
      %1622 = vrot.lane.b32.xlu0 %v1591, 127
      %v1623 = vpop.permute.xlu0 %1622
      %1624 = vrot.lane.b32.xlu0 %v1592, 127
      %v1625 = vpop.permute.xlu0 %1624
      %1626 = vrot.lane.b32.xlu0 %v1593, 127
      %v1627 = vpop.permute.xlu0 %1626
      %1628 = vrot.lane.b32.xlu0 %v1594, 127
      %v1629 = vpop.permute.xlu0 %1628
      %1630 = vrot.lane.b32.xlu0 %v1595, 127
      %v1631 = vpop.permute.xlu0 %1630
      %v1632 = vsel %vm724, %v1609, %v1611
      %v1633 = vsel %vm724, %v1611, %v1613
      %v1634 = vsel %vm724, %v1613, %v1615
      %v1635 = vsel %vm724, %v1617, %v1619
      %v1636 = vsel %vm724, %v1619, %v1621
      %v1637 = vsel %vm724, %v1621, %v1623
      %v1638 = vsel %vm724, %v1625, %v1627
      %v1639 = vsel %vm724, %v1627, %v1629
      %v1640 = vsel %vm724, %v1629, %v1631
      %1650 = vst [vmem:[#allocation3 + $0x168] sm:$0xff] %v1632
      %1651 = vst [vmem:[#allocation3 + $0x170] sm:$0xff] %v1633
      %1652 = vst [vmem:[#allocation3 + $0x178] sm:$0xff] %v1634
      %1653 = vst [vmem:[#allocation3 + $0x180] sm:$0xff] %v1635
      %1654 = vst [vmem:[#allocation3 + $0x188] sm:$0xff] %v1636
      %1655 = vst [vmem:[#allocation3 + $0x190] sm:$0xff] %v1637
      %1656 = vst [vmem:[#allocation3 + $0x198] sm:$0xff] %v1638
      %1657 = vst [vmem:[#allocation3 + $0x1a0] sm:$0xff] %v1639
      %1658 = vst [vmem:[#allocation3 + $0x1a8] sm:$0xff] %v1640
      %v1659 = vld [vmem:[#allocation2 + $0x8] sm:$0xff]
      %v1660 = vld [vmem:[#allocation2 + $0x10] sm:$0xff]
      %v1661 = vld [vmem:[#allocation2 + $0x18] sm:$0xff]
      %v1662 = vld [vmem:[#allocation2 + $0x20] sm:$0xff]
      %v1663 = vld [vmem:[#allocation2 + $0x30] sm:$0xff]
      %v1664 = vld [vmem:[#allocation2 + $0x38] sm:$0xff]
      %v1665 = vld [vmem:[#allocation2 + $0x40] sm:$0xff]
      %v1666 = vld [vmem:[#allocation2 + $0x48] sm:$0xff]
      %v1667 = vld [vmem:[#allocation2 + $0x58] sm:$0xff]
      %v1668 = vld [vmem:[#allocation2 + $0x60] sm:$0xff]
      %v1669 = vld [vmem:[#allocation2 + $0x68] sm:$0xff]
      %v1670 = vld [vmem:[#allocation2 + $0x70] sm:$0xff]
      %1683 = vrot.lane.b32.xlu0 %v1659, 111
      %v1684 = vpop.permute.xlu0 %1683
      %1685 = vrot.lane.b32.xlu0 %v1660, 111
      %v1686 = vpop.permute.xlu0 %1685
      %1687 = vrot.lane.b32.xlu0 %v1661, 111
      %v1688 = vpop.permute.xlu0 %1687
      %1689 = vrot.lane.b32.xlu0 %v1662, 111
      %v1690 = vpop.permute.xlu0 %1689
      %1691 = vrot.lane.b32.xlu0 %v1663, 111
      %v1692 = vpop.permute.xlu0 %1691
      %1693 = vrot.lane.b32.xlu0 %v1664, 111
      %v1694 = vpop.permute.xlu0 %1693
      %1695 = vrot.lane.b32.xlu0 %v1665, 111
      %v1696 = vpop.permute.xlu0 %1695
      %1697 = vrot.lane.b32.xlu0 %v1666, 111
      %v1698 = vpop.permute.xlu0 %1697
      %1699 = vrot.lane.b32.xlu0 %v1667, 111
      %v1700 = vpop.permute.xlu0 %1699
      %1701 = vrot.lane.b32.xlu0 %v1668, 111
      %v1702 = vpop.permute.xlu0 %1701
      %1703 = vrot.lane.b32.xlu0 %v1669, 111
      %v1704 = vpop.permute.xlu0 %1703
      %1705 = vrot.lane.b32.xlu0 %v1670, 111
      %v1706 = vpop.permute.xlu0 %1705
      %v1707 = vsel %vm800, %v1684, %v1686
      %v1708 = vsel %vm800, %v1686, %v1688
      %v1709 = vsel %vm800, %v1688, %v1690
      %v1710 = vsel %vm800, %v1692, %v1694
      %v1711 = vsel %vm800, %v1694, %v1696
      %v1712 = vsel %vm800, %v1696, %v1698
      %v1713 = vsel %vm800, %v1700, %v1702
      %v1714 = vsel %vm800, %v1702, %v1704
      %v1715 = vsel %vm800, %v1704, %v1706
      %1725 = vst [vmem:[#allocation3 + $0x1b0] sm:$0xff] %v1707
      %1726 = vst [vmem:[#allocation3 + $0x1b8] sm:$0xff] %v1708
      %1727 = vst [vmem:[#allocation3 + $0x1c0] sm:$0xff] %v1709
      %1728 = vst [vmem:[#allocation3 + $0x1c8] sm:$0xff] %v1710
      %1729 = vst [vmem:[#allocation3 + $0x1d0] sm:$0xff] %v1711
      %1730 = vst [vmem:[#allocation3 + $0x1d8] sm:$0xff] %v1712
      %1731 = vst [vmem:[#allocation3 + $0x1e0] sm:$0xff] %v1713
      %1732 = vst [vmem:[#allocation3 + $0x1e8] sm:$0xff] %v1714
      %1733 = vst [vmem:[#allocation3 + $0x1f0] sm:$0xff] %v1715
      %v1734 = vld [vmem:[#allocation2 + $0x8] sm:$0xff]
      %v1735 = vld [vmem:[#allocation2 + $0x10] sm:$0xff]
      %v1736 = vld [vmem:[#allocation2 + $0x18] sm:$0xff]
      %v1737 = vld [vmem:[#allocation2 + $0x20] sm:$0xff]
      %v1738 = vld [vmem:[#allocation2 + $0x30] sm:$0xff]
      %v1739 = vld [vmem:[#allocation2 + $0x38] sm:$0xff]
      %v1740 = vld [vmem:[#allocation2 + $0x40] sm:$0xff]
      %v1741 = vld [vmem:[#allocation2 + $0x48] sm:$0xff]
      %v1742 = vld [vmem:[#allocation2 + $0x58] sm:$0xff]
      %v1743 = vld [vmem:[#allocation2 + $0x60] sm:$0xff]
      %v1744 = vld [vmem:[#allocation2 + $0x68] sm:$0xff]
      %v1745 = vld [vmem:[#allocation2 + $0x70] sm:$0xff]
      %1758 = vrot.lane.b32.xlu0 %v1734, 110
      %v1759 = vpop.permute.xlu0 %1758
      %1760 = vrot.lane.b32.xlu0 %v1735, 110
      %v1761 = vpop.permute.xlu0 %1760
      %1762 = vrot.lane.b32.xlu0 %v1736, 110
      %v1763 = vpop.permute.xlu0 %1762
      %1764 = vrot.lane.b32.xlu0 %v1737, 110
      %v1765 = vpop.permute.xlu0 %1764
      %1766 = vrot.lane.b32.xlu0 %v1738, 110
      %v1767 = vpop.permute.xlu0 %1766
      %1768 = vrot.lane.b32.xlu0 %v1739, 110
      %v1769 = vpop.permute.xlu0 %1768
      %1770 = vrot.lane.b32.xlu0 %v1740, 110
      %v1771 = vpop.permute.xlu0 %1770
      %1772 = vrot.lane.b32.xlu0 %v1741, 110
      %v1773 = vpop.permute.xlu0 %1772
      %1774 = vrot.lane.b32.xlu0 %v1742, 110
      %v1775 = vpop.permute.xlu0 %1774
      %1776 = vrot.lane.b32.xlu0 %v1743, 110
      %v1777 = vpop.permute.xlu0 %1776
      %1778 = vrot.lane.b32.xlu0 %v1744, 110
      %v1779 = vpop.permute.xlu0 %1778
      %1780 = vrot.lane.b32.xlu0 %v1745, 110
      %v1781 = vpop.permute.xlu0 %1780
      %v1782 = vsel %vm876, %v1759, %v1761
      %v1783 = vsel %vm876, %v1761, %v1763
      %v1784 = vsel %vm876, %v1763, %v1765
      %v1785 = vsel %vm876, %v1767, %v1769
      %v1786 = vsel %vm876, %v1769, %v1771
      %v1787 = vsel %vm876, %v1771, %v1773
      %v1788 = vsel %vm876, %v1775, %v1777
      %v1789 = vsel %vm876, %v1777, %v1779
      %v1790 = vsel %vm876, %v1779, %v1781
      %1800 = vst [vmem:[#allocation3 + $0x1f8] sm:$0xff] %v1782
      %1801 = vst [vmem:[#allocation3 + $0x200] sm:$0xff] %v1783
      %1802 = vst [vmem:[#allocation3 + $0x208] sm:$0xff] %v1784
      %1803 = vst [vmem:[#allocation3 + $0x210] sm:$0xff] %v1785
      %1804 = vst [vmem:[#allocation3 + $0x218] sm:$0xff] %v1786
      %1805 = vst [vmem:[#allocation3 + $0x220] sm:$0xff] %v1787
      %1806 = vst [vmem:[#allocation3 + $0x228] sm:$0xff] %v1788
      %1807 = vst [vmem:[#allocation3 + $0x230] sm:$0xff] %v1789
      %1808 = vst [vmem:[#allocation3 + $0x238] sm:$0xff] %v1790
      %v1809 = vld [vmem:[#allocation2 + $0x8] sm:$0xff]
      %v1810 = vld [vmem:[#allocation2 + $0x10] sm:$0xff]
      %v1811 = vld [vmem:[#allocation2 + $0x18] sm:$0xff]
      %v1812 = vld [vmem:[#allocation2 + $0x20] sm:$0xff]
      %v1813 = vld [vmem:[#allocation2 + $0x30] sm:$0xff]
      %v1814 = vld [vmem:[#allocation2 + $0x38] sm:$0xff]
      %v1815 = vld [vmem:[#allocation2 + $0x40] sm:$0xff]
      %v1816 = vld [vmem:[#allocation2 + $0x48] sm:$0xff]
      %v1817 = vld [vmem:[#allocation2 + $0x58] sm:$0xff]
      %v1818 = vld [vmem:[#allocation2 + $0x60] sm:$0xff]
      %v1819 = vld [vmem:[#allocation2 + $0x68] sm:$0xff]
      %v1820 = vld [vmem:[#allocation2 + $0x70] sm:$0xff]
      %1833 = vrot.lane.b32.xlu0 %v1809, 109
      %v1834 = vpop.permute.xlu0 %1833
      %1835 = vrot.lane.b32.xlu0 %v1810, 109
      %v1836 = vpop.permute.xlu0 %1835
      %1837 = vrot.lane.b32.xlu0 %v1811, 109
      %v1838 = vpop.permute.xlu0 %1837
      %1839 = vrot.lane.b32.xlu0 %v1812, 109
      %v1840 = vpop.permute.xlu0 %1839
      %1841 = vrot.lane.b32.xlu0 %v1813, 109
      %v1842 = vpop.permute.xlu0 %1841
      %1843 = vrot.lane.b32.xlu0 %v1814, 109
      %v1844 = vpop.permute.xlu0 %1843
      %1845 = vrot.lane.b32.xlu0 %v1815, 109
      %v1846 = vpop.permute.xlu0 %1845
      %1847 = vrot.lane.b32.xlu0 %v1816, 109
      %v1848 = vpop.permute.xlu0 %1847
      %1849 = vrot.lane.b32.xlu0 %v1817, 109
      %v1850 = vpop.permute.xlu0 %1849
      %1851 = vrot.lane.b32.xlu0 %v1818, 109
      %v1852 = vpop.permute.xlu0 %1851
      %1853 = vrot.lane.b32.xlu0 %v1819, 109
      %v1854 = vpop.permute.xlu0 %1853
      %1855 = vrot.lane.b32.xlu0 %v1820, 109
      %v1856 = vpop.permute.xlu0 %1855
      %v1857 = vsel %vm952, %v1834, %v1836
      %v1858 = vsel %vm952, %v1836, %v1838
      %v1859 = vsel %vm952, %v1838, %v1840
      %v1860 = vsel %vm952, %v1842, %v1844
      %v1861 = vsel %vm952, %v1844, %v1846
      %v1862 = vsel %vm952, %v1846, %v1848
      %v1863 = vsel %vm952, %v1850, %v1852
      %v1864 = vsel %vm952, %v1852, %v1854
      %v1865 = vsel %vm952, %v1854, %v1856
      %1875 = vst [vmem:[#allocation3 + $0x240] sm:$0xff] %v1857
      %1876 = vst [vmem:[#allocation3 + $0x248] sm:$0xff] %v1858
      %1877 = vst [vmem:[#allocation3 + $0x250] sm:$0xff] %v1859
      %1878 = vst [vmem:[#allocation3 + $0x258] sm:$0xff] %v1860
      %1879 = vst [vmem:[#allocation3 + $0x260] sm:$0xff] %v1861
      %1880 = vst [vmem:[#allocation3 + $0x268] sm:$0xff] %v1862
      %1881 = vst [vmem:[#allocation3 + $0x270] sm:$0xff] %v1863
      %1882 = vst [vmem:[#allocation3 + $0x278] sm:$0xff] %v1864
      %1883 = vst [vmem:[#allocation3 + $0x280] sm:$0xff] %v1865
      %v1884 = vld [vmem:[%s5] sm:$0xff]
      %v1885 = vld [vmem:[%s5 + $0x8] sm:$0xff]
      %v1886 = vld [vmem:[#allocation3] sm:$0xff]
      %v1887 = vld [vmem:[#allocation3 + $0x8] sm:$0xff]
      %v1888 = vld [vmem:[#allocation3 + $0x10] sm:$0xff]
      %v1889 = vld [vmem:[#allocation3 + $0x18] sm:$0xff]
      %v1890 = vld [vmem:[#allocation3 + $0x20] sm:$0xff]
      %v1891 = vld [vmem:[#allocation3 + $0x28] sm:$0xff]
      %v1892 = vld [vmem:[#allocation3 + $0x30] sm:$0xff]
      %v1893 = vld [vmem:[#allocation3 + $0x38] sm:$0xff]
      %v1894 = vld [vmem:[#allocation3 + $0x40] sm:$0xff]
      %v1895 = vld [vmem:[#allocation3 + $0x48] sm:$0xff]
      %v1896 = vld [vmem:[#allocation3 + $0x50] sm:$0xff]
      %v1897 = vld [vmem:[#allocation3 + $0x58] sm:$0xff]
      %v1898 = vld [vmem:[#allocation3 + $0x60] sm:$0xff]
      %v1899 = vld [vmem:[#allocation3 + $0x68] sm:$0xff]
      %v1900 = vld [vmem:[#allocation3 + $0x70] sm:$0xff]
      %v1901 = vld [vmem:[#allocation3 + $0x78] sm:$0xff]
      %v1902 = vld [vmem:[#allocation3 + $0x80] sm:$0xff]
      %v1903 = vld [vmem:[#allocation3 + $0x88] sm:$0xff]
      %v1904 = vld [vmem:[#allocation3 + $0x90] sm:$0xff]
      %v1905 = vld [vmem:[#allocation3 + $0x98] sm:$0xff]
      %v1906 = vld [vmem:[#allocation3 + $0xa0] sm:$0xff]
      %v1907 = vld [vmem:[#allocation3 + $0xa8] sm:$0xff]
      %v1908 = vld [vmem:[#allocation3 + $0xb0] sm:$0xff]
      %v1909 = vld [vmem:[#allocation3 + $0xb8] sm:$0xff]
      %v1910 = vld [vmem:[#allocation3 + $0xc0] sm:$0xff]
      %v1911 = vld [vmem:[#allocation3 + $0xc8] sm:$0xff]
      %v1912 = vld [vmem:[#allocation3 + $0xd0] sm:$0xff]
      %v1913 = vld [vmem:[#allocation3 + $0xd8] sm:$0xff]
      %v1914 = vld [vmem:[#allocation3 + $0xe0] sm:$0xff]
      %v1915 = vld [vmem:[#allocation3 + $0xe8] sm:$0xff]
      %v1916 = vld [vmem:[#allocation3 + $0xf0] sm:$0xff]
      %v1917 = vld [vmem:[#allocation3 + $0xf8] sm:$0xff]
      %v1918 = vld [vmem:[#allocation3 + $0x100] sm:$0xff]
      %v1919 = vld [vmem:[#allocation3 + $0x108] sm:$0xff]
      %v1920 = vld [vmem:[#allocation3 + $0x110] sm:$0xff]
      %v1921 = vld [vmem:[#allocation3 + $0x118] sm:$0xff]
      %v1922 = vld [vmem:[#allocation3 + $0x120] sm:$0xff]
      %v1923 = vld [vmem:[#allocation3 + $0x128] sm:$0xff]
      %v1924 = vld [vmem:[#allocation3 + $0x130] sm:$0xff]
      %v1925 = vld [vmem:[#allocation3 + $0x138] sm:$0xff]
      %v1926 = vld [vmem:[#allocation3 + $0x140] sm:$0xff]
      %v1927 = vld [vmem:[#allocation3 + $0x148] sm:$0xff]
      %v1928 = vld [vmem:[#allocation3 + $0x150] sm:$0xff]
      %v1929 = vld [vmem:[#allocation3 + $0x158] sm:$0xff]
      %v1930 = vld [vmem:[#allocation3 + $0x160] sm:$0xff]
      %v1931 = vld [vmem:[#allocation3 + $0x168] sm:$0xff]
      %v1932 = vld [vmem:[#allocation3 + $0x170] sm:$0xff]
      %v1933 = vld [vmem:[#allocation3 + $0x178] sm:$0xff]
      %v1934 = vld [vmem:[#allocation3 + $0x180] sm:$0xff]
      %v1935 = vld [vmem:[#allocation3 + $0x188] sm:$0xff]
      %v1936 = vld [vmem:[#allocation3 + $0x190] sm:$0xff]
      %v1937 = vld [vmem:[#allocation3 + $0x198] sm:$0xff]
      %v1938 = vld [vmem:[#allocation3 + $0x1a0] sm:$0xff]
      %v1939 = vld [vmem:[#allocation3 + $0x1a8] sm:$0xff]
      %v1940 = vld [vmem:[#allocation3 + $0x1b0] sm:$0xff]
      %v1941 = vld [vmem:[#allocation3 + $0x1b8] sm:$0xff]
      %v1942 = vld [vmem:[#allocation3 + $0x1c0] sm:$0xff]
      %v1943 = vld [vmem:[#allocation3 + $0x1c8] sm:$0xff]
      %v1944 = vld [vmem:[#allocation3 + $0x1d0] sm:$0xff]
      %v1945 = vld [vmem:[#allocation3 + $0x1d8] sm:$0xff]
      %v1946 = vld [vmem:[#allocation3 + $0x1e0] sm:$0xff]
      %v1947 = vld [vmem:[#allocation3 + $0x1e8] sm:$0xff]
      %v1948 = vld [vmem:[#allocation3 + $0x1f0] sm:$0xff]
      %v1949 = vld [vmem:[#allocation3 + $0x1f8] sm:$0xff]
      %v1950 = vld [vmem:[#allocation3 + $0x200] sm:$0xff]
      %v1951 = vld [vmem:[#allocation3 + $0x208] sm:$0xff]
      %v1952 = vld [vmem:[#allocation3 + $0x210] sm:$0xff]
      %v1953 = vld [vmem:[#allocation3 + $0x218] sm:$0xff]
      %v1954 = vld [vmem:[#allocation3 + $0x220] sm:$0xff]
      %v1955 = vld [vmem:[#allocation3 + $0x228] sm:$0xff]
      %v1956 = vld [vmem:[#allocation3 + $0x230] sm:$0xff]
      %v1957 = vld [vmem:[#allocation3 + $0x238] sm:$0xff]
      %v1958 = vld [vmem:[#allocation3 + $0x240] sm:$0xff]
      %v1959 = vld [vmem:[#allocation3 + $0x248] sm:$0xff]
      %v1960 = vld [vmem:[#allocation3 + $0x250] sm:$0xff]
      %v1961 = vld [vmem:[#allocation3 + $0x258] sm:$0xff]
      %v1962 = vld [vmem:[#allocation3 + $0x260] sm:$0xff]
      %v1963 = vld [vmem:[#allocation3 + $0x268] sm:$0xff]
      %v1964 = vld [vmem:[#allocation3 + $0x270] sm:$0xff]
      %v1965 = vld [vmem:[#allocation3 + $0x278] sm:$0xff]
      %v1966 = vld [vmem:[#allocation3 + $0x280] sm:$0xff]
      %v1968 = vsel %vm1083, %v1885, 0
      %1970 = vmatprep.subr.mxu0 %v1932
      %1971 = vmatpush1.msra.mxu0 %v1931
      %1972 = vmatprep.subr.mxu0 %v1929
      %1973 = vmatpush1.msra.mxu0 %v1928
      %1974 = vmatprep.subr.mxu0 %v1926
      %1975 = vmatpush1.msra.mxu0 %v1925
      %1976 = vmatprep.subr.mxu0 %v1923
      %1977 = vmatpush1.msra.mxu0 %v1922
      %1978 = vmatprep.subr.mxu0 %v1920
      %1979 = vmatpush1.msra.mxu0 %v1919
      %1980 = vmatprep.subr.mxu0 %v1917
      %1981 = vmatpush1.msra.mxu0 %v1916
      %1982 = vmatprep.subr.mxu0 %v1914
      %1983 = vmatpush1.msra.mxu0 %v1913
      %1984 = vmatprep.subr.mxu0 %v1911
      %1985 = vmatpush1.msra.mxu0 %v1910
      %1986 = vmatprep.subr.mxu0 %v1908
      %1987 = vmatpush1.msra.mxu0 %v1907
      %1988 = vmatprep.subr.mxu0 %v1905
      %1989 = vmatpush1.msra.mxu0 %v1904
      %1990 = vmatprep.subr.mxu0 %v1902
      %1991 = vmatpush1.msra.mxu0 %v1901
      %1992 = vmatprep.subr.mxu0 %v1899
      %1993 = vmatpush1.msra.mxu0 %v1898
      %1994 = vmatprep.subr.mxu0 %v1896
      %1995 = vmatpush1.msra.mxu0 %v1895
      %1996 = vmatprep.subr.mxu0 %v1893
      %1997 = vmatpush1.msra.mxu0 %v1892
      %1998 = vmatprep.subr.mxu0 %v1890
      %1999 = vmatpush1.msra.mxu0 %v1889
      %2000 = vmatprep.subr.mxu0 %v1887
      %2001 = vmatpush1.msra.mxu0 %v1886
      %2002 = vmatprep.subr.mxu0 0.0
      %2003 = vmatpush2.msra.mxu0 0.0
      %2004 = vmatprep.subr.mxu0 0.0
      %2005 = vmatpush2.msra.mxu0 0.0
      %2006 = vmatprep.subr.mxu0 0.0
      %2007 = vmatpush2.msra.mxu0 0.0
      %2008 = vmatprep.subr.mxu0 0.0
      %2009 = vmatpush2.msra.mxu0 0.0
      %2010 = vmatprep.subr.mxu0 0.0
      %2011 = vmatpush2.msra.mxu0 0.0
      %2012 = vmatprep.subr.mxu0 %v1965
      %2013 = vmatpush2.msra.mxu0 %v1964
      %2014 = vmatprep.subr.mxu0 %v1962
      %2015 = vmatpush2.msra.mxu0 %v1961
      %2016 = vmatprep.subr.mxu0 %v1959
      %2017 = vmatpush2.msra.mxu0 %v1958
      %2018 = vmatprep.subr.mxu0 %v1956
      %2019 = vmatpush2.msra.mxu0 %v1955
      %2020 = vmatprep.subr.mxu0 %v1953
      %2021 = vmatpush2.msra.mxu0 %v1952
      %2022 = vmatprep.subr.mxu0 %v1950
      %2023 = vmatpush2.msra.mxu0 %v1949
      %2024 = vmatprep.subr.mxu0 %v1947
      %2025 = vmatpush2.msra.mxu0 %v1946
      %2026 = vmatprep.subr.mxu0 %v1944
      %2027 = vmatpush2.msra.mxu0 %v1943
      %2028 = vmatprep.subr.mxu0 %v1941
      %2029 = vmatpush2.msra.mxu0 %v1940
      %2030 = vmatprep.subr.mxu0 %v1938
      %2031 = vmatpush2.msra.mxu0 %v1937
      %2032 = vmatprep.subr.mxu0 %v1935
      %2033 = vmatpush2.msra.mxu0 %v1934
      %2034 = vmatprep.mubr.f32.mxu0 %v1968
      %2035 = vmatmul.mubr.f32.gmra.mxu0 %v1884
      %v2036 = vpop.f32.mrf.mxu0
      %v2037 = vadd.f32 0.0, %v2036
      %v2038 = vpop.f32.mrf.mxu0
      %v2039 = vadd.f32 0.0, %v2038
      %2040 = vdwg.mxu0
      %2041 = vmatprep.subr.mxu0 0.0
      %2042 = vmatpush1.msra.mxu0 %v1933
      %2043 = vmatprep.subr.mxu0 0.0
      %2044 = vmatpush1.msra.mxu0 %v1930
      %2045 = vmatprep.subr.mxu0 0.0
      %2046 = vmatpush1.msra.mxu0 %v1927
      %2047 = vmatprep.subr.mxu0 0.0
      %2048 = vmatpush1.msra.mxu0 %v1924
      %2049 = vmatprep.subr.mxu0 0.0
      %2050 = vmatpush1.msra.mxu0 %v1921
      %2051 = vmatprep.subr.mxu0 0.0
      %2052 = vmatpush1.msra.mxu0 %v1918
      %2053 = vmatprep.subr.mxu0 0.0
      %2054 = vmatpush1.msra.mxu0 %v1915
      %2055 = vmatprep.subr.mxu0 0.0
      %2056 = vmatpush1.msra.mxu0 %v1912
      %2057 = vmatprep.subr.mxu0 0.0
      %2058 = vmatpush1.msra.mxu0 %v1909
      %2059 = vmatprep.subr.mxu0 0.0
      %2060 = vmatpush1.msra.mxu0 %v1906
      %2061 = vmatprep.subr.mxu0 0.0
      %2062 = vmatpush1.msra.mxu0 %v1903
      %2063 = vmatprep.subr.mxu0 0.0
      %2064 = vmatpush1.msra.mxu0 %v1900
      %2065 = vmatprep.subr.mxu0 0.0
      %2066 = vmatpush1.msra.mxu0 %v1897
      %2067 = vmatprep.subr.mxu0 0.0
      %2068 = vmatpush1.msra.mxu0 %v1894
      %2069 = vmatprep.subr.mxu0 0.0
      %2070 = vmatpush1.msra.mxu0 %v1891
      %2071 = vmatprep.subr.mxu0 0.0
      %2072 = vmatpush1.msra.mxu0 %v1888
      %2073 = vmatprep.subr.mxu0 0.0
      %2074 = vmatpush2.msra.mxu0 0.0
      %2075 = vmatprep.subr.mxu0 0.0
      %2076 = vmatpush2.msra.mxu0 0.0
      %2077 = vmatprep.subr.mxu0 0.0
      %2078 = vmatpush2.msra.mxu0 0.0
      %2079 = vmatprep.subr.mxu0 0.0
      %2080 = vmatpush2.msra.mxu0 0.0
      %2081 = vmatprep.subr.mxu0 0.0
      %2082 = vmatpush2.msra.mxu0 0.0
      %2083 = vmatprep.subr.mxu0 0.0
      %2084 = vmatpush2.msra.mxu0 %v1966
      %2085 = vmatprep.subr.mxu0 0.0
      %2086 = vmatpush2.msra.mxu0 %v1963
      %2087 = vmatprep.subr.mxu0 0.0
      %2088 = vmatpush2.msra.mxu0 %v1960
      %2089 = vmatprep.subr.mxu0 0.0
      %2090 = vmatpush2.msra.mxu0 %v1957
      %2091 = vmatprep.subr.mxu0 0.0
      %2092 = vmatpush2.msra.mxu0 %v1954
      %2093 = vmatprep.subr.mxu0 0.0
      %2094 = vmatpush2.msra.mxu0 %v1951
      %2095 = vmatprep.subr.mxu0 0.0
      %2096 = vmatpush2.msra.mxu0 %v1948
      %2097 = vmatprep.subr.mxu0 0.0
      %2098 = vmatpush2.msra.mxu0 %v1945
      %2099 = vmatprep.subr.mxu0 0.0
      %2100 = vmatpush2.msra.mxu0 %v1942
      %2101 = vmatprep.subr.mxu0 0.0
      %2102 = vmatpush2.msra.mxu0 %v1939
      %2103 = vmatprep.subr.mxu0 0.0
      %2104 = vmatpush2.msra.mxu0 %v1936
      %2105 = vmatprep.mubr.f32.mxu0 %v1968
      %2106 = vmatmul.mubr.f32.gmra.mxu0 %v1884
      %v2107 = vpop.f32.mrf.mxu0
      %v2108 = vadd.f32 0.0, %v2107
      %v2109 = vpop.f32.mrf.mxu0
      %2110 = vdwg.mxu0
      %v2111 = vld [vmem:[%s351] ss:$8 sm:$0x7]
      %v2112 = vld [vmem:[%s6] sm:$0x1]
      %2114 = vset.pattern.permute.xlu0 0
      %2115 = vperm.xlu0 %2114, %v2112
      %v2116 = vpop.permute.xlu0 %2115
      %v2118 = vlaneseq
      %v2119 = vshrl.u32 %v2118, 7
      %v2120 = vsub.s32 0, %v2119
      %v2121 = vrot.slane %v2116, %v2120
      %v2122 = vadd.f32 %v2037, %v2121
      %v2123 = vadd.f32 %v2039, %v2121
      %v2124 = vadd.f32 %v2108, %v2121
      %v2125 = vmul.f32 %v2122, %v314
      %v2126 = vmul.f32 %v2123, %v318
      %v2127 = vmul.f32 %v2124, %v322
      %v2131 = vcombine.low %v2125, %v2126
      %v2133 = vunpack.c.l.s4 1966171168
      %v2134 = vunpack.c.0.s8 %v2133
      %v2135 = vlaneseq
      %v2136 = vshrl.u32 %v2135, 7
      %v2137 = vsub.s32 %v2134, %v2136
      %v2138 = vrot.slane %v2131, %v2137
      %v2140 = vunpack.c.l.s4 1966171168
      %v2141 = vunpack.c.0.s8 %v2140
      %v2142 = vlaneseq
      %v2143 = vshrl.u32 %v2142, 7
      %v2144 = vsub.s32 %v2141, %v2143
      %v2145 = vrot.slane %v2127, %v2144
      %v2146 = vcombine.low %v2138, %v2145
      %v2148 = vunpack.c.l.s4 1966171168
      %v2149 = vunpack.c.0.s8 %v2148
      %v2150 = vlaneseq
      %v2151 = vshrl.u32 %v2150, 7
      %v2152 = vsub.s32 %v2149, %v2151
      %v2153 = vrot.slane %v2146, %v2152
      %v2155 = vadd.f32 %v2111, %v2153
      %2156 = vst.msk [vmem:[%s351] ss:$8 sm:$0x7] %vm350, %v2155
      %2157 = vst.msk [vmem:[%s351] ss:$8 sm:$0x0] %vm350, %v2155
      %v2158 = vld [vmem:[#allocation2] sm:$0xff]
      %v2159 = vld [vmem:[#allocation2 + $0x8] sm:$0xff]
      %v2160 = vld [vmem:[#allocation2 + $0x10] sm:$0xff]
      %v2161 = vld [vmem:[#allocation2 + $0x18] sm:$0xff]
      %v2162 = vld [vmem:[#allocation2 + $0x28] sm:$0xff]
      %v2163 = vld [vmem:[#allocation2 + $0x30] sm:$0xff]
      %v2164 = vld [vmem:[#allocation2 + $0x38] sm:$0xff]
      %v2165 = vld [vmem:[#allocation2 + $0x40] sm:$0xff]
      %v2166 = vld [vmem:[#allocation2 + $0x50] sm:$0xff]
      %v2167 = vld [vmem:[#allocation2 + $0x58] sm:$0xff]
      %v2168 = vld [vmem:[#allocation2 + $0x60] sm:$0xff]
      %v2169 = vld [vmem:[#allocation2 + $0x68] sm:$0xff]
      %2182 = vrot.lane.b32.xlu0 %v2158, 19
      %v2183 = vpop.permute.xlu0 %2182
      %2184 = vrot.lane.b32.xlu0 %v2159, 19
      %v2185 = vpop.permute.xlu0 %2184
      %2186 = vrot.lane.b32.xlu0 %v2160, 19
      %v2187 = vpop.permute.xlu0 %2186
      %2188 = vrot.lane.b32.xlu0 %v2161, 19
      %v2189 = vpop.permute.xlu0 %2188
      %2190 = vrot.lane.b32.xlu0 %v2162, 19
      %v2191 = vpop.permute.xlu0 %2190
      %2192 = vrot.lane.b32.xlu0 %v2163, 19
      %v2193 = vpop.permute.xlu0 %2192
      %2194 = vrot.lane.b32.xlu0 %v2164, 19
      %v2195 = vpop.permute.xlu0 %2194
      %2196 = vrot.lane.b32.xlu0 %v2165, 19
      %v2197 = vpop.permute.xlu0 %2196
      %2198 = vrot.lane.b32.xlu0 %v2166, 19
      %v2199 = vpop.permute.xlu0 %2198
      %2200 = vrot.lane.b32.xlu0 %v2167, 19
      %v2201 = vpop.permute.xlu0 %2200
      %2202 = vrot.lane.b32.xlu0 %v2168, 19
      %v2203 = vpop.permute.xlu0 %2202
      %2204 = vrot.lane.b32.xlu0 %v2169, 19
      %v2205 = vpop.permute.xlu0 %2204
      %v2206 = vsel %vm402, %v2183, %v2185
      %v2207 = vsel %vm402, %v2185, %v2187
      %v2208 = vsel %vm402, %v2187, %v2189
      %v2209 = vsel %vm402, %v2191, %v2193
      %v2210 = vsel %vm402, %v2193, %v2195
      %v2211 = vsel %vm402, %v2195, %v2197
      %v2212 = vsel %vm402, %v2199, %v2201
      %v2213 = vsel %vm402, %v2201, %v2203
      %v2214 = vsel %vm402, %v2203, %v2205
      %2224 = vst [vmem:[#allocation3] sm:$0xff] %v2206
      %2225 = vst [vmem:[#allocation3 + $0x8] sm:$0xff] %v2207
      %2226 = vst [vmem:[#allocation3 + $0x10] sm:$0xff] %v2208
      %2227 = vst [vmem:[#allocation3 + $0x18] sm:$0xff] %v2209
      %2228 = vst [vmem:[#allocation3 + $0x20] sm:$0xff] %v2210
      %2229 = vst [vmem:[#allocation3 + $0x28] sm:$0xff] %v2211
      %2230 = vst [vmem:[#allocation3 + $0x30] sm:$0xff] %v2212
      %2231 = vst [vmem:[#allocation3 + $0x38] sm:$0xff] %v2213
      %2232 = vst [vmem:[#allocation3 + $0x40] sm:$0xff] %v2214
      %v2233 = vld [vmem:[#allocation2] sm:$0xff]
      %v2234 = vld [vmem:[#allocation2 + $0x8] sm:$0xff]
      %v2235 = vld [vmem:[#allocation2 + $0x10] sm:$0xff]
      %v2236 = vld [vmem:[#allocation2 + $0x18] sm:$0xff]
      %v2237 = vld [vmem:[#allocation2 + $0x28] sm:$0xff]
      %v2238 = vld [vmem:[#allocation2 + $0x30] sm:$0xff]
      %v2239 = vld [vmem:[#allocation2 + $0x38] sm:$0xff]
      %v2240 = vld [vmem:[#allocation2 + $0x40] sm:$0xff]
      %v2241 = vld [vmem:[#allocation2 + $0x50] sm:$0xff]
      %v2242 = vld [vmem:[#allocation2 + $0x58] sm:$0xff]
      %v2243 = vld [vmem:[#allocation2 + $0x60] sm:$0xff]
      %v2244 = vld [vmem:[#allocation2 + $0x68] sm:$0xff]
      %2257 = vrot.lane.b32.xlu0 %v2233, 18
      %v2258 = vpop.permute.xlu0 %2257
      %2259 = vrot.lane.b32.xlu0 %v2234, 18
      %v2260 = vpop.permute.xlu0 %2259
      %2261 = vrot.lane.b32.xlu0 %v2235, 18
      %v2262 = vpop.permute.xlu0 %2261
      %2263 = vrot.lane.b32.xlu0 %v2236, 18
      %v2264 = vpop.permute.xlu0 %2263
      %2265 = vrot.lane.b32.xlu0 %v2237, 18
      %v2266 = vpop.permute.xlu0 %2265
      %2267 = vrot.lane.b32.xlu0 %v2238, 18
      %v2268 = vpop.permute.xlu0 %2267
      %2269 = vrot.lane.b32.xlu0 %v2239, 18
      %v2270 = vpop.permute.xlu0 %2269
      %2271 = vrot.lane.b32.xlu0 %v2240, 18
      %v2272 = vpop.permute.xlu0 %2271
      %2273 = vrot.lane.b32.xlu0 %v2241, 18
      %v2274 = vpop.permute.xlu0 %2273
      %2275 = vrot.lane.b32.xlu0 %v2242, 18
      %v2276 = vpop.permute.xlu0 %2275
      %2277 = vrot.lane.b32.xlu0 %v2243, 18
      %v2278 = vpop.permute.xlu0 %2277
      %2279 = vrot.lane.b32.xlu0 %v2244, 18
      %v2280 = vpop.permute.xlu0 %2279
      %v2281 = vsel %vm478, %v2258, %v2260
      %v2282 = vsel %vm478, %v2260, %v2262
      %v2283 = vsel %vm478, %v2262, %v2264
      %v2284 = vsel %vm478, %v2266, %v2268
      %v2285 = vsel %vm478, %v2268, %v2270
      %v2286 = vsel %vm478, %v2270, %v2272
      %v2287 = vsel %vm478, %v2274, %v2276
      %v2288 = vsel %vm478, %v2276, %v2278
      %v2289 = vsel %vm478, %v2278, %v2280
      %2299 = vst [vmem:[#allocation3 + $0x48] sm:$0xff] %v2281
      %2300 = vst [vmem:[#allocation3 + $0x50] sm:$0xff] %v2282
      %2301 = vst [vmem:[#allocation3 + $0x58] sm:$0xff] %v2283
      %2302 = vst [vmem:[#allocation3 + $0x60] sm:$0xff] %v2284
      %2303 = vst [vmem:[#allocation3 + $0x68] sm:$0xff] %v2285
      %2304 = vst [vmem:[#allocation3 + $0x70] sm:$0xff] %v2286
      %2305 = vst [vmem:[#allocation3 + $0x78] sm:$0xff] %v2287
      %2306 = vst [vmem:[#allocation3 + $0x80] sm:$0xff] %v2288
      %2307 = vst [vmem:[#allocation3 + $0x88] sm:$0xff] %v2289
      %v2308 = vld [vmem:[#allocation2] sm:$0xff]
      %v2309 = vld [vmem:[#allocation2 + $0x8] sm:$0xff]
      %v2310 = vld [vmem:[#allocation2 + $0x10] sm:$0xff]
      %v2311 = vld [vmem:[#allocation2 + $0x18] sm:$0xff]
      %v2312 = vld [vmem:[#allocation2 + $0x28] sm:$0xff]
      %v2313 = vld [vmem:[#allocation2 + $0x30] sm:$0xff]
      %v2314 = vld [vmem:[#allocation2 + $0x38] sm:$0xff]
      %v2315 = vld [vmem:[#allocation2 + $0x40] sm:$0xff]
      %v2316 = vld [vmem:[#allocation2 + $0x50] sm:$0xff]
      %v2317 = vld [vmem:[#allocation2 + $0x58] sm:$0xff]
      %v2318 = vld [vmem:[#allocation2 + $0x60] sm:$0xff]
      %v2319 = vld [vmem:[#allocation2 + $0x68] sm:$0xff]
      %2332 = vrot.lane.b32.xlu0 %v2308, 17
      %v2333 = vpop.permute.xlu0 %2332
      %2334 = vrot.lane.b32.xlu0 %v2309, 17
      %v2335 = vpop.permute.xlu0 %2334
      %2336 = vrot.lane.b32.xlu0 %v2310, 17
      %v2337 = vpop.permute.xlu0 %2336
      %2338 = vrot.lane.b32.xlu0 %v2311, 17
      %v2339 = vpop.permute.xlu0 %2338
      %2340 = vrot.lane.b32.xlu0 %v2312, 17
      %v2341 = vpop.permute.xlu0 %2340
      %2342 = vrot.lane.b32.xlu0 %v2313, 17
      %v2343 = vpop.permute.xlu0 %2342
      %2344 = vrot.lane.b32.xlu0 %v2314, 17
      %v2345 = vpop.permute.xlu0 %2344
      %2346 = vrot.lane.b32.xlu0 %v2315, 17
      %v2347 = vpop.permute.xlu0 %2346
      %2348 = vrot.lane.b32.xlu0 %v2316, 17
      %v2349 = vpop.permute.xlu0 %2348
      %2350 = vrot.lane.b32.xlu0 %v2317, 17
      %v2351 = vpop.permute.xlu0 %2350
      %2352 = vrot.lane.b32.xlu0 %v2318, 17
      %v2353 = vpop.permute.xlu0 %2352
      %2354 = vrot.lane.b32.xlu0 %v2319, 17
      %v2355 = vpop.permute.xlu0 %2354
      %v2356 = vsel %vm554, %v2333, %v2335
      %v2357 = vsel %vm554, %v2335, %v2337
      %v2358 = vsel %vm554, %v2337, %v2339
      %v2359 = vsel %vm554, %v2341, %v2343
      %v2360 = vsel %vm554, %v2343, %v2345
      %v2361 = vsel %vm554, %v2345, %v2347
      %v2362 = vsel %vm554, %v2349, %v2351
      %v2363 = vsel %vm554, %v2351, %v2353
      %v2364 = vsel %vm554, %v2353, %v2355
      %2374 = vst [vmem:[#allocation3 + $0x90] sm:$0xff] %v2356
      %2375 = vst [vmem:[#allocation3 + $0x98] sm:$0xff] %v2357
      %2376 = vst [vmem:[#allocation3 + $0xa0] sm:$0xff] %v2358
      %2377 = vst [vmem:[#allocation3 + $0xa8] sm:$0xff] %v2359
      %2378 = vst [vmem:[#allocation3 + $0xb0] sm:$0xff] %v2360
      %2379 = vst [vmem:[#allocation3 + $0xb8] sm:$0xff] %v2361
      %2380 = vst [vmem:[#allocation3 + $0xc0] sm:$0xff] %v2362
      %2381 = vst [vmem:[#allocation3 + $0xc8] sm:$0xff] %v2363
      %2382 = vst [vmem:[#allocation3 + $0xd0] sm:$0xff] %v2364
      %v2383 = vld [vmem:[#allocation2] sm:$0xff]
      %v2384 = vld [vmem:[#allocation2 + $0x8] sm:$0xff]
      %v2385 = vld [vmem:[#allocation2 + $0x10] sm:$0xff]
      %v2386 = vld [vmem:[#allocation2 + $0x18] sm:$0xff]
      %v2387 = vld [vmem:[#allocation2 + $0x28] sm:$0xff]
      %v2388 = vld [vmem:[#allocation2 + $0x30] sm:$0xff]
      %v2389 = vld [vmem:[#allocation2 + $0x38] sm:$0xff]
      %v2390 = vld [vmem:[#allocation2 + $0x40] sm:$0xff]
      %v2391 = vld [vmem:[#allocation2 + $0x50] sm:$0xff]
      %v2392 = vld [vmem:[#allocation2 + $0x58] sm:$0xff]
      %v2393 = vld [vmem:[#allocation2 + $0x60] sm:$0xff]
      %v2394 = vld [vmem:[#allocation2 + $0x68] sm:$0xff]
      %2407 = vrot.lane.b32.xlu0 %v2383, 1
      %v2408 = vpop.permute.xlu0 %2407
      %2409 = vrot.lane.b32.xlu0 %v2384, 1
      %v2410 = vpop.permute.xlu0 %2409
      %2411 = vrot.lane.b32.xlu0 %v2385, 1
      %v2412 = vpop.permute.xlu0 %2411
      %2413 = vrot.lane.b32.xlu0 %v2386, 1
      %v2414 = vpop.permute.xlu0 %2413
      %2415 = vrot.lane.b32.xlu0 %v2387, 1
      %v2416 = vpop.permute.xlu0 %2415
      %2417 = vrot.lane.b32.xlu0 %v2388, 1
      %v2418 = vpop.permute.xlu0 %2417
      %2419 = vrot.lane.b32.xlu0 %v2389, 1
      %v2420 = vpop.permute.xlu0 %2419
      %2421 = vrot.lane.b32.xlu0 %v2390, 1
      %v2422 = vpop.permute.xlu0 %2421
      %2423 = vrot.lane.b32.xlu0 %v2391, 1
      %v2424 = vpop.permute.xlu0 %2423
      %2425 = vrot.lane.b32.xlu0 %v2392, 1
      %v2426 = vpop.permute.xlu0 %2425
      %2427 = vrot.lane.b32.xlu0 %v2393, 1
      %v2428 = vpop.permute.xlu0 %2427
      %2429 = vrot.lane.b32.xlu0 %v2394, 1
      %v2430 = vpop.permute.xlu0 %2429
      %v2431 = vsel %vm630, %v2408, %v2410
      %v2432 = vsel %vm630, %v2410, %v2412
      %v2433 = vsel %vm630, %v2412, %v2414
      %v2434 = vsel %vm630, %v2416, %v2418
      %v2435 = vsel %vm630, %v2418, %v2420
      %v2436 = vsel %vm630, %v2420, %v2422
      %v2437 = vsel %vm630, %v2424, %v2426
      %v2438 = vsel %vm630, %v2426, %v2428
      %v2439 = vsel %vm630, %v2428, %v2430
      %2449 = vst [vmem:[#allocation3 + $0xd8] sm:$0xff] %v2431
      %2450 = vst [vmem:[#allocation3 + $0xe0] sm:$0xff] %v2432
      %2451 = vst [vmem:[#allocation3 + $0xe8] sm:$0xff] %v2433
      %2452 = vst [vmem:[#allocation3 + $0xf0] sm:$0xff] %v2434
      %2453 = vst [vmem:[#allocation3 + $0xf8] sm:$0xff] %v2435
      %2454 = vst [vmem:[#allocation3 + $0x100] sm:$0xff] %v2436
      %2455 = vst [vmem:[#allocation3 + $0x108] sm:$0xff] %v2437
      %2456 = vst [vmem:[#allocation3 + $0x110] sm:$0xff] %v2438
      %2457 = vst [vmem:[#allocation3 + $0x118] sm:$0xff] %v2439
      %v2458 = vld [vmem:[#allocation2 + $0x8] sm:$0xff]
      %v2459 = vld [vmem:[#allocation2 + $0x10] sm:$0xff]
      %v2460 = vld [vmem:[#allocation2 + $0x18] sm:$0xff]
      %v2461 = vld [vmem:[#allocation2 + $0x30] sm:$0xff]
      %v2462 = vld [vmem:[#allocation2 + $0x38] sm:$0xff]
      %v2463 = vld [vmem:[#allocation2 + $0x40] sm:$0xff]
      %v2464 = vld [vmem:[#allocation2 + $0x58] sm:$0xff]
      %v2465 = vld [vmem:[#allocation2 + $0x60] sm:$0xff]
      %v2466 = vld [vmem:[#allocation2 + $0x68] sm:$0xff]
      %2467 = vst [vmem:[#allocation3 + $0x120] sm:$0xff] %v2458
      %2468 = vst [vmem:[#allocation3 + $0x128] sm:$0xff] %v2459
      %2469 = vst [vmem:[#allocation3 + $0x130] sm:$0xff] %v2460
      %2470 = vst [vmem:[#allocation3 + $0x138] sm:$0xff] %v2461
      %2471 = vst [vmem:[#allocation3 + $0x140] sm:$0xff] %v2462
      %2472 = vst [vmem:[#allocation3 + $0x148] sm:$0xff] %v2463
      %2473 = vst [vmem:[#allocation3 + $0x150] sm:$0xff] %v2464
      %2474 = vst [vmem:[#allocation3 + $0x158] sm:$0xff] %v2465
      %2475 = vst [vmem:[#allocation3 + $0x160] sm:$0xff] %v2466
      %v2476 = vld [vmem:[#allocation2 + $0x8] sm:$0xff]
      %v2477 = vld [vmem:[#allocation2 + $0x10] sm:$0xff]
      %v2478 = vld [vmem:[#allocation2 + $0x18] sm:$0xff]
      %v2479 = vld [vmem:[#allocation2 + $0x20] sm:$0xff]
      %v2480 = vld [vmem:[#allocation2 + $0x30] sm:$0xff]
      %v2481 = vld [vmem:[#allocation2 + $0x38] sm:$0xff]
      %v2482 = vld [vmem:[#allocation2 + $0x40] sm:$0xff]
      %v2483 = vld [vmem:[#allocation2 + $0x48] sm:$0xff]
      %v2484 = vld [vmem:[#allocation2 + $0x58] sm:$0xff]
      %v2485 = vld [vmem:[#allocation2 + $0x60] sm:$0xff]
      %v2486 = vld [vmem:[#allocation2 + $0x68] sm:$0xff]
      %v2487 = vld [vmem:[#allocation2 + $0x70] sm:$0xff]
      %2500 = vrot.lane.b32.xlu0 %v2476, 127
      %v2501 = vpop.permute.xlu0 %2500
      %2502 = vrot.lane.b32.xlu0 %v2477, 127
      %v2503 = vpop.permute.xlu0 %2502
      %2504 = vrot.lane.b32.xlu0 %v2478, 127
      %v2505 = vpop.permute.xlu0 %2504
      %2506 = vrot.lane.b32.xlu0 %v2479, 127
      %v2507 = vpop.permute.xlu0 %2506
      %2508 = vrot.lane.b32.xlu0 %v2480, 127
      %v2509 = vpop.permute.xlu0 %2508
      %2510 = vrot.lane.b32.xlu0 %v2481, 127
      %v2511 = vpop.permute.xlu0 %2510
      %2512 = vrot.lane.b32.xlu0 %v2482, 127
      %v2513 = vpop.permute.xlu0 %2512
      %2514 = vrot.lane.b32.xlu0 %v2483, 127
      %v2515 = vpop.permute.xlu0 %2514
      %2516 = vrot.lane.b32.xlu0 %v2484, 127
      %v2517 = vpop.permute.xlu0 %2516
      %2518 = vrot.lane.b32.xlu0 %v2485, 127
      %v2519 = vpop.permute.xlu0 %2518
      %2520 = vrot.lane.b32.xlu0 %v2486, 127
      %v2521 = vpop.permute.xlu0 %2520
      %2522 = vrot.lane.b32.xlu0 %v2487, 127
      %v2523 = vpop.permute.xlu0 %2522
      %v2524 = vsel %vm724, %v2501, %v2503
      %v2525 = vsel %vm724, %v2503, %v2505
      %v2526 = vsel %vm724, %v2505, %v2507
      %v2527 = vsel %vm724, %v2509, %v2511
      %v2528 = vsel %vm724, %v2511, %v2513
      %v2529 = vsel %vm724, %v2513, %v2515
      %v2530 = vsel %vm724, %v2517, %v2519
      %v2531 = vsel %vm724, %v2519, %v2521
      %v2532 = vsel %vm724, %v2521, %v2523
      %2542 = vst [vmem:[#allocation3 + $0x168] sm:$0xff] %v2524
      %2543 = vst [vmem:[#allocation3 + $0x170] sm:$0xff] %v2525
      %2544 = vst [vmem:[#allocation3 + $0x178] sm:$0xff] %v2526
      %2545 = vst [vmem:[#allocation3 + $0x180] sm:$0xff] %v2527
      %2546 = vst [vmem:[#allocation3 + $0x188] sm:$0xff] %v2528
      %2547 = vst [vmem:[#allocation3 + $0x190] sm:$0xff] %v2529
      %2548 = vst [vmem:[#allocation3 + $0x198] sm:$0xff] %v2530
      %2549 = vst [vmem:[#allocation3 + $0x1a0] sm:$0xff] %v2531
      %2550 = vst [vmem:[#allocation3 + $0x1a8] sm:$0xff] %v2532
      %v2551 = vld [vmem:[#allocation2 + $0x8] sm:$0xff]
      %v2552 = vld [vmem:[#allocation2 + $0x10] sm:$0xff]
      %v2553 = vld [vmem:[#allocation2 + $0x18] sm:$0xff]
      %v2554 = vld [vmem:[#allocation2 + $0x20] sm:$0xff]
      %v2555 = vld [vmem:[#allocation2 + $0x30] sm:$0xff]
      %v2556 = vld [vmem:[#allocation2 + $0x38] sm:$0xff]
      %v2557 = vld [vmem:[#allocation2 + $0x40] sm:$0xff]
      %v2558 = vld [vmem:[#allocation2 + $0x48] sm:$0xff]
      %v2559 = vld [vmem:[#allocation2 + $0x58] sm:$0xff]
      %v2560 = vld [vmem:[#allocation2 + $0x60] sm:$0xff]
      %v2561 = vld [vmem:[#allocation2 + $0x68] sm:$0xff]
      %v2562 = vld [vmem:[#allocation2 + $0x70] sm:$0xff]
      %2575 = vrot.lane.b32.xlu0 %v2551, 111
      %v2576 = vpop.permute.xlu0 %2575
      %2577 = vrot.lane.b32.xlu0 %v2552, 111
      %v2578 = vpop.permute.xlu0 %2577
      %2579 = vrot.lane.b32.xlu0 %v2553, 111
      %v2580 = vpop.permute.xlu0 %2579
      %2581 = vrot.lane.b32.xlu0 %v2554, 111
      %v2582 = vpop.permute.xlu0 %2581
      %2583 = vrot.lane.b32.xlu0 %v2555, 111
      %v2584 = vpop.permute.xlu0 %2583
      %2585 = vrot.lane.b32.xlu0 %v2556, 111
      %v2586 = vpop.permute.xlu0 %2585
      %2587 = vrot.lane.b32.xlu0 %v2557, 111
      %v2588 = vpop.permute.xlu0 %2587
      %2589 = vrot.lane.b32.xlu0 %v2558, 111
      %v2590 = vpop.permute.xlu0 %2589
      %2591 = vrot.lane.b32.xlu0 %v2559, 111
      %v2592 = vpop.permute.xlu0 %2591
      %2593 = vrot.lane.b32.xlu0 %v2560, 111
      %v2594 = vpop.permute.xlu0 %2593
      %2595 = vrot.lane.b32.xlu0 %v2561, 111
      %v2596 = vpop.permute.xlu0 %2595
      %2597 = vrot.lane.b32.xlu0 %v2562, 111
      %v2598 = vpop.permute.xlu0 %2597
      %v2599 = vsel %vm800, %v2576, %v2578
      %v2600 = vsel %vm800, %v2578, %v2580
      %v2601 = vsel %vm800, %v2580, %v2582
      %v2602 = vsel %vm800, %v2584, %v2586
      %v2603 = vsel %vm800, %v2586, %v2588
      %v2604 = vsel %vm800, %v2588, %v2590
      %v2605 = vsel %vm800, %v2592, %v2594
      %v2606 = vsel %vm800, %v2594, %v2596
      %v2607 = vsel %vm800, %v2596, %v2598
      %2617 = vst [vmem:[#allocation3 + $0x1b0] sm:$0xff] %v2599
      %2618 = vst [vmem:[#allocation3 + $0x1b8] sm:$0xff] %v2600
      %2619 = vst [vmem:[#allocation3 + $0x1c0] sm:$0xff] %v2601
      %2620 = vst [vmem:[#allocation3 + $0x1c8] sm:$0xff] %v2602
      %2621 = vst [vmem:[#allocation3 + $0x1d0] sm:$0xff] %v2603
      %2622 = vst [vmem:[#allocation3 + $0x1d8] sm:$0xff] %v2604
      %2623 = vst [vmem:[#allocation3 + $0x1e0] sm:$0xff] %v2605
      %2624 = vst [vmem:[#allocation3 + $0x1e8] sm:$0xff] %v2606
      %2625 = vst [vmem:[#allocation3 + $0x1f0] sm:$0xff] %v2607
      %v2626 = vld [vmem:[#allocation2 + $0x8] sm:$0xff]
      %v2627 = vld [vmem:[#allocation2 + $0x10] sm:$0xff]
      %v2628 = vld [vmem:[#allocation2 + $0x18] sm:$0xff]
      %v2629 = vld [vmem:[#allocation2 + $0x20] sm:$0xff]
      %v2630 = vld [vmem:[#allocation2 + $0x30] sm:$0xff]
      %v2631 = vld [vmem:[#allocation2 + $0x38] sm:$0xff]
      %v2632 = vld [vmem:[#allocation2 + $0x40] sm:$0xff]
      %v2633 = vld [vmem:[#allocation2 + $0x48] sm:$0xff]
      %v2634 = vld [vmem:[#allocation2 + $0x58] sm:$0xff]
      %v2635 = vld [vmem:[#allocation2 + $0x60] sm:$0xff]
      %v2636 = vld [vmem:[#allocation2 + $0x68] sm:$0xff]
      %v2637 = vld [vmem:[#allocation2 + $0x70] sm:$0xff]
      %2650 = vrot.lane.b32.xlu0 %v2626, 110
      %v2651 = vpop.permute.xlu0 %2650
      %2652 = vrot.lane.b32.xlu0 %v2627, 110
      %v2653 = vpop.permute.xlu0 %2652
      %2654 = vrot.lane.b32.xlu0 %v2628, 110
      %v2655 = vpop.permute.xlu0 %2654
      %2656 = vrot.lane.b32.xlu0 %v2629, 110
      %v2657 = vpop.permute.xlu0 %2656
      %2658 = vrot.lane.b32.xlu0 %v2630, 110
      %v2659 = vpop.permute.xlu0 %2658
      %2660 = vrot.lane.b32.xlu0 %v2631, 110
      %v2661 = vpop.permute.xlu0 %2660
      %2662 = vrot.lane.b32.xlu0 %v2632, 110
      %v2663 = vpop.permute.xlu0 %2662
      %2664 = vrot.lane.b32.xlu0 %v2633, 110
      %v2665 = vpop.permute.xlu0 %2664
      %2666 = vrot.lane.b32.xlu0 %v2634, 110
      %v2667 = vpop.permute.xlu0 %2666
      %2668 = vrot.lane.b32.xlu0 %v2635, 110
      %v2669 = vpop.permute.xlu0 %2668
      %2670 = vrot.lane.b32.xlu0 %v2636, 110
      %v2671 = vpop.permute.xlu0 %2670
      %2672 = vrot.lane.b32.xlu0 %v2637, 110
      %v2673 = vpop.permute.xlu0 %2672
      %v2674 = vsel %vm876, %v2651, %v2653
      %v2675 = vsel %vm876, %v2653, %v2655
      %v2676 = vsel %vm876, %v2655, %v2657
      %v2677 = vsel %vm876, %v2659, %v2661
      %v2678 = vsel %vm876, %v2661, %v2663
      %v2679 = vsel %vm876, %v2663, %v2665
      %v2680 = vsel %vm876, %v2667, %v2669
      %v2681 = vsel %vm876, %v2669, %v2671
      %v2682 = vsel %vm876, %v2671, %v2673
      %2692 = vst [vmem:[#allocation3 + $0x1f8] sm:$0xff] %v2674
      %2693 = vst [vmem:[#allocation3 + $0x200] sm:$0xff] %v2675
      %2694 = vst [vmem:[#allocation3 + $0x208] sm:$0xff] %v2676
      %2695 = vst [vmem:[#allocation3 + $0x210] sm:$0xff] %v2677
      %2696 = vst [vmem:[#allocation3 + $0x218] sm:$0xff] %v2678
      %2697 = vst [vmem:[#allocation3 + $0x220] sm:$0xff] %v2679
      %2698 = vst [vmem:[#allocation3 + $0x228] sm:$0xff] %v2680
      %2699 = vst [vmem:[#allocation3 + $0x230] sm:$0xff] %v2681
      %2700 = vst [vmem:[#allocation3 + $0x238] sm:$0xff] %v2682
      %v2701 = vld [vmem:[#allocation2 + $0x8] sm:$0xff]
      %v2702 = vld [vmem:[#allocation2 + $0x10] sm:$0xff]
      %v2703 = vld [vmem:[#allocation2 + $0x18] sm:$0xff]
      %v2704 = vld [vmem:[#allocation2 + $0x20] sm:$0xff]
      %v2705 = vld [vmem:[#allocation2 + $0x30] sm:$0xff]
      %v2706 = vld [vmem:[#allocation2 + $0x38] sm:$0xff]
      %v2707 = vld [vmem:[#allocation2 + $0x40] sm:$0xff]
      %v2708 = vld [vmem:[#allocation2 + $0x48] sm:$0xff]
      %v2709 = vld [vmem:[#allocation2 + $0x58] sm:$0xff]
      %v2710 = vld [vmem:[#allocation2 + $0x60] sm:$0xff]
      %v2711 = vld [vmem:[#allocation2 + $0x68] sm:$0xff]
      %v2712 = vld [vmem:[#allocation2 + $0x70] sm:$0xff]
      %2725 = vrot.lane.b32.xlu0 %v2701, 109
      %v2726 = vpop.permute.xlu0 %2725
      %2727 = vrot.lane.b32.xlu0 %v2702, 109
      %v2728 = vpop.permute.xlu0 %2727
      %2729 = vrot.lane.b32.xlu0 %v2703, 109
      %v2730 = vpop.permute.xlu0 %2729
      %2731 = vrot.lane.b32.xlu0 %v2704, 109
      %v2732 = vpop.permute.xlu0 %2731
      %2733 = vrot.lane.b32.xlu0 %v2705, 109
      %v2734 = vpop.permute.xlu0 %2733
      %2735 = vrot.lane.b32.xlu0 %v2706, 109
      %v2736 = vpop.permute.xlu0 %2735
      %2737 = vrot.lane.b32.xlu0 %v2707, 109
      %v2738 = vpop.permute.xlu0 %2737
      %2739 = vrot.lane.b32.xlu0 %v2708, 109
      %v2740 = vpop.permute.xlu0 %2739
      %2741 = vrot.lane.b32.xlu0 %v2709, 109
      %v2742 = vpop.permute.xlu0 %2741
      %2743 = vrot.lane.b32.xlu0 %v2710, 109
      %v2744 = vpop.permute.xlu0 %2743
      %2745 = vrot.lane.b32.xlu0 %v2711, 109
      %v2746 = vpop.permute.xlu0 %2745
      %2747 = vrot.lane.b32.xlu0 %v2712, 109
      %v2748 = vpop.permute.xlu0 %2747
      %v2749 = vsel %vm952, %v2726, %v2728
      %v2750 = vsel %vm952, %v2728, %v2730
      %v2751 = vsel %vm952, %v2730, %v2732
      %v2752 = vsel %vm952, %v2734, %v2736
      %v2753 = vsel %vm952, %v2736, %v2738
      %v2754 = vsel %vm952, %v2738, %v2740
      %v2755 = vsel %vm952, %v2742, %v2744
      %v2756 = vsel %vm952, %v2744, %v2746
      %v2757 = vsel %vm952, %v2746, %v2748
      %2767 = vst [vmem:[#allocation3 + $0x240] sm:$0xff] %v2749
      %2768 = vst [vmem:[#allocation3 + $0x248] sm:$0xff] %v2750
      %2769 = vst [vmem:[#allocation3 + $0x250] sm:$0xff] %v2751
      %2770 = vst [vmem:[#allocation3 + $0x258] sm:$0xff] %v2752
      %2771 = vst [vmem:[#allocation3 + $0x260] sm:$0xff] %v2753
      %2772 = vst [vmem:[#allocation3 + $0x268] sm:$0xff] %v2754
      %2773 = vst [vmem:[#allocation3 + $0x270] sm:$0xff] %v2755
      %2774 = vst [vmem:[#allocation3 + $0x278] sm:$0xff] %v2756
      %2775 = vst [vmem:[#allocation3 + $0x280] sm:$0xff] %v2757
      %s2776 = scalar_lea.vmem %s3, 32
      %v2777 = vld [vmem:[%s2776] sm:$0xff]
      %v2778 = vld [vmem:[%s2776 + $0x8] sm:$0xff]
      %v2779 = vld [vmem:[%s2776 + $0x10] sm:$0xff]
      %v2780 = vld [vmem:[%s2776 + $0x18] sm:$0xff]
      %v2781 = vld [vmem:[#allocation3] sm:$0xff]
      %v2782 = vld [vmem:[#allocation3 + $0x8] sm:$0xff]
      %v2783 = vld [vmem:[#allocation3 + $0x10] sm:$0xff]
      %v2784 = vld [vmem:[#allocation3 + $0x18] sm:$0xff]
      %v2785 = vld [vmem:[#allocation3 + $0x20] sm:$0xff]
      %v2786 = vld [vmem:[#allocation3 + $0x28] sm:$0xff]
      %v2787 = vld [vmem:[#allocation3 + $0x30] sm:$0xff]
      %v2788 = vld [vmem:[#allocation3 + $0x38] sm:$0xff]
      %v2789 = vld [vmem:[#allocation3 + $0x40] sm:$0xff]
      %v2790 = vld [vmem:[#allocation3 + $0x48] sm:$0xff]
      %v2791 = vld [vmem:[#allocation3 + $0x50] sm:$0xff]
      %v2792 = vld [vmem:[#allocation3 + $0x58] sm:$0xff]
      %v2793 = vld [vmem:[#allocation3 + $0x60] sm:$0xff]
      %v2794 = vld [vmem:[#allocation3 + $0x68] sm:$0xff]
      %v2795 = vld [vmem:[#allocation3 + $0x70] sm:$0xff]
      %v2796 = vld [vmem:[#allocation3 + $0x78] sm:$0xff]
      %v2797 = vld [vmem:[#allocation3 + $0x80] sm:$0xff]
      %v2798 = vld [vmem:[#allocation3 + $0x88] sm:$0xff]
      %v2799 = vld [vmem:[#allocation3 + $0x90] sm:$0xff]
      %v2800 = vld [vmem:[#allocation3 + $0x98] sm:$0xff]
      %v2801 = vld [vmem:[#allocation3 + $0xa0] sm:$0xff]
      %v2802 = vld [vmem:[#allocation3 + $0xa8] sm:$0xff]
      %v2803 = vld [vmem:[#allocation3 + $0xb0] sm:$0xff]
      %v2804 = vld [vmem:[#allocation3 + $0xb8] sm:$0xff]
      %v2805 = vld [vmem:[#allocation3 + $0xc0] sm:$0xff]
      %v2806 = vld [vmem:[#allocation3 + $0xc8] sm:$0xff]
      %v2807 = vld [vmem:[#allocation3 + $0xd0] sm:$0xff]
      %v2808 = vld [vmem:[#allocation3 + $0xd8] sm:$0xff]
      %v2809 = vld [vmem:[#allocation3 + $0xe0] sm:$0xff]
      %v2810 = vld [vmem:[#allocation3 + $0xe8] sm:$0xff]
      %v2811 = vld [vmem:[#allocation3 + $0xf0] sm:$0xff]
      %v2812 = vld [vmem:[#allocation3 + $0xf8] sm:$0xff]
      %v2813 = vld [vmem:[#allocation3 + $0x100] sm:$0xff]
      %v2814 = vld [vmem:[#allocation3 + $0x108] sm:$0xff]
      %v2815 = vld [vmem:[#allocation3 + $0x110] sm:$0xff]
      %v2816 = vld [vmem:[#allocation3 + $0x118] sm:$0xff]
      %v2817 = vld [vmem:[#allocation3 + $0x120] sm:$0xff]
      %v2818 = vld [vmem:[#allocation3 + $0x128] sm:$0xff]
      %v2819 = vld [vmem:[#allocation3 + $0x130] sm:$0xff]
      %v2820 = vld [vmem:[#allocation3 + $0x138] sm:$0xff]
      %v2821 = vld [vmem:[#allocation3 + $0x140] sm:$0xff]
      %v2822 = vld [vmem:[#allocation3 + $0x148] sm:$0xff]
      %v2823 = vld [vmem:[#allocation3 + $0x150] sm:$0xff]
      %v2824 = vld [vmem:[#allocation3 + $0x158] sm:$0xff]
      %v2825 = vld [vmem:[#allocation3 + $0x160] sm:$0xff]
      %v2826 = vld [vmem:[#allocation3 + $0x168] sm:$0xff]
      %v2827 = vld [vmem:[#allocation3 + $0x170] sm:$0xff]
      %v2828 = vld [vmem:[#allocation3 + $0x178] sm:$0xff]
      %v2829 = vld [vmem:[#allocation3 + $0x180] sm:$0xff]
      %v2830 = vld [vmem:[#allocation3 + $0x188] sm:$0xff]
      %v2831 = vld [vmem:[#allocation3 + $0x190] sm:$0xff]
      %v2832 = vld [vmem:[#allocation3 + $0x198] sm:$0xff]
      %v2833 = vld [vmem:[#allocation3 + $0x1a0] sm:$0xff]
      %v2834 = vld [vmem:[#allocation3 + $0x1a8] sm:$0xff]
      %v2835 = vld [vmem:[#allocation3 + $0x1b0] sm:$0xff]
      %v2836 = vld [vmem:[#allocation3 + $0x1b8] sm:$0xff]
      %v2837 = vld [vmem:[#allocation3 + $0x1c0] sm:$0xff]
      %v2838 = vld [vmem:[#allocation3 + $0x1c8] sm:$0xff]
      %v2839 = vld [vmem:[#allocation3 + $0x1d0] sm:$0xff]
      %v2840 = vld [vmem:[#allocation3 + $0x1d8] sm:$0xff]
      %v2841 = vld [vmem:[#allocation3 + $0x1e0] sm:$0xff]
      %v2842 = vld [vmem:[#allocation3 + $0x1e8] sm:$0xff]
      %v2843 = vld [vmem:[#allocation3 + $0x1f0] sm:$0xff]
      %v2844 = vld [vmem:[#allocation3 + $0x1f8] sm:$0xff]
      %v2845 = vld [vmem:[#allocation3 + $0x200] sm:$0xff]
      %v2846 = vld [vmem:[#allocation3 + $0x208] sm:$0xff]
      %v2847 = vld [vmem:[#allocation3 + $0x210] sm:$0xff]
      %v2848 = vld [vmem:[#allocation3 + $0x218] sm:$0xff]
      %v2849 = vld [vmem:[#allocation3 + $0x220] sm:$0xff]
      %v2850 = vld [vmem:[#allocation3 + $0x228] sm:$0xff]
      %v2851 = vld [vmem:[#allocation3 + $0x230] sm:$0xff]
      %v2852 = vld [vmem:[#allocation3 + $0x238] sm:$0xff]
      %v2853 = vld [vmem:[#allocation3 + $0x240] sm:$0xff]
      %v2854 = vld [vmem:[#allocation3 + $0x248] sm:$0xff]
      %v2855 = vld [vmem:[#allocation3 + $0x250] sm:$0xff]
      %v2856 = vld [vmem:[#allocation3 + $0x258] sm:$0xff]
      %v2857 = vld [vmem:[#allocation3 + $0x260] sm:$0xff]
      %v2858 = vld [vmem:[#allocation3 + $0x268] sm:$0xff]
      %v2859 = vld [vmem:[#allocation3 + $0x270] sm:$0xff]
      %v2860 = vld [vmem:[#allocation3 + $0x278] sm:$0xff]
      %v2861 = vld [vmem:[#allocation3 + $0x280] sm:$0xff]
      %v2862 = vld [vmem:[#allocation2 + $0x8] sm:$0xff]
      %v2863 = vld [vmem:[#allocation2 + $0x10] sm:$0xff]
      %v2864 = vld [vmem:[#allocation2 + $0x18] sm:$0xff]
      %v2865 = vld [vmem:[#allocation2 + $0x30] sm:$0xff]
      %v2866 = vld [vmem:[#allocation2 + $0x38] sm:$0xff]
      %v2867 = vld [vmem:[#allocation2 + $0x40] sm:$0xff]
      %s2868 = scalar_lea.vmem %s4, 16
      %v2869 = vld [vmem:[%s2868] sm:$0xff]
      %v2870 = vld [vmem:[%s2868 + $0x8] sm:$0xff]
      %2872 = vset.pattern.permute.xlu0 0
      %2873 = vperm.xlu0 %2872, %v2869
      %v2874 = vpop.permute.xlu0 %2873
      %2877 = vset.pattern.permute.xlu0 0
      %2878 = vperm.xlu0 %2877, %v2870
      %v2879 = vpop.permute.xlu0 %2878
      %v2882 = vsel %vm1083, %v2778, 0
      %v2885 = vsel %vm1083, %v2780, 0
      %2887 = vmatprep.subr.mxu0 %v2827
      %2888 = vmatpush1.msra.mxu0 %v2826
      %2889 = vmatprep.subr.mxu0 %v2824
      %2890 = vmatpush1.msra.mxu0 %v2823
      %2891 = vmatprep.subr.mxu0 %v2821
      %2892 = vmatpush1.msra.mxu0 %v2820
      %2893 = vmatprep.subr.mxu0 %v2818
      %2894 = vmatpush1.msra.mxu0 %v2817
      %2895 = vmatprep.subr.mxu0 %v2815
      %2896 = vmatpush1.msra.mxu0 %v2814
      %2897 = vmatprep.subr.mxu0 %v2812
      %2898 = vmatpush1.msra.mxu0 %v2811
      %2899 = vmatprep.subr.mxu0 %v2809
      %2900 = vmatpush1.msra.mxu0 %v2808
      %2901 = vmatprep.subr.mxu0 %v2806
      %2902 = vmatpush1.msra.mxu0 %v2805
      %2903 = vmatprep.subr.mxu0 %v2803
      %2904 = vmatpush1.msra.mxu0 %v2802
      %2905 = vmatprep.subr.mxu0 %v2800
      %2906 = vmatpush1.msra.mxu0 %v2799
      %2907 = vmatprep.subr.mxu0 %v2797
      %2908 = vmatpush1.msra.mxu0 %v2796
      %2909 = vmatprep.subr.mxu0 %v2794
      %2910 = vmatpush1.msra.mxu0 %v2793
      %2911 = vmatprep.subr.mxu0 %v2791
      %2912 = vmatpush1.msra.mxu0 %v2790
      %2913 = vmatprep.subr.mxu0 %v2788
      %2914 = vmatpush1.msra.mxu0 %v2787
      %2915 = vmatprep.subr.mxu0 %v2785
      %2916 = vmatpush1.msra.mxu0 %v2784
      %2917 = vmatprep.subr.mxu0 %v2782
      %2918 = vmatpush1.msra.mxu0 %v2781
      %2919 = vmatprep.subr.mxu0 0.0
      %2920 = vmatpush2.msra.mxu0 0.0
      %2921 = vmatprep.subr.mxu0 0.0
      %2922 = vmatpush2.msra.mxu0 0.0
      %2923 = vmatprep.subr.mxu0 0.0
      %2924 = vmatpush2.msra.mxu0 0.0
      %2925 = vmatprep.subr.mxu0 0.0
      %2926 = vmatpush2.msra.mxu0 0.0
      %2927 = vmatprep.subr.mxu0 0.0
      %2928 = vmatpush2.msra.mxu0 0.0
      %2929 = vmatprep.subr.mxu0 %v2860
      %2930 = vmatpush2.msra.mxu0 %v2859
      %2931 = vmatprep.subr.mxu0 %v2857
      %2932 = vmatpush2.msra.mxu0 %v2856
      %2933 = vmatprep.subr.mxu0 %v2854
      %2934 = vmatpush2.msra.mxu0 %v2853
      %2935 = vmatprep.subr.mxu0 %v2851
      %2936 = vmatpush2.msra.mxu0 %v2850
      %2937 = vmatprep.subr.mxu0 %v2848
      %2938 = vmatpush2.msra.mxu0 %v2847
      %2939 = vmatprep.subr.mxu0 %v2845
      %2940 = vmatpush2.msra.mxu0 %v2844
      %2941 = vmatprep.subr.mxu0 %v2842
      %2942 = vmatpush2.msra.mxu0 %v2841
      %2943 = vmatprep.subr.mxu0 %v2839
      %2944 = vmatpush2.msra.mxu0 %v2838
      %2945 = vmatprep.subr.mxu0 %v2836
      %2946 = vmatpush2.msra.mxu0 %v2835
      %2947 = vmatprep.subr.mxu0 %v2833
      %2948 = vmatpush2.msra.mxu0 %v2832
      %2949 = vmatprep.subr.mxu0 %v2830
      %2950 = vmatpush2.msra.mxu0 %v2829
      %2951 = vmatprep.mubr.f32.mxu0 %v2882
      %2952 = vmatmul.mubr.f32.gmra.mxu0 %v2777
      %v2953 = vpop.f32.mrf.mxu0
      %v2954 = vadd.f32 %v2874, %v2953
      %v2955 = vpop.f32.mrf.mxu0
      %v2956 = vadd.f32 %v2874, %v2955
      %2957 = vmatprep.mubr.f32.mxu0 %v2885
      %2958 = vmatmul.mubr.f32.gmra.mxu0 %v2779
      %v2959 = vpop.f32.mrf.mxu0
      %v2960 = vadd.f32 %v2879, %v2959
      %v2961 = vpop.f32.mrf.mxu0
      %v2962 = vadd.f32 %v2879, %v2961
      %2963 = vdwg.mxu0
      %2964 = vmatprep.subr.mxu0 0.0
      %2965 = vmatpush1.msra.mxu0 %v2828
      %2966 = vmatprep.subr.mxu0 0.0
      %2967 = vmatpush1.msra.mxu0 %v2825
      %2968 = vmatprep.subr.mxu0 0.0
      %2969 = vmatpush1.msra.mxu0 %v2822
      %2970 = vmatprep.subr.mxu0 0.0
      %2971 = vmatpush1.msra.mxu0 %v2819
      %2972 = vmatprep.subr.mxu0 0.0
      %2973 = vmatpush1.msra.mxu0 %v2816
      %2974 = vmatprep.subr.mxu0 0.0
      %2975 = vmatpush1.msra.mxu0 %v2813
      %2976 = vmatprep.subr.mxu0 0.0
      %2977 = vmatpush1.msra.mxu0 %v2810
      %2978 = vmatprep.subr.mxu0 0.0
      %2979 = vmatpush1.msra.mxu0 %v2807
      %2980 = vmatprep.subr.mxu0 0.0
      %2981 = vmatpush1.msra.mxu0 %v2804
      %2982 = vmatprep.subr.mxu0 0.0
      %2983 = vmatpush1.msra.mxu0 %v2801
      %2984 = vmatprep.subr.mxu0 0.0
      %2985 = vmatpush1.msra.mxu0 %v2798
      %2986 = vmatprep.subr.mxu0 0.0
      %2987 = vmatpush1.msra.mxu0 %v2795
      %2988 = vmatprep.subr.mxu0 0.0
      %2989 = vmatpush1.msra.mxu0 %v2792
      %2990 = vmatprep.subr.mxu0 0.0
      %2991 = vmatpush1.msra.mxu0 %v2789
      %2992 = vmatprep.subr.mxu0 0.0
      %2993 = vmatpush1.msra.mxu0 %v2786
      %2994 = vmatprep.subr.mxu0 0.0
      %2995 = vmatpush1.msra.mxu0 %v2783
      %2996 = vmatprep.subr.mxu0 0.0
      %2997 = vmatpush2.msra.mxu0 0.0
      %2998 = vmatprep.subr.mxu0 0.0
      %2999 = vmatpush2.msra.mxu0 0.0
      %3000 = vmatprep.subr.mxu0 0.0
      %3001 = vmatpush2.msra.mxu0 0.0
      %3002 = vmatprep.subr.mxu0 0.0
      %3003 = vmatpush2.msra.mxu0 0.0
      %3004 = vmatprep.subr.mxu0 0.0
      %3005 = vmatpush2.msra.mxu0 0.0
      %3006 = vmatprep.subr.mxu0 0.0
      %3007 = vmatpush2.msra.mxu0 %v2861
      %3008 = vmatprep.subr.mxu0 0.0
      %3009 = vmatpush2.msra.mxu0 %v2858
      %3010 = vmatprep.subr.mxu0 0.0
      %3011 = vmatpush2.msra.mxu0 %v2855
      %3012 = vmatprep.subr.mxu0 0.0
      %3013 = vmatpush2.msra.mxu0 %v2852
      %3014 = vmatprep.subr.mxu0 0.0
      %3015 = vmatpush2.msra.mxu0 %v2849
      %3016 = vmatprep.subr.mxu0 0.0
      %3017 = vmatpush2.msra.mxu0 %v2846
      %3018 = vmatprep.subr.mxu0 0.0
      %3019 = vmatpush2.msra.mxu0 %v2843
      %3020 = vmatprep.subr.mxu0 0.0
      %3021 = vmatpush2.msra.mxu0 %v2840
      %3022 = vmatprep.subr.mxu0 0.0
      %3023 = vmatpush2.msra.mxu0 %v2837
      %3024 = vmatprep.subr.mxu0 0.0
      %3025 = vmatpush2.msra.mxu0 %v2834
      %3026 = vmatprep.subr.mxu0 0.0
      %3027 = vmatpush2.msra.mxu0 %v2831
      %3028 = vmatprep.mubr.f32.mxu0 %v2882
      %3029 = vmatmul.mubr.f32.gmra.mxu0 %v2777
      %v3030 = vpop.f32.mrf.mxu0
      %v3031 = vadd.f32 %v2874, %v3030
      %v3032 = vpop.f32.mrf.mxu0
      %3033 = vmatprep.mubr.f32.mxu0 %v2885
      %3034 = vmatmul.mubr.f32.gmra.mxu0 %v2779
      %v3035 = vpop.f32.mrf.mxu0
      %v3036 = vadd.f32 %v2879, %v3035
      %v3037 = vpop.f32.mrf.mxu0
      %3038 = vdwg.mxu0
      %v3039 = vmax.f32 %v2954, 0.0
      %v3040 = vmax.f32 %v2956, 0.0
      %v3041 = vmax.f32 %v3031, 0.0
      %v3042 = vmax.f32 %v2960, 0.0
      %v3043 = vmax.f32 %v2962, 0.0
      %v3044 = vmax.f32 %v3036, 0.0
      %v3045 = vmul.f32 %v3039, %v314
      %v3046 = vmul.f32 %v3040, %v318
      %v3047 = vmul.f32 %v3041, %v322
      %v3048 = vmul.f32 %v3042, %v314
      %v3049 = vmul.f32 %v3043, %v318
      %v3050 = vmul.f32 %v3044, %v322
      %v3051 = vadd.f32 %v2862, %v3045
      %v3052 = vadd.f32 %v2863, %v3046
      %v3053 = vadd.f32 %v2864, %v3047
      %v3054 = vadd.f32 %v2865, %v3048
      %v3055 = vadd.f32 %v2866, %v3049
      %v3056 = vadd.f32 %v2867, %v3050
      %3057 = vst [vmem:[#allocation2 + $0x8] sm:$0xff] %v3051
      %3058 = vst [vmem:[#allocation2 + $0x10] sm:$0xff] %v3052
      %3059 = vst [vmem:[#allocation2 + $0x18] sm:$0xff] %v3053
      %3060 = vst [vmem:[#allocation2 + $0x30] sm:$0xff] %v3054
      %3061 = vst [vmem:[#allocation2 + $0x38] sm:$0xff] %v3055
      %3062 = vst [vmem:[#allocation2 + $0x40] sm:$0xff] %v3056
      %v3063 = vld [vmem:[#allocation2] sm:$0xff]
      %v3064 = vld [vmem:[#allocation2 + $0x8] sm:$0xff]
      %v3065 = vld [vmem:[#allocation2 + $0x10] sm:$0xff]
      %v3066 = vld [vmem:[#allocation2 + $0x18] sm:$0xff]
      %v3067 = vld [vmem:[#allocation2 + $0x28] sm:$0xff]
      %v3068 = vld [vmem:[#allocation2 + $0x30] sm:$0xff]
      %v3069 = vld [vmem:[#allocation2 + $0x38] sm:$0xff]
      %v3070 = vld [vmem:[#allocation2 + $0x40] sm:$0xff]
      %v3071 = vld [vmem:[#allocation2 + $0x50] sm:$0xff]
      %v3072 = vld [vmem:[#allocation2 + $0x58] sm:$0xff]
      %v3073 = vld [vmem:[#allocation2 + $0x60] sm:$0xff]
      %v3074 = vld [vmem:[#allocation2 + $0x68] sm:$0xff]
      %3087 = vrot.lane.b32.xlu0 %v3063, 19
      %v3088 = vpop.permute.xlu0 %3087
      %3089 = vrot.lane.b32.xlu0 %v3064, 19
      %v3090 = vpop.permute.xlu0 %3089
      %3091 = vrot.lane.b32.xlu0 %v3065, 19
      %v3092 = vpop.permute.xlu0 %3091
      %3093 = vrot.lane.b32.xlu0 %v3066, 19
      %v3094 = vpop.permute.xlu0 %3093
      %3095 = vrot.lane.b32.xlu0 %v3067, 19
      %v3096 = vpop.permute.xlu0 %3095
      %3097 = vrot.lane.b32.xlu0 %v3068, 19
      %v3098 = vpop.permute.xlu0 %3097
      %3099 = vrot.lane.b32.xlu0 %v3069, 19
      %v3100 = vpop.permute.xlu0 %3099
      %3101 = vrot.lane.b32.xlu0 %v3070, 19
      %v3102 = vpop.permute.xlu0 %3101
      %3103 = vrot.lane.b32.xlu0 %v3071, 19
      %v3104 = vpop.permute.xlu0 %3103
      %3105 = vrot.lane.b32.xlu0 %v3072, 19
      %v3106 = vpop.permute.xlu0 %3105
      %3107 = vrot.lane.b32.xlu0 %v3073, 19
      %v3108 = vpop.permute.xlu0 %3107
      %3109 = vrot.lane.b32.xlu0 %v3074, 19
      %v3110 = vpop.permute.xlu0 %3109
      %v3111 = vsel %vm402, %v3088, %v3090
      %v3112 = vsel %vm402, %v3090, %v3092
      %v3113 = vsel %vm402, %v3092, %v3094
      %v3114 = vsel %vm402, %v3096, %v3098
      %v3115 = vsel %vm402, %v3098, %v3100
      %v3116 = vsel %vm402, %v3100, %v3102
      %v3117 = vsel %vm402, %v3104, %v3106
      %v3118 = vsel %vm402, %v3106, %v3108
      %v3119 = vsel %vm402, %v3108, %v3110
      %3129 = vst [vmem:[#allocation3] sm:$0xff] %v3111
      %3130 = vst [vmem:[#allocation3 + $0x8] sm:$0xff] %v3112
      %3131 = vst [vmem:[#allocation3 + $0x10] sm:$0xff] %v3113
      %3132 = vst [vmem:[#allocation3 + $0x18] sm:$0xff] %v3114
      %3133 = vst [vmem:[#allocation3 + $0x20] sm:$0xff] %v3115
      %3134 = vst [vmem:[#allocation3 + $0x28] sm:$0xff] %v3116
      %3135 = vst [vmem:[#allocation3 + $0x30] sm:$0xff] %v3117
      %3136 = vst [vmem:[#allocation3 + $0x38] sm:$0xff] %v3118
      %3137 = vst [vmem:[#allocation3 + $0x40] sm:$0xff] %v3119
      %v3138 = vld [vmem:[#allocation2] sm:$0xff]
      %v3139 = vld [vmem:[#allocation2 + $0x8] sm:$0xff]
      %v3140 = vld [vmem:[#allocation2 + $0x10] sm:$0xff]
      %v3141 = vld [vmem:[#allocation2 + $0x18] sm:$0xff]
      %v3142 = vld [vmem:[#allocation2 + $0x28] sm:$0xff]
      %v3143 = vld [vmem:[#allocation2 + $0x30] sm:$0xff]
      %v3144 = vld [vmem:[#allocation2 + $0x38] sm:$0xff]
      %v3145 = vld [vmem:[#allocation2 + $0x40] sm:$0xff]
      %v3146 = vld [vmem:[#allocation2 + $0x50] sm:$0xff]
      %v3147 = vld [vmem:[#allocation2 + $0x58] sm:$0xff]
      %v3148 = vld [vmem:[#allocation2 + $0x60] sm:$0xff]
      %v3149 = vld [vmem:[#allocation2 + $0x68] sm:$0xff]
      %3162 = vrot.lane.b32.xlu0 %v3138, 18
      %v3163 = vpop.permute.xlu0 %3162
      %3164 = vrot.lane.b32.xlu0 %v3139, 18
      %v3165 = vpop.permute.xlu0 %3164
      %3166 = vrot.lane.b32.xlu0 %v3140, 18
      %v3167 = vpop.permute.xlu0 %3166
      %3168 = vrot.lane.b32.xlu0 %v3141, 18
      %v3169 = vpop.permute.xlu0 %3168
      %3170 = vrot.lane.b32.xlu0 %v3142, 18
      %v3171 = vpop.permute.xlu0 %3170
      %3172 = vrot.lane.b32.xlu0 %v3143, 18
      %v3173 = vpop.permute.xlu0 %3172
      %3174 = vrot.lane.b32.xlu0 %v3144, 18
      %v3175 = vpop.permute.xlu0 %3174
      %3176 = vrot.lane.b32.xlu0 %v3145, 18
      %v3177 = vpop.permute.xlu0 %3176
      %3178 = vrot.lane.b32.xlu0 %v3146, 18
      %v3179 = vpop.permute.xlu0 %3178
      %3180 = vrot.lane.b32.xlu0 %v3147, 18
      %v3181 = vpop.permute.xlu0 %3180
      %3182 = vrot.lane.b32.xlu0 %v3148, 18
      %v3183 = vpop.permute.xlu0 %3182
      %3184 = vrot.lane.b32.xlu0 %v3149, 18
      %v3185 = vpop.permute.xlu0 %3184
      %v3186 = vsel %vm478, %v3163, %v3165
      %v3187 = vsel %vm478, %v3165, %v3167
      %v3188 = vsel %vm478, %v3167, %v3169
      %v3189 = vsel %vm478, %v3171, %v3173
      %v3190 = vsel %vm478, %v3173, %v3175
      %v3191 = vsel %vm478, %v3175, %v3177
      %v3192 = vsel %vm478, %v3179, %v3181
      %v3193 = vsel %vm478, %v3181, %v3183
      %v3194 = vsel %vm478, %v3183, %v3185
      %3204 = vst [vmem:[#allocation3 + $0x48] sm:$0xff] %v3186
      %3205 = vst [vmem:[#allocation3 + $0x50] sm:$0xff] %v3187
      %3206 = vst [vmem:[#allocation3 + $0x58] sm:$0xff] %v3188
      %3207 = vst [vmem:[#allocation3 + $0x60] sm:$0xff] %v3189
      %3208 = vst [vmem:[#allocation3 + $0x68] sm:$0xff] %v3190
      %3209 = vst [vmem:[#allocation3 + $0x70] sm:$0xff] %v3191
      %3210 = vst [vmem:[#allocation3 + $0x78] sm:$0xff] %v3192
      %3211 = vst [vmem:[#allocation3 + $0x80] sm:$0xff] %v3193
      %3212 = vst [vmem:[#allocation3 + $0x88] sm:$0xff] %v3194
      %v3213 = vld [vmem:[#allocation2] sm:$0xff]
      %v3214 = vld [vmem:[#allocation2 + $0x8] sm:$0xff]
      %v3215 = vld [vmem:[#allocation2 + $0x10] sm:$0xff]
      %v3216 = vld [vmem:[#allocation2 + $0x18] sm:$0xff]
      %v3217 = vld [vmem:[#allocation2 + $0x28] sm:$0xff]
      %v3218 = vld [vmem:[#allocation2 + $0x30] sm:$0xff]
      %v3219 = vld [vmem:[#allocation2 + $0x38] sm:$0xff]
      %v3220 = vld [vmem:[#allocation2 + $0x40] sm:$0xff]
      %v3221 = vld [vmem:[#allocation2 + $0x50] sm:$0xff]
      %v3222 = vld [vmem:[#allocation2 + $0x58] sm:$0xff]
      %v3223 = vld [vmem:[#allocation2 + $0x60] sm:$0xff]
      %v3224 = vld [vmem:[#allocation2 + $0x68] sm:$0xff]
      %3237 = vrot.lane.b32.xlu0 %v3213, 17
      %v3238 = vpop.permute.xlu0 %3237
      %3239 = vrot.lane.b32.xlu0 %v3214, 17
      %v3240 = vpop.permute.xlu0 %3239
      %3241 = vrot.lane.b32.xlu0 %v3215, 17
      %v3242 = vpop.permute.xlu0 %3241
      %3243 = vrot.lane.b32.xlu0 %v3216, 17
      %v3244 = vpop.permute.xlu0 %3243
      %3245 = vrot.lane.b32.xlu0 %v3217, 17
      %v3246 = vpop.permute.xlu0 %3245
      %3247 = vrot.lane.b32.xlu0 %v3218, 17
      %v3248 = vpop.permute.xlu0 %3247
      %3249 = vrot.lane.b32.xlu0 %v3219, 17
      %v3250 = vpop.permute.xlu0 %3249
      %3251 = vrot.lane.b32.xlu0 %v3220, 17
      %v3252 = vpop.permute.xlu0 %3251
      %3253 = vrot.lane.b32.xlu0 %v3221, 17
      %v3254 = vpop.permute.xlu0 %3253
      %3255 = vrot.lane.b32.xlu0 %v3222, 17
      %v3256 = vpop.permute.xlu0 %3255
      %3257 = vrot.lane.b32.xlu0 %v3223, 17
      %v3258 = vpop.permute.xlu0 %3257
      %3259 = vrot.lane.b32.xlu0 %v3224, 17
      %v3260 = vpop.permute.xlu0 %3259
      %v3261 = vsel %vm554, %v3238, %v3240
      %v3262 = vsel %vm554, %v3240, %v3242
      %v3263 = vsel %vm554, %v3242, %v3244
      %v3264 = vsel %vm554, %v3246, %v3248
      %v3265 = vsel %vm554, %v3248, %v3250
      %v3266 = vsel %vm554, %v3250, %v3252
      %v3267 = vsel %vm554, %v3254, %v3256
      %v3268 = vsel %vm554, %v3256, %v3258
      %v3269 = vsel %vm554, %v3258, %v3260
      %3279 = vst [vmem:[#allocation3 + $0x90] sm:$0xff] %v3261
      %3280 = vst [vmem:[#allocation3 + $0x98] sm:$0xff] %v3262
      %3281 = vst [vmem:[#allocation3 + $0xa0] sm:$0xff] %v3263
      %3282 = vst [vmem:[#allocation3 + $0xa8] sm:$0xff] %v3264
      %3283 = vst [vmem:[#allocation3 + $0xb0] sm:$0xff] %v3265
      %3284 = vst [vmem:[#allocation3 + $0xb8] sm:$0xff] %v3266
      %3285 = vst [vmem:[#allocation3 + $0xc0] sm:$0xff] %v3267
      %3286 = vst [vmem:[#allocation3 + $0xc8] sm:$0xff] %v3268
      %3287 = vst [vmem:[#allocation3 + $0xd0] sm:$0xff] %v3269
      %v3288 = vld [vmem:[#allocation2] sm:$0xff]
      %v3289 = vld [vmem:[#allocation2 + $0x8] sm:$0xff]
      %v3290 = vld [vmem:[#allocation2 + $0x10] sm:$0xff]
      %v3291 = vld [vmem:[#allocation2 + $0x18] sm:$0xff]
      %v3292 = vld [vmem:[#allocation2 + $0x28] sm:$0xff]
      %v3293 = vld [vmem:[#allocation2 + $0x30] sm:$0xff]
      %v3294 = vld [vmem:[#allocation2 + $0x38] sm:$0xff]
      %v3295 = vld [vmem:[#allocation2 + $0x40] sm:$0xff]
      %v3296 = vld [vmem:[#allocation2 + $0x50] sm:$0xff]
      %v3297 = vld [vmem:[#allocation2 + $0x58] sm:$0xff]
      %v3298 = vld [vmem:[#allocation2 + $0x60] sm:$0xff]
      %v3299 = vld [vmem:[#allocation2 + $0x68] sm:$0xff]
      %3312 = vrot.lane.b32.xlu0 %v3288, 1
      %v3313 = vpop.permute.xlu0 %3312
      %3314 = vrot.lane.b32.xlu0 %v3289, 1
      %v3315 = vpop.permute.xlu0 %3314
      %3316 = vrot.lane.b32.xlu0 %v3290, 1
      %v3317 = vpop.permute.xlu0 %3316
      %3318 = vrot.lane.b32.xlu0 %v3291, 1
      %v3319 = vpop.permute.xlu0 %3318
      %3320 = vrot.lane.b32.xlu0 %v3292, 1
      %v3321 = vpop.permute.xlu0 %3320
      %3322 = vrot.lane.b32.xlu0 %v3293, 1
      %v3323 = vpop.permute.xlu0 %3322
      %3324 = vrot.lane.b32.xlu0 %v3294, 1
      %v3325 = vpop.permute.xlu0 %3324
      %3326 = vrot.lane.b32.xlu0 %v3295, 1
      %v3327 = vpop.permute.xlu0 %3326
      %3328 = vrot.lane.b32.xlu0 %v3296, 1
      %v3329 = vpop.permute.xlu0 %3328
      %3330 = vrot.lane.b32.xlu0 %v3297, 1
      %v3331 = vpop.permute.xlu0 %3330
      %3332 = vrot.lane.b32.xlu0 %v3298, 1
      %v3333 = vpop.permute.xlu0 %3332
      %3334 = vrot.lane.b32.xlu0 %v3299, 1
      %v3335 = vpop.permute.xlu0 %3334
      %v3336 = vsel %vm630, %v3313, %v3315
      %v3337 = vsel %vm630, %v3315, %v3317
      %v3338 = vsel %vm630, %v3317, %v3319
      %v3339 = vsel %vm630, %v3321, %v3323
      %v3340 = vsel %vm630, %v3323, %v3325
      %v3341 = vsel %vm630, %v3325, %v3327
      %v3342 = vsel %vm630, %v3329, %v3331
      %v3343 = vsel %vm630, %v3331, %v3333
      %v3344 = vsel %vm630, %v3333, %v3335
      %3354 = vst [vmem:[#allocation3 + $0xd8] sm:$0xff] %v3336
      %3355 = vst [vmem:[#allocation3 + $0xe0] sm:$0xff] %v3337
      %3356 = vst [vmem:[#allocation3 + $0xe8] sm:$0xff] %v3338
      %3357 = vst [vmem:[#allocation3 + $0xf0] sm:$0xff] %v3339
      %3358 = vst [vmem:[#allocation3 + $0xf8] sm:$0xff] %v3340
      %3359 = vst [vmem:[#allocation3 + $0x100] sm:$0xff] %v3341
      %3360 = vst [vmem:[#allocation3 + $0x108] sm:$0xff] %v3342
      %3361 = vst [vmem:[#allocation3 + $0x110] sm:$0xff] %v3343
      %3362 = vst [vmem:[#allocation3 + $0x118] sm:$0xff] %v3344
      %v3363 = vld [vmem:[#allocation2 + $0x8] sm:$0xff]
      %v3364 = vld [vmem:[#allocation2 + $0x10] sm:$0xff]
      %v3365 = vld [vmem:[#allocation2 + $0x18] sm:$0xff]
      %v3366 = vld [vmem:[#allocation2 + $0x30] sm:$0xff]
      %v3367 = vld [vmem:[#allocation2 + $0x38] sm:$0xff]
      %v3368 = vld [vmem:[#allocation2 + $0x40] sm:$0xff]
      %v3369 = vld [vmem:[#allocation2 + $0x58] sm:$0xff]
      %v3370 = vld [vmem:[#allocation2 + $0x60] sm:$0xff]
      %v3371 = vld [vmem:[#allocation2 + $0x68] sm:$0xff]
      %3372 = vst [vmem:[#allocation3 + $0x120] sm:$0xff] %v3363
      %3373 = vst [vmem:[#allocation3 + $0x128] sm:$0xff] %v3364
      %3374 = vst [vmem:[#allocation3 + $0x130] sm:$0xff] %v3365
      %3375 = vst [vmem:[#allocation3 + $0x138] sm:$0xff] %v3366
      %3376 = vst [vmem:[#allocation3 + $0x140] sm:$0xff] %v3367
      %3377 = vst [vmem:[#allocation3 + $0x148] sm:$0xff] %v3368
      %3378 = vst [vmem:[#allocation3 + $0x150] sm:$0xff] %v3369
      %3379 = vst [vmem:[#allocation3 + $0x158] sm:$0xff] %v3370
      %3380 = vst [vmem:[#allocation3 + $0x160] sm:$0xff] %v3371
      %v3381 = vld [vmem:[#allocation2 + $0x8] sm:$0xff]
      %v3382 = vld [vmem:[#allocation2 + $0x10] sm:$0xff]
      %v3383 = vld [vmem:[#allocation2 + $0x18] sm:$0xff]
      %v3384 = vld [vmem:[#allocation2 + $0x20] sm:$0xff]
      %v3385 = vld [vmem:[#allocation2 + $0x30] sm:$0xff]
      %v3386 = vld [vmem:[#allocation2 + $0x38] sm:$0xff]
      %v3387 = vld [vmem:[#allocation2 + $0x40] sm:$0xff]
      %v3388 = vld [vmem:[#allocation2 + $0x48] sm:$0xff]
      %v3389 = vld [vmem:[#allocation2 + $0x58] sm:$0xff]
      %v3390 = vld [vmem:[#allocation2 + $0x60] sm:$0xff]
      %v3391 = vld [vmem:[#allocation2 + $0x68] sm:$0xff]
      %v3392 = vld [vmem:[#allocation2 + $0x70] sm:$0xff]
      %3405 = vrot.lane.b32.xlu0 %v3381, 127
      %v3406 = vpop.permute.xlu0 %3405
      %3407 = vrot.lane.b32.xlu0 %v3382, 127
      %v3408 = vpop.permute.xlu0 %3407
      %3409 = vrot.lane.b32.xlu0 %v3383, 127
      %v3410 = vpop.permute.xlu0 %3409
      %3411 = vrot.lane.b32.xlu0 %v3384, 127
      %v3412 = vpop.permute.xlu0 %3411
      %3413 = vrot.lane.b32.xlu0 %v3385, 127
      %v3414 = vpop.permute.xlu0 %3413
      %3415 = vrot.lane.b32.xlu0 %v3386, 127
      %v3416 = vpop.permute.xlu0 %3415
      %3417 = vrot.lane.b32.xlu0 %v3387, 127
      %v3418 = vpop.permute.xlu0 %3417
      %3419 = vrot.lane.b32.xlu0 %v3388, 127
      %v3420 = vpop.permute.xlu0 %3419
      %3421 = vrot.lane.b32.xlu0 %v3389, 127
      %v3422 = vpop.permute.xlu0 %3421
      %3423 = vrot.lane.b32.xlu0 %v3390, 127
      %v3424 = vpop.permute.xlu0 %3423
      %3425 = vrot.lane.b32.xlu0 %v3391, 127
      %v3426 = vpop.permute.xlu0 %3425
      %3427 = vrot.lane.b32.xlu0 %v3392, 127
      %v3428 = vpop.permute.xlu0 %3427
      %v3429 = vsel %vm724, %v3406, %v3408
      %v3430 = vsel %vm724, %v3408, %v3410
      %v3431 = vsel %vm724, %v3410, %v3412
      %v3432 = vsel %vm724, %v3414, %v3416
      %v3433 = vsel %vm724, %v3416, %v3418
      %v3434 = vsel %vm724, %v3418, %v3420
      %v3435 = vsel %vm724, %v3422, %v3424
      %v3436 = vsel %vm724, %v3424, %v3426
      %v3437 = vsel %vm724, %v3426, %v3428
      %3447 = vst [vmem:[#allocation3 + $0x168] sm:$0xff] %v3429
      %3448 = vst [vmem:[#allocation3 + $0x170] sm:$0xff] %v3430
      %3449 = vst [vmem:[#allocation3 + $0x178] sm:$0xff] %v3431
      %3450 = vst [vmem:[#allocation3 + $0x180] sm:$0xff] %v3432
      %3451 = vst [vmem:[#allocation3 + $0x188] sm:$0xff] %v3433
      %3452 = vst [vmem:[#allocation3 + $0x190] sm:$0xff] %v3434
      %3453 = vst [vmem:[#allocation3 + $0x198] sm:$0xff] %v3435
      %3454 = vst [vmem:[#allocation3 + $0x1a0] sm:$0xff] %v3436
      %3455 = vst [vmem:[#allocation3 + $0x1a8] sm:$0xff] %v3437
      %v3456 = vld [vmem:[#allocation2 + $0x8] sm:$0xff]
      %v3457 = vld [vmem:[#allocation2 + $0x10] sm:$0xff]
      %v3458 = vld [vmem:[#allocation2 + $0x18] sm:$0xff]
      %v3459 = vld [vmem:[#allocation2 + $0x20] sm:$0xff]
      %v3460 = vld [vmem:[#allocation2 + $0x30] sm:$0xff]
      %v3461 = vld [vmem:[#allocation2 + $0x38] sm:$0xff]
      %v3462 = vld [vmem:[#allocation2 + $0x40] sm:$0xff]
      %v3463 = vld [vmem:[#allocation2 + $0x48] sm:$0xff]
      %v3464 = vld [vmem:[#allocation2 + $0x58] sm:$0xff]
      %v3465 = vld [vmem:[#allocation2 + $0x60] sm:$0xff]
      %v3466 = vld [vmem:[#allocation2 + $0x68] sm:$0xff]
      %v3467 = vld [vmem:[#allocation2 + $0x70] sm:$0xff]
      %3480 = vrot.lane.b32.xlu0 %v3456, 111
      %v3481 = vpop.permute.xlu0 %3480
      %3482 = vrot.lane.b32.xlu0 %v3457, 111
      %v3483 = vpop.permute.xlu0 %3482
      %3484 = vrot.lane.b32.xlu0 %v3458, 111
      %v3485 = vpop.permute.xlu0 %3484
      %3486 = vrot.lane.b32.xlu0 %v3459, 111
      %v3487 = vpop.permute.xlu0 %3486
      %3488 = vrot.lane.b32.xlu0 %v3460, 111
      %v3489 = vpop.permute.xlu0 %3488
      %3490 = vrot.lane.b32.xlu0 %v3461, 111
      %v3491 = vpop.permute.xlu0 %3490
      %3492 = vrot.lane.b32.xlu0 %v3462, 111
      %v3493 = vpop.permute.xlu0 %3492
      %3494 = vrot.lane.b32.xlu0 %v3463, 111
      %v3495 = vpop.permute.xlu0 %3494
      %3496 = vrot.lane.b32.xlu0 %v3464, 111
      %v3497 = vpop.permute.xlu0 %3496
      %3498 = vrot.lane.b32.xlu0 %v3465, 111
      %v3499 = vpop.permute.xlu0 %3498
      %3500 = vrot.lane.b32.xlu0 %v3466, 111
      %v3501 = vpop.permute.xlu0 %3500
      %3502 = vrot.lane.b32.xlu0 %v3467, 111
      %v3503 = vpop.permute.xlu0 %3502
      %v3504 = vsel %vm800, %v3481, %v3483
      %v3505 = vsel %vm800, %v3483, %v3485
      %v3506 = vsel %vm800, %v3485, %v3487
      %v3507 = vsel %vm800, %v3489, %v3491
      %v3508 = vsel %vm800, %v3491, %v3493
      %v3509 = vsel %vm800, %v3493, %v3495
      %v3510 = vsel %vm800, %v3497, %v3499
      %v3511 = vsel %vm800, %v3499, %v3501
      %v3512 = vsel %vm800, %v3501, %v3503
      %3522 = vst [vmem:[#allocation3 + $0x1b0] sm:$0xff] %v3504
      %3523 = vst [vmem:[#allocation3 + $0x1b8] sm:$0xff] %v3505
      %3524 = vst [vmem:[#allocation3 + $0x1c0] sm:$0xff] %v3506
      %3525 = vst [vmem:[#allocation3 + $0x1c8] sm:$0xff] %v3507
      %3526 = vst [vmem:[#allocation3 + $0x1d0] sm:$0xff] %v3508
      %3527 = vst [vmem:[#allocation3 + $0x1d8] sm:$0xff] %v3509
      %3528 = vst [vmem:[#allocation3 + $0x1e0] sm:$0xff] %v3510
      %3529 = vst [vmem:[#allocation3 + $0x1e8] sm:$0xff] %v3511
      %3530 = vst [vmem:[#allocation3 + $0x1f0] sm:$0xff] %v3512
      %v3531 = vld [vmem:[#allocation2 + $0x8] sm:$0xff]
      %v3532 = vld [vmem:[#allocation2 + $0x10] sm:$0xff]
      %v3533 = vld [vmem:[#allocation2 + $0x18] sm:$0xff]
      %v3534 = vld [vmem:[#allocation2 + $0x20] sm:$0xff]
      %v3535 = vld [vmem:[#allocation2 + $0x30] sm:$0xff]
      %v3536 = vld [vmem:[#allocation2 + $0x38] sm:$0xff]
      %v3537 = vld [vmem:[#allocation2 + $0x40] sm:$0xff]
      %v3538 = vld [vmem:[#allocation2 + $0x48] sm:$0xff]
      %v3539 = vld [vmem:[#allocation2 + $0x58] sm:$0xff]
      %v3540 = vld [vmem:[#allocation2 + $0x60] sm:$0xff]
      %v3541 = vld [vmem:[#allocation2 + $0x68] sm:$0xff]
      %v3542 = vld [vmem:[#allocation2 + $0x70] sm:$0xff]
      %3555 = vrot.lane.b32.xlu0 %v3531, 110
      %v3556 = vpop.permute.xlu0 %3555
      %3557 = vrot.lane.b32.xlu0 %v3532, 110
      %v3558 = vpop.permute.xlu0 %3557
      %3559 = vrot.lane.b32.xlu0 %v3533, 110
      %v3560 = vpop.permute.xlu0 %3559
      %3561 = vrot.lane.b32.xlu0 %v3534, 110
      %v3562 = vpop.permute.xlu0 %3561
      %3563 = vrot.lane.b32.xlu0 %v3535, 110
      %v3564 = vpop.permute.xlu0 %3563
      %3565 = vrot.lane.b32.xlu0 %v3536, 110
      %v3566 = vpop.permute.xlu0 %3565
      %3567 = vrot.lane.b32.xlu0 %v3537, 110
      %v3568 = vpop.permute.xlu0 %3567
      %3569 = vrot.lane.b32.xlu0 %v3538, 110
      %v3570 = vpop.permute.xlu0 %3569
      %3571 = vrot.lane.b32.xlu0 %v3539, 110
      %v3572 = vpop.permute.xlu0 %3571
      %3573 = vrot.lane.b32.xlu0 %v3540, 110
      %v3574 = vpop.permute.xlu0 %3573
      %3575 = vrot.lane.b32.xlu0 %v3541, 110
      %v3576 = vpop.permute.xlu0 %3575
      %3577 = vrot.lane.b32.xlu0 %v3542, 110
      %v3578 = vpop.permute.xlu0 %3577
      %v3579 = vsel %vm876, %v3556, %v3558
      %v3580 = vsel %vm876, %v3558, %v3560
      %v3581 = vsel %vm876, %v3560, %v3562
      %v3582 = vsel %vm876, %v3564, %v3566
      %v3583 = vsel %vm876, %v3566, %v3568
      %v3584 = vsel %vm876, %v3568, %v3570
      %v3585 = vsel %vm876, %v3572, %v3574
      %v3586 = vsel %vm876, %v3574, %v3576
      %v3587 = vsel %vm876, %v3576, %v3578
      %3597 = vst [vmem:[#allocation3 + $0x1f8] sm:$0xff] %v3579
      %3598 = vst [vmem:[#allocation3 + $0x200] sm:$0xff] %v3580
      %3599 = vst [vmem:[#allocation3 + $0x208] sm:$0xff] %v3581
      %3600 = vst [vmem:[#allocation3 + $0x210] sm:$0xff] %v3582
      %3601 = vst [vmem:[#allocation3 + $0x218] sm:$0xff] %v3583
      %3602 = vst [vmem:[#allocation3 + $0x220] sm:$0xff] %v3584
      %3603 = vst [vmem:[#allocation3 + $0x228] sm:$0xff] %v3585
      %3604 = vst [vmem:[#allocation3 + $0x230] sm:$0xff] %v3586
      %3605 = vst [vmem:[#allocation3 + $0x238] sm:$0xff] %v3587
      %v3606 = vld [vmem:[#allocation2 + $0x8] sm:$0xff]
      %v3607 = vld [vmem:[#allocation2 + $0x10] sm:$0xff]
      %v3608 = vld [vmem:[#allocation2 + $0x18] sm:$0xff]
      %v3609 = vld [vmem:[#allocation2 + $0x20] sm:$0xff]
      %v3610 = vld [vmem:[#allocation2 + $0x30] sm:$0xff]
      %v3611 = vld [vmem:[#allocation2 + $0x38] sm:$0xff]
      %v3612 = vld [vmem:[#allocation2 + $0x40] sm:$0xff]
      %v3613 = vld [vmem:[#allocation2 + $0x48] sm:$0xff]
      %v3614 = vld [vmem:[#allocation2 + $0x58] sm:$0xff]
      %v3615 = vld [vmem:[#allocation2 + $0x60] sm:$0xff]
      %v3616 = vld [vmem:[#allocation2 + $0x68] sm:$0xff]
      %v3617 = vld [vmem:[#allocation2 + $0x70] sm:$0xff]
      %3630 = vrot.lane.b32.xlu0 %v3606, 109
      %v3631 = vpop.permute.xlu0 %3630
      %3632 = vrot.lane.b32.xlu0 %v3607, 109
      %v3633 = vpop.permute.xlu0 %3632
      %3634 = vrot.lane.b32.xlu0 %v3608, 109
      %v3635 = vpop.permute.xlu0 %3634
      %3636 = vrot.lane.b32.xlu0 %v3609, 109
      %v3637 = vpop.permute.xlu0 %3636
      %3638 = vrot.lane.b32.xlu0 %v3610, 109
      %v3639 = vpop.permute.xlu0 %3638
      %3640 = vrot.lane.b32.xlu0 %v3611, 109
      %v3641 = vpop.permute.xlu0 %3640
      %3642 = vrot.lane.b32.xlu0 %v3612, 109
      %v3643 = vpop.permute.xlu0 %3642
      %3644 = vrot.lane.b32.xlu0 %v3613, 109
      %v3645 = vpop.permute.xlu0 %3644
      %3646 = vrot.lane.b32.xlu0 %v3614, 109
      %v3647 = vpop.permute.xlu0 %3646
      %3648 = vrot.lane.b32.xlu0 %v3615, 109
      %v3649 = vpop.permute.xlu0 %3648
      %3650 = vrot.lane.b32.xlu0 %v3616, 109
      %v3651 = vpop.permute.xlu0 %3650
      %3652 = vrot.lane.b32.xlu0 %v3617, 109
      %v3653 = vpop.permute.xlu0 %3652
      %v3654 = vsel %vm952, %v3631, %v3633
      %v3655 = vsel %vm952, %v3633, %v3635
      %v3656 = vsel %vm952, %v3635, %v3637
      %v3657 = vsel %vm952, %v3639, %v3641
      %v3658 = vsel %vm952, %v3641, %v3643
      %v3659 = vsel %vm952, %v3643, %v3645
      %v3660 = vsel %vm952, %v3647, %v3649
      %v3661 = vsel %vm952, %v3649, %v3651
      %v3662 = vsel %vm952, %v3651, %v3653
      %3672 = vst [vmem:[#allocation3 + $0x240] sm:$0xff] %v3654
      %3673 = vst [vmem:[#allocation3 + $0x248] sm:$0xff] %v3655
      %3674 = vst [vmem:[#allocation3 + $0x250] sm:$0xff] %v3656
      %3675 = vst [vmem:[#allocation3 + $0x258] sm:$0xff] %v3657
      %3676 = vst [vmem:[#allocation3 + $0x260] sm:$0xff] %v3658
      %3677 = vst [vmem:[#allocation3 + $0x268] sm:$0xff] %v3659
      %3678 = vst [vmem:[#allocation3 + $0x270] sm:$0xff] %v3660
      %3679 = vst [vmem:[#allocation3 + $0x278] sm:$0xff] %v3661
      %3680 = vst [vmem:[#allocation3 + $0x280] sm:$0xff] %v3662
      %s3681 = scalar_lea.vmem %s5, 16
      %v3682 = vld [vmem:[%s3681] sm:$0xff]
      %v3683 = vld [vmem:[%s3681 + $0x8] sm:$0xff]
      %v3684 = vld [vmem:[#allocation3] sm:$0xff]
      %v3685 = vld [vmem:[#allocation3 + $0x8] sm:$0xff]
      %v3686 = vld [vmem:[#allocation3 + $0x10] sm:$0xff]
      %v3687 = vld [vmem:[#allocation3 + $0x18] sm:$0xff]
      %v3688 = vld [vmem:[#allocation3 + $0x20] sm:$0xff]
      %v3689 = vld [vmem:[#allocation3 + $0x28] sm:$0xff]
      %v3690 = vld [vmem:[#allocation3 + $0x30] sm:$0xff]
      %v3691 = vld [vmem:[#allocation3 + $0x38] sm:$0xff]
      %v3692 = vld [vmem:[#allocation3 + $0x40] sm:$0xff]
      %v3693 = vld [vmem:[#allocation3 + $0x48] sm:$0xff]
      %v3694 = vld [vmem:[#allocation3 + $0x50] sm:$0xff]
      %v3695 = vld [vmem:[#allocation3 + $0x58] sm:$0xff]
      %v3696 = vld [vmem:[#allocation3 + $0x60] sm:$0xff]
      %v3697 = vld [vmem:[#allocation3 + $0x68] sm:$0xff]
      %v3698 = vld [vmem:[#allocation3 + $0x70] sm:$0xff]
      %v3699 = vld [vmem:[#allocation3 + $0x78] sm:$0xff]
      %v3700 = vld [vmem:[#allocation3 + $0x80] sm:$0xff]
      %v3701 = vld [vmem:[#allocation3 + $0x88] sm:$0xff]
      %v3702 = vld [vmem:[#allocation3 + $0x90] sm:$0xff]
      %v3703 = vld [vmem:[#allocation3 + $0x98] sm:$0xff]
      %v3704 = vld [vmem:[#allocation3 + $0xa0] sm:$0xff]
      %v3705 = vld [vmem:[#allocation3 + $0xa8] sm:$0xff]
      %v3706 = vld [vmem:[#allocation3 + $0xb0] sm:$0xff]
      %v3707 = vld [vmem:[#allocation3 + $0xb8] sm:$0xff]
      %v3708 = vld [vmem:[#allocation3 + $0xc0] sm:$0xff]
      %v3709 = vld [vmem:[#allocation3 + $0xc8] sm:$0xff]
      %v3710 = vld [vmem:[#allocation3 + $0xd0] sm:$0xff]
      %v3711 = vld [vmem:[#allocation3 + $0xd8] sm:$0xff]
      %v3712 = vld [vmem:[#allocation3 + $0xe0] sm:$0xff]
      %v3713 = vld [vmem:[#allocation3 + $0xe8] sm:$0xff]
      %v3714 = vld [vmem:[#allocation3 + $0xf0] sm:$0xff]
      %v3715 = vld [vmem:[#allocation3 + $0xf8] sm:$0xff]
      %v3716 = vld [vmem:[#allocation3 + $0x100] sm:$0xff]
      %v3717 = vld [vmem:[#allocation3 + $0x108] sm:$0xff]
      %v3718 = vld [vmem:[#allocation3 + $0x110] sm:$0xff]
      %v3719 = vld [vmem:[#allocation3 + $0x118] sm:$0xff]
      %v3720 = vld [vmem:[#allocation3 + $0x120] sm:$0xff]
      %v3721 = vld [vmem:[#allocation3 + $0x128] sm:$0xff]
      %v3722 = vld [vmem:[#allocation3 + $0x130] sm:$0xff]
      %v3723 = vld [vmem:[#allocation3 + $0x138] sm:$0xff]
      %v3724 = vld [vmem:[#allocation3 + $0x140] sm:$0xff]
      %v3725 = vld [vmem:[#allocation3 + $0x148] sm:$0xff]
      %v3726 = vld [vmem:[#allocation3 + $0x150] sm:$0xff]
      %v3727 = vld [vmem:[#allocation3 + $0x158] sm:$0xff]
      %v3728 = vld [vmem:[#allocation3 + $0x160] sm:$0xff]
      %v3729 = vld [vmem:[#allocation3 + $0x168] sm:$0xff]
      %v3730 = vld [vmem:[#allocation3 + $0x170] sm:$0xff]
      %v3731 = vld [vmem:[#allocation3 + $0x178] sm:$0xff]
      %v3732 = vld [vmem:[#allocation3 + $0x180] sm:$0xff]
      %v3733 = vld [vmem:[#allocation3 + $0x188] sm:$0xff]
      %v3734 = vld [vmem:[#allocation3 + $0x190] sm:$0xff]
      %v3735 = vld [vmem:[#allocation3 + $0x198] sm:$0xff]
      %v3736 = vld [vmem:[#allocation3 + $0x1a0] sm:$0xff]
      %v3737 = vld [vmem:[#allocation3 + $0x1a8] sm:$0xff]
      %v3738 = vld [vmem:[#allocation3 + $0x1b0] sm:$0xff]
      %v3739 = vld [vmem:[#allocation3 + $0x1b8] sm:$0xff]
      %v3740 = vld [vmem:[#allocation3 + $0x1c0] sm:$0xff]
      %v3741 = vld [vmem:[#allocation3 + $0x1c8] sm:$0xff]
      %v3742 = vld [vmem:[#allocation3 + $0x1d0] sm:$0xff]
      %v3743 = vld [vmem:[#allocation3 + $0x1d8] sm:$0xff]
      %v3744 = vld [vmem:[#allocation3 + $0x1e0] sm:$0xff]
      %v3745 = vld [vmem:[#allocation3 + $0x1e8] sm:$0xff]
      %v3746 = vld [vmem:[#allocation3 + $0x1f0] sm:$0xff]
      %v3747 = vld [vmem:[#allocation3 + $0x1f8] sm:$0xff]
      %v3748 = vld [vmem:[#allocation3 + $0x200] sm:$0xff]
      %v3749 = vld [vmem:[#allocation3 + $0x208] sm:$0xff]
      %v3750 = vld [vmem:[#allocation3 + $0x210] sm:$0xff]
      %v3751 = vld [vmem:[#allocation3 + $0x218] sm:$0xff]
      %v3752 = vld [vmem:[#allocation3 + $0x220] sm:$0xff]
      %v3753 = vld [vmem:[#allocation3 + $0x228] sm:$0xff]
      %v3754 = vld [vmem:[#allocation3 + $0x230] sm:$0xff]
      %v3755 = vld [vmem:[#allocation3 + $0x238] sm:$0xff]
      %v3756 = vld [vmem:[#allocation3 + $0x240] sm:$0xff]
      %v3757 = vld [vmem:[#allocation3 + $0x248] sm:$0xff]
      %v3758 = vld [vmem:[#allocation3 + $0x250] sm:$0xff]
      %v3759 = vld [vmem:[#allocation3 + $0x258] sm:$0xff]
      %v3760 = vld [vmem:[#allocation3 + $0x260] sm:$0xff]
      %v3761 = vld [vmem:[#allocation3 + $0x268] sm:$0xff]
      %v3762 = vld [vmem:[#allocation3 + $0x270] sm:$0xff]
      %v3763 = vld [vmem:[#allocation3 + $0x278] sm:$0xff]
      %v3764 = vld [vmem:[#allocation3 + $0x280] sm:$0xff]
      %v3766 = vsel %vm1083, %v3683, 0
      %3768 = vmatprep.subr.mxu0 %v3730
      %3769 = vmatpush1.msra.mxu0 %v3729
      %3770 = vmatprep.subr.mxu0 %v3727
      %3771 = vmatpush1.msra.mxu0 %v3726
      %3772 = vmatprep.subr.mxu0 %v3724
      %3773 = vmatpush1.msra.mxu0 %v3723
      %3774 = vmatprep.subr.mxu0 %v3721
      %3775 = vmatpush1.msra.mxu0 %v3720
      %3776 = vmatprep.subr.mxu0 %v3718
      %3777 = vmatpush1.msra.mxu0 %v3717
      %3778 = vmatprep.subr.mxu0 %v3715
      %3779 = vmatpush1.msra.mxu0 %v3714
      %3780 = vmatprep.subr.mxu0 %v3712
      %3781 = vmatpush1.msra.mxu0 %v3711
      %3782 = vmatprep.subr.mxu0 %v3709
      %3783 = vmatpush1.msra.mxu0 %v3708
      %3784 = vmatprep.subr.mxu0 %v3706
      %3785 = vmatpush1.msra.mxu0 %v3705
      %3786 = vmatprep.subr.mxu0 %v3703
      %3787 = vmatpush1.msra.mxu0 %v3702
      %3788 = vmatprep.subr.mxu0 %v3700
      %3789 = vmatpush1.msra.mxu0 %v3699
      %3790 = vmatprep.subr.mxu0 %v3697
      %3791 = vmatpush1.msra.mxu0 %v3696
      %3792 = vmatprep.subr.mxu0 %v3694
      %3793 = vmatpush1.msra.mxu0 %v3693
      %3794 = vmatprep.subr.mxu0 %v3691
      %3795 = vmatpush1.msra.mxu0 %v3690
      %3796 = vmatprep.subr.mxu0 %v3688
      %3797 = vmatpush1.msra.mxu0 %v3687
      %3798 = vmatprep.subr.mxu0 %v3685
      %3799 = vmatpush1.msra.mxu0 %v3684
      %3800 = vmatprep.subr.mxu0 0.0
      %3801 = vmatpush2.msra.mxu0 0.0
      %3802 = vmatprep.subr.mxu0 0.0
      %3803 = vmatpush2.msra.mxu0 0.0
      %3804 = vmatprep.subr.mxu0 0.0
      %3805 = vmatpush2.msra.mxu0 0.0
      %3806 = vmatprep.subr.mxu0 0.0
      %3807 = vmatpush2.msra.mxu0 0.0
      %3808 = vmatprep.subr.mxu0 0.0
      %3809 = vmatpush2.msra.mxu0 0.0
      %3810 = vmatprep.subr.mxu0 %v3763
      %3811 = vmatpush2.msra.mxu0 %v3762
      %3812 = vmatprep.subr.mxu0 %v3760
      %3813 = vmatpush2.msra.mxu0 %v3759
      %3814 = vmatprep.subr.mxu0 %v3757
      %3815 = vmatpush2.msra.mxu0 %v3756
      %3816 = vmatprep.subr.mxu0 %v3754
      %3817 = vmatpush2.msra.mxu0 %v3753
      %3818 = vmatprep.subr.mxu0 %v3751
      %3819 = vmatpush2.msra.mxu0 %v3750
      %3820 = vmatprep.subr.mxu0 %v3748
      %3821 = vmatpush2.msra.mxu0 %v3747
      %3822 = vmatprep.subr.mxu0 %v3745
      %3823 = vmatpush2.msra.mxu0 %v3744
      %3824 = vmatprep.subr.mxu0 %v3742
      %3825 = vmatpush2.msra.mxu0 %v3741
      %3826 = vmatprep.subr.mxu0 %v3739
      %3827 = vmatpush2.msra.mxu0 %v3738
      %3828 = vmatprep.subr.mxu0 %v3736
      %3829 = vmatpush2.msra.mxu0 %v3735
      %3830 = vmatprep.subr.mxu0 %v3733
      %3831 = vmatpush2.msra.mxu0 %v3732
      %3832 = vmatprep.mubr.f32.mxu0 %v3766
      %3833 = vmatmul.mubr.f32.gmra.mxu0 %v3682
      %v3834 = vpop.f32.mrf.mxu0
      %v3835 = vadd.f32 0.0, %v3834
      %v3836 = vpop.f32.mrf.mxu0
      %v3837 = vadd.f32 0.0, %v3836
      %3838 = vdwg.mxu0
      %3839 = vmatprep.subr.mxu0 0.0
      %3840 = vmatpush1.msra.mxu0 %v3731
      %3841 = vmatprep.subr.mxu0 0.0
      %3842 = vmatpush1.msra.mxu0 %v3728
      %3843 = vmatprep.subr.mxu0 0.0
      %3844 = vmatpush1.msra.mxu0 %v3725
      %3845 = vmatprep.subr.mxu0 0.0
      %3846 = vmatpush1.msra.mxu0 %v3722
      %3847 = vmatprep.subr.mxu0 0.0
      %3848 = vmatpush1.msra.mxu0 %v3719
      %3849 = vmatprep.subr.mxu0 0.0
      %3850 = vmatpush1.msra.mxu0 %v3716
      %3851 = vmatprep.subr.mxu0 0.0
      %3852 = vmatpush1.msra.mxu0 %v3713
      %3853 = vmatprep.subr.mxu0 0.0
      %3854 = vmatpush1.msra.mxu0 %v3710
      %3855 = vmatprep.subr.mxu0 0.0
      %3856 = vmatpush1.msra.mxu0 %v3707
      %3857 = vmatprep.subr.mxu0 0.0
      %3858 = vmatpush1.msra.mxu0 %v3704
      %3859 = vmatprep.subr.mxu0 0.0
      %3860 = vmatpush1.msra.mxu0 %v3701
      %3861 = vmatprep.subr.mxu0 0.0
      %3862 = vmatpush1.msra.mxu0 %v3698
      %3863 = vmatprep.subr.mxu0 0.0
      %3864 = vmatpush1.msra.mxu0 %v3695
      %3865 = vmatprep.subr.mxu0 0.0
      %3866 = vmatpush1.msra.mxu0 %v3692
      %3867 = vmatprep.subr.mxu0 0.0
      %3868 = vmatpush1.msra.mxu0 %v3689
      %3869 = vmatprep.subr.mxu0 0.0
      %3870 = vmatpush1.msra.mxu0 %v3686
      %3871 = vmatprep.subr.mxu0 0.0
      %3872 = vmatpush2.msra.mxu0 0.0
      %3873 = vmatprep.subr.mxu0 0.0
      %3874 = vmatpush2.msra.mxu0 0.0
      %3875 = vmatprep.subr.mxu0 0.0
      %3876 = vmatpush2.msra.mxu0 0.0
      %3877 = vmatprep.subr.mxu0 0.0
      %3878 = vmatpush2.msra.mxu0 0.0
      %3879 = vmatprep.subr.mxu0 0.0
      %3880 = vmatpush2.msra.mxu0 0.0
      %3881 = vmatprep.subr.mxu0 0.0
      %3882 = vmatpush2.msra.mxu0 %v3764
      %3883 = vmatprep.subr.mxu0 0.0
      %3884 = vmatpush2.msra.mxu0 %v3761
      %3885 = vmatprep.subr.mxu0 0.0
      %3886 = vmatpush2.msra.mxu0 %v3758
      %3887 = vmatprep.subr.mxu0 0.0
      %3888 = vmatpush2.msra.mxu0 %v3755
      %3889 = vmatprep.subr.mxu0 0.0
      %3890 = vmatpush2.msra.mxu0 %v3752
      %3891 = vmatprep.subr.mxu0 0.0
      %3892 = vmatpush2.msra.mxu0 %v3749
      %3893 = vmatprep.subr.mxu0 0.0
      %3894 = vmatpush2.msra.mxu0 %v3746
      %3895 = vmatprep.subr.mxu0 0.0
      %3896 = vmatpush2.msra.mxu0 %v3743
      %3897 = vmatprep.subr.mxu0 0.0
      %3898 = vmatpush2.msra.mxu0 %v3740
      %3899 = vmatprep.subr.mxu0 0.0
      %3900 = vmatpush2.msra.mxu0 %v3737
      %3901 = vmatprep.subr.mxu0 0.0
      %3902 = vmatpush2.msra.mxu0 %v3734
      %3903 = vmatprep.mubr.f32.mxu0 %v3766
      %3904 = vmatmul.mubr.f32.gmra.mxu0 %v3682
      %v3905 = vpop.f32.mrf.mxu0
      %v3906 = vadd.f32 0.0, %v3905
      %v3907 = vpop.f32.mrf.mxu0
      %3908 = vdwg.mxu0
      %v3909 = vld [vmem:[%s351] ss:$8 sm:$0x7]
      %s3910 = scalar_lea.vmem %s6, 1
      %v3911 = vld [vmem:[%s3910] sm:$0x1]
      %3913 = vset.pattern.permute.xlu0 0
      %3914 = vperm.xlu0 %3913, %v3911
      %v3915 = vpop.permute.xlu0 %3914
      %v3917 = vlaneseq
      %v3918 = vshrl.u32 %v3917, 7
      %v3919 = vsub.s32 0, %v3918
      %v3920 = vrot.slane %v3915, %v3919
      %v3921 = vadd.f32 %v3835, %v3920
      %v3922 = vadd.f32 %v3837, %v3920
      %v3923 = vadd.f32 %v3906, %v3920
      %v3924 = vmul.f32 %v3921, %v314
      %v3925 = vmul.f32 %v3922, %v318
      %v3926 = vmul.f32 %v3923, %v322
      %v3930 = vcombine.low %v3924, %v3925
      %v3932 = vunpack.c.l.s4 1966171168
      %v3933 = vunpack.c.0.s8 %v3932
      %v3934 = vlaneseq
      %v3935 = vshrl.u32 %v3934, 7
      %v3936 = vsub.s32 %v3933, %v3935
      %v3937 = vrot.slane %v3930, %v3936
      %v3939 = vunpack.c.l.s4 1966171168
      %v3940 = vunpack.c.0.s8 %v3939
      %v3941 = vlaneseq
      %v3942 = vshrl.u32 %v3941, 7
      %v3943 = vsub.s32 %v3940, %v3942
      %v3944 = vrot.slane %v3926, %v3943
      %v3945 = vcombine.low %v3937, %v3944
      %v3947 = vunpack.c.l.s4 1966171168
      %v3948 = vunpack.c.0.s8 %v3947
      %v3949 = vlaneseq
      %v3950 = vshrl.u32 %v3949, 7
      %v3951 = vsub.s32 %v3948, %v3950
      %v3952 = vrot.slane %v3945, %v3951
      %v3954 = vadd.f32 %v3909, %v3952
      %3955 = vst.msk [vmem:[%s351] ss:$8 sm:$0x7] %vm350, %v3954
      %3956 = vst.msk [vmem:[%s351] ss:$8 sm:$0x0] %vm350, %v3954
      %v3957 = vld [vmem:[#allocation2] sm:$0xff]
      %v3958 = vld [vmem:[#allocation2 + $0x8] sm:$0xff]
      %v3959 = vld [vmem:[#allocation2 + $0x10] sm:$0xff]
      %v3960 = vld [vmem:[#allocation2 + $0x18] sm:$0xff]
      %v3961 = vld [vmem:[#allocation2 + $0x28] sm:$0xff]
      %v3962 = vld [vmem:[#allocation2 + $0x30] sm:$0xff]
      %v3963 = vld [vmem:[#allocation2 + $0x38] sm:$0xff]
      %v3964 = vld [vmem:[#allocation2 + $0x40] sm:$0xff]
      %v3965 = vld [vmem:[#allocation2 + $0x50] sm:$0xff]
      %v3966 = vld [vmem:[#allocation2 + $0x58] sm:$0xff]
      %v3967 = vld [vmem:[#allocation2 + $0x60] sm:$0xff]
      %v3968 = vld [vmem:[#allocation2 + $0x68] sm:$0xff]
      %3981 = vrot.lane.b32.xlu0 %v3957, 19
      %v3982 = vpop.permute.xlu0 %3981
      %3983 = vrot.lane.b32.xlu0 %v3958, 19
      %v3984 = vpop.permute.xlu0 %3983
      %3985 = vrot.lane.b32.xlu0 %v3959, 19
      %v3986 = vpop.permute.xlu0 %3985
      %3987 = vrot.lane.b32.xlu0 %v3960, 19
      %v3988 = vpop.permute.xlu0 %3987
      %3989 = vrot.lane.b32.xlu0 %v3961, 19
      %v3990 = vpop.permute.xlu0 %3989
      %3991 = vrot.lane.b32.xlu0 %v3962, 19
      %v3992 = vpop.permute.xlu0 %3991
      %3993 = vrot.lane.b32.xlu0 %v3963, 19
      %v3994 = vpop.permute.xlu0 %3993
      %3995 = vrot.lane.b32.xlu0 %v3964, 19
      %v3996 = vpop.permute.xlu0 %3995
      %3997 = vrot.lane.b32.xlu0 %v3965, 19
      %v3998 = vpop.permute.xlu0 %3997
      %3999 = vrot.lane.b32.xlu0 %v3966, 19
      %v4000 = vpop.permute.xlu0 %3999
      %4001 = vrot.lane.b32.xlu0 %v3967, 19
      %v4002 = vpop.permute.xlu0 %4001
      %4003 = vrot.lane.b32.xlu0 %v3968, 19
      %v4004 = vpop.permute.xlu0 %4003
      %v4005 = vsel %vm402, %v3982, %v3984
      %v4006 = vsel %vm402, %v3984, %v3986
      %v4007 = vsel %vm402, %v3986, %v3988
      %v4008 = vsel %vm402, %v3990, %v3992
      %v4009 = vsel %vm402, %v3992, %v3994
      %v4010 = vsel %vm402, %v3994, %v3996
      %v4011 = vsel %vm402, %v3998, %v4000
      %v4012 = vsel %vm402, %v4000, %v4002
      %v4013 = vsel %vm402, %v4002, %v4004
      %4023 = vst [vmem:[#allocation3] sm:$0xff] %v4005
      %4024 = vst [vmem:[#allocation3 + $0x8] sm:$0xff] %v4006
      %4025 = vst [vmem:[#allocation3 + $0x10] sm:$0xff] %v4007
      %4026 = vst [vmem:[#allocation3 + $0x18] sm:$0xff] %v4008
      %4027 = vst [vmem:[#allocation3 + $0x20] sm:$0xff] %v4009
      %4028 = vst [vmem:[#allocation3 + $0x28] sm:$0xff] %v4010
      %4029 = vst [vmem:[#allocation3 + $0x30] sm:$0xff] %v4011
      %4030 = vst [vmem:[#allocation3 + $0x38] sm:$0xff] %v4012
      %4031 = vst [vmem:[#allocation3 + $0x40] sm:$0xff] %v4013
      %v4032 = vld [vmem:[#allocation2] sm:$0xff]
      %v4033 = vld [vmem:[#allocation2 + $0x8] sm:$0xff]
      %v4034 = vld [vmem:[#allocation2 + $0x10] sm:$0xff]
      %v4035 = vld [vmem:[#allocation2 + $0x18] sm:$0xff]
      %v4036 = vld [vmem:[#allocation2 + $0x28] sm:$0xff]
      %v4037 = vld [vmem:[#allocation2 + $0x30] sm:$0xff]
      %v4038 = vld [vmem:[#allocation2 + $0x38] sm:$0xff]
      %v4039 = vld [vmem:[#allocation2 + $0x40] sm:$0xff]
      %v4040 = vld [vmem:[#allocation2 + $0x50] sm:$0xff]
      %v4041 = vld [vmem:[#allocation2 + $0x58] sm:$0xff]
      %v4042 = vld [vmem:[#allocation2 + $0x60] sm:$0xff]
      %v4043 = vld [vmem:[#allocation2 + $0x68] sm:$0xff]
      %4056 = vrot.lane.b32.xlu0 %v4032, 18
      %v4057 = vpop.permute.xlu0 %4056
      %4058 = vrot.lane.b32.xlu0 %v4033, 18
      %v4059 = vpop.permute.xlu0 %4058
      %4060 = vrot.lane.b32.xlu0 %v4034, 18
      %v4061 = vpop.permute.xlu0 %4060
      %4062 = vrot.lane.b32.xlu0 %v4035, 18
      %v4063 = vpop.permute.xlu0 %4062
      %4064 = vrot.lane.b32.xlu0 %v4036, 18
      %v4065 = vpop.permute.xlu0 %4064
      %4066 = vrot.lane.b32.xlu0 %v4037, 18
      %v4067 = vpop.permute.xlu0 %4066
      %4068 = vrot.lane.b32.xlu0 %v4038, 18
      %v4069 = vpop.permute.xlu0 %4068
      %4070 = vrot.lane.b32.xlu0 %v4039, 18
      %v4071 = vpop.permute.xlu0 %4070
      %4072 = vrot.lane.b32.xlu0 %v4040, 18
      %v4073 = vpop.permute.xlu0 %4072
      %4074 = vrot.lane.b32.xlu0 %v4041, 18
      %v4075 = vpop.permute.xlu0 %4074
      %4076 = vrot.lane.b32.xlu0 %v4042, 18
      %v4077 = vpop.permute.xlu0 %4076
      %4078 = vrot.lane.b32.xlu0 %v4043, 18
      %v4079 = vpop.permute.xlu0 %4078
      %v4080 = vsel %vm478, %v4057, %v4059
      %v4081 = vsel %vm478, %v4059, %v4061
      %v4082 = vsel %vm478, %v4061, %v4063
      %v4083 = vsel %vm478, %v4065, %v4067
      %v4084 = vsel %vm478, %v4067, %v4069
      %v4085 = vsel %vm478, %v4069, %v4071
      %v4086 = vsel %vm478, %v4073, %v4075
      %v4087 = vsel %vm478, %v4075, %v4077
      %v4088 = vsel %vm478, %v4077, %v4079
      %4098 = vst [vmem:[#allocation3 + $0x48] sm:$0xff] %v4080
      %4099 = vst [vmem:[#allocation3 + $0x50] sm:$0xff] %v4081
      %4100 = vst [vmem:[#allocation3 + $0x58] sm:$0xff] %v4082
      %4101 = vst [vmem:[#allocation3 + $0x60] sm:$0xff] %v4083
      %4102 = vst [vmem:[#allocation3 + $0x68] sm:$0xff] %v4084
      %4103 = vst [vmem:[#allocation3 + $0x70] sm:$0xff] %v4085
      %4104 = vst [vmem:[#allocation3 + $0x78] sm:$0xff] %v4086
      %4105 = vst [vmem:[#allocation3 + $0x80] sm:$0xff] %v4087
      %4106 = vst [vmem:[#allocation3 + $0x88] sm:$0xff] %v4088
      %v4107 = vld [vmem:[#allocation2] sm:$0xff]
      %v4108 = vld [vmem:[#allocation2 + $0x8] sm:$0xff]
      %v4109 = vld [vmem:[#allocation2 + $0x10] sm:$0xff]
      %v4110 = vld [vmem:[#allocation2 + $0x18] sm:$0xff]
      %v4111 = vld [vmem:[#allocation2 + $0x28] sm:$0xff]
      %v4112 = vld [vmem:[#allocation2 + $0x30] sm:$0xff]
      %v4113 = vld [vmem:[#allocation2 + $0x38] sm:$0xff]
      %v4114 = vld [vmem:[#allocation2 + $0x40] sm:$0xff]
      %v4115 = vld [vmem:[#allocation2 + $0x50] sm:$0xff]
      %v4116 = vld [vmem:[#allocation2 + $0x58] sm:$0xff]
      %v4117 = vld [vmem:[#allocation2 + $0x60] sm:$0xff]
      %v4118 = vld [vmem:[#allocation2 + $0x68] sm:$0xff]
      %4131 = vrot.lane.b32.xlu0 %v4107, 17
      %v4132 = vpop.permute.xlu0 %4131
      %4133 = vrot.lane.b32.xlu0 %v4108, 17
      %v4134 = vpop.permute.xlu0 %4133
      %4135 = vrot.lane.b32.xlu0 %v4109, 17
      %v4136 = vpop.permute.xlu0 %4135
      %4137 = vrot.lane.b32.xlu0 %v4110, 17
      %v4138 = vpop.permute.xlu0 %4137
      %4139 = vrot.lane.b32.xlu0 %v4111, 17
      %v4140 = vpop.permute.xlu0 %4139
      %4141 = vrot.lane.b32.xlu0 %v4112, 17
      %v4142 = vpop.permute.xlu0 %4141
      %4143 = vrot.lane.b32.xlu0 %v4113, 17
      %v4144 = vpop.permute.xlu0 %4143
      %4145 = vrot.lane.b32.xlu0 %v4114, 17
      %v4146 = vpop.permute.xlu0 %4145
      %4147 = vrot.lane.b32.xlu0 %v4115, 17
      %v4148 = vpop.permute.xlu0 %4147
      %4149 = vrot.lane.b32.xlu0 %v4116, 17
      %v4150 = vpop.permute.xlu0 %4149
      %4151 = vrot.lane.b32.xlu0 %v4117, 17
      %v4152 = vpop.permute.xlu0 %4151
      %4153 = vrot.lane.b32.xlu0 %v4118, 17
      %v4154 = vpop.permute.xlu0 %4153
      %v4155 = vsel %vm554, %v4132, %v4134
      %v4156 = vsel %vm554, %v4134, %v4136
      %v4157 = vsel %vm554, %v4136, %v4138
      %v4158 = vsel %vm554, %v4140, %v4142
      %v4159 = vsel %vm554, %v4142, %v4144
      %v4160 = vsel %vm554, %v4144, %v4146
      %v4161 = vsel %vm554, %v4148, %v4150
      %v4162 = vsel %vm554, %v4150, %v4152
      %v4163 = vsel %vm554, %v4152, %v4154
      %4173 = vst [vmem:[#allocation3 + $0x90] sm:$0xff] %v4155
      %4174 = vst [vmem:[#allocation3 + $0x98] sm:$0xff] %v4156
      %4175 = vst [vmem:[#allocation3 + $0xa0] sm:$0xff] %v4157
      %4176 = vst [vmem:[#allocation3 + $0xa8] sm:$0xff] %v4158
      %4177 = vst [vmem:[#allocation3 + $0xb0] sm:$0xff] %v4159
      %4178 = vst [vmem:[#allocation3 + $0xb8] sm:$0xff] %v4160
      %4179 = vst [vmem:[#allocation3 + $0xc0] sm:$0xff] %v4161
      %4180 = vst [vmem:[#allocation3 + $0xc8] sm:$0xff] %v4162
      %4181 = vst [vmem:[#allocation3 + $0xd0] sm:$0xff] %v4163
      %v4182 = vld [vmem:[#allocation2] sm:$0xff]
      %v4183 = vld [vmem:[#allocation2 + $0x8] sm:$0xff]
      %v4184 = vld [vmem:[#allocation2 + $0x10] sm:$0xff]
      %v4185 = vld [vmem:[#allocation2 + $0x18] sm:$0xff]
      %v4186 = vld [vmem:[#allocation2 + $0x28] sm:$0xff]
      %v4187 = vld [vmem:[#allocation2 + $0x30] sm:$0xff]
      %v4188 = vld [vmem:[#allocation2 + $0x38] sm:$0xff]
      %v4189 = vld [vmem:[#allocation2 + $0x40] sm:$0xff]
      %v4190 = vld [vmem:[#allocation2 + $0x50] sm:$0xff]
      %v4191 = vld [vmem:[#allocation2 + $0x58] sm:$0xff]
      %v4192 = vld [vmem:[#allocation2 + $0x60] sm:$0xff]
      %v4193 = vld [vmem:[#allocation2 + $0x68] sm:$0xff]
      %4206 = vrot.lane.b32.xlu0 %v4182, 1
      %v4207 = vpop.permute.xlu0 %4206
      %4208 = vrot.lane.b32.xlu0 %v4183, 1
      %v4209 = vpop.permute.xlu0 %4208
      %4210 = vrot.lane.b32.xlu0 %v4184, 1
      %v4211 = vpop.permute.xlu0 %4210
      %4212 = vrot.lane.b32.xlu0 %v4185, 1
      %v4213 = vpop.permute.xlu0 %4212
      %4214 = vrot.lane.b32.xlu0 %v4186, 1
      %v4215 = vpop.permute.xlu0 %4214
      %4216 = vrot.lane.b32.xlu0 %v4187, 1
      %v4217 = vpop.permute.xlu0 %4216
      %4218 = vrot.lane.b32.xlu0 %v4188, 1
      %v4219 = vpop.permute.xlu0 %4218
      %4220 = vrot.lane.b32.xlu0 %v4189, 1
      %v4221 = vpop.permute.xlu0 %4220
      %4222 = vrot.lane.b32.xlu0 %v4190, 1
      %v4223 = vpop.permute.xlu0 %4222
      %4224 = vrot.lane.b32.xlu0 %v4191, 1
      %v4225 = vpop.permute.xlu0 %4224
      %4226 = vrot.lane.b32.xlu0 %v4192, 1
      %v4227 = vpop.permute.xlu0 %4226
      %4228 = vrot.lane.b32.xlu0 %v4193, 1
      %v4229 = vpop.permute.xlu0 %4228
      %v4230 = vsel %vm630, %v4207, %v4209
      %v4231 = vsel %vm630, %v4209, %v4211
      %v4232 = vsel %vm630, %v4211, %v4213
      %v4233 = vsel %vm630, %v4215, %v4217
      %v4234 = vsel %vm630, %v4217, %v4219
      %v4235 = vsel %vm630, %v4219, %v4221
      %v4236 = vsel %vm630, %v4223, %v4225
      %v4237 = vsel %vm630, %v4225, %v4227
      %v4238 = vsel %vm630, %v4227, %v4229
      %4248 = vst [vmem:[#allocation3 + $0xd8] sm:$0xff] %v4230
      %4249 = vst [vmem:[#allocation3 + $0xe0] sm:$0xff] %v4231
      %4250 = vst [vmem:[#allocation3 + $0xe8] sm:$0xff] %v4232
      %4251 = vst [vmem:[#allocation3 + $0xf0] sm:$0xff] %v4233
      %4252 = vst [vmem:[#allocation3 + $0xf8] sm:$0xff] %v4234
      %4253 = vst [vmem:[#allocation3 + $0x100] sm:$0xff] %v4235
      %4254 = vst [vmem:[#allocation3 + $0x108] sm:$0xff] %v4236
      %4255 = vst [vmem:[#allocation3 + $0x110] sm:$0xff] %v4237
      %4256 = vst [vmem:[#allocation3 + $0x118] sm:$0xff] %v4238
      %v4257 = vld [vmem:[#allocation2 + $0x8] sm:$0xff]
      %v4258 = vld [vmem:[#allocation2 + $0x10] sm:$0xff]
      %v4259 = vld [vmem:[#allocation2 + $0x18] sm:$0xff]
      %v4260 = vld [vmem:[#allocation2 + $0x30] sm:$0xff]
      %v4261 = vld [vmem:[#allocation2 + $0x38] sm:$0xff]
      %v4262 = vld [vmem:[#allocation2 + $0x40] sm:$0xff]
      %v4263 = vld [vmem:[#allocation2 + $0x58] sm:$0xff]
      %v4264 = vld [vmem:[#allocation2 + $0x60] sm:$0xff]
      %v4265 = vld [vmem:[#allocation2 + $0x68] sm:$0xff]
      %4266 = vst [vmem:[#allocation3 + $0x120] sm:$0xff] %v4257
      %4267 = vst [vmem:[#allocation3 + $0x128] sm:$0xff] %v4258
      %4268 = vst [vmem:[#allocation3 + $0x130] sm:$0xff] %v4259
      %4269 = vst [vmem:[#allocation3 + $0x138] sm:$0xff] %v4260
      %4270 = vst [vmem:[#allocation3 + $0x140] sm:$0xff] %v4261
      %4271 = vst [vmem:[#allocation3 + $0x148] sm:$0xff] %v4262
      %4272 = vst [vmem:[#allocation3 + $0x150] sm:$0xff] %v4263
      %4273 = vst [vmem:[#allocation3 + $0x158] sm:$0xff] %v4264
      %4274 = vst [vmem:[#allocation3 + $0x160] sm:$0xff] %v4265
      %v4275 = vld [vmem:[#allocation2 + $0x8] sm:$0xff]
      %v4276 = vld [vmem:[#allocation2 + $0x10] sm:$0xff]
      %v4277 = vld [vmem:[#allocation2 + $0x18] sm:$0xff]
      %v4278 = vld [vmem:[#allocation2 + $0x20] sm:$0xff]
      %v4279 = vld [vmem:[#allocation2 + $0x30] sm:$0xff]
      %v4280 = vld [vmem:[#allocation2 + $0x38] sm:$0xff]
      %v4281 = vld [vmem:[#allocation2 + $0x40] sm:$0xff]
      %v4282 = vld [vmem:[#allocation2 + $0x48] sm:$0xff]
      %v4283 = vld [vmem:[#allocation2 + $0x58] sm:$0xff]
      %v4284 = vld [vmem:[#allocation2 + $0x60] sm:$0xff]
      %v4285 = vld [vmem:[#allocation2 + $0x68] sm:$0xff]
      %v4286 = vld [vmem:[#allocation2 + $0x70] sm:$0xff]
      %4299 = vrot.lane.b32.xlu0 %v4275, 127
      %v4300 = vpop.permute.xlu0 %4299
      %4301 = vrot.lane.b32.xlu0 %v4276, 127
      %v4302 = vpop.permute.xlu0 %4301
      %4303 = vrot.lane.b32.xlu0 %v4277, 127
      %v4304 = vpop.permute.xlu0 %4303
      %4305 = vrot.lane.b32.xlu0 %v4278, 127
      %v4306 = vpop.permute.xlu0 %4305
      %4307 = vrot.lane.b32.xlu0 %v4279, 127
      %v4308 = vpop.permute.xlu0 %4307
      %4309 = vrot.lane.b32.xlu0 %v4280, 127
      %v4310 = vpop.permute.xlu0 %4309
      %4311 = vrot.lane.b32.xlu0 %v4281, 127
      %v4312 = vpop.permute.xlu0 %4311
      %4313 = vrot.lane.b32.xlu0 %v4282, 127
      %v4314 = vpop.permute.xlu0 %4313
      %4315 = vrot.lane.b32.xlu0 %v4283, 127
      %v4316 = vpop.permute.xlu0 %4315
      %4317 = vrot.lane.b32.xlu0 %v4284, 127
      %v4318 = vpop.permute.xlu0 %4317
      %4319 = vrot.lane.b32.xlu0 %v4285, 127
      %v4320 = vpop.permute.xlu0 %4319
      %4321 = vrot.lane.b32.xlu0 %v4286, 127
      %v4322 = vpop.permute.xlu0 %4321
      %v4323 = vsel %vm724, %v4300, %v4302
      %v4324 = vsel %vm724, %v4302, %v4304
      %v4325 = vsel %vm724, %v4304, %v4306
      %v4326 = vsel %vm724, %v4308, %v4310
      %v4327 = vsel %vm724, %v4310, %v4312
      %v4328 = vsel %vm724, %v4312, %v4314
      %v4329 = vsel %vm724, %v4316, %v4318
      %v4330 = vsel %vm724, %v4318, %v4320
      %v4331 = vsel %vm724, %v4320, %v4322
      %4341 = vst [vmem:[#allocation3 + $0x168] sm:$0xff] %v4323
      %4342 = vst [vmem:[#allocation3 + $0x170] sm:$0xff] %v4324
      %4343 = vst [vmem:[#allocation3 + $0x178] sm:$0xff] %v4325
      %4344 = vst [vmem:[#allocation3 + $0x180] sm:$0xff] %v4326
      %4345 = vst [vmem:[#allocation3 + $0x188] sm:$0xff] %v4327
      %4346 = vst [vmem:[#allocation3 + $0x190] sm:$0xff] %v4328
      %4347 = vst [vmem:[#allocation3 + $0x198] sm:$0xff] %v4329
      %4348 = vst [vmem:[#allocation3 + $0x1a0] sm:$0xff] %v4330
      %4349 = vst [vmem:[#allocation3 + $0x1a8] sm:$0xff] %v4331
      %v4350 = vld [vmem:[#allocation2 + $0x8] sm:$0xff]
      %v4351 = vld [vmem:[#allocation2 + $0x10] sm:$0xff]
      %v4352 = vld [vmem:[#allocation2 + $0x18] sm:$0xff]
      %v4353 = vld [vmem:[#allocation2 + $0x20] sm:$0xff]
      %v4354 = vld [vmem:[#allocation2 + $0x30] sm:$0xff]
      %v4355 = vld [vmem:[#allocation2 + $0x38] sm:$0xff]
      %v4356 = vld [vmem:[#allocation2 + $0x40] sm:$0xff]
      %v4357 = vld [vmem:[#allocation2 + $0x48] sm:$0xff]
      %v4358 = vld [vmem:[#allocation2 + $0x58] sm:$0xff]
      %v4359 = vld [vmem:[#allocation2 + $0x60] sm:$0xff]
      %v4360 = vld [vmem:[#allocation2 + $0x68] sm:$0xff]
      %v4361 = vld [vmem:[#allocation2 + $0x70] sm:$0xff]
      %4374 = vrot.lane.b32.xlu0 %v4350, 111
      %v4375 = vpop.permute.xlu0 %4374
      %4376 = vrot.lane.b32.xlu0 %v4351, 111
      %v4377 = vpop.permute.xlu0 %4376
      %4378 = vrot.lane.b32.xlu0 %v4352, 111
      %v4379 = vpop.permute.xlu0 %4378
      %4380 = vrot.lane.b32.xlu0 %v4353, 111
      %v4381 = vpop.permute.xlu0 %4380
      %4382 = vrot.lane.b32.xlu0 %v4354, 111
      %v4383 = vpop.permute.xlu0 %4382
      %4384 = vrot.lane.b32.xlu0 %v4355, 111
      %v4385 = vpop.permute.xlu0 %4384
      %4386 = vrot.lane.b32.xlu0 %v4356, 111
      %v4387 = vpop.permute.xlu0 %4386
      %4388 = vrot.lane.b32.xlu0 %v4357, 111
      %v4389 = vpop.permute.xlu0 %4388
      %4390 = vrot.lane.b32.xlu0 %v4358, 111
      %v4391 = vpop.permute.xlu0 %4390
      %4392 = vrot.lane.b32.xlu0 %v4359, 111
      %v4393 = vpop.permute.xlu0 %4392
      %4394 = vrot.lane.b32.xlu0 %v4360, 111
      %v4395 = vpop.permute.xlu0 %4394
      %4396 = vrot.lane.b32.xlu0 %v4361, 111
      %v4397 = vpop.permute.xlu0 %4396
      %v4398 = vsel %vm800, %v4375, %v4377
      %v4399 = vsel %vm800, %v4377, %v4379
      %v4400 = vsel %vm800, %v4379, %v4381
      %v4401 = vsel %vm800, %v4383, %v4385
      %v4402 = vsel %vm800, %v4385, %v4387
      %v4403 = vsel %vm800, %v4387, %v4389
      %v4404 = vsel %vm800, %v4391, %v4393
      %v4405 = vsel %vm800, %v4393, %v4395
      %v4406 = vsel %vm800, %v4395, %v4397
      %4416 = vst [vmem:[#allocation3 + $0x1b0] sm:$0xff] %v4398
      %4417 = vst [vmem:[#allocation3 + $0x1b8] sm:$0xff] %v4399
      %4418 = vst [vmem:[#allocation3 + $0x1c0] sm:$0xff] %v4400
      %4419 = vst [vmem:[#allocation3 + $0x1c8] sm:$0xff] %v4401
      %4420 = vst [vmem:[#allocation3 + $0x1d0] sm:$0xff] %v4402
      %4421 = vst [vmem:[#allocation3 + $0x1d8] sm:$0xff] %v4403
      %4422 = vst [vmem:[#allocation3 + $0x1e0] sm:$0xff] %v4404
      %4423 = vst [vmem:[#allocation3 + $0x1e8] sm:$0xff] %v4405
      %4424 = vst [vmem:[#allocation3 + $0x1f0] sm:$0xff] %v4406
      %v4425 = vld [vmem:[#allocation2 + $0x8] sm:$0xff]
      %v4426 = vld [vmem:[#allocation2 + $0x10] sm:$0xff]
      %v4427 = vld [vmem:[#allocation2 + $0x18] sm:$0xff]
      %v4428 = vld [vmem:[#allocation2 + $0x20] sm:$0xff]
      %v4429 = vld [vmem:[#allocation2 + $0x30] sm:$0xff]
      %v4430 = vld [vmem:[#allocation2 + $0x38] sm:$0xff]
      %v4431 = vld [vmem:[#allocation2 + $0x40] sm:$0xff]
      %v4432 = vld [vmem:[#allocation2 + $0x48] sm:$0xff]
      %v4433 = vld [vmem:[#allocation2 + $0x58] sm:$0xff]
      %v4434 = vld [vmem:[#allocation2 + $0x60] sm:$0xff]
      %v4435 = vld [vmem:[#allocation2 + $0x68] sm:$0xff]
      %v4436 = vld [vmem:[#allocation2 + $0x70] sm:$0xff]
      %4449 = vrot.lane.b32.xlu0 %v4425, 110
      %v4450 = vpop.permute.xlu0 %4449
      %4451 = vrot.lane.b32.xlu0 %v4426, 110
      %v4452 = vpop.permute.xlu0 %4451
      %4453 = vrot.lane.b32.xlu0 %v4427, 110
      %v4454 = vpop.permute.xlu0 %4453
      %4455 = vrot.lane.b32.xlu0 %v4428, 110
      %v4456 = vpop.permute.xlu0 %4455
      %4457 = vrot.lane.b32.xlu0 %v4429, 110
      %v4458 = vpop.permute.xlu0 %4457
      %4459 = vrot.lane.b32.xlu0 %v4430, 110
      %v4460 = vpop.permute.xlu0 %4459
      %4461 = vrot.lane.b32.xlu0 %v4431, 110
      %v4462 = vpop.permute.xlu0 %4461
      %4463 = vrot.lane.b32.xlu0 %v4432, 110
      %v4464 = vpop.permute.xlu0 %4463
      %4465 = vrot.lane.b32.xlu0 %v4433, 110
      %v4466 = vpop.permute.xlu0 %4465
      %4467 = vrot.lane.b32.xlu0 %v4434, 110
      %v4468 = vpop.permute.xlu0 %4467
      %4469 = vrot.lane.b32.xlu0 %v4435, 110
      %v4470 = vpop.permute.xlu0 %4469
      %4471 = vrot.lane.b32.xlu0 %v4436, 110
      %v4472 = vpop.permute.xlu0 %4471
      %v4473 = vsel %vm876, %v4450, %v4452
      %v4474 = vsel %vm876, %v4452, %v4454
      %v4475 = vsel %vm876, %v4454, %v4456
      %v4476 = vsel %vm876, %v4458, %v4460
      %v4477 = vsel %vm876, %v4460, %v4462
      %v4478 = vsel %vm876, %v4462, %v4464
      %v4479 = vsel %vm876, %v4466, %v4468
      %v4480 = vsel %vm876, %v4468, %v4470
      %v4481 = vsel %vm876, %v4470, %v4472
      %4491 = vst [vmem:[#allocation3 + $0x1f8] sm:$0xff] %v4473
      %4492 = vst [vmem:[#allocation3 + $0x200] sm:$0xff] %v4474
      %4493 = vst [vmem:[#allocation3 + $0x208] sm:$0xff] %v4475
      %4494 = vst [vmem:[#allocation3 + $0x210] sm:$0xff] %v4476
      %4495 = vst [vmem:[#allocation3 + $0x218] sm:$0xff] %v4477
      %4496 = vst [vmem:[#allocation3 + $0x220] sm:$0xff] %v4478
      %4497 = vst [vmem:[#allocation3 + $0x228] sm:$0xff] %v4479
      %4498 = vst [vmem:[#allocation3 + $0x230] sm:$0xff] %v4480
      %4499 = vst [vmem:[#allocation3 + $0x238] sm:$0xff] %v4481
      %v4500 = vld [vmem:[#allocation2 + $0x8] sm:$0xff]
      %v4501 = vld [vmem:[#allocation2 + $0x10] sm:$0xff]
      %v4502 = vld [vmem:[#allocation2 + $0x18] sm:$0xff]
      %v4503 = vld [vmem:[#allocation2 + $0x20] sm:$0xff]
      %v4504 = vld [vmem:[#allocation2 + $0x30] sm:$0xff]
      %v4505 = vld [vmem:[#allocation2 + $0x38] sm:$0xff]
      %v4506 = vld [vmem:[#allocation2 + $0x40] sm:$0xff]
      %v4507 = vld [vmem:[#allocation2 + $0x48] sm:$0xff]
      %v4508 = vld [vmem:[#allocation2 + $0x58] sm:$0xff]
      %v4509 = vld [vmem:[#allocation2 + $0x60] sm:$0xff]
      %v4510 = vld [vmem:[#allocation2 + $0x68] sm:$0xff]
      %v4511 = vld [vmem:[#allocation2 + $0x70] sm:$0xff]
      %4524 = vrot.lane.b32.xlu0 %v4500, 109
      %v4525 = vpop.permute.xlu0 %4524
      %4526 = vrot.lane.b32.xlu0 %v4501, 109
      %v4527 = vpop.permute.xlu0 %4526
      %4528 = vrot.lane.b32.xlu0 %v4502, 109
      %v4529 = vpop.permute.xlu0 %4528
      %4530 = vrot.lane.b32.xlu0 %v4503, 109
      %v4531 = vpop.permute.xlu0 %4530
      %4532 = vrot.lane.b32.xlu0 %v4504, 109
      %v4533 = vpop.permute.xlu0 %4532
      %4534 = vrot.lane.b32.xlu0 %v4505, 109
      %v4535 = vpop.permute.xlu0 %4534
      %4536 = vrot.lane.b32.xlu0 %v4506, 109
      %v4537 = vpop.permute.xlu0 %4536
      %4538 = vrot.lane.b32.xlu0 %v4507, 109
      %v4539 = vpop.permute.xlu0 %4538
      %4540 = vrot.lane.b32.xlu0 %v4508, 109
      %v4541 = vpop.permute.xlu0 %4540
      %4542 = vrot.lane.b32.xlu0 %v4509, 109
      %v4543 = vpop.permute.xlu0 %4542
      %4544 = vrot.lane.b32.xlu0 %v4510, 109
      %v4545 = vpop.permute.xlu0 %4544
      %4546 = vrot.lane.b32.xlu0 %v4511, 109
      %v4547 = vpop.permute.xlu0 %4546
      %v4548 = vsel %vm952, %v4525, %v4527
      %v4549 = vsel %vm952, %v4527, %v4529
      %v4550 = vsel %vm952, %v4529, %v4531
      %v4551 = vsel %vm952, %v4533, %v4535
      %v4552 = vsel %vm952, %v4535, %v4537
      %v4553 = vsel %vm952, %v4537, %v4539
      %v4554 = vsel %vm952, %v4541, %v4543
      %v4555 = vsel %vm952, %v4543, %v4545
      %v4556 = vsel %vm952, %v4545, %v4547
      %4566 = vst [vmem:[#allocation3 + $0x240] sm:$0xff] %v4548
      %4567 = vst [vmem:[#allocation3 + $0x248] sm:$0xff] %v4549
      %4568 = vst [vmem:[#allocation3 + $0x250] sm:$0xff] %v4550
      %4569 = vst [vmem:[#allocation3 + $0x258] sm:$0xff] %v4551
      %4570 = vst [vmem:[#allocation3 + $0x260] sm:$0xff] %v4552
      %4571 = vst [vmem:[#allocation3 + $0x268] sm:$0xff] %v4553
      %4572 = vst [vmem:[#allocation3 + $0x270] sm:$0xff] %v4554
      %4573 = vst [vmem:[#allocation3 + $0x278] sm:$0xff] %v4555
      %4574 = vst [vmem:[#allocation3 + $0x280] sm:$0xff] %v4556
      %s4575 = scalar_lea.vmem %s3, 64
      %v4576 = vld [vmem:[%s4575] sm:$0xff]
      %v4577 = vld [vmem:[%s4575 + $0x8] sm:$0xff]
      %v4578 = vld [vmem:[%s4575 + $0x10] sm:$0xff]
      %v4579 = vld [vmem:[%s4575 + $0x18] sm:$0xff]
      %v4580 = vld [vmem:[#allocation3] sm:$0xff]
      %v4581 = vld [vmem:[#allocation3 + $0x8] sm:$0xff]
      %v4582 = vld [vmem:[#allocation3 + $0x10] sm:$0xff]
      %v4583 = vld [vmem:[#allocation3 + $0x18] sm:$0xff]
      %v4584 = vld [vmem:[#allocation3 + $0x20] sm:$0xff]
      %v4585 = vld [vmem:[#allocation3 + $0x28] sm:$0xff]
      %v4586 = vld [vmem:[#allocation3 + $0x30] sm:$0xff]
      %v4587 = vld [vmem:[#allocation3 + $0x38] sm:$0xff]
      %v4588 = vld [vmem:[#allocation3 + $0x40] sm:$0xff]
      %v4589 = vld [vmem:[#allocation3 + $0x48] sm:$0xff]
      %v4590 = vld [vmem:[#allocation3 + $0x50] sm:$0xff]
      %v4591 = vld [vmem:[#allocation3 + $0x58] sm:$0xff]
      %v4592 = vld [vmem:[#allocation3 + $0x60] sm:$0xff]
      %v4593 = vld [vmem:[#allocation3 + $0x68] sm:$0xff]
      %v4594 = vld [vmem:[#allocation3 + $0x70] sm:$0xff]
      %v4595 = vld [vmem:[#allocation3 + $0x78] sm:$0xff]
      %v4596 = vld [vmem:[#allocation3 + $0x80] sm:$0xff]
      %v4597 = vld [vmem:[#allocation3 + $0x88] sm:$0xff]
      %v4598 = vld [vmem:[#allocation3 + $0x90] sm:$0xff]
      %v4599 = vld [vmem:[#allocation3 + $0x98] sm:$0xff]
      %v4600 = vld [vmem:[#allocation3 + $0xa0] sm:$0xff]
      %v4601 = vld [vmem:[#allocation3 + $0xa8] sm:$0xff]
      %v4602 = vld [vmem:[#allocation3 + $0xb0] sm:$0xff]
      %v4603 = vld [vmem:[#allocation3 + $0xb8] sm:$0xff]
      %v4604 = vld [vmem:[#allocation3 + $0xc0] sm:$0xff]
      %v4605 = vld [vmem:[#allocation3 + $0xc8] sm:$0xff]
      %v4606 = vld [vmem:[#allocation3 + $0xd0] sm:$0xff]
      %v4607 = vld [vmem:[#allocation3 + $0xd8] sm:$0xff]
      %v4608 = vld [vmem:[#allocation3 + $0xe0] sm:$0xff]
      %v4609 = vld [vmem:[#allocation3 + $0xe8] sm:$0xff]
      %v4610 = vld [vmem:[#allocation3 + $0xf0] sm:$0xff]
      %v4611 = vld [vmem:[#allocation3 + $0xf8] sm:$0xff]
      %v4612 = vld [vmem:[#allocation3 + $0x100] sm:$0xff]
      %v4613 = vld [vmem:[#allocation3 + $0x108] sm:$0xff]
      %v4614 = vld [vmem:[#allocation3 + $0x110] sm:$0xff]
      %v4615 = vld [vmem:[#allocation3 + $0x118] sm:$0xff]
      %v4616 = vld [vmem:[#allocation3 + $0x120] sm:$0xff]
      %v4617 = vld [vmem:[#allocation3 + $0x128] sm:$0xff]
      %v4618 = vld [vmem:[#allocation3 + $0x130] sm:$0xff]
      %v4619 = vld [vmem:[#allocation3 + $0x138] sm:$0xff]
      %v4620 = vld [vmem:[#allocation3 + $0x140] sm:$0xff]
      %v4621 = vld [vmem:[#allocation3 + $0x148] sm:$0xff]
      %v4622 = vld [vmem:[#allocation3 + $0x150] sm:$0xff]
      %v4623 = vld [vmem:[#allocation3 + $0x158] sm:$0xff]
      %v4624 = vld [vmem:[#allocation3 + $0x160] sm:$0xff]
      %v4625 = vld [vmem:[#allocation3 + $0x168] sm:$0xff]
      %v4626 = vld [vmem:[#allocation3 + $0x170] sm:$0xff]
      %v4627 = vld [vmem:[#allocation3 + $0x178] sm:$0xff]
      %v4628 = vld [vmem:[#allocation3 + $0x180] sm:$0xff]
      %v4629 = vld [vmem:[#allocation3 + $0x188] sm:$0xff]
      %v4630 = vld [vmem:[#allocation3 + $0x190] sm:$0xff]
      %v4631 = vld [vmem:[#allocation3 + $0x198] sm:$0xff]
      %v4632 = vld [vmem:[#allocation3 + $0x1a0] sm:$0xff]
      %v4633 = vld [vmem:[#allocation3 + $0x1a8] sm:$0xff]
      %v4634 = vld [vmem:[#allocation3 + $0x1b0] sm:$0xff]
      %v4635 = vld [vmem:[#allocation3 + $0x1b8] sm:$0xff]
      %v4636 = vld [vmem:[#allocation3 + $0x1c0] sm:$0xff]
      %v4637 = vld [vmem:[#allocation3 + $0x1c8] sm:$0xff]
      %v4638 = vld [vmem:[#allocation3 + $0x1d0] sm:$0xff]
      %v4639 = vld [vmem:[#allocation3 + $0x1d8] sm:$0xff]
      %v4640 = vld [vmem:[#allocation3 + $0x1e0] sm:$0xff]
      %v4641 = vld [vmem:[#allocation3 + $0x1e8] sm:$0xff]
      %v4642 = vld [vmem:[#allocation3 + $0x1f0] sm:$0xff]
      %v4643 = vld [vmem:[#allocation3 + $0x1f8] sm:$0xff]
      %v4644 = vld [vmem:[#allocation3 + $0x200] sm:$0xff]
      %v4645 = vld [vmem:[#allocation3 + $0x208] sm:$0xff]
      %v4646 = vld [vmem:[#allocation3 + $0x210] sm:$0xff]
      %v4647 = vld [vmem:[#allocation3 + $0x218] sm:$0xff]
      %v4648 = vld [vmem:[#allocation3 + $0x220] sm:$0xff]
      %v4649 = vld [vmem:[#allocation3 + $0x228] sm:$0xff]
      %v4650 = vld [vmem:[#allocation3 + $0x230] sm:$0xff]
      %v4651 = vld [vmem:[#allocation3 + $0x238] sm:$0xff]
      %v4652 = vld [vmem:[#allocation3 + $0x240] sm:$0xff]
      %v4653 = vld [vmem:[#allocation3 + $0x248] sm:$0xff]
      %v4654 = vld [vmem:[#allocation3 + $0x250] sm:$0xff]
      %v4655 = vld [vmem:[#allocation3 + $0x258] sm:$0xff]
      %v4656 = vld [vmem:[#allocation3 + $0x260] sm:$0xff]
      %v4657 = vld [vmem:[#allocation3 + $0x268] sm:$0xff]
      %v4658 = vld [vmem:[#allocation3 + $0x270] sm:$0xff]
      %v4659 = vld [vmem:[#allocation3 + $0x278] sm:$0xff]
      %v4660 = vld [vmem:[#allocation3 + $0x280] sm:$0xff]
      %v4661 = vld [vmem:[#allocation2 + $0x8] sm:$0xff]
      %v4662 = vld [vmem:[#allocation2 + $0x10] sm:$0xff]
      %v4663 = vld [vmem:[#allocation2 + $0x18] sm:$0xff]
      %v4664 = vld [vmem:[#allocation2 + $0x30] sm:$0xff]
      %v4665 = vld [vmem:[#allocation2 + $0x38] sm:$0xff]
      %v4666 = vld [vmem:[#allocation2 + $0x40] sm:$0xff]
      %s4667 = scalar_lea.vmem %s4, 32
      %v4668 = vld [vmem:[%s4667] sm:$0xff]
      %v4669 = vld [vmem:[%s4667 + $0x8] sm:$0xff]
      %4671 = vset.pattern.permute.xlu0 0
      %4672 = vperm.xlu0 %4671, %v4668
      %v4673 = vpop.permute.xlu0 %4672
      %4676 = vset.pattern.permute.xlu0 0
      %4677 = vperm.xlu0 %4676, %v4669
      %v4678 = vpop.permute.xlu0 %4677
      %v4681 = vsel %vm1083, %v4577, 0
      %v4684 = vsel %vm1083, %v4579, 0
      %4686 = vmatprep.subr.mxu0 %v4626
      %4687 = vmatpush1.msra.mxu0 %v4625
      %4688 = vmatprep.subr.mxu0 %v4623
      %4689 = vmatpush1.msra.mxu0 %v4622
      %4690 = vmatprep.subr.mxu0 %v4620
      %4691 = vmatpush1.msra.mxu0 %v4619
      %4692 = vmatprep.subr.mxu0 %v4617
      %4693 = vmatpush1.msra.mxu0 %v4616
      %4694 = vmatprep.subr.mxu0 %v4614
      %4695 = vmatpush1.msra.mxu0 %v4613
      %4696 = vmatprep.subr.mxu0 %v4611
      %4697 = vmatpush1.msra.mxu0 %v4610
      %4698 = vmatprep.subr.mxu0 %v4608
      %4699 = vmatpush1.msra.mxu0 %v4607
      %4700 = vmatprep.subr.mxu0 %v4605
      %4701 = vmatpush1.msra.mxu0 %v4604
      %4702 = vmatprep.subr.mxu0 %v4602
      %4703 = vmatpush1.msra.mxu0 %v4601
      %4704 = vmatprep.subr.mxu0 %v4599
      %4705 = vmatpush1.msra.mxu0 %v4598
      %4706 = vmatprep.subr.mxu0 %v4596
      %4707 = vmatpush1.msra.mxu0 %v4595
      %4708 = vmatprep.subr.mxu0 %v4593
      %4709 = vmatpush1.msra.mxu0 %v4592
      %4710 = vmatprep.subr.mxu0 %v4590
      %4711 = vmatpush1.msra.mxu0 %v4589
      %4712 = vmatprep.subr.mxu0 %v4587
      %4713 = vmatpush1.msra.mxu0 %v4586
      %4714 = vmatprep.subr.mxu0 %v4584
      %4715 = vmatpush1.msra.mxu0 %v4583
      %4716 = vmatprep.subr.mxu0 %v4581
      %4717 = vmatpush1.msra.mxu0 %v4580
      %4718 = vmatprep.subr.mxu0 0.0
      %4719 = vmatpush2.msra.mxu0 0.0
      %4720 = vmatprep.subr.mxu0 0.0
      %4721 = vmatpush2.msra.mxu0 0.0
      %4722 = vmatprep.subr.mxu0 0.0
      %4723 = vmatpush2.msra.mxu0 0.0
      %4724 = vmatprep.subr.mxu0 0.0
      %4725 = vmatpush2.msra.mxu0 0.0
      %4726 = vmatprep.subr.mxu0 0.0
      %4727 = vmatpush2.msra.mxu0 0.0
      %4728 = vmatprep.subr.mxu0 %v4659
      %4729 = vmatpush2.msra.mxu0 %v4658
      %4730 = vmatprep.subr.mxu0 %v4656
      %4731 = vmatpush2.msra.mxu0 %v4655
      %4732 = vmatprep.subr.mxu0 %v4653
      %4733 = vmatpush2.msra.mxu0 %v4652
      %4734 = vmatprep.subr.mxu0 %v4650
      %4735 = vmatpush2.msra.mxu0 %v4649
      %4736 = vmatprep.subr.mxu0 %v4647
      %4737 = vmatpush2.msra.mxu0 %v4646
      %4738 = vmatprep.subr.mxu0 %v4644
      %4739 = vmatpush2.msra.mxu0 %v4643
      %4740 = vmatprep.subr.mxu0 %v4641
      %4741 = vmatpush2.msra.mxu0 %v4640
      %4742 = vmatprep.subr.mxu0 %v4638
      %4743 = vmatpush2.msra.mxu0 %v4637
      %4744 = vmatprep.subr.mxu0 %v4635
      %4745 = vmatpush2.msra.mxu0 %v4634
      %4746 = vmatprep.subr.mxu0 %v4632
      %4747 = vmatpush2.msra.mxu0 %v4631
      %4748 = vmatprep.subr.mxu0 %v4629
      %4749 = vmatpush2.msra.mxu0 %v4628
      %4750 = vmatprep.mubr.f32.mxu0 %v4681
      %4751 = vmatmul.mubr.f32.gmra.mxu0 %v4576
      %v4752 = vpop.f32.mrf.mxu0
      %v4753 = vadd.f32 %v4673, %v4752
      %v4754 = vpop.f32.mrf.mxu0
      %v4755 = vadd.f32 %v4673, %v4754
      %4756 = vmatprep.mubr.f32.mxu0 %v4684
      %4757 = vmatmul.mubr.f32.gmra.mxu0 %v4578
      %v4758 = vpop.f32.mrf.mxu0
      %v4759 = vadd.f32 %v4678, %v4758
      %v4760 = vpop.f32.mrf.mxu0
      %v4761 = vadd.f32 %v4678, %v4760
      %4762 = vdwg.mxu0
      %4763 = vmatprep.subr.mxu0 0.0
      %4764 = vmatpush1.msra.mxu0 %v4627
      %4765 = vmatprep.subr.mxu0 0.0
      %4766 = vmatpush1.msra.mxu0 %v4624
      %4767 = vmatprep.subr.mxu0 0.0
      %4768 = vmatpush1.msra.mxu0 %v4621
      %4769 = vmatprep.subr.mxu0 0.0
      %4770 = vmatpush1.msra.mxu0 %v4618
      %4771 = vmatprep.subr.mxu0 0.0
      %4772 = vmatpush1.msra.mxu0 %v4615
      %4773 = vmatprep.subr.mxu0 0.0
      %4774 = vmatpush1.msra.mxu0 %v4612
      %4775 = vmatprep.subr.mxu0 0.0
      %4776 = vmatpush1.msra.mxu0 %v4609
      %4777 = vmatprep.subr.mxu0 0.0
      %4778 = vmatpush1.msra.mxu0 %v4606
      %4779 = vmatprep.subr.mxu0 0.0
      %4780 = vmatpush1.msra.mxu0 %v4603
      %4781 = vmatprep.subr.mxu0 0.0
      %4782 = vmatpush1.msra.mxu0 %v4600
      %4783 = vmatprep.subr.mxu0 0.0
      %4784 = vmatpush1.msra.mxu0 %v4597
      %4785 = vmatprep.subr.mxu0 0.0
      %4786 = vmatpush1.msra.mxu0 %v4594
      %4787 = vmatprep.subr.mxu0 0.0
      %4788 = vmatpush1.msra.mxu0 %v4591
      %4789 = vmatprep.subr.mxu0 0.0
      %4790 = vmatpush1.msra.mxu0 %v4588
      %4791 = vmatprep.subr.mxu0 0.0
      %4792 = vmatpush1.msra.mxu0 %v4585
      %4793 = vmatprep.subr.mxu0 0.0
      %4794 = vmatpush1.msra.mxu0 %v4582
      %4795 = vmatprep.subr.mxu0 0.0
      %4796 = vmatpush2.msra.mxu0 0.0
      %4797 = vmatprep.subr.mxu0 0.0
      %4798 = vmatpush2.msra.mxu0 0.0
      %4799 = vmatprep.subr.mxu0 0.0
      %4800 = vmatpush2.msra.mxu0 0.0
      %4801 = vmatprep.subr.mxu0 0.0
      %4802 = vmatpush2.msra.mxu0 0.0
      %4803 = vmatprep.subr.mxu0 0.0
      %4804 = vmatpush2.msra.mxu0 0.0
      %4805 = vmatprep.subr.mxu0 0.0
      %4806 = vmatpush2.msra.mxu0 %v4660
      %4807 = vmatprep.subr.mxu0 0.0
      %4808 = vmatpush2.msra.mxu0 %v4657
      %4809 = vmatprep.subr.mxu0 0.0
      %4810 = vmatpush2.msra.mxu0 %v4654
      %4811 = vmatprep.subr.mxu0 0.0
      %4812 = vmatpush2.msra.mxu0 %v4651
      %4813 = vmatprep.subr.mxu0 0.0
      %4814 = vmatpush2.msra.mxu0 %v4648
      %4815 = vmatprep.subr.mxu0 0.0
      %4816 = vmatpush2.msra.mxu0 %v4645
      %4817 = vmatprep.subr.mxu0 0.0
      %4818 = vmatpush2.msra.mxu0 %v4642
      %4819 = vmatprep.subr.mxu0 0.0
      %4820 = vmatpush2.msra.mxu0 %v4639
      %4821 = vmatprep.subr.mxu0 0.0
      %4822 = vmatpush2.msra.mxu0 %v4636
      %4823 = vmatprep.subr.mxu0 0.0
      %4824 = vmatpush2.msra.mxu0 %v4633
      %4825 = vmatprep.subr.mxu0 0.0
      %4826 = vmatpush2.msra.mxu0 %v4630
      %4827 = vmatprep.mubr.f32.mxu0 %v4681
      %4828 = vmatmul.mubr.f32.gmra.mxu0 %v4576
      %v4829 = vpop.f32.mrf.mxu0
      %v4830 = vadd.f32 %v4673, %v4829
      %v4831 = vpop.f32.mrf.mxu0
      %4832 = vmatprep.mubr.f32.mxu0 %v4684
      %4833 = vmatmul.mubr.f32.gmra.mxu0 %v4578
      %v4834 = vpop.f32.mrf.mxu0
      %v4835 = vadd.f32 %v4678, %v4834
      %v4836 = vpop.f32.mrf.mxu0
      %4837 = vdwg.mxu0
      %v4838 = vmax.f32 %v4753, 0.0
      %v4839 = vmax.f32 %v4755, 0.0
      %v4840 = vmax.f32 %v4830, 0.0
      %v4841 = vmax.f32 %v4759, 0.0
      %v4842 = vmax.f32 %v4761, 0.0
      %v4843 = vmax.f32 %v4835, 0.0
      %v4844 = vmul.f32 %v4838, %v314
      %v4845 = vmul.f32 %v4839, %v318
      %v4846 = vmul.f32 %v4840, %v322
      %v4847 = vmul.f32 %v4841, %v314
      %v4848 = vmul.f32 %v4842, %v318
      %v4849 = vmul.f32 %v4843, %v322
      %v4850 = vadd.f32 %v4661, %v4844
      %v4851 = vadd.f32 %v4662, %v4845
      %v4852 = vadd.f32 %v4663, %v4846
      %v4853 = vadd.f32 %v4664, %v4847
      %v4854 = vadd.f32 %v4665, %v4848
      %v4855 = vadd.f32 %v4666, %v4849
      %4856 = vst [vmem:[#allocation2 + $0x8] sm:$0xff] %v4850
      %4857 = vst [vmem:[#allocation2 + $0x10] sm:$0xff] %v4851
      %4858 = vst [vmem:[#allocation2 + $0x18] sm:$0xff] %v4852
      %4859 = vst [vmem:[#allocation2 + $0x30] sm:$0xff] %v4853
      %4860 = vst [vmem:[#allocation2 + $0x38] sm:$0xff] %v4854
      %4861 = vst [vmem:[#allocation2 + $0x40] sm:$0xff] %v4855
      %v4862 = vld [vmem:[#allocation2] sm:$0xff]
      %v4863 = vld [vmem:[#allocation2 + $0x8] sm:$0xff]
      %v4864 = vld [vmem:[#allocation2 + $0x10] sm:$0xff]
      %v4865 = vld [vmem:[#allocation2 + $0x18] sm:$0xff]
      %v4866 = vld [vmem:[#allocation2 + $0x28] sm:$0xff]
      %v4867 = vld [vmem:[#allocation2 + $0x30] sm:$0xff]
      %v4868 = vld [vmem:[#allocation2 + $0x38] sm:$0xff]
      %v4869 = vld [vmem:[#allocation2 + $0x40] sm:$0xff]
      %v4870 = vld [vmem:[#allocation2 + $0x50] sm:$0xff]
      %v4871 = vld [vmem:[#allocation2 + $0x58] sm:$0xff]
      %v4872 = vld [vmem:[#allocation2 + $0x60] sm:$0xff]
      %v4873 = vld [vmem:[#allocation2 + $0x68] sm:$0xff]
      %4886 = vrot.lane.b32.xlu0 %v4862, 19
      %v4887 = vpop.permute.xlu0 %4886
      %4888 = vrot.lane.b32.xlu0 %v4863, 19
      %v4889 = vpop.permute.xlu0 %4888
      %4890 = vrot.lane.b32.xlu0 %v4864, 19
      %v4891 = vpop.permute.xlu0 %4890
      %4892 = vrot.lane.b32.xlu0 %v4865, 19
      %v4893 = vpop.permute.xlu0 %4892
      %4894 = vrot.lane.b32.xlu0 %v4866, 19
      %v4895 = vpop.permute.xlu0 %4894
      %4896 = vrot.lane.b32.xlu0 %v4867, 19
      %v4897 = vpop.permute.xlu0 %4896
      %4898 = vrot.lane.b32.xlu0 %v4868, 19
      %v4899 = vpop.permute.xlu0 %4898
      %4900 = vrot.lane.b32.xlu0 %v4869, 19
      %v4901 = vpop.permute.xlu0 %4900
      %4902 = vrot.lane.b32.xlu0 %v4870, 19
      %v4903 = vpop.permute.xlu0 %4902
      %4904 = vrot.lane.b32.xlu0 %v4871, 19
      %v4905 = vpop.permute.xlu0 %4904
      %4906 = vrot.lane.b32.xlu0 %v4872, 19
      %v4907 = vpop.permute.xlu0 %4906
      %4908 = vrot.lane.b32.xlu0 %v4873, 19
      %v4909 = vpop.permute.xlu0 %4908
      %v4910 = vsel %vm402, %v4887, %v4889
      %v4911 = vsel %vm402, %v4889, %v4891
      %v4912 = vsel %vm402, %v4891, %v4893
      %v4913 = vsel %vm402, %v4895, %v4897
      %v4914 = vsel %vm402, %v4897, %v4899
      %v4915 = vsel %vm402, %v4899, %v4901
      %v4916 = vsel %vm402, %v4903, %v4905
      %v4917 = vsel %vm402, %v4905, %v4907
      %v4918 = vsel %vm402, %v4907, %v4909
      %4928 = vst [vmem:[#allocation3] sm:$0xff] %v4910
      %4929 = vst [vmem:[#allocation3 + $0x8] sm:$0xff] %v4911
      %4930 = vst [vmem:[#allocation3 + $0x10] sm:$0xff] %v4912
      %4931 = vst [vmem:[#allocation3 + $0x18] sm:$0xff] %v4913
      %4932 = vst [vmem:[#allocation3 + $0x20] sm:$0xff] %v4914
      %4933 = vst [vmem:[#allocation3 + $0x28] sm:$0xff] %v4915
      %4934 = vst [vmem:[#allocation3 + $0x30] sm:$0xff] %v4916
      %4935 = vst [vmem:[#allocation3 + $0x38] sm:$0xff] %v4917
      %4936 = vst [vmem:[#allocation3 + $0x40] sm:$0xff] %v4918
      %v4937 = vld [vmem:[#allocation2] sm:$0xff]
      %v4938 = vld [vmem:[#allocation2 + $0x8] sm:$0xff]
      %v4939 = vld [vmem:[#allocation2 + $0x10] sm:$0xff]
      %v4940 = vld [vmem:[#allocation2 + $0x18] sm:$0xff]
      %v4941 = vld [vmem:[#allocation2 + $0x28] sm:$0xff]
      %v4942 = vld [vmem:[#allocation2 + $0x30] sm:$0xff]
      %v4943 = vld [vmem:[#allocation2 + $0x38] sm:$0xff]
      %v4944 = vld [vmem:[#allocation2 + $0x40] sm:$0xff]
      %v4945 = vld [vmem:[#allocation2 + $0x50] sm:$0xff]
      %v4946 = vld [vmem:[#allocation2 + $0x58] sm:$0xff]
      %v4947 = vld [vmem:[#allocation2 + $0x60] sm:$0xff]
      %v4948 = vld [vmem:[#allocation2 + $0x68] sm:$0xff]
      %4961 = vrot.lane.b32.xlu0 %v4937, 18
      %v4962 = vpop.permute.xlu0 %4961
      %4963 = vrot.lane.b32.xlu0 %v4938, 18
      %v4964 = vpop.permute.xlu0 %4963
      %4965 = vrot.lane.b32.xlu0 %v4939, 18
      %v4966 = vpop.permute.xlu0 %4965
      %4967 = vrot.lane.b32.xlu0 %v4940, 18
      %v4968 = vpop.permute.xlu0 %4967
      %4969 = vrot.lane.b32.xlu0 %v4941, 18
      %v4970 = vpop.permute.xlu0 %4969
      %4971 = vrot.lane.b32.xlu0 %v4942, 18
      %v4972 = vpop.permute.xlu0 %4971
      %4973 = vrot.lane.b32.xlu0 %v4943, 18
      %v4974 = vpop.permute.xlu0 %4973
      %4975 = vrot.lane.b32.xlu0 %v4944, 18
      %v4976 = vpop.permute.xlu0 %4975
      %4977 = vrot.lane.b32.xlu0 %v4945, 18
      %v4978 = vpop.permute.xlu0 %4977
      %4979 = vrot.lane.b32.xlu0 %v4946, 18
      %v4980 = vpop.permute.xlu0 %4979
      %4981 = vrot.lane.b32.xlu0 %v4947, 18
      %v4982 = vpop.permute.xlu0 %4981
      %4983 = vrot.lane.b32.xlu0 %v4948, 18
      %v4984 = vpop.permute.xlu0 %4983
      %v4985 = vsel %vm478, %v4962, %v4964
      %v4986 = vsel %vm478, %v4964, %v4966
      %v4987 = vsel %vm478, %v4966, %v4968
      %v4988 = vsel %vm478, %v4970, %v4972
      %v4989 = vsel %vm478, %v4972, %v4974
      %v4990 = vsel %vm478, %v4974, %v4976
      %v4991 = vsel %vm478, %v4978, %v4980
      %v4992 = vsel %vm478, %v4980, %v4982
      %v4993 = vsel %vm478, %v4982, %v4984
      %5003 = vst [vmem:[#allocation3 + $0x48] sm:$0xff] %v4985
      %5004 = vst [vmem:[#allocation3 + $0x50] sm:$0xff] %v4986
      %5005 = vst [vmem:[#allocation3 + $0x58] sm:$0xff] %v4987
      %5006 = vst [vmem:[#allocation3 + $0x60] sm:$0xff] %v4988
      %5007 = vst [vmem:[#allocation3 + $0x68] sm:$0xff] %v4989
      %5008 = vst [vmem:[#allocation3 + $0x70] sm:$0xff] %v4990
      %5009 = vst [vmem:[#allocation3 + $0x78] sm:$0xff] %v4991
      %5010 = vst [vmem:[#allocation3 + $0x80] sm:$0xff] %v4992
      %5011 = vst [vmem:[#allocation3 + $0x88] sm:$0xff] %v4993
      %v5012 = vld [vmem:[#allocation2] sm:$0xff]
      %v5013 = vld [vmem:[#allocation2 + $0x8] sm:$0xff]
      %v5014 = vld [vmem:[#allocation2 + $0x10] sm:$0xff]
      %v5015 = vld [vmem:[#allocation2 + $0x18] sm:$0xff]
      %v5016 = vld [vmem:[#allocation2 + $0x28] sm:$0xff]
      %v5017 = vld [vmem:[#allocation2 + $0x30] sm:$0xff]
      %v5018 = vld [vmem:[#allocation2 + $0x38] sm:$0xff]
      %v5019 = vld [vmem:[#allocation2 + $0x40] sm:$0xff]
      %v5020 = vld [vmem:[#allocation2 + $0x50] sm:$0xff]
      %v5021 = vld [vmem:[#allocation2 + $0x58] sm:$0xff]
      %v5022 = vld [vmem:[#allocation2 + $0x60] sm:$0xff]
      %v5023 = vld [vmem:[#allocation2 + $0x68] sm:$0xff]
      %5036 = vrot.lane.b32.xlu0 %v5012, 17
      %v5037 = vpop.permute.xlu0 %5036
      %5038 = vrot.lane.b32.xlu0 %v5013, 17
      %v5039 = vpop.permute.xlu0 %5038
      %5040 = vrot.lane.b32.xlu0 %v5014, 17
      %v5041 = vpop.permute.xlu0 %5040
      %5042 = vrot.lane.b32.xlu0 %v5015, 17
      %v5043 = vpop.permute.xlu0 %5042
      %5044 = vrot.lane.b32.xlu0 %v5016, 17
      %v5045 = vpop.permute.xlu0 %5044
      %5046 = vrot.lane.b32.xlu0 %v5017, 17
      %v5047 = vpop.permute.xlu0 %5046
      %5048 = vrot.lane.b32.xlu0 %v5018, 17
      %v5049 = vpop.permute.xlu0 %5048
      %5050 = vrot.lane.b32.xlu0 %v5019, 17
      %v5051 = vpop.permute.xlu0 %5050
      %5052 = vrot.lane.b32.xlu0 %v5020, 17
      %v5053 = vpop.permute.xlu0 %5052
      %5054 = vrot.lane.b32.xlu0 %v5021, 17
      %v5055 = vpop.permute.xlu0 %5054
      %5056 = vrot.lane.b32.xlu0 %v5022, 17
      %v5057 = vpop.permute.xlu0 %5056
      %5058 = vrot.lane.b32.xlu0 %v5023, 17
      %v5059 = vpop.permute.xlu0 %5058
      %v5060 = vsel %vm554, %v5037, %v5039
      %v5061 = vsel %vm554, %v5039, %v5041
      %v5062 = vsel %vm554, %v5041, %v5043
      %v5063 = vsel %vm554, %v5045, %v5047
      %v5064 = vsel %vm554, %v5047, %v5049
      %v5065 = vsel %vm554, %v5049, %v5051
      %v5066 = vsel %vm554, %v5053, %v5055
      %v5067 = vsel %vm554, %v5055, %v5057
      %v5068 = vsel %vm554, %v5057, %v5059
      %5078 = vst [vmem:[#allocation3 + $0x90] sm:$0xff] %v5060
      %5079 = vst [vmem:[#allocation3 + $0x98] sm:$0xff] %v5061
      %5080 = vst [vmem:[#allocation3 + $0xa0] sm:$0xff] %v5062
      %5081 = vst [vmem:[#allocation3 + $0xa8] sm:$0xff] %v5063
      %5082 = vst [vmem:[#allocation3 + $0xb0] sm:$0xff] %v5064
      %5083 = vst [vmem:[#allocation3 + $0xb8] sm:$0xff] %v5065
      %5084 = vst [vmem:[#allocation3 + $0xc0] sm:$0xff] %v5066
      %5085 = vst [vmem:[#allocation3 + $0xc8] sm:$0xff] %v5067
      %5086 = vst [vmem:[#allocation3 + $0xd0] sm:$0xff] %v5068
      %v5087 = vld [vmem:[#allocation2] sm:$0xff]
      %v5088 = vld [vmem:[#allocation2 + $0x8] sm:$0xff]
      %v5089 = vld [vmem:[#allocation2 + $0x10] sm:$0xff]
      %v5090 = vld [vmem:[#allocation2 + $0x18] sm:$0xff]
      %v5091 = vld [vmem:[#allocation2 + $0x28] sm:$0xff]
      %v5092 = vld [vmem:[#allocation2 + $0x30] sm:$0xff]
      %v5093 = vld [vmem:[#allocation2 + $0x38] sm:$0xff]
      %v5094 = vld [vmem:[#allocation2 + $0x40] sm:$0xff]
      %v5095 = vld [vmem:[#allocation2 + $0x50] sm:$0xff]
      %v5096 = vld [vmem:[#allocation2 + $0x58] sm:$0xff]
      %v5097 = vld [vmem:[#allocation2 + $0x60] sm:$0xff]
      %v5098 = vld [vmem:[#allocation2 + $0x68] sm:$0xff]
      %5111 = vrot.lane.b32.xlu0 %v5087, 1
      %v5112 = vpop.permute.xlu0 %5111
      %5113 = vrot.lane.b32.xlu0 %v5088, 1
      %v5114 = vpop.permute.xlu0 %5113
      %5115 = vrot.lane.b32.xlu0 %v5089, 1
      %v5116 = vpop.permute.xlu0 %5115
      %5117 = vrot.lane.b32.xlu0 %v5090, 1
      %v5118 = vpop.permute.xlu0 %5117
      %5119 = vrot.lane.b32.xlu0 %v5091, 1
      %v5120 = vpop.permute.xlu0 %5119
      %5121 = vrot.lane.b32.xlu0 %v5092, 1
      %v5122 = vpop.permute.xlu0 %5121
      %5123 = vrot.lane.b32.xlu0 %v5093, 1
      %v5124 = vpop.permute.xlu0 %5123
      %5125 = vrot.lane.b32.xlu0 %v5094, 1
      %v5126 = vpop.permute.xlu0 %5125
      %5127 = vrot.lane.b32.xlu0 %v5095, 1
      %v5128 = vpop.permute.xlu0 %5127
      %5129 = vrot.lane.b32.xlu0 %v5096, 1
      %v5130 = vpop.permute.xlu0 %5129
      %5131 = vrot.lane.b32.xlu0 %v5097, 1
      %v5132 = vpop.permute.xlu0 %5131
      %5133 = vrot.lane.b32.xlu0 %v5098, 1
      %v5134 = vpop.permute.xlu0 %5133
      %v5135 = vsel %vm630, %v5112, %v5114
      %v5136 = vsel %vm630, %v5114, %v5116
      %v5137 = vsel %vm630, %v5116, %v5118
      %v5138 = vsel %vm630, %v5120, %v5122
      %v5139 = vsel %vm630, %v5122, %v5124
      %v5140 = vsel %vm630, %v5124, %v5126
      %v5141 = vsel %vm630, %v5128, %v5130
      %v5142 = vsel %vm630, %v5130, %v5132
      %v5143 = vsel %vm630, %v5132, %v5134
      %5153 = vst [vmem:[#allocation3 + $0xd8] sm:$0xff] %v5135
      %5154 = vst [vmem:[#allocation3 + $0xe0] sm:$0xff] %v5136
      %5155 = vst [vmem:[#allocation3 + $0xe8] sm:$0xff] %v5137
      %5156 = vst [vmem:[#allocation3 + $0xf0] sm:$0xff] %v5138
      %5157 = vst [vmem:[#allocation3 + $0xf8] sm:$0xff] %v5139
      %5158 = vst [vmem:[#allocation3 + $0x100] sm:$0xff] %v5140
      %5159 = vst [vmem:[#allocation3 + $0x108] sm:$0xff] %v5141
      %5160 = vst [vmem:[#allocation3 + $0x110] sm:$0xff] %v5142
      %5161 = vst [vmem:[#allocation3 + $0x118] sm:$0xff] %v5143
      %v5162 = vld [vmem:[#allocation2 + $0x8] sm:$0xff]
      %v5163 = vld [vmem:[#allocation2 + $0x10] sm:$0xff]
      %v5164 = vld [vmem:[#allocation2 + $0x18] sm:$0xff]
      %v5165 = vld [vmem:[#allocation2 + $0x30] sm:$0xff]
      %v5166 = vld [vmem:[#allocation2 + $0x38] sm:$0xff]
      %v5167 = vld [vmem:[#allocation2 + $0x40] sm:$0xff]
      %v5168 = vld [vmem:[#allocation2 + $0x58] sm:$0xff]
      %v5169 = vld [vmem:[#allocation2 + $0x60] sm:$0xff]
      %v5170 = vld [vmem:[#allocation2 + $0x68] sm:$0xff]
      %5171 = vst [vmem:[#allocation3 + $0x120] sm:$0xff] %v5162
      %5172 = vst [vmem:[#allocation3 + $0x128] sm:$0xff] %v5163
      %5173 = vst [vmem:[#allocation3 + $0x130] sm:$0xff] %v5164
      %5174 = vst [vmem:[#allocation3 + $0x138] sm:$0xff] %v5165
      %5175 = vst [vmem:[#allocation3 + $0x140] sm:$0xff] %v5166
      %5176 = vst [vmem:[#allocation3 + $0x148] sm:$0xff] %v5167
      %5177 = vst [vmem:[#allocation3 + $0x150] sm:$0xff] %v5168
      %5178 = vst [vmem:[#allocation3 + $0x158] sm:$0xff] %v5169
      %5179 = vst [vmem:[#allocation3 + $0x160] sm:$0xff] %v5170
      %v5180 = vld [vmem:[#allocation2 + $0x8] sm:$0xff]
      %v5181 = vld [vmem:[#allocation2 + $0x10] sm:$0xff]
      %v5182 = vld [vmem:[#allocation2 + $0x18] sm:$0xff]
      %v5183 = vld [vmem:[#allocation2 + $0x20] sm:$0xff]
      %v5184 = vld [vmem:[#allocation2 + $0x30] sm:$0xff]
      %v5185 = vld [vmem:[#allocation2 + $0x38] sm:$0xff]
      %v5186 = vld [vmem:[#allocation2 + $0x40] sm:$0xff]
      %v5187 = vld [vmem:[#allocation2 + $0x48] sm:$0xff]
      %v5188 = vld [vmem:[#allocation2 + $0x58] sm:$0xff]
      %v5189 = vld [vmem:[#allocation2 + $0x60] sm:$0xff]
      %v5190 = vld [vmem:[#allocation2 + $0x68] sm:$0xff]
      %v5191 = vld [vmem:[#allocation2 + $0x70] sm:$0xff]
      %5204 = vrot.lane.b32.xlu0 %v5180, 127
      %v5205 = vpop.permute.xlu0 %5204
      %5206 = vrot.lane.b32.xlu0 %v5181, 127
      %v5207 = vpop.permute.xlu0 %5206
      %5208 = vrot.lane.b32.xlu0 %v5182, 127
      %v5209 = vpop.permute.xlu0 %5208
      %5210 = vrot.lane.b32.xlu0 %v5183, 127
      %v5211 = vpop.permute.xlu0 %5210
      %5212 = vrot.lane.b32.xlu0 %v5184, 127
      %v5213 = vpop.permute.xlu0 %5212
      %5214 = vrot.lane.b32.xlu0 %v5185, 127
      %v5215 = vpop.permute.xlu0 %5214
      %5216 = vrot.lane.b32.xlu0 %v5186, 127
      %v5217 = vpop.permute.xlu0 %5216
      %5218 = vrot.lane.b32.xlu0 %v5187, 127
      %v5219 = vpop.permute.xlu0 %5218
      %5220 = vrot.lane.b32.xlu0 %v5188, 127
      %v5221 = vpop.permute.xlu0 %5220
      %5222 = vrot.lane.b32.xlu0 %v5189, 127
      %v5223 = vpop.permute.xlu0 %5222
      %5224 = vrot.lane.b32.xlu0 %v5190, 127
      %v5225 = vpop.permute.xlu0 %5224
      %5226 = vrot.lane.b32.xlu0 %v5191, 127
      %v5227 = vpop.permute.xlu0 %5226
      %v5228 = vsel %vm724, %v5205, %v5207
      %v5229 = vsel %vm724, %v5207, %v5209
      %v5230 = vsel %vm724, %v5209, %v5211
      %v5231 = vsel %vm724, %v5213, %v5215
      %v5232 = vsel %vm724, %v5215, %v5217
      %v5233 = vsel %vm724, %v5217, %v5219
      %v5234 = vsel %vm724, %v5221, %v5223
      %v5235 = vsel %vm724, %v5223, %v5225
      %v5236 = vsel %vm724, %v5225, %v5227
      %5246 = vst [vmem:[#allocation3 + $0x168] sm:$0xff] %v5228
      %5247 = vst [vmem:[#allocation3 + $0x170] sm:$0xff] %v5229
      %5248 = vst [vmem:[#allocation3 + $0x178] sm:$0xff] %v5230
      %5249 = vst [vmem:[#allocation3 + $0x180] sm:$0xff] %v5231
      %5250 = vst [vmem:[#allocation3 + $0x188] sm:$0xff] %v5232
      %5251 = vst [vmem:[#allocation3 + $0x190] sm:$0xff] %v5233
      %5252 = vst [vmem:[#allocation3 + $0x198] sm:$0xff] %v5234
      %5253 = vst [vmem:[#allocation3 + $0x1a0] sm:$0xff] %v5235
      %5254 = vst [vmem:[#allocation3 + $0x1a8] sm:$0xff] %v5236
      %v5255 = vld [vmem:[#allocation2 + $0x8] sm:$0xff]
      %v5256 = vld [vmem:[#allocation2 + $0x10] sm:$0xff]
      %v5257 = vld [vmem:[#allocation2 + $0x18] sm:$0xff]
      %v5258 = vld [vmem:[#allocation2 + $0x20] sm:$0xff]
      %v5259 = vld [vmem:[#allocation2 + $0x30] sm:$0xff]
      %v5260 = vld [vmem:[#allocation2 + $0x38] sm:$0xff]
      %v5261 = vld [vmem:[#allocation2 + $0x40] sm:$0xff]
      %v5262 = vld [vmem:[#allocation2 + $0x48] sm:$0xff]
      %v5263 = vld [vmem:[#allocation2 + $0x58] sm:$0xff]
      %v5264 = vld [vmem:[#allocation2 + $0x60] sm:$0xff]
      %v5265 = vld [vmem:[#allocation2 + $0x68] sm:$0xff]
      %v5266 = vld [vmem:[#allocation2 + $0x70] sm:$0xff]
      %5279 = vrot.lane.b32.xlu0 %v5255, 111
      %v5280 = vpop.permute.xlu0 %5279
      %5281 = vrot.lane.b32.xlu0 %v5256, 111
      %v5282 = vpop.permute.xlu0 %5281
      %5283 = vrot.lane.b32.xlu0 %v5257, 111
      %v5284 = vpop.permute.xlu0 %5283
      %5285 = vrot.lane.b32.xlu0 %v5258, 111
      %v5286 = vpop.permute.xlu0 %5285
      %5287 = vrot.lane.b32.xlu0 %v5259, 111
      %v5288 = vpop.permute.xlu0 %5287
      %5289 = vrot.lane.b32.xlu0 %v5260, 111
      %v5290 = vpop.permute.xlu0 %5289
      %5291 = vrot.lane.b32.xlu0 %v5261, 111
      %v5292 = vpop.permute.xlu0 %5291
      %5293 = vrot.lane.b32.xlu0 %v5262, 111
      %v5294 = vpop.permute.xlu0 %5293
      %5295 = vrot.lane.b32.xlu0 %v5263, 111
      %v5296 = vpop.permute.xlu0 %5295
      %5297 = vrot.lane.b32.xlu0 %v5264, 111
      %v5298 = vpop.permute.xlu0 %5297
      %5299 = vrot.lane.b32.xlu0 %v5265, 111
      %v5300 = vpop.permute.xlu0 %5299
      %5301 = vrot.lane.b32.xlu0 %v5266, 111
      %v5302 = vpop.permute.xlu0 %5301
      %v5303 = vsel %vm800, %v5280, %v5282
      %v5304 = vsel %vm800, %v5282, %v5284
      %v5305 = vsel %vm800, %v5284, %v5286
      %v5306 = vsel %vm800, %v5288, %v5290
      %v5307 = vsel %vm800, %v5290, %v5292
      %v5308 = vsel %vm800, %v5292, %v5294
      %v5309 = vsel %vm800, %v5296, %v5298
      %v5310 = vsel %vm800, %v5298, %v5300
      %v5311 = vsel %vm800, %v5300, %v5302
      %5321 = vst [vmem:[#allocation3 + $0x1b0] sm:$0xff] %v5303
      %5322 = vst [vmem:[#allocation3 + $0x1b8] sm:$0xff] %v5304
      %5323 = vst [vmem:[#allocation3 + $0x1c0] sm:$0xff] %v5305
      %5324 = vst [vmem:[#allocation3 + $0x1c8] sm:$0xff] %v5306
      %5325 = vst [vmem:[#allocation3 + $0x1d0] sm:$0xff] %v5307
      %5326 = vst [vmem:[#allocation3 + $0x1d8] sm:$0xff] %v5308
      %5327 = vst [vmem:[#allocation3 + $0x1e0] sm:$0xff] %v5309
      %5328 = vst [vmem:[#allocation3 + $0x1e8] sm:$0xff] %v5310
      %5329 = vst [vmem:[#allocation3 + $0x1f0] sm:$0xff] %v5311
      %v5330 = vld [vmem:[#allocation2 + $0x8] sm:$0xff]
      %v5331 = vld [vmem:[#allocation2 + $0x10] sm:$0xff]
      %v5332 = vld [vmem:[#allocation2 + $0x18] sm:$0xff]
      %v5333 = vld [vmem:[#allocation2 + $0x20] sm:$0xff]
      %v5334 = vld [vmem:[#allocation2 + $0x30] sm:$0xff]
      %v5335 = vld [vmem:[#allocation2 + $0x38] sm:$0xff]
      %v5336 = vld [vmem:[#allocation2 + $0x40] sm:$0xff]
      %v5337 = vld [vmem:[#allocation2 + $0x48] sm:$0xff]
      %v5338 = vld [vmem:[#allocation2 + $0x58] sm:$0xff]
      %v5339 = vld [vmem:[#allocation2 + $0x60] sm:$0xff]
      %v5340 = vld [vmem:[#allocation2 + $0x68] sm:$0xff]
      %v5341 = vld [vmem:[#allocation2 + $0x70] sm:$0xff]
      %5354 = vrot.lane.b32.xlu0 %v5330, 110
      %v5355 = vpop.permute.xlu0 %5354
      %5356 = vrot.lane.b32.xlu0 %v5331, 110
      %v5357 = vpop.permute.xlu0 %5356
      %5358 = vrot.lane.b32.xlu0 %v5332, 110
      %v5359 = vpop.permute.xlu0 %5358
      %5360 = vrot.lane.b32.xlu0 %v5333, 110
      %v5361 = vpop.permute.xlu0 %5360
      %5362 = vrot.lane.b32.xlu0 %v5334, 110
      %v5363 = vpop.permute.xlu0 %5362
      %5364 = vrot.lane.b32.xlu0 %v5335, 110
      %v5365 = vpop.permute.xlu0 %5364
      %5366 = vrot.lane.b32.xlu0 %v5336, 110
      %v5367 = vpop.permute.xlu0 %5366
      %5368 = vrot.lane.b32.xlu0 %v5337, 110
      %v5369 = vpop.permute.xlu0 %5368
      %5370 = vrot.lane.b32.xlu0 %v5338, 110
      %v5371 = vpop.permute.xlu0 %5370
      %5372 = vrot.lane.b32.xlu0 %v5339, 110
      %v5373 = vpop.permute.xlu0 %5372
      %5374 = vrot.lane.b32.xlu0 %v5340, 110
      %v5375 = vpop.permute.xlu0 %5374
      %5376 = vrot.lane.b32.xlu0 %v5341, 110
      %v5377 = vpop.permute.xlu0 %5376
      %v5378 = vsel %vm876, %v5355, %v5357
      %v5379 = vsel %vm876, %v5357, %v5359
      %v5380 = vsel %vm876, %v5359, %v5361
      %v5381 = vsel %vm876, %v5363, %v5365
      %v5382 = vsel %vm876, %v5365, %v5367
      %v5383 = vsel %vm876, %v5367, %v5369
      %v5384 = vsel %vm876, %v5371, %v5373
      %v5385 = vsel %vm876, %v5373, %v5375
      %v5386 = vsel %vm876, %v5375, %v5377
      %5396 = vst [vmem:[#allocation3 + $0x1f8] sm:$0xff] %v5378
      %5397 = vst [vmem:[#allocation3 + $0x200] sm:$0xff] %v5379
      %5398 = vst [vmem:[#allocation3 + $0x208] sm:$0xff] %v5380
      %5399 = vst [vmem:[#allocation3 + $0x210] sm:$0xff] %v5381
      %5400 = vst [vmem:[#allocation3 + $0x218] sm:$0xff] %v5382
      %5401 = vst [vmem:[#allocation3 + $0x220] sm:$0xff] %v5383
      %5402 = vst [vmem:[#allocation3 + $0x228] sm:$0xff] %v5384
      %5403 = vst [vmem:[#allocation3 + $0x230] sm:$0xff] %v5385
      %5404 = vst [vmem:[#allocation3 + $0x238] sm:$0xff] %v5386
      %v5405 = vld [vmem:[#allocation2 + $0x8] sm:$0xff]
      %v5406 = vld [vmem:[#allocation2 + $0x10] sm:$0xff]
      %v5407 = vld [vmem:[#allocation2 + $0x18] sm:$0xff]
      %v5408 = vld [vmem:[#allocation2 + $0x20] sm:$0xff]
      %v5409 = vld [vmem:[#allocation2 + $0x30] sm:$0xff]
      %v5410 = vld [vmem:[#allocation2 + $0x38] sm:$0xff]
      %v5411 = vld [vmem:[#allocation2 + $0x40] sm:$0xff]
      %v5412 = vld [vmem:[#allocation2 + $0x48] sm:$0xff]
      %v5413 = vld [vmem:[#allocation2 + $0x58] sm:$0xff]
      %v5414 = vld [vmem:[#allocation2 + $0x60] sm:$0xff]
      %v5415 = vld [vmem:[#allocation2 + $0x68] sm:$0xff]
      %v5416 = vld [vmem:[#allocation2 + $0x70] sm:$0xff]
      %5429 = vrot.lane.b32.xlu0 %v5405, 109
      %v5430 = vpop.permute.xlu0 %5429
      %5431 = vrot.lane.b32.xlu0 %v5406, 109
      %v5432 = vpop.permute.xlu0 %5431
      %5433 = vrot.lane.b32.xlu0 %v5407, 109
      %v5434 = vpop.permute.xlu0 %5433
      %5435 = vrot.lane.b32.xlu0 %v5408, 109
      %v5436 = vpop.permute.xlu0 %5435
      %5437 = vrot.lane.b32.xlu0 %v5409, 109
      %v5438 = vpop.permute.xlu0 %5437
      %5439 = vrot.lane.b32.xlu0 %v5410, 109
      %v5440 = vpop.permute.xlu0 %5439
      %5441 = vrot.lane.b32.xlu0 %v5411, 109
      %v5442 = vpop.permute.xlu0 %5441
      %5443 = vrot.lane.b32.xlu0 %v5412, 109
      %v5444 = vpop.permute.xlu0 %5443
      %5445 = vrot.lane.b32.xlu0 %v5413, 109
      %v5446 = vpop.permute.xlu0 %5445
      %5447 = vrot.lane.b32.xlu0 %v5414, 109
      %v5448 = vpop.permute.xlu0 %5447
      %5449 = vrot.lane.b32.xlu0 %v5415, 109
      %v5450 = vpop.permute.xlu0 %5449
      %5451 = vrot.lane.b32.xlu0 %v5416, 109
      %v5452 = vpop.permute.xlu0 %5451
      %v5453 = vsel %vm952, %v5430, %v5432
      %v5454 = vsel %vm952, %v5432, %v5434
      %v5455 = vsel %vm952, %v5434, %v5436
      %v5456 = vsel %vm952, %v5438, %v5440
      %v5457 = vsel %vm952, %v5440, %v5442
      %v5458 = vsel %vm952, %v5442, %v5444
      %v5459 = vsel %vm952, %v5446, %v5448
      %v5460 = vsel %vm952, %v5448, %v5450
      %v5461 = vsel %vm952, %v5450, %v5452
      %5471 = vst [vmem:[#allocation3 + $0x240] sm:$0xff] %v5453
      %5472 = vst [vmem:[#allocation3 + $0x248] sm:$0xff] %v5454
      %5473 = vst [vmem:[#allocation3 + $0x250] sm:$0xff] %v5455
      %5474 = vst [vmem:[#allocation3 + $0x258] sm:$0xff] %v5456
      %5475 = vst [vmem:[#allocation3 + $0x260] sm:$0xff] %v5457
      %5476 = vst [vmem:[#allocation3 + $0x268] sm:$0xff] %v5458
      %5477 = vst [vmem:[#allocation3 + $0x270] sm:$0xff] %v5459
      %5478 = vst [vmem:[#allocation3 + $0x278] sm:$0xff] %v5460
      %5479 = vst [vmem:[#allocation3 + $0x280] sm:$0xff] %v5461
      %s5480 = scalar_lea.vmem %s5, 32
      %v5481 = vld [vmem:[%s5480] sm:$0xff]
      %v5482 = vld [vmem:[%s5480 + $0x8] sm:$0xff]
      %v5483 = vld [vmem:[#allocation3] sm:$0xff]
      %v5484 = vld [vmem:[#allocation3 + $0x8] sm:$0xff]
      %v5485 = vld [vmem:[#allocation3 + $0x10] sm:$0xff]
      %v5486 = vld [vmem:[#allocation3 + $0x18] sm:$0xff]
      %v5487 = vld [vmem:[#allocation3 + $0x20] sm:$0xff]
      %v5488 = vld [vmem:[#allocation3 + $0x28] sm:$0xff]
      %v5489 = vld [vmem:[#allocation3 + $0x30] sm:$0xff]
      %v5490 = vld [vmem:[#allocation3 + $0x38] sm:$0xff]
      %v5491 = vld [vmem:[#allocation3 + $0x40] sm:$0xff]
      %v5492 = vld [vmem:[#allocation3 + $0x48] sm:$0xff]
      %v5493 = vld [vmem:[#allocation3 + $0x50] sm:$0xff]
      %v5494 = vld [vmem:[#allocation3 + $0x58] sm:$0xff]
      %v5495 = vld [vmem:[#allocation3 + $0x60] sm:$0xff]
      %v5496 = vld [vmem:[#allocation3 + $0x68] sm:$0xff]
      %v5497 = vld [vmem:[#allocation3 + $0x70] sm:$0xff]
      %v5498 = vld [vmem:[#allocation3 + $0x78] sm:$0xff]
      %v5499 = vld [vmem:[#allocation3 + $0x80] sm:$0xff]
      %v5500 = vld [vmem:[#allocation3 + $0x88] sm:$0xff]
      %v5501 = vld [vmem:[#allocation3 + $0x90] sm:$0xff]
      %v5502 = vld [vmem:[#allocation3 + $0x98] sm:$0xff]
      %v5503 = vld [vmem:[#allocation3 + $0xa0] sm:$0xff]
      %v5504 = vld [vmem:[#allocation3 + $0xa8] sm:$0xff]
      %v5505 = vld [vmem:[#allocation3 + $0xb0] sm:$0xff]
      %v5506 = vld [vmem:[#allocation3 + $0xb8] sm:$0xff]
      %v5507 = vld [vmem:[#allocation3 + $0xc0] sm:$0xff]
      %v5508 = vld [vmem:[#allocation3 + $0xc8] sm:$0xff]
      %v5509 = vld [vmem:[#allocation3 + $0xd0] sm:$0xff]
      %v5510 = vld [vmem:[#allocation3 + $0xd8] sm:$0xff]
      %v5511 = vld [vmem:[#allocation3 + $0xe0] sm:$0xff]
      %v5512 = vld [vmem:[#allocation3 + $0xe8] sm:$0xff]
      %v5513 = vld [vmem:[#allocation3 + $0xf0] sm:$0xff]
      %v5514 = vld [vmem:[#allocation3 + $0xf8] sm:$0xff]
      %v5515 = vld [vmem:[#allocation3 + $0x100] sm:$0xff]
      %v5516 = vld [vmem:[#allocation3 + $0x108] sm:$0xff]
      %v5517 = vld [vmem:[#allocation3 + $0x110] sm:$0xff]
      %v5518 = vld [vmem:[#allocation3 + $0x118] sm:$0xff]
      %v5519 = vld [vmem:[#allocation3 + $0x120] sm:$0xff]
      %v5520 = vld [vmem:[#allocation3 + $0x128] sm:$0xff]
      %v5521 = vld [vmem:[#allocation3 + $0x130] sm:$0xff]
      %v5522 = vld [vmem:[#allocation3 + $0x138] sm:$0xff]
      %v5523 = vld [vmem:[#allocation3 + $0x140] sm:$0xff]
      %v5524 = vld [vmem:[#allocation3 + $0x148] sm:$0xff]
      %v5525 = vld [vmem:[#allocation3 + $0x150] sm:$0xff]
      %v5526 = vld [vmem:[#allocation3 + $0x158] sm:$0xff]
      %v5527 = vld [vmem:[#allocation3 + $0x160] sm:$0xff]
      %v5528 = vld [vmem:[#allocation3 + $0x168] sm:$0xff]
      %v5529 = vld [vmem:[#allocation3 + $0x170] sm:$0xff]
      %v5530 = vld [vmem:[#allocation3 + $0x178] sm:$0xff]
      %v5531 = vld [vmem:[#allocation3 + $0x180] sm:$0xff]
      %v5532 = vld [vmem:[#allocation3 + $0x188] sm:$0xff]
      %v5533 = vld [vmem:[#allocation3 + $0x190] sm:$0xff]
      %v5534 = vld [vmem:[#allocation3 + $0x198] sm:$0xff]
      %v5535 = vld [vmem:[#allocation3 + $0x1a0] sm:$0xff]
      %v5536 = vld [vmem:[#allocation3 + $0x1a8] sm:$0xff]
      %v5537 = vld [vmem:[#allocation3 + $0x1b0] sm:$0xff]
      %v5538 = vld [vmem:[#allocation3 + $0x1b8] sm:$0xff]
      %v5539 = vld [vmem:[#allocation3 + $0x1c0] sm:$0xff]
      %v5540 = vld [vmem:[#allocation3 + $0x1c8] sm:$0xff]
      %v5541 = vld [vmem:[#allocation3 + $0x1d0] sm:$0xff]
      %v5542 = vld [vmem:[#allocation3 + $0x1d8] sm:$0xff]
      %v5543 = vld [vmem:[#allocation3 + $0x1e0] sm:$0xff]
      %v5544 = vld [vmem:[#allocation3 + $0x1e8] sm:$0xff]
      %v5545 = vld [vmem:[#allocation3 + $0x1f0] sm:$0xff]
      %v5546 = vld [vmem:[#allocation3 + $0x1f8] sm:$0xff]
      %v5547 = vld [vmem:[#allocation3 + $0x200] sm:$0xff]
      %v5548 = vld [vmem:[#allocation3 + $0x208] sm:$0xff]
      %v5549 = vld [vmem:[#allocation3 + $0x210] sm:$0xff]
      %v5550 = vld [vmem:[#allocation3 + $0x218] sm:$0xff]
      %v5551 = vld [vmem:[#allocation3 + $0x220] sm:$0xff]
      %v5552 = vld [vmem:[#allocation3 + $0x228] sm:$0xff]
      %v5553 = vld [vmem:[#allocation3 + $0x230] sm:$0xff]
      %v5554 = vld [vmem:[#allocation3 + $0x238] sm:$0xff]
      %v5555 = vld [vmem:[#allocation3 + $0x240] sm:$0xff]
      %v5556 = vld [vmem:[#allocation3 + $0x248] sm:$0xff]
      %v5557 = vld [vmem:[#allocation3 + $0x250] sm:$0xff]
      %v5558 = vld [vmem:[#allocation3 + $0x258] sm:$0xff]
      %v5559 = vld [vmem:[#allocation3 + $0x260] sm:$0xff]
      %v5560 = vld [vmem:[#allocation3 + $0x268] sm:$0xff]
      %v5561 = vld [vmem:[#allocation3 + $0x270] sm:$0xff]
      %v5562 = vld [vmem:[#allocation3 + $0x278] sm:$0xff]
      %v5563 = vld [vmem:[#allocation3 + $0x280] sm:$0xff]
      %v5565 = vsel %vm1083, %v5482, 0
      %5567 = vmatprep.subr.mxu0 %v5529
      %5568 = vmatpush1.msra.mxu0 %v5528
      %5569 = vmatprep.subr.mxu0 %v5526
      %5570 = vmatpush1.msra.mxu0 %v5525
      %5571 = vmatprep.subr.mxu0 %v5523
      %5572 = vmatpush1.msra.mxu0 %v5522
      %5573 = vmatprep.subr.mxu0 %v5520
      %5574 = vmatpush1.msra.mxu0 %v5519
      %5575 = vmatprep.subr.mxu0 %v5517
      %5576 = vmatpush1.msra.mxu0 %v5516
      %5577 = vmatprep.subr.mxu0 %v5514
      %5578 = vmatpush1.msra.mxu0 %v5513
      %5579 = vmatprep.subr.mxu0 %v5511
      %5580 = vmatpush1.msra.mxu0 %v5510
      %5581 = vmatprep.subr.mxu0 %v5508
      %5582 = vmatpush1.msra.mxu0 %v5507
      %5583 = vmatprep.subr.mxu0 %v5505
      %5584 = vmatpush1.msra.mxu0 %v5504
      %5585 = vmatprep.subr.mxu0 %v5502
      %5586 = vmatpush1.msra.mxu0 %v5501
      %5587 = vmatprep.subr.mxu0 %v5499
      %5588 = vmatpush1.msra.mxu0 %v5498
      %5589 = vmatprep.subr.mxu0 %v5496
      %5590 = vmatpush1.msra.mxu0 %v5495
      %5591 = vmatprep.subr.mxu0 %v5493
      %5592 = vmatpush1.msra.mxu0 %v5492
      %5593 = vmatprep.subr.mxu0 %v5490
      %5594 = vmatpush1.msra.mxu0 %v5489
      %5595 = vmatprep.subr.mxu0 %v5487
      %5596 = vmatpush1.msra.mxu0 %v5486
      %5597 = vmatprep.subr.mxu0 %v5484
      %5598 = vmatpush1.msra.mxu0 %v5483
      %5599 = vmatprep.subr.mxu0 0.0
      %5600 = vmatpush2.msra.mxu0 0.0
      %5601 = vmatprep.subr.mxu0 0.0
      %5602 = vmatpush2.msra.mxu0 0.0
      %5603 = vmatprep.subr.mxu0 0.0
      %5604 = vmatpush2.msra.mxu0 0.0
      %5605 = vmatprep.subr.mxu0 0.0
      %5606 = vmatpush2.msra.mxu0 0.0
      %5607 = vmatprep.subr.mxu0 0.0
      %5608 = vmatpush2.msra.mxu0 0.0
      %5609 = vmatprep.subr.mxu0 %v5562
      %5610 = vmatpush2.msra.mxu0 %v5561
      %5611 = vmatprep.subr.mxu0 %v5559
      %5612 = vmatpush2.msra.mxu0 %v5558
      %5613 = vmatprep.subr.mxu0 %v5556
      %5614 = vmatpush2.msra.mxu0 %v5555
      %5615 = vmatprep.subr.mxu0 %v5553
      %5616 = vmatpush2.msra.mxu0 %v5552
      %5617 = vmatprep.subr.mxu0 %v5550
      %5618 = vmatpush2.msra.mxu0 %v5549
      %5619 = vmatprep.subr.mxu0 %v5547
      %5620 = vmatpush2.msra.mxu0 %v5546
      %5621 = vmatprep.subr.mxu0 %v5544
      %5622 = vmatpush2.msra.mxu0 %v5543
      %5623 = vmatprep.subr.mxu0 %v5541
      %5624 = vmatpush2.msra.mxu0 %v5540
      %5625 = vmatprep.subr.mxu0 %v5538
      %5626 = vmatpush2.msra.mxu0 %v5537
      %5627 = vmatprep.subr.mxu0 %v5535
      %5628 = vmatpush2.msra.mxu0 %v5534
      %5629 = vmatprep.subr.mxu0 %v5532
      %5630 = vmatpush2.msra.mxu0 %v5531
      %5631 = vmatprep.mubr.f32.mxu0 %v5565
      %5632 = vmatmul.mubr.f32.gmra.mxu0 %v5481
      %v5633 = vpop.f32.mrf.mxu0
      %v5634 = vadd.f32 0.0, %v5633
      %v5635 = vpop.f32.mrf.mxu0
      %v5636 = vadd.f32 0.0, %v5635
      %5637 = vdwg.mxu0
      %5638 = vmatprep.subr.mxu0 0.0
      %5639 = vmatpush1.msra.mxu0 %v5530
      %5640 = vmatprep.subr.mxu0 0.0
      %5641 = vmatpush1.msra.mxu0 %v5527
      %5642 = vmatprep.subr.mxu0 0.0
      %5643 = vmatpush1.msra.mxu0 %v5524
      %5644 = vmatprep.subr.mxu0 0.0
      %5645 = vmatpush1.msra.mxu0 %v5521
      %5646 = vmatprep.subr.mxu0 0.0
      %5647 = vmatpush1.msra.mxu0 %v5518
      %5648 = vmatprep.subr.mxu0 0.0
      %5649 = vmatpush1.msra.mxu0 %v5515
      %5650 = vmatprep.subr.mxu0 0.0
      %5651 = vmatpush1.msra.mxu0 %v5512
      %5652 = vmatprep.subr.mxu0 0.0
      %5653 = vmatpush1.msra.mxu0 %v5509
      %5654 = vmatprep.subr.mxu0 0.0
      %5655 = vmatpush1.msra.mxu0 %v5506
      %5656 = vmatprep.subr.mxu0 0.0
      %5657 = vmatpush1.msra.mxu0 %v5503
      %5658 = vmatprep.subr.mxu0 0.0
      %5659 = vmatpush1.msra.mxu0 %v5500
      %5660 = vmatprep.subr.mxu0 0.0
      %5661 = vmatpush1.msra.mxu0 %v5497
      %5662 = vmatprep.subr.mxu0 0.0
      %5663 = vmatpush1.msra.mxu0 %v5494
      %5664 = vmatprep.subr.mxu0 0.0
      %5665 = vmatpush1.msra.mxu0 %v5491
      %5666 = vmatprep.subr.mxu0 0.0
      %5667 = vmatpush1.msra.mxu0 %v5488
      %5668 = vmatprep.subr.mxu0 0.0
      %5669 = vmatpush1.msra.mxu0 %v5485
      %5670 = vmatprep.subr.mxu0 0.0
      %5671 = vmatpush2.msra.mxu0 0.0
      %5672 = vmatprep.subr.mxu0 0.0
      %5673 = vmatpush2.msra.mxu0 0.0
      %5674 = vmatprep.subr.mxu0 0.0
      %5675 = vmatpush2.msra.mxu0 0.0
      %5676 = vmatprep.subr.mxu0 0.0
      %5677 = vmatpush2.msra.mxu0 0.0
      %5678 = vmatprep.subr.mxu0 0.0
      %5679 = vmatpush2.msra.mxu0 0.0
      %5680 = vmatprep.subr.mxu0 0.0
      %5681 = vmatpush2.msra.mxu0 %v5563
      %5682 = vmatprep.subr.mxu0 0.0
      %5683 = vmatpush2.msra.mxu0 %v5560
      %5684 = vmatprep.subr.mxu0 0.0
      %5685 = vmatpush2.msra.mxu0 %v5557
      %5686 = vmatprep.subr.mxu0 0.0
      %5687 = vmatpush2.msra.mxu0 %v5554
      %5688 = vmatprep.subr.mxu0 0.0
      %5689 = vmatpush2.msra.mxu0 %v5551
      %5690 = vmatprep.subr.mxu0 0.0
      %5691 = vmatpush2.msra.mxu0 %v5548
      %5692 = vmatprep.subr.mxu0 0.0
      %5693 = vmatpush2.msra.mxu0 %v5545
      %5694 = vmatprep.subr.mxu0 0.0
      %5695 = vmatpush2.msra.mxu0 %v5542
      %5696 = vmatprep.subr.mxu0 0.0
      %5697 = vmatpush2.msra.mxu0 %v5539
      %5698 = vmatprep.subr.mxu0 0.0
      %5699 = vmatpush2.msra.mxu0 %v5536
      %5700 = vmatprep.subr.mxu0 0.0
      %5701 = vmatpush2.msra.mxu0 %v5533
      %5702 = vmatprep.mubr.f32.mxu0 %v5565
      %5703 = vmatmul.mubr.f32.gmra.mxu0 %v5481
      %v5704 = vpop.f32.mrf.mxu0
      %v5705 = vadd.f32 0.0, %v5704
      %v5706 = vpop.f32.mrf.mxu0
      %5707 = vdwg.mxu0
      %v5708 = vld [vmem:[%s351] ss:$8 sm:$0x7]
      %s5709 = scalar_lea.vmem %s6, 2
      %v5710 = vld [vmem:[%s5709] sm:$0x1]
      %5712 = vset.pattern.permute.xlu0 0
      %5713 = vperm.xlu0 %5712, %v5710
      %v5714 = vpop.permute.xlu0 %5713
      %v5716 = vlaneseq
      %v5717 = vshrl.u32 %v5716, 7
      %v5718 = vsub.s32 0, %v5717
      %v5719 = vrot.slane %v5714, %v5718
      %v5720 = vadd.f32 %v5634, %v5719
      %v5721 = vadd.f32 %v5636, %v5719
      %v5722 = vadd.f32 %v5705, %v5719
      %v5723 = vmul.f32 %v5720, %v314
      %v5724 = vmul.f32 %v5721, %v318
      %v5725 = vmul.f32 %v5722, %v322
      %v5729 = vcombine.low %v5723, %v5724
      %v5731 = vunpack.c.l.s4 1966171168
      %v5732 = vunpack.c.0.s8 %v5731
      %v5733 = vlaneseq
      %v5734 = vshrl.u32 %v5733, 7
      %v5735 = vsub.s32 %v5732, %v5734
      %v5736 = vrot.slane %v5729, %v5735
      %v5738 = vunpack.c.l.s4 1966171168
      %v5739 = vunpack.c.0.s8 %v5738
      %v5740 = vlaneseq
      %v5741 = vshrl.u32 %v5740, 7
      %v5742 = vsub.s32 %v5739, %v5741
      %v5743 = vrot.slane %v5725, %v5742
      %v5744 = vcombine.low %v5736, %v5743
      %v5746 = vunpack.c.l.s4 1966171168
      %v5747 = vunpack.c.0.s8 %v5746
      %v5748 = vlaneseq
      %v5749 = vshrl.u32 %v5748, 7
      %v5750 = vsub.s32 %v5747, %v5749
      %v5751 = vrot.slane %v5744, %v5750
      %v5753 = vadd.f32 %v5708, %v5751
      %5754 = vst.msk [vmem:[%s351] ss:$8 sm:$0x7] %vm350, %v5753
      %5755 = vst.msk [vmem:[%s351] ss:$8 sm:$0x0] %vm350, %v5753
      %v5756 = vld [vmem:[%s351] ss:$8 sm:$0x7]
      %5757 = vst.msk [vmem:[%s293] sm:$0x7] %vm350, %v5756
      %p5758 = scmp.lt.s32.totalorder %s18, 1
      %s5759 = scalar_select %p5758, %s18, 1
      %s5760 = smul.addr %s5759, 3
      %s5761 = scalar_lea.vmem %s7, %s5760
      // Predicated region
      $region49: #{_reverse_stage_impl.1} parent=47 // pred_check
        %p5762 = pneg %p193
      $region50: #{_reverse_stage_impl.1} parent=47 // pred_check_branch
        %5764 = sbr.rel (%p5762) target = $region52
      $region51: #{_reverse_stage_impl.1} parent=47 // pred_region
        _
      $region52: #{_reverse_stage_impl.1} parent=47 // pred_fallthru
        _
    $region48: #{_reverse_stage_impl.1} parent=5 // pred_fallthru
      _
    %p5765 = scmp.le.s32.totalorder 2, %s13
    // Predicated region
    $region53: #{_reverse_stage_impl.1} parent=5 // pred_check
      %p5766 = pneg %p5765
    $region54: #{_reverse_stage_impl.1} parent=5 // pred_check_branch
      %5768 = sbr.rel (%p5766) target = $region56
    $region55: #{_reverse_stage_impl.1} parent=5 // pred_region
      %s5769 = ssub.s32 %s13, 2
      // Predicated region
      $region57: #{_reverse_stage_impl.1} parent=55 // pred_check
        %p5770 = pneg %p199
      $region58: #{_reverse_stage_impl.1} parent=55 // pred_check_branch
        %5772 = sbr.rel (%p5770) target = $region60
      $region59: #{_reverse_stage_impl.1} parent=55 // pred_region
        %p5773 = scmp.lt.s32.totalorder %s19, 1
        %s5774 = scalar_select %p5773, %s19, 1
        %s5775 = smul.addr %s5774, 3
        %s5776 = scalar_lea.vmem %s7, %s5775
      $region60: #{_reverse_stage_impl.1} parent=55 // pred_fallthru
        _
    $region56: #{_reverse_stage_impl.1} parent=5 // pred_fallthru
      _
  $region6: #{_reverse_stage_impl.1} parent=0 // loop_footer
    %s17 = sadd.s32 1, %s13
  $region7: #{_reverse_stage_impl.1} parent=0 // loop_footer_branch
    %12 = sbr.rel target = $region3
  $region8: #{_reverse_stage_impl.1} parent=0 // loop_exit
    _

</llo_original>
